<compile_context>
chip_gen: v6e
topology: v6e:2x2x1
jax: 0.10.0
libtpu: 0.0.40
codegen_flags: <defaults>
</compile_context>

<pallas_src>
import functools

import jax
import jax.numpy as jnp
from jax import lax
from jax.experimental import pallas as pl
from jax.experimental.pallas import tpu as pltpu

LANE = 128


def _round_up(x, m):
    return ((x + m - 1) // m) * m


def _choose_row_tile(m, max_tile):
    """Pick a sublane-aligned row tile; returns (tile, padded_m, n_blocks)."""
    n_blocks = -(-m // max_tile)                 # ceil(m / max_tile)
    tile = _round_up(-(-m // n_blocks), 8)       # ceil(m / n_blocks) rounded up to 8
    return tile, tile * n_blocks, n_blocks


# ----------------------------------------------------------------------------
# Pallas kernels
# ----------------------------------------------------------------------------
def _matmul_bias_relu_kernel(x_ref, w_ref, b_ref, o_ref):
    """o = relu(x @ w + b).  x:(tm,K) f32, w:(K,N) bf16, b:(1,N) f32, o:(tm,N) f32."""
    acc = jnp.dot(x_ref[...].astype(jnp.bfloat16), w_ref[...],
                  preferred_element_type=jnp.float32)
    o_ref[...] = jnp.maximum(acc + b_ref[...], 0.0).astype(o_ref.dtype)


def pallas_matmul_bias_relu(x, w, b, *, max_tile_m=512):
    """Row-tiled (M,K)@(K,N)+bias with ReLU.  N must be a multiple of 128 (lane-dense)."""
    m, k = x.shape
    k2, n = w.shape
    assert k == k2 and n % LANE == 0
    tm, mp, n_blocks = _choose_row_tile(m, max_tile_m)
    if mp != m:
        x = jnp.pad(x, ((0, mp - m), (0, 0)))
    out = pl.pallas_call(
        _matmul_bias_relu_kernel,
        out_shape=jax.ShapeDtypeStruct((mp, n), jnp.float32),
        grid_spec=pltpu.PrefetchScalarGridSpec(
            num_scalar_prefetch=0,
            grid=(n_blocks,),
            in_specs=[
                pl.BlockSpec((tm, k), lambda i: (i, 0)),
                pl.BlockSpec((k, n), lambda i: (0, 0)),
                pl.BlockSpec((1, n), lambda i: (0, 0)),
            ],
            out_specs=pl.BlockSpec((tm, n), lambda i: (i, 0)),
        ),
        compiler_params=pltpu.CompilerParams(
            dimension_semantics=("parallel",)),
    )(x, w, b.reshape(1, n).astype(jnp.float32))
    return out[:m] if mp != m else out


def _fc_heads_kernel(x_ref, wfc_ref, bfc_ref, wh_ref, bh_ref, o_ref, *, action_dim):
    """Fused fc(3136->512)+ReLU, merged actor/critic matmul, masked softmax.

    Output slab (tb, 128): cols [0, action_dim) = action probs, col action_dim = value.
    """
    # hidden layer: lives in VMEM/registers, never written back to HBM
    h = jnp.dot(x_ref[...].astype(jnp.bfloat16), wfc_ref[...],
                preferred_element_type=jnp.float32) + bfc_ref[...]
    h = jnp.maximum(h, 0.0)
    # one lane-dense 128-wide matmul covers actor logits + critic value
    logits = jnp.dot(h.astype(jnp.bfloat16), wh_ref[...],
                     preferred_element_type=jnp.float32) + bh_ref[...]
    col = lax.broadcasted_iota(jnp.int32, logits.shape, 1)
    masked = jnp.where(col < action_dim, logits, -jnp.inf)
    m = jnp.max(masked, axis=-1, keepdims=True)
    e = jnp.exp(masked - m)                       # padded columns -> exp(-inf) = 0
    probs = e / jnp.sum(e, axis=-1, keepdims=True)
    o_ref[...] = jnp.where(col == action_dim, logits, probs).astype(o_ref.dtype)


def pallas_fc_heads(x, wfc, bfc, wh, bh, action_dim, *, max_tile_b=128):
    b_rows, k = x.shape
    n_hidden = wfc.shape[1]
    n_out = wh.shape[1]
    assert wfc.shape[0] == k and wh.shape[0] == n_hidden and n_out % LANE == 0
    tb, bp, n_blocks = _choose_row_tile(b_rows, max_tile_b)
    if bp != b_rows:
        x = jnp.pad(x, ((0, bp - b_rows), (0, 0)))
    out = pl.pallas_call(
        functools.partial(_fc_heads_kernel, action_dim=action_dim),
        out_shape=jax.ShapeDtypeStruct((bp, n_out), jnp.float32),
        grid_spec=pltpu.PrefetchScalarGridSpec(
            num_scalar_prefetch=0,
            grid=(n_blocks,),
            in_specs=[
                pl.BlockSpec((tb, k), lambda i: (i, 0)),
                pl.BlockSpec((k, n_hidden), lambda i: (0, 0)),
                pl.BlockSpec((1, n_hidden), lambda i: (0, 0)),
                pl.BlockSpec((n_hidden, n_out), lambda i: (0, 0)),
                pl.BlockSpec((1, n_out), lambda i: (0, 0)),
            ],
            out_specs=pl.BlockSpec((tb, n_out), lambda i: (i, 0)),
        ),
        compiler_params=pltpu.CompilerParams(
            dimension_semantics=("parallel",)),
    )(x, wfc, bfc.reshape(1, n_hidden).astype(jnp.float32),
      wh, bh.reshape(1, n_out).astype(jnp.float32))
    probs = out[:b_rows, :action_dim]
    value = out[:b_rows, action_dim:action_dim + 1]
    return probs, value


# ----------------------------------------------------------------------------
# XLA glue: im2col patch extraction (pure slicing / reshape)
# ----------------------------------------------------------------------------
def im2col_nhwc(x, kh, kw, stride, c_real):
    """x:(B,H,W,C_pad) -> cols:(B*OH*OW, kh*kw*c_real) in (ki,kj,c) column order."""
    b, h, w, _ = x.shape
    x = x[..., :c_real]                            # drop lane padding from previous layer
    oh = (h - kh) // stride + 1
    ow = (w - kw) // stride + 1
    patches = []
    for i in range(kh):
        for j in range(kw):
            patches.append(x[:, i:i + stride * oh:stride, j:j + stride * ow:stride, :])
    cols = jnp.stack(patches, axis=3).reshape(b * oh * ow, kh * kw * c_real)
    return cols, oh, ow


def conv2d_relu(x_nhwc, w_mat, bias, *, kh, kw, stride, c_in):
    """Conv via im2col + Pallas matmul; output channels are zero-padded to 128 lanes."""
    b = x_nhwc.shape[0]
    cols, oh, ow = im2col_nhwc(x_nhwc, kh, kw, stride, c_in)
    out = pallas_matmul_bias_relu(cols, w_mat, bias)        # (B*OH*OW, 128)
    return out.reshape(b, oh, ow, -1)


# ----------------------------------------------------------------------------
# Parameters (orthogonal init, zero biases — matches the PyTorch init)
# ----------------------------------------------------------------------------
def orthogonal_init(key, rows, cols, gain):
    a = jax.random.normal(key, (max(rows, cols), min(rows, cols)), jnp.float32)
    q, r = jnp.linalg.qr(a)
    q = q * jnp.sign(jnp.diag(r))[None, :]
    if rows < cols:
        q = q.T
    return (gain * q[:rows, :cols]).astype(jnp.float32)


def make_params(key, action_dim):
    gain = jnp.sqrt(2.0)          # calculate_gain('relu')
    ks = jax.random.split(key, 6)
    p = {}

    def conv_weight(k, oc, ic, kh, kw):
        # torch layout (OC,IC,KH,KW) -> rows ordered (ki,kj,ic) to match im2col,
        # output channels zero-padded to 128 lanes, stored bf16.
        w = orthogonal_init(k, oc, ic * kh * kw, gain).reshape(oc, ic, kh, kw)
        wm = jnp.transpose(w, (2, 3, 1, 0)).reshape(kh * kw * ic, oc)
        return jnp.pad(wm, ((0, 0), (0, LANE - oc))).astype(jnp.bfloat16)

    p["w1"] = conv_weight(ks[0], 32, 1, 8, 8)
    p["b1"] = jnp.zeros((LANE,), jnp.float32)
    p["w2"] = conv_weight(ks[1], 64, 32, 4, 4)
    p["b2"] = jnp.zeros((LANE,), jnp.float32)
    p["w3"] = conv_weight(ks[2], 64, 64, 3, 3)
    p["b3"] = jnp.zeros((LANE,), jnp.float32)

    # fc (512,3136): torch flattens NCHW (c*49 + h*7 + w); we feed the NHWC flatten
    # ((h*7+w)*64 + c) directly, so permute the 3136 weight rows once here instead of
    # transposing the activation on the hot path.
    wfc_t = orthogonal_init(ks[3], 512, 3136, gain).T       # (3136, 512), (C,H,W) rows
    f = jnp.arange(3136)
    perm = (f % 64) * 49 + (f // 64)                        # NHWC row -> (C,H,W) row
    p["wfc"] = wfc_t[perm, :].astype(jnp.bfloat16)
    p["bfc"] = jnp.zeros((512,), jnp.float32)

    # merged heads: (512, 128) bf16; cols [0,A) = actor, col A = critic, rest zero
    wa = orthogonal_init(ks[4], action_dim, 512, gain).T    # (512, A)
    wc = orthogonal_init(ks[5], 1, 512, gain).T             # (512, 1)
    wh = jnp.concatenate([wa, wc], axis=1)
    p["wh"] = jnp.pad(wh, ((0, 0), (0, LANE - (action_dim + 1)))).astype(jnp.bfloat16)
    p["bh"] = jnp.zeros((LANE,), jnp.float32)
    return p


# ----------------------------------------------------------------------------
# Forward pass (matches ActorCritic.forward semantics)
# ----------------------------------------------------------------------------
def actor_critic_forward(params, x, *, action_dim):
    x = jnp.asarray(x, jnp.float32)
    # replicate PyTorch's dim massaging
    if x.ndim == 2:
        x = x[None, None]                                   # (1,1,H,W)
    elif x.ndim == 3:
        if x.shape[0] == 3:
            x = jnp.mean(x, axis=0, keepdims=True)[None]    # (1,1,H,W)
        else:
            x = x[None]                                     # (1,C,H,W)
    x = jnp.transpose(x, (0, 2, 3, 1))                      # NCHW -> NHWC (C=1: free)

    x = conv2d_relu(x, params["w1"], params["b1"], kh=8, kw=8, stride=4, c_in=1)
    x = conv2d_relu(x, params["w2"], params["b2"], kh=4, kw=4, stride=2, c_in=32)
    x = conv2d_relu(x, params["w3"], params["b3"], kh=3, kw=3, stride=1, c_in=64)

    b = x.shape[0]
    x = x[..., :64].reshape(b, -1)                          # NHWC flatten (B, 3136)
    return pallas_fc_heads(x, params["wfc"], params["bfc"],
                           params["wh"], params["bh"], action_dim)


# ----------------------------------------------------------------------------
if __name__ == "__main__":
    key = jax.random.PRNGKey(0)
    k_param, k_in = jax.random.split(key)

    ACTION_DIM = 6
    params = make_params(k_param, ACTION_DIM)

    # Atari-style input: batch=2, 1 channel, 84x84 (fc expects 3136 = 64*7*7)
    x = jax.random.uniform(k_in, (2, 1, 84, 84), jnp.float32)

    forward = jax.jit(functools.partial(actor_critic_forward, action_dim=ACTION_DIM))
    probs, value = forward(params, x)
    probs = jax.block_until_ready(probs)
    value = jax.block_until_ready(value)

    assert probs.shape == (2, ACTION_DIM)
    assert value.shape == (2, 1)
    # softmax rows must sum to 1
    assert bool(jnp.all(jnp.abs(jnp.sum(probs, axis=-1) - 1.0) < 1e-4))
    assert bool(jnp.all(jnp.isfinite(value)))

    print("KERNEL_OK")
</pallas_src>

<mosaic_0001>
module attributes {stable_mosaic.version = 11 : i64} {
  func.func @_matmul_bias_relu_kernel(%arg0: i32, %arg1: memref<400x64xf32, #tpu.memory_space<vmem>>, %arg2: memref<64x128xbf16, #tpu.memory_space<vmem>>, %arg3: memref<1x128xf32, #tpu.memory_space<vmem>>, %arg4: memref<400x128xf32, #tpu.memory_space<vmem>>) attributes {dimension_semantics = [#tpu.dimension_semantics<parallel>], iteration_bounds = array<i64: 2>, scalar_prefetch = 0 : i64, scratch_operands = 0 : i64, tpu.core_type = #tpu.core_type<tc>, window_params = [{transform_indices = @transform_0, window_bounds = array<i64: 400, 64>}, {pipeline_mode = #tpu.pipeline_mode<synchronous>, transform_indices = @transform_1, window_bounds = array<i64: 64, 128>}, {pipeline_mode = #tpu.pipeline_mode<synchronous>, transform_indices = @transform_2, window_bounds = array<i64: 1, 128>}, {transform_indices = @transform_3, window_bounds = array<i64: 400, 128>}]} {
    %c0 = arith.constant 0 : index
    %c0_0 = arith.constant 0 : index
    %0 = vector.load %arg1[%c0, %c0_0] : memref<400x64xf32, #tpu.memory_space<vmem>>, vector<400x64xf32>
    %1 = arith.truncf %0 : vector<400x64xf32> to vector<400x64xbf16>
    %c0_1 = arith.constant 0 : index
    %c0_2 = arith.constant 0 : index
    %2 = vector.load %arg2[%c0_1, %c0_2] : memref<64x128xbf16, #tpu.memory_space<vmem>>, vector<64x128xbf16>
    %cst = arith.constant dense<0.000000e+00> : vector<400x128xf32>
    %3 = tpu.matmul %1, %2, %cst {dimension_numbers = #tpu.dot_dimension_numbers<[1], [0], [0], [1], [0, 0, 1, 1], [], []>} : vector<400x64xbf16>, vector<64x128xbf16>, vector<400x128xf32> -> vector<400x128xf32>
    %c0_3 = arith.constant 0 : index
    %c0_4 = arith.constant 0 : index
    %4 = vector.load %arg3[%c0_3, %c0_4] : memref<1x128xf32, #tpu.memory_space<vmem>>, vector<1x128xf32>
    %5 = vector.broadcast %4 : vector<1x128xf32> to vector<400x128xf32>
    %6 = arith.addf %3, %5 : vector<400x128xf32>
    %cst_5 = arith.constant 0.000000e+00 : f32
    %7 = vector.broadcast %cst_5 : f32 to vector<400x128xf32>
    %8 = arith.maximumf %6, %7 : vector<400x128xf32>
    %c0_6 = arith.constant 0 : index
    %c0_7 = arith.constant 0 : index
    %9 = vector.load %arg4[%c0_6, %c0_7] : memref<400x128xf32, #tpu.memory_space<vmem>>, vector<400x128xf32>
    tpu.vector_store %arg4[%c0_6, %c0_7], %8 {strides = array<i32>} : memref<400x128xf32, #tpu.memory_space<vmem>>, vector<400x128xf32>,
    return
  }
  func.func @transform_0(%arg0: i32) -> (i32, i32) {
    %c0_i32 = arith.constant 0 : i32
    %c0_i32_0 = arith.constant 0 : i32
    return %arg0, %c0_i32 : i32, i32
  }
  func.func @transform_1(%arg0: i32) -> (i32, i32) {
    %c0_i32 = arith.constant 0 : i32
    %c0_i32_0 = arith.constant 0 : i32
    %c0_i32_1 = arith.constant 0 : i32
    return %c0_i32, %c0_i32_0 : i32, i32
  }
  func.func @transform_2(%arg0: i32) -> (i32, i32) {
    %c0_i32 = arith.constant 0 : i32
    %c0_i32_0 = arith.constant 0 : i32
    %c0_i32_1 = arith.constant 0 : i32
    return %c0_i32, %c0_i32_0 : i32, i32
  }
  func.func @transform_3(%arg0: i32) -> (i32, i32) {
    %c0_i32 = arith.constant 0 : i32
    %c0_i32_0 = arith.constant 0 : i32
    return %arg0, %c0_i32 : i32, i32
  }
}

module attributes {stable_mosaic.version = 11 : i64} {
  func.func @_matmul_bias_relu_kernel(%arg0: i32, %arg1: memref<168x512xf32, #tpu.memory_space<vmem>>, %arg2: memref<512x128xbf16, #tpu.memory_space<vmem>>, %arg3: memref<1x128xf32, #tpu.memory_space<vmem>>, %arg4: memref<168x128xf32, #tpu.memory_space<vmem>>) attributes {dimension_semantics = [#tpu.dimension_semantics<parallel>], iteration_bounds = array<i64: 1>, scalar_prefetch = 0 : i64, scratch_operands = 0 : i64, tpu.core_type = #tpu.core_type<tc>, window_params = [{transform_indices = @transform_0, window_bounds = array<i64: 168, 512>}, {pipeline_mode = #tpu.pipeline_mode<synchronous>, transform_indices = @transform_1, window_bounds = array<i64: 512, 128>}, {pipeline_mode = #tpu.pipeline_mode<synchronous>, transform_indices = @transform_2, window_bounds = array<i64: 1, 128>}, {transform_indices = @transform_3, window_bounds = array<i64: 168, 128>}]} {
    %c0 = arith.constant 0 : index
    %c0_0 = arith.constant 0 : index
    %0 = vector.load %arg1[%c0, %c0_0] : memref<168x512xf32, #tpu.memory_space<vmem>>, vector<168x512xf32>
    %1 = arith.truncf %0 : vector<168x512xf32> to vector<168x512xbf16>
    %c0_1 = arith.constant 0 : index
    %c0_2 = arith.constant 0 : index
    %2 = vector.load %arg2[%c0_1, %c0_2] : memref<512x128xbf16, #tpu.memory_space<vmem>>, vector<512x128xbf16>
    %cst = arith.constant dense<0.000000e+00> : vector<168x128xf32>
    %3 = tpu.matmul %1, %2, %cst {dimension_numbers = #tpu.dot_dimension_numbers<[1], [0], [0], [1], [0, 0, 1, 1], [], []>} : vector<168x512xbf16>, vector<512x128xbf16>, vector<168x128xf32> -> vector<168x128xf32>
    %c0_3 = arith.constant 0 : index
    %c0_4 = arith.constant 0 : index
    %4 = vector.load %arg3[%c0_3, %c0_4] : memref<1x128xf32, #tpu.memory_space<vmem>>, vector<1x128xf32>
    %5 = vector.broadcast %4 : vector<1x128xf32> to vector<168x128xf32>
    %6 = arith.addf %3, %5 : vector<168x128xf32>
    %cst_5 = arith.constant 0.000000e+00 : f32
    %7 = vector.broadcast %cst_5 : f32 to vector<168x128xf32>
    %8 = arith.maximumf %6, %7 : vector<168x128xf32>
    %c0_6 = arith.constant 0 : index
    %c0_7 = arith.constant 0 : index
    %9 = vector.load %arg4[%c0_6, %c0_7] : memref<168x128xf32, #tpu.memory_space<vmem>>, vector<168x128xf32>
    tpu.vector_store %arg4[%c0_6, %c0_7], %8 {strides = array<i32>} : memref<168x128xf32, #tpu.memory_space<vmem>>, vector<168x128xf32>,
    return
  }
  func.func @transform_0(%arg0: i32) -> (i32, i32) {
    %c0_i32 = arith.constant 0 : i32
    %c0_i32_0 = arith.constant 0 : i32
    return %arg0, %c0_i32 : i32, i32
  }
  func.func @transform_1(%arg0: i32) -> (i32, i32) {
    %c0_i32 = arith.constant 0 : i32
    %c0_i32_0 = arith.constant 0 : i32
    %c0_i32_1 = arith.constant 0 : i32
    return %c0_i32, %c0_i32_0 : i32, i32
  }
  func.func @transform_2(%arg0: i32) -> (i32, i32) {
    %c0_i32 = arith.constant 0 : i32
    %c0_i32_0 = arith.constant 0 : i32
    %c0_i32_1 = arith.constant 0 : i32
    return %c0_i32, %c0_i32_0 : i32, i32
  }
  func.func @transform_3(%arg0: i32) -> (i32, i32) {
    %c0_i32 = arith.constant 0 : i32
    %c0_i32_0 = arith.constant 0 : i32
    return %arg0, %c0_i32 : i32, i32
  }
}

module attributes {stable_mosaic.version = 11 : i64} {
  func.func @_matmul_bias_relu_kernel(%arg0: i32, %arg1: memref<104x576xf32, #tpu.memory_space<vmem>>, %arg2: memref<576x128xbf16, #tpu.memory_space<vmem>>, %arg3: memref<1x128xf32, #tpu.memory_space<vmem>>, %arg4: memref<104x128xf32, #tpu.memory_space<vmem>>) attributes {dimension_semantics = [#tpu.dimension_semantics<parallel>], iteration_bounds = array<i64: 1>, scalar_prefetch = 0 : i64, scratch_operands = 0 : i64, tpu.core_type = #tpu.core_type<tc>, window_params = [{transform_indices = @transform_0, window_bounds = array<i64: 104, 576>}, {pipeline_mode = #tpu.pipeline_mode<synchronous>, transform_indices = @transform_1, window_bounds = array<i64: 576, 128>}, {pipeline_mode = #tpu.pipeline_mode<synchronous>, transform_indices = @transform_2, window_bounds = array<i64: 1, 128>}, {transform_indices = @transform_3, window_bounds = array<i64: 104, 128>}]} {
    %c0 = arith.constant 0 : index
    %c0_0 = arith.constant 0 : index
    %0 = vector.load %arg1[%c0, %c0_0] : memref<104x576xf32, #tpu.memory_space<vmem>>, vector<104x576xf32>
    %1 = arith.truncf %0 : vector<104x576xf32> to vector<104x576xbf16>
    %c0_1 = arith.constant 0 : index
    %c0_2 = arith.constant 0 : index
    %2 = vector.load %arg2[%c0_1, %c0_2] : memref<576x128xbf16, #tpu.memory_space<vmem>>, vector<576x128xbf16>
    %cst = arith.constant dense<0.000000e+00> : vector<104x128xf32>
    %3 = tpu.matmul %1, %2, %cst {dimension_numbers = #tpu.dot_dimension_numbers<[1], [0], [0], [1], [0, 0, 1, 1], [], []>} : vector<104x576xbf16>, vector<576x128xbf16>, vector<104x128xf32> -> vector<104x128xf32>
    %c0_3 = arith.constant 0 : index
    %c0_4 = arith.constant 0 : index
    %4 = vector.load %arg3[%c0_3, %c0_4] : memref<1x128xf32, #tpu.memory_space<vmem>>, vector<1x128xf32>
    %5 = vector.broadcast %4 : vector<1x128xf32> to vector<104x128xf32>
    %6 = arith.addf %3, %5 : vector<104x128xf32>
    %cst_5 = arith.constant 0.000000e+00 : f32
    %7 = vector.broadcast %cst_5 : f32 to vector<104x128xf32>
    %8 = arith.maximumf %6, %7 : vector<104x128xf32>
    %c0_6 = arith.constant 0 : index
    %c0_7 = arith.constant 0 : index
    %9 = vector.load %arg4[%c0_6, %c0_7] : memref<104x128xf32, #tpu.memory_space<vmem>>, vector<104x128xf32>
    tpu.vector_store %arg4[%c0_6, %c0_7], %8 {strides = array<i32>} : memref<104x128xf32, #tpu.memory_space<vmem>>, vector<104x128xf32>,
    return
  }
  func.func @transform_0(%arg0: i32) -> (i32, i32) {
    %c0_i32 = arith.constant 0 : i32
    %c0_i32_0 = arith.constant 0 : i32
    return %arg0, %c0_i32 : i32, i32
  }
  func.func @transform_1(%arg0: i32) -> (i32, i32) {
    %c0_i32 = arith.constant 0 : i32
    %c0_i32_0 = arith.constant 0 : i32
    %c0_i32_1 = arith.constant 0 : i32
    return %c0_i32, %c0_i32_0 : i32, i32
  }
  func.func @transform_2(%arg0: i32) -> (i32, i32) {
    %c0_i32 = arith.constant 0 : i32
    %c0_i32_0 = arith.constant 0 : i32
    %c0_i32_1 = arith.constant 0 : i32
    return %c0_i32, %c0_i32_0 : i32, i32
  }
  func.func @transform_3(%arg0: i32) -> (i32, i32) {
    %c0_i32 = arith.constant 0 : i32
    %c0_i32_0 = arith.constant 0 : i32
    return %arg0, %c0_i32 : i32, i32
  }
}

module attributes {stable_mosaic.version = 11 : i64} {
  func.func @_fc_heads_kernel(%arg0: i32, %arg1: memref<8x3136xf32, #tpu.memory_space<vmem>>, %arg2: memref<3136x512xbf16, #tpu.memory_space<vmem>>, %arg3: memref<1x512xf32, #tpu.memory_space<vmem>>, %arg4: memref<512x128xbf16, #tpu.memory_space<vmem>>, %arg5: memref<1x128xf32, #tpu.memory_space<vmem>>, %arg6: memref<8x128xf32, #tpu.memory_space<vmem>>) attributes {dimension_semantics = [#tpu.dimension_semantics<parallel>], iteration_bounds = array<i64: 1>, scalar_prefetch = 0 : i64, scratch_operands = 0 : i64, tpu.core_type = #tpu.core_type<tc>, window_params = [{transform_indices = @transform_0, window_bounds = array<i64: 8, 3136>}, {pipeline_mode = #tpu.pipeline_mode<synchronous>, transform_indices = @transform_1, window_bounds = array<i64: 3136, 512>}, {pipeline_mode = #tpu.pipeline_mode<synchronous>, transform_indices = @transform_2, window_bounds = array<i64: 1, 512>}, {pipeline_mode = #tpu.pipeline_mode<synchronous>, transform_indices = @transform_3, window_bounds = array<i64: 512, 128>}, {pipeline_mode = #tpu.pipeline_mode<synchronous>, transform_indices = @transform_4, window_bounds = array<i64: 1, 128>}, {transform_indices = @transform_5, window_bounds = array<i64: 8, 128>}]} {
    %c0 = arith.constant 0 : index
    %c0_0 = arith.constant 0 : index
    %0 = vector.load %arg1[%c0, %c0_0] : memref<8x3136xf32, #tpu.memory_space<vmem>>, vector<8x3136xf32>
    %1 = arith.truncf %0 : vector<8x3136xf32> to vector<8x3136xbf16>
    %c0_1 = arith.constant 0 : index
    %c0_2 = arith.constant 0 : index
    %2 = vector.load %arg2[%c0_1, %c0_2] : memref<3136x512xbf16, #tpu.memory_space<vmem>>, vector<3136x512xbf16>
    %cst = arith.constant dense<0.000000e+00> : vector<8x512xf32>
    %3 = tpu.matmul %1, %2, %cst {dimension_numbers = #tpu.dot_dimension_numbers<[1], [0], [0], [1], [0, 0, 1, 1], [], []>} : vector<8x3136xbf16>, vector<3136x512xbf16>, vector<8x512xf32> -> vector<8x512xf32>
    %c0_3 = arith.constant 0 : index
    %c0_4 = arith.constant 0 : index
    %4 = vector.load %arg3[%c0_3, %c0_4] : memref<1x512xf32, #tpu.memory_space<vmem>>, vector<1x512xf32>
    %5 = vector.broadcast %4 : vector<1x512xf32> to vector<8x512xf32>
    %6 = arith.addf %3, %5 : vector<8x512xf32>
    %cst_5 = arith.constant 0.000000e+00 : f32
    %7 = vector.broadcast %cst_5 : f32 to vector<8x512xf32>
    %8 = arith.maximumf %6, %7 : vector<8x512xf32>
    %9 = arith.truncf %8 : vector<8x512xf32> to vector<8x512xbf16>
    %c0_6 = arith.constant 0 : index
    %c0_7 = arith.constant 0 : index
    %10 = vector.load %arg4[%c0_6, %c0_7] : memref<512x128xbf16, #tpu.memory_space<vmem>>, vector<512x128xbf16>
    %cst_8 = arith.constant dense<0.000000e+00> : vector<8x128xf32>
    %11 = tpu.matmul %9, %10, %cst_8 {dimension_numbers = #tpu.dot_dimension_numbers<[1], [0], [0], [1], [0, 0, 1, 1], [], []>} : vector<8x512xbf16>, vector<512x128xbf16>, vector<8x128xf32> -> vector<8x128xf32>
    %c0_9 = arith.constant 0 : index
    %c0_10 = arith.constant 0 : index
    %12 = vector.load %arg5[%c0_9, %c0_10] : memref<1x128xf32, #tpu.memory_space<vmem>>, vector<1x128xf32>
    %13 = vector.broadcast %12 : vector<1x128xf32> to vector<8x128xf32>
    %14 = arith.addf %11, %13 : vector<8x128xf32>
    %15 = tpu.iota {dimensions = array<i32: 1>} : vector<8x128xi32>
    %c6_i32 = arith.constant 6 : i32
    %16 = vector.broadcast %c6_i32 : i32 to vector<8x128xi32>
    %17 = arith.cmpi slt, %15, %16 : vector<8x128xi32>
    %cst_11 = arith.constant 0xFF800000 : f32
    %18 = vector.broadcast %cst_11 : f32 to vector<8x128xf32>
    %19 = arith.select %17, %14, %18 : vector<8x128xi1>, vector<8x128xf32>
    %cst_12 = arith.constant dense<0xFF800000> : vector<8xf32>
    %20 = vector.multi_reduction <maximumf>, %19, %cst_12 [1] : vector<8x128xf32> to vector<8xf32>
    %21 = vector.shape_cast %20 : vector<8xf32> to vector<8x1xf32>
    %22 = vector.broadcast %21 : vector<8x1xf32> to vector<8x128xf32>
    %23 = arith.subf %19, %22 : vector<8x128xf32>
    %24 = math.exp %23 : vector<8x128xf32>
    %cst_13 = arith.constant dense<0.000000e+00> : vector<8xf32>
    %25 = vector.multi_reduction <add>, %24, %cst_13 [1] : vector<8x128xf32> to vector<8xf32>
    %26 = vector.shape_cast %25 : vector<8xf32> to vector<8x1xf32>
    %27 = vector.broadcast %26 : vector<8x1xf32> to vector<8x128xf32>
    %28 = arith.divf %24, %27 : vector<8x128xf32>
    %c6_i32_14 = arith.constant 6 : i32
    %29 = vector.broadcast %c6_i32_14 : i32 to vector<8x128xi32>
    %30 = arith.cmpi eq, %15, %29 : vector<8x128xi32>
    %31 = arith.select %30, %14, %28 : vector<8x128xi1>, vector<8x128xf32>
    %c0_15 = arith.constant 0 : index
    %c0_16 = arith.constant 0 : index
    %32 = vector.load %arg6[%c0_15, %c0_16] : memref<8x128xf32, #tpu.memory_space<vmem>>, vector<8x128xf32>
    tpu.vector_store %arg6[%c0_15, %c0_16], %31 {strides = array<i32>} : memref<8x128xf32, #tpu.memory_space<vmem>>, vector<8x128xf32>,
    return
  }
  func.func @transform_0(%arg0: i32) -> (i32, i32) {
    %c0_i32 = arith.constant 0 : i32
    %c0_i32_0 = arith.constant 0 : i32
    return %arg0, %c0_i32 : i32, i32
  }
  func.func @transform_1(%arg0: i32) -> (i32, i32) {
    %c0_i32 = arith.constant 0 : i32
    %c0_i32_0 = arith.constant 0 : i32
    %c0_i32_1 = arith.constant 0 : i32
    return %c0_i32, %c0_i32_0 : i32, i32
  }
  func.func @transform_2(%arg0: i32) -> (i32, i32) {
    %c0_i32 = arith.constant 0 : i32
    %c0_i32_0 = arith.constant 0 : i32
    %c0_i32_1 = arith.constant 0 : i32
    return %c0_i32, %c0_i32_0 : i32, i32
  }
  func.func @transform_3(%arg0: i32) -> (i32, i32) {
    %c0_i32 = arith.constant 0 : i32
    %c0_i32_0 = arith.constant 0 : i32
    %c0_i32_1 = arith.constant 0 : i32
    return %c0_i32, %c0_i32_0 : i32, i32
  }
  func.func @transform_4(%arg0: i32) -> (i32, i32) {
    %c0_i32 = arith.constant 0 : i32
    %c0_i32_0 = arith.constant 0 : i32
    %c0_i32_1 = arith.constant 0 : i32
    return %c0_i32, %c0_i32_0 : i32, i32
  }
  func.func @transform_5(%arg0: i32) -> (i32, i32) {
    %c0_i32 = arith.constant 0 : i32
    %c0_i32_0 = arith.constant 0 : i32
    return %arg0, %c0_i32 : i32, i32
  }
}

</mosaic_0001>

<llo_original>
// kernel: actor_critic_forward.4
$region0: #{actor_critic_forward.4}
  #allocation0 [shape = 'u32[]', space=smem, size = 0x4, offset = 0x4, fixed_abs, tag = 'smem constant byte address 0x4 - core index']
  #allocation1 [shape = 'u32[144,128]{1,0:T(1,128)}', space=vmem, size = 0x12000, scoped, tag = 'internal scratch']
  %s0 = inlined_call_operand.vmem [shape: f32[800,64], index: 0, kind: input, shape index: {}]
  %s1 = inlined_call_operand.vmem [shape: bf16[64,128], index: 1, kind: input, shape index: {}]
  %s2 = inlined_call_operand.vmem [shape: f32[1,128], index: 2, kind: input, shape index: {}]
  %s3 = inlined_call_operand.vmem [shape: f32[800,128], index: 3, kind: output, shape index: {}]
  %s4 = sld [smem:[#allocation0]]
  $region45: #{actor_critic_forward.4} parent=0
    _
  %s6 = ssub.s32 1, %s4
  %s7 = scalar_select 0, %s6, %s4
  loop: start=0, step=1, limit=4
  $region2: #{actor_critic_forward.4} parent=0 // loop_pre_header
    _
  $region3: #{actor_critic_forward.4} parent=0 // loop_header
    %s9 = sphi 0, %s13
    %p10 = scmp.ge.s32.totalorder %s9, 4
    %s19 = sphi 0, %s21
    %s22 = sphi 0, %s19
    %s23 = sphi 0, %s22
    %s39 = sphi 0, %s23
    %s43 = sphi 0, %s43
    %s45 = sphi 0, %s43
    %s46 = sphi 0, %s45
    %s60 = sphi 0, %s46
    %s64 = sphi 0, %s64
    %s66 = sphi 0, %s64
    %s67 = sphi 0, %s66
    %s81 = sphi 0, %s67
    %s87 = sphi 0, %s89
    %s90 = sphi 0, %s87
    %s91 = sphi 0, %s90
    %s107 = sphi 0, %s91
  $region4: #{actor_critic_forward.4} parent=0 // loop_header_branch
    %12 = sbr.rel (%p10) target = $region8
  $region5: #{actor_critic_forward.4} parent=0 // loop_body
    %s14 = ssub.s32 %s9, 1
    %s15 = ssub.s32 %s9, 2
    %s16 = sadd.s32 %s9, 1
    %s17 = ssub.s32 %s9, %s16
    %p18 = scmp.eq.s32.totalorder %s17, 0
    %s20 = sadd.s32 %s19, 1
    %s21 = scalar_select %p18, %s19, %s20
    %p24 = pneg %p18
    %p25 = scmp.eq.s32.totalorder %s9, 1
    %p26 = por %p24, %p25
    %p27 = scmp.ne.s32.totalorder %s19, %s22
    %p28 = scmp.eq.s32.totalorder %s9, 0
    %p29 = por %p27, %p28
    %p30 = scmp.ne.s32.totalorder %s19, %s22
    %p31 = scmp.eq.s32.totalorder %s14, 1
    %p32 = por %p30, %p31
    %p33 = scmp.ne.s32.totalorder %s22, %s23
    %p34 = scmp.eq.s32.totalorder %s14, 0
    %p35 = por %p33, %p34
    %p36 = scmp.ne.s32.totalorder %s22, %s23
    %p37 = scmp.eq.s32.totalorder %s15, 1
    %p38 = por %p36, %p37
    %p40 = scmp.ne.s32.totalorder %s23, %s39
    %p41 = scmp.eq.s32.totalorder %s15, 0
    %p42 = por %p40, %p41
    %s44 = sadd.s32 %s43, 1
    %p47 = scmp.eq.s32.totalorder %s9, 1
    %p48 = scmp.ne.s32.totalorder %s43, %s45
    %p49 = scmp.eq.s32.totalorder %s9, 0
    %p50 = por %p48, %p49
    %p51 = scmp.ne.s32.totalorder %s43, %s45
    %p52 = scmp.eq.s32.totalorder %s14, 1
    %p53 = por %p51, %p52
    %p54 = scmp.ne.s32.totalorder %s45, %s46
    %p55 = scmp.eq.s32.totalorder %s14, 0
    %p56 = por %p54, %p55
    %p57 = scmp.ne.s32.totalorder %s45, %s46
    %p58 = scmp.eq.s32.totalorder %s15, 1
    %p59 = por %p57, %p58
    %p61 = scmp.ne.s32.totalorder %s46, %s60
    %p62 = scmp.eq.s32.totalorder %s15, 0
    %p63 = por %p61, %p62
    %s65 = sadd.s32 %s64, 1
    %p68 = scmp.eq.s32.totalorder %s9, 1
    %p69 = scmp.ne.s32.totalorder %s64, %s66
    %p70 = scmp.eq.s32.totalorder %s9, 0
    %p71 = por %p69, %p70
    %p72 = scmp.ne.s32.totalorder %s64, %s66
    %p73 = scmp.eq.s32.totalorder %s14, 1
    %p74 = por %p72, %p73
    %p75 = scmp.ne.s32.totalorder %s66, %s67
    %p76 = scmp.eq.s32.totalorder %s14, 0
    %p77 = por %p75, %p76
    %p78 = scmp.ne.s32.totalorder %s66, %s67
    %p79 = scmp.eq.s32.totalorder %s15, 1
    %p80 = por %p78, %p79
    %p82 = scmp.ne.s32.totalorder %s67, %s81
    %p83 = scmp.eq.s32.totalorder %s15, 0
    %p84 = por %p82, %p83
    %s85 = ssub.s32 %s9, %s16
    %p86 = scmp.eq.s32.totalorder %s85, 0
    %s88 = sadd.s32 %s87, 1
    %s89 = scalar_select %p86, %s87, %s88
    %p92 = pneg %p86
    %p93 = scmp.eq.s32.totalorder %s9, 1
    %p94 = por %p92, %p93
    %p95 = scmp.ne.s32.totalorder %s87, %s90
    %p96 = scmp.eq.s32.totalorder %s9, 0
    %p97 = por %p95, %p96
    %p98 = scmp.ne.s32.totalorder %s87, %s90
    %p99 = scmp.eq.s32.totalorder %s14, 1
    %p100 = por %p98, %p99
    %p101 = scmp.ne.s32.totalorder %s90, %s91
    %p102 = scmp.eq.s32.totalorder %s14, 0
    %p103 = por %p101, %p102
    %p104 = scmp.ne.s32.totalorder %s90, %s91
    %p105 = scmp.eq.s32.totalorder %s15, 1
    %p106 = por %p104, %p105
    %p108 = scmp.ne.s32.totalorder %s91, %s107
    %p109 = scmp.eq.s32.totalorder %s15, 0
    %p110 = por %p108, %p109
    %p111 = scmp.le.s32.totalorder 1, %s9
    %p112 = scmp.lt.s32.totalorder %s9, 3
    %p113 = pnand %p111, %p112
    %p114 = pneg %p113
    // Predicated region
    $region9: #{actor_critic_forward.4} parent=5 // pred_check
      _
    $region10: #{actor_critic_forward.4} parent=5 // pred_check_branch
      %116 = sbr.rel (%p113) target = $region12
    $region11: #{actor_critic_forward.4} parent=5 // pred_region
      %s117 = ssub.s32 %s9, 1
      // Predicated region
      $region13: #{actor_critic_forward.4} parent=11 // pred_check
        %p118 = pneg %p56
      $region14: #{actor_critic_forward.4} parent=11 // pred_check_branch
        %120 = sbr.rel (%p118) target = $region16
      $region15: #{actor_critic_forward.4} parent=11 // pred_region
        _
      $region16: #{actor_critic_forward.4} parent=11 // pred_fallthru
        _
      // Predicated region
      $region17: #{actor_critic_forward.4} parent=11 // pred_check
        %p121 = pneg %p77
      $region18: #{actor_critic_forward.4} parent=11 // pred_check_branch
        %123 = sbr.rel (%p121) target = $region20
      $region19: #{actor_critic_forward.4} parent=11 // pred_region
        _
      $region20: #{actor_critic_forward.4} parent=11 // pred_fallthru
        _
    $region12: #{actor_critic_forward.4} parent=5 // pred_fallthru
      _
    %p124 = scmp.lt.s32.totalorder %s9, 2
    // Predicated region
    $region21: #{actor_critic_forward.4} parent=5 // pred_check
      %p125 = pneg %p124
    $region22: #{actor_critic_forward.4} parent=5 // pred_check_branch
      %127 = sbr.rel (%p125) target = $region24
    $region23: #{actor_critic_forward.4} parent=5 // pred_region
      // Predicated region
      $region25: #{actor_critic_forward.4} parent=23 // pred_check
        %p128 = pneg %p29
      $region26: #{actor_critic_forward.4} parent=23 // pred_check_branch
        %130 = sbr.rel (%p128) target = $region28
      $region27: #{actor_critic_forward.4} parent=23 // pred_region
        %s131 = smul.u32 50, %s9
        %p132 = scmp.lt.s32.totalorder %s131, 99
        %s133 = scalar_select %p132, %s131, 99
        %s134 = smul.addr %s133, 8
        %s135 = scalar_lea.vmem %s0, %s134
        %s136 = smul.u32 50, %s9
      $region28: #{actor_critic_forward.4} parent=23 // pred_fallthru
        _
    $region24: #{actor_critic_forward.4} parent=5 // pred_fallthru
      _
    %p137 = scmp.le.s32.totalorder 1, %s9
    %p138 = scmp.lt.s32.totalorder %s9, 3
    %p139 = pnand %p137, %p138
    %p140 = pneg %p139
    // Predicated region
    $region29: #{actor_critic_forward.4} parent=5 // pred_check
      _
    $region30: #{actor_critic_forward.4} parent=5 // pred_check_branch
      %142 = sbr.rel (%p139) target = $region32
    $region31: #{actor_critic_forward.4} parent=5 // pred_region
      %s143 = ssub.s32 %s9, 1
      %s144 = smul.u32 50, %s14
      %p145 = scmp.lt.s32.totalorder %s144, 99
      %s146 = scalar_select %p145, %s144, 99
      %s147 = smul.addr %s146, 8
      %s148 = scalar_lea.vmem %s0, %s147
      %p149 = pneg %p35
      %p150 = pneg %p32
      %p151 = pneg %p56
      %p152 = pneg %p53
      %p153 = pneg %p77
      %p154 = pneg %p74
      %p155 = pneg %p103
      %p156 = pneg %p100
      %s157 = smul.u32 50, %s14
      %p158 = scmp.lt.s32.totalorder %s157, 99
      %s159 = scalar_select %p158, %s157, 99
      %s160 = smul.addr %s159, 8
      %s161 = scalar_lea.vmem %s3, %s160
      %s162 = smul.u32 50, %s14
      %p163 = scmp.lt.s32.totalorder %s162, 99
      %s164 = scalar_select %p163, %s162, 99
      %s165 = smul.addr %s164, 8
      %s166 = scalar_lea.vmem %s0, %s165
      %s167 = smul.u32 50, %s14
      %s168 = smul.u32 50, %s14
      %p169 = scmp.lt.s32.totalorder %s168, 99
      %s170 = scalar_select %p169, %s168, 99
      %s171 = smul.addr %s170, 8
      %s172 = scalar_lea.vmem %s3, %s171
      %s173 = smul.u32 50, %s14
      %v175 = vld [vmem:[%s166] sm:$0xff]
      %v176 = vld [vmem:[%s166 + $0x8] sm:$0xff]
      %v177 = vld [vmem:[%s166 + $0x10] sm:$0xff]
      %v178 = vld [vmem:[%s166 + $0x18] sm:$0xff]
      %v179 = vld [vmem:[%s166 + $0x20] sm:$0xff]
      %v180 = vld [vmem:[%s166 + $0x28] sm:$0xff]
      %v181 = vld [vmem:[%s166 + $0x30] sm:$0xff]
      %v182 = vld [vmem:[%s166 + $0x38] sm:$0xff]
      %v183 = vld [vmem:[%s166 + $0x40] sm:$0xff]
      %v184 = vld [vmem:[%s166 + $0x48] sm:$0xff]
      %v185 = vld [vmem:[%s166 + $0x50] sm:$0xff]
      %v186 = vld [vmem:[%s166 + $0x58] sm:$0xff]
      %v187 = vld [vmem:[%s166 + $0x60] sm:$0xff]
      %v188 = vld [vmem:[%s166 + $0x68] sm:$0xff]
      %v189 = vld [vmem:[%s166 + $0x70] sm:$0xff]
      %v190 = vld [vmem:[%s166 + $0x78] sm:$0xff]
      %v191 = vld [vmem:[%s166 + $0x80] sm:$0xff]
      %v192 = vld [vmem:[%s166 + $0x88] sm:$0xff]
      %v193 = vld [vmem:[%s166 + $0x90] sm:$0xff]
      %v194 = vld [vmem:[%s166 + $0x98] sm:$0xff]
      %v195 = vld [vmem:[%s166 + $0xa0] sm:$0xff]
      %v196 = vld [vmem:[%s166 + $0xa8] sm:$0xff]
      %v197 = vld [vmem:[%s166 + $0xb0] sm:$0xff]
      %v198 = vld [vmem:[%s166 + $0xb8] sm:$0xff]
      %v199 = vld [vmem:[%s166 + $0xc0] sm:$0xff]
      %v200 = vld [vmem:[%s166 + $0xc8] sm:$0xff]
      %v201 = vld [vmem:[%s166 + $0xd0] sm:$0xff]
      %v202 = vld [vmem:[%s166 + $0xd8] sm:$0xff]
      %v203 = vld [vmem:[%s166 + $0xe0] sm:$0xff]
      %v204 = vld [vmem:[%s166 + $0xe8] sm:$0xff]
      %v205 = vld [vmem:[%s166 + $0xf0] sm:$0xff]
      %v206 = vld [vmem:[%s166 + $0xf8] sm:$0xff]
      %v207 = vld [vmem:[%s166 + $0x100] sm:$0xff]
      %v208 = vld [vmem:[%s166 + $0x108] sm:$0xff]
      %v209 = vld [vmem:[%s166 + $0x110] sm:$0xff]
      %v210 = vld [vmem:[%s166 + $0x118] sm:$0xff]
      %v211 = vld [vmem:[%s166 + $0x120] sm:$0xff]
      %v212 = vld [vmem:[%s166 + $0x128] sm:$0xff]
      %v213 = vld [vmem:[%s166 + $0x130] sm:$0xff]
      %v214 = vld [vmem:[%s166 + $0x138] sm:$0xff]
      %v215 = vld [vmem:[%s166 + $0x140] sm:$0xff]
      %v216 = vld [vmem:[%s166 + $0x148] sm:$0xff]
      %v217 = vld [vmem:[%s166 + $0x150] sm:$0xff]
      %v218 = vld [vmem:[%s166 + $0x158] sm:$0xff]
      %v219 = vld [vmem:[%s166 + $0x160] sm:$0xff]
      %v220 = vld [vmem:[%s166 + $0x168] sm:$0xff]
      %v221 = vld [vmem:[%s166 + $0x170] sm:$0xff]
      %v222 = vld [vmem:[%s166 + $0x178] sm:$0xff]
      %v223 = vld [vmem:[%s166 + $0x180] sm:$0xff]
      %v224 = vld [vmem:[%s166 + $0x188] sm:$0xff]
      %v225 = vpack.c.bf16 %v176, %v175
      %v226 = vpack.c.bf16 %v178, %v177
      %v227 = vpack.c.bf16 %v180, %v179
      %v228 = vpack.c.bf16 %v182, %v181
      %v229 = vpack.c.bf16 %v184, %v183
      %v230 = vpack.c.bf16 %v186, %v185
      %v231 = vpack.c.bf16 %v188, %v187
      %v232 = vpack.c.bf16 %v190, %v189
      %v233 = vpack.c.bf16 %v192, %v191
      %v234 = vpack.c.bf16 %v194, %v193
      %v235 = vpack.c.bf16 %v196, %v195
      %v236 = vpack.c.bf16 %v198, %v197
      %v237 = vpack.c.bf16 %v200, %v199
      %v238 = vpack.c.bf16 %v202, %v201
      %v239 = vpack.c.bf16 %v204, %v203
      %v240 = vpack.c.bf16 %v206, %v205
      %v241 = vpack.c.bf16 %v208, %v207
      %v242 = vpack.c.bf16 %v210, %v209
      %v243 = vpack.c.bf16 %v212, %v211
      %v244 = vpack.c.bf16 %v214, %v213
      %v245 = vpack.c.bf16 %v216, %v215
      %v246 = vpack.c.bf16 %v218, %v217
      %v247 = vpack.c.bf16 %v220, %v219
      %v248 = vpack.c.bf16 %v222, %v221
      %v249 = vpack.c.bf16 %v224, %v223
      %v250 = vld [vmem:[%s1] sm:$0xf]
      %v251 = vld [vmem:[%s1 + $0x4] sm:$0xf]
      %v252 = vld [vmem:[%s1 + $0x8] sm:$0xf]
      %v253 = vld [vmem:[%s1 + $0xc] sm:$0xf]
      %v254 = vld [vmem:[%s1 + $0x10] sm:$0xf]
      %v255 = vld [vmem:[%s1 + $0x14] sm:$0xf]
      %v256 = vld [vmem:[%s1 + $0x18] sm:$0xf]
      %v257 = vld [vmem:[%s1 + $0x1c] sm:$0xf]
      %v258 = vld [vmem:[%s2] sm:$0x1]
      %v260 = vlaneseq
      %v261 = vshrl.u32 %v260, 7
      %v262 = vsub.s32 0, %v261
      %v263 = vrot.slane %v258, %v262
      %v273 = vunpack.c.l.b16 %v250
      %v274 = vunpack.c.l.b16 %v251
      %v275 = vunpack.c.l.b16 %v252
      %v276 = vunpack.c.l.b16 %v253
      %v277 = vunpack.c.l.b16 %v254
      %v278 = vunpack.c.l.b16 %v255
      %v279 = vunpack.c.l.b16 %v256
      %v280 = vunpack.c.l.b16 %v257
      %v281 = vpack.c.b16 %v274, %v273
      %v282 = vpack.c.b16 %v276, %v275
      %v283 = vpack.c.b16 %v278, %v277
      %v284 = vpack.c.b16 %v280, %v279
      %vm289 = vcmask 523264
      %v291 = vsel %vm289, %v225, 0
      %v294 = vsel %vm289, %v226, 0
      %v297 = vsel %vm289, %v227, 0
      %v300 = vsel %vm289, %v228, 0
      %v303 = vsel %vm289, %v229, 0
      %v306 = vsel %vm289, %v230, 0
      %v309 = vsel %vm289, %v231, 0
      %v312 = vsel %vm289, %v232, 0
      %v315 = vsel %vm289, %v233, 0
      %v318 = vsel %vm289, %v234, 0
      %v321 = vsel %vm289, %v235, 0
      %v324 = vsel %vm289, %v236, 0
      %v327 = vsel %vm289, %v237, 0
      %v330 = vsel %vm289, %v238, 0
      %v333 = vsel %vm289, %v239, 0
      %v336 = vsel %vm289, %v240, 0
      %v339 = vsel %vm289, %v241, 0
      %v342 = vsel %vm289, %v242, 0
      %v345 = vsel %vm289, %v243, 0
      %v348 = vsel %vm289, %v244, 0
      %v351 = vsel %vm289, %v245, 0
      %v354 = vsel %vm289, %v246, 0
      %v357 = vsel %vm289, %v247, 0
      %v360 = vsel %vm289, %v248, 0
      %v363 = vsel %vm289, %v249, 0
      %365 = vmatprep.subr.bf16.mxu0 0
      %366 = vmatpush1.bf16.msra.mxu0 0
      %367 = vmatprep.subr.bf16.mxu0 0
      %368 = vmatpush1.bf16.msra.mxu0 0
      %369 = vmatprep.subr.bf16.mxu0 0
      %370 = vmatpush1.bf16.msra.mxu0 0
      %371 = vmatprep.subr.bf16.mxu0 0
      %372 = vmatpush1.bf16.msra.mxu0 0
      %373 = vmatprep.subr.bf16.mxu0 0
      %374 = vmatpush1.bf16.msra.mxu0 %v284
      %375 = vmatprep.subr.bf16.mxu0 0
      %376 = vmatpush1.bf16.msra.mxu0 %v283
      %377 = vmatprep.subr.bf16.mxu0 0
      %378 = vmatpush1.bf16.msra.mxu0 %v282
      %379 = vmatprep.subr.bf16.mxu0 0
      %380 = vmatpush1.bf16.msra.mxu0 %v281
      %381 = vmatprep.subr.bf16.mxu0 0
      %382 = vmatpush2.bf16.msra.mxu0 0
      %383 = vmatprep.subr.bf16.mxu0 0
      %384 = vmatpush2.bf16.msra.mxu0 0
      %385 = vmatprep.subr.bf16.mxu0 0
      %386 = vmatpush2.bf16.msra.mxu0 0
      %387 = vmatprep.subr.bf16.mxu0 0
      %388 = vmatpush2.bf16.msra.mxu0 0
      %389 = vmatprep.subr.bf16.mxu0 0
      %390 = vmatpush2.bf16.msra.mxu0 0
      %391 = vmatprep.subr.bf16.mxu0 0
      %392 = vmatpush2.bf16.msra.mxu0 0
      %393 = vmatprep.subr.bf16.mxu0 0
      %394 = vmatpush2.bf16.msra.mxu0 0
      %395 = vmatprep.subr.bf16.mxu0 0
      %396 = vmatpush2.bf16.msra.mxu0 0
      %397 = vmatprep.mubr.bf16.mxu0 0
      %398 = vmatmul.mubr.bf16.gmra.mxu0 %v291
      %v399 = vpop.f32.mrf.mxu0
      %v400 = vadd.f32 %v263, %v399
      %v401 = vpop.f32.mrf.mxu0
      %v402 = vpop.f32.mrf.mxu0
      %v403 = vadd.f32 %v263, %v402
      %v404 = vpop.f32.mrf.mxu0
      %405 = vmatprep.mubr.bf16.mxu0 0
      %406 = vmatmul.mubr.bf16.gmra.mxu0 %v294
      %v407 = vpop.f32.mrf.mxu0
      %v408 = vadd.f32 %v263, %v407
      %v409 = vpop.f32.mrf.mxu0
      %v410 = vpop.f32.mrf.mxu0
      %v411 = vadd.f32 %v263, %v410
      %v412 = vpop.f32.mrf.mxu0
      %413 = vmatprep.mubr.bf16.mxu0 0
      %414 = vmatmul.mubr.bf16.gmra.mxu0 %v297
      %v415 = vpop.f32.mrf.mxu0
      %v416 = vadd.f32 %v263, %v415
      %v417 = vpop.f32.mrf.mxu0
      %v418 = vpop.f32.mrf.mxu0
      %v419 = vadd.f32 %v263, %v418
      %v420 = vpop.f32.mrf.mxu0
      %421 = vmatprep.mubr.bf16.mxu0 0
      %422 = vmatmul.mubr.bf16.gmra.mxu0 %v300
      %v423 = vpop.f32.mrf.mxu0
      %v424 = vadd.f32 %v263, %v423
      %v425 = vpop.f32.mrf.mxu0
      %v426 = vpop.f32.mrf.mxu0
      %v427 = vadd.f32 %v263, %v426
      %v428 = vpop.f32.mrf.mxu0
      %429 = vmatprep.mubr.bf16.mxu0 0
      %430 = vmatmul.mubr.bf16.gmra.mxu0 %v303
      %v431 = vpop.f32.mrf.mxu0
      %v432 = vadd.f32 %v263, %v431
      %v433 = vpop.f32.mrf.mxu0
      %v434 = vpop.f32.mrf.mxu0
      %v435 = vadd.f32 %v263, %v434
      %v436 = vpop.f32.mrf.mxu0
      %437 = vmatprep.mubr.bf16.mxu0 0
      %438 = vmatmul.mubr.bf16.gmra.mxu0 %v306
      %v439 = vpop.f32.mrf.mxu0
      %v440 = vadd.f32 %v263, %v439
      %v441 = vpop.f32.mrf.mxu0
      %v442 = vpop.f32.mrf.mxu0
      %v443 = vadd.f32 %v263, %v442
      %v444 = vpop.f32.mrf.mxu0
      %445 = vmatprep.mubr.bf16.mxu0 0
      %446 = vmatmul.mubr.bf16.gmra.mxu0 %v309
      %v447 = vpop.f32.mrf.mxu0
      %v448 = vadd.f32 %v263, %v447
      %v449 = vpop.f32.mrf.mxu0
      %v450 = vpop.f32.mrf.mxu0
      %v451 = vadd.f32 %v263, %v450
      %v452 = vpop.f32.mrf.mxu0
      %453 = vmatprep.mubr.bf16.mxu0 0
      %454 = vmatmul.mubr.bf16.gmra.mxu0 %v312
      %v455 = vpop.f32.mrf.mxu0
      %v456 = vadd.f32 %v263, %v455
      %v457 = vpop.f32.mrf.mxu0
      %v458 = vpop.f32.mrf.mxu0
      %v459 = vadd.f32 %v263, %v458
      %v460 = vpop.f32.mrf.mxu0
      %461 = vmatprep.mubr.bf16.mxu0 0
      %462 = vmatmul.mubr.bf16.gmra.mxu0 %v315
      %v463 = vpop.f32.mrf.mxu0
      %v464 = vadd.f32 %v263, %v463
      %v465 = vpop.f32.mrf.mxu0
      %v466 = vpop.f32.mrf.mxu0
      %v467 = vadd.f32 %v263, %v466
      %v468 = vpop.f32.mrf.mxu0
      %469 = vmatprep.mubr.bf16.mxu0 0
      %470 = vmatmul.mubr.bf16.gmra.mxu0 %v318
      %v471 = vpop.f32.mrf.mxu0
      %v472 = vadd.f32 %v263, %v471
      %v473 = vpop.f32.mrf.mxu0
      %v474 = vpop.f32.mrf.mxu0
      %v475 = vadd.f32 %v263, %v474
      %v476 = vpop.f32.mrf.mxu0
      %477 = vmatprep.mubr.bf16.mxu0 0
      %478 = vmatmul.mubr.bf16.gmra.mxu0 %v321
      %v479 = vpop.f32.mrf.mxu0
      %v480 = vadd.f32 %v263, %v479
      %v481 = vpop.f32.mrf.mxu0
      %v482 = vpop.f32.mrf.mxu0
      %v483 = vadd.f32 %v263, %v482
      %v484 = vpop.f32.mrf.mxu0
      %485 = vmatprep.mubr.bf16.mxu0 0
      %486 = vmatmul.mubr.bf16.gmra.mxu0 %v324
      %v487 = vpop.f32.mrf.mxu0
      %v488 = vadd.f32 %v263, %v487
      %v489 = vpop.f32.mrf.mxu0
      %v490 = vpop.f32.mrf.mxu0
      %v491 = vadd.f32 %v263, %v490
      %v492 = vpop.f32.mrf.mxu0
      %493 = vmatprep.mubr.bf16.mxu0 0
      %494 = vmatmul.mubr.bf16.gmra.mxu0 %v327
      %v495 = vpop.f32.mrf.mxu0
      %v496 = vadd.f32 %v263, %v495
      %v497 = vpop.f32.mrf.mxu0
      %v498 = vpop.f32.mrf.mxu0
      %v499 = vadd.f32 %v263, %v498
      %v500 = vpop.f32.mrf.mxu0
      %501 = vmatprep.mubr.bf16.mxu0 0
      %502 = vmatmul.mubr.bf16.gmra.mxu0 %v330
      %v503 = vpop.f32.mrf.mxu0
      %v504 = vadd.f32 %v263, %v503
      %v505 = vpop.f32.mrf.mxu0
      %v506 = vpop.f32.mrf.mxu0
      %v507 = vadd.f32 %v263, %v506
      %v508 = vpop.f32.mrf.mxu0
      %509 = vmatprep.mubr.bf16.mxu0 0
      %510 = vmatmul.mubr.bf16.gmra.mxu0 %v333
      %v511 = vpop.f32.mrf.mxu0
      %v512 = vadd.f32 %v263, %v511
      %v513 = vpop.f32.mrf.mxu0
      %v514 = vpop.f32.mrf.mxu0
      %v515 = vadd.f32 %v263, %v514
      %v516 = vpop.f32.mrf.mxu0
      %517 = vmatprep.mubr.bf16.mxu0 0
      %518 = vmatmul.mubr.bf16.gmra.mxu0 %v336
      %v519 = vpop.f32.mrf.mxu0
      %v520 = vadd.f32 %v263, %v519
      %v521 = vpop.f32.mrf.mxu0
      %v522 = vpop.f32.mrf.mxu0
      %v523 = vadd.f32 %v263, %v522
      %v524 = vpop.f32.mrf.mxu0
      %525 = vmatprep.mubr.bf16.mxu0 0
      %526 = vmatmul.mubr.bf16.gmra.mxu0 %v339
      %v527 = vpop.f32.mrf.mxu0
      %v528 = vadd.f32 %v263, %v527
      %v529 = vpop.f32.mrf.mxu0
      %v530 = vpop.f32.mrf.mxu0
      %v531 = vadd.f32 %v263, %v530
      %v532 = vpop.f32.mrf.mxu0
      %533 = vmatprep.mubr.bf16.mxu0 0
      %534 = vmatmul.mubr.bf16.gmra.mxu0 %v342
      %v535 = vpop.f32.mrf.mxu0
      %v536 = vadd.f32 %v263, %v535
      %v537 = vpop.f32.mrf.mxu0
      %v538 = vpop.f32.mrf.mxu0
      %v539 = vadd.f32 %v263, %v538
      %v540 = vpop.f32.mrf.mxu0
      %541 = vmatprep.mubr.bf16.mxu0 0
      %542 = vmatmul.mubr.bf16.gmra.mxu0 %v345
      %v543 = vpop.f32.mrf.mxu0
      %v544 = vadd.f32 %v263, %v543
      %v545 = vpop.f32.mrf.mxu0
      %v546 = vpop.f32.mrf.mxu0
      %v547 = vadd.f32 %v263, %v546
      %v548 = vpop.f32.mrf.mxu0
      %549 = vmatprep.mubr.bf16.mxu0 0
      %550 = vmatmul.mubr.bf16.gmra.mxu0 %v348
      %v551 = vpop.f32.mrf.mxu0
      %v552 = vadd.f32 %v263, %v551
      %v553 = vpop.f32.mrf.mxu0
      %v554 = vpop.f32.mrf.mxu0
      %v555 = vadd.f32 %v263, %v554
      %v556 = vpop.f32.mrf.mxu0
      %557 = vmatprep.mubr.bf16.mxu0 0
      %558 = vmatmul.mubr.bf16.gmra.mxu0 %v351
      %v559 = vpop.f32.mrf.mxu0
      %v560 = vadd.f32 %v263, %v559
      %v561 = vpop.f32.mrf.mxu0
      %v562 = vpop.f32.mrf.mxu0
      %v563 = vadd.f32 %v263, %v562
      %v564 = vpop.f32.mrf.mxu0
      %565 = vmatprep.mubr.bf16.mxu0 0
      %566 = vmatmul.mubr.bf16.gmra.mxu0 %v354
      %v567 = vpop.f32.mrf.mxu0
      %v568 = vadd.f32 %v263, %v567
      %v569 = vpop.f32.mrf.mxu0
      %v570 = vpop.f32.mrf.mxu0
      %v571 = vadd.f32 %v263, %v570
      %v572 = vpop.f32.mrf.mxu0
      %573 = vmatprep.mubr.bf16.mxu0 0
      %574 = vmatmul.mubr.bf16.gmra.mxu0 %v357
      %v575 = vpop.f32.mrf.mxu0
      %v576 = vadd.f32 %v263, %v575
      %v577 = vpop.f32.mrf.mxu0
      %v578 = vpop.f32.mrf.mxu0
      %v579 = vadd.f32 %v263, %v578
      %v580 = vpop.f32.mrf.mxu0
      %581 = vmatprep.mubr.bf16.mxu0 0
      %582 = vmatmul.mubr.bf16.gmra.mxu0 %v360
      %v583 = vpop.f32.mrf.mxu0
      %v584 = vadd.f32 %v263, %v583
      %v585 = vpop.f32.mrf.mxu0
      %v586 = vpop.f32.mrf.mxu0
      %v587 = vadd.f32 %v263, %v586
      %v588 = vpop.f32.mrf.mxu0
      %589 = vmatprep.mubr.bf16.mxu0 0
      %590 = vmatmul.mubr.bf16.gmra.mxu0 %v363
      %v591 = vpop.f32.mrf.mxu0
      %v592 = vadd.f32 %v263, %v591
      %v593 = vpop.f32.mrf.mxu0
      %v594 = vpop.f32.mrf.mxu0
      %v595 = vadd.f32 %v263, %v594
      %v596 = vpop.f32.mrf.mxu0
      %597 = vdwg.mxu0
      %v598 = vmax.f32 %v400, 0.0
      %v599 = vmax.f32 %v403, 0.0
      %v600 = vmax.f32 %v408, 0.0
      %v601 = vmax.f32 %v411, 0.0
      %v602 = vmax.f32 %v416, 0.0
      %v603 = vmax.f32 %v419, 0.0
      %v604 = vmax.f32 %v424, 0.0
      %v605 = vmax.f32 %v427, 0.0
      %v606 = vmax.f32 %v432, 0.0
      %v607 = vmax.f32 %v435, 0.0
      %v608 = vmax.f32 %v440, 0.0
      %v609 = vmax.f32 %v443, 0.0
      %v610 = vmax.f32 %v448, 0.0
      %v611 = vmax.f32 %v451, 0.0
      %v612 = vmax.f32 %v456, 0.0
      %v613 = vmax.f32 %v459, 0.0
      %v614 = vmax.f32 %v464, 0.0
      %v615 = vmax.f32 %v467, 0.0
      %v616 = vmax.f32 %v472, 0.0
      %v617 = vmax.f32 %v475, 0.0
      %v618 = vmax.f32 %v480, 0.0
      %v619 = vmax.f32 %v483, 0.0
      %v620 = vmax.f32 %v488, 0.0
      %v621 = vmax.f32 %v491, 0.0
      %v622 = vmax.f32 %v496, 0.0
      %v623 = vmax.f32 %v499, 0.0
      %v624 = vmax.f32 %v504, 0.0
      %v625 = vmax.f32 %v507, 0.0
      %v626 = vmax.f32 %v512, 0.0
      %v627 = vmax.f32 %v515, 0.0
      %v628 = vmax.f32 %v520, 0.0
      %v629 = vmax.f32 %v523, 0.0
      %v630 = vmax.f32 %v528, 0.0
      %v631 = vmax.f32 %v531, 0.0
      %v632 = vmax.f32 %v536, 0.0
      %v633 = vmax.f32 %v539, 0.0
      %v634 = vmax.f32 %v544, 0.0
      %v635 = vmax.f32 %v547, 0.0
      %v636 = vmax.f32 %v552, 0.0
      %v637 = vmax.f32 %v555, 0.0
      %v638 = vmax.f32 %v560, 0.0
      %v639 = vmax.f32 %v563, 0.0
      %v640 = vmax.f32 %v568, 0.0
      %v641 = vmax.f32 %v571, 0.0
      %v642 = vmax.f32 %v576, 0.0
      %v643 = vmax.f32 %v579, 0.0
      %v644 = vmax.f32 %v584, 0.0
      %v645 = vmax.f32 %v587, 0.0
      %v646 = vmax.f32 %v592, 0.0
      %v647 = vmax.f32 %v595, 0.0
      %648 = vst [vmem:[%s172] sm:$0xff] %v598
      %649 = vst [vmem:[%s172 + $0x8] sm:$0xff] %v599
      %650 = vst [vmem:[%s172 + $0x10] sm:$0xff] %v600
      %651 = vst [vmem:[%s172 + $0x18] sm:$0xff] %v601
      %652 = vst [vmem:[%s172 + $0x20] sm:$0xff] %v602
      %653 = vst [vmem:[%s172 + $0x28] sm:$0xff] %v603
      %654 = vst [vmem:[%s172 + $0x30] sm:$0xff] %v604
      %655 = vst [vmem:[%s172 + $0x38] sm:$0xff] %v605
      %656 = vst [vmem:[%s172 + $0x40] sm:$0xff] %v606
      %657 = vst [vmem:[%s172 + $0x48] sm:$0xff] %v607
      %658 = vst [vmem:[%s172 + $0x50] sm:$0xff] %v608
      %659 = vst [vmem:[%s172 + $0x58] sm:$0xff] %v609
      %660 = vst [vmem:[%s172 + $0x60] sm:$0xff] %v610
      %661 = vst [vmem:[%s172 + $0x68] sm:$0xff] %v611
      %662 = vst [vmem:[%s172 + $0x70] sm:$0xff] %v612
      %663 = vst [vmem:[%s172 + $0x78] sm:$0xff] %v613
      %664 = vst [vmem:[%s172 + $0x80] sm:$0xff] %v614
      %665 = vst [vmem:[%s172 + $0x88] sm:$0xff] %v615
      %666 = vst [vmem:[%s172 + $0x90] sm:$0xff] %v616
      %667 = vst [vmem:[%s172 + $0x98] sm:$0xff] %v617
      %668 = vst [vmem:[%s172 + $0xa0] sm:$0xff] %v618
      %669 = vst [vmem:[%s172 + $0xa8] sm:$0xff] %v619
      %670 = vst [vmem:[%s172 + $0xb0] sm:$0xff] %v620
      %671 = vst [vmem:[%s172 + $0xb8] sm:$0xff] %v621
      %672 = vst [vmem:[%s172 + $0xc0] sm:$0xff] %v622
      %673 = vst [vmem:[%s172 + $0xc8] sm:$0xff] %v623
      %674 = vst [vmem:[%s172 + $0xd0] sm:$0xff] %v624
      %675 = vst [vmem:[%s172 + $0xd8] sm:$0xff] %v625
      %676 = vst [vmem:[%s172 + $0xe0] sm:$0xff] %v626
      %677 = vst [vmem:[%s172 + $0xe8] sm:$0xff] %v627
      %678 = vst [vmem:[%s172 + $0xf0] sm:$0xff] %v628
      %679 = vst [vmem:[%s172 + $0xf8] sm:$0xff] %v629
      %680 = vst [vmem:[%s172 + $0x100] sm:$0xff] %v630
      %681 = vst [vmem:[%s172 + $0x108] sm:$0xff] %v631
      %682 = vst [vmem:[%s172 + $0x110] sm:$0xff] %v632
      %683 = vst [vmem:[%s172 + $0x118] sm:$0xff] %v633
      %684 = vst [vmem:[%s172 + $0x120] sm:$0xff] %v634
      %685 = vst [vmem:[%s172 + $0x128] sm:$0xff] %v635
      %686 = vst [vmem:[%s172 + $0x130] sm:$0xff] %v636
      %687 = vst [vmem:[%s172 + $0x138] sm:$0xff] %v637
      %688 = vst [vmem:[%s172 + $0x140] sm:$0xff] %v638
      %689 = vst [vmem:[%s172 + $0x148] sm:$0xff] %v639
      %690 = vst [vmem:[%s172 + $0x150] sm:$0xff] %v640
      %691 = vst [vmem:[%s172 + $0x158] sm:$0xff] %v641
      %692 = vst [vmem:[%s172 + $0x160] sm:$0xff] %v642
      %693 = vst [vmem:[%s172 + $0x168] sm:$0xff] %v643
      %694 = vst [vmem:[%s172 + $0x170] sm:$0xff] %v644
      %695 = vst [vmem:[%s172 + $0x178] sm:$0xff] %v645
      %696 = vst [vmem:[%s172 + $0x180] sm:$0xff] %v646
      %697 = vst [vmem:[%s172 + $0x188] sm:$0xff] %v647
      %s698 = smul.u32 50, %s14
      %p699 = scmp.lt.s32.totalorder %s698, 99
      %s700 = scalar_select %p699, %s698, 99
      %s701 = smul.addr %s700, 8
      %s702 = scalar_lea.vmem %s3, %s701
      // Predicated region
      $region33: #{actor_critic_forward.4} parent=31 // pred_check
        %p703 = pneg %p100
      $region34: #{actor_critic_forward.4} parent=31 // pred_check_branch
        %705 = sbr.rel (%p703) target = $region36
      $region35: #{actor_critic_forward.4} parent=31 // pred_region
        %s706 = smul.u32 50, %s14
      $region36: #{actor_critic_forward.4} parent=31 // pred_fallthru
        _
    $region32: #{actor_critic_forward.4} parent=5 // pred_fallthru
      _
    %p707 = scmp.le.s32.totalorder 2, %s9
    // Predicated region
    $region37: #{actor_critic_forward.4} parent=5 // pred_check
      %p708 = pneg %p707
    $region38: #{actor_critic_forward.4} parent=5 // pred_check_branch
      %710 = sbr.rel (%p708) target = $region40
    $region39: #{actor_critic_forward.4} parent=5 // pred_region
      %s711 = ssub.s32 %s9, 2
      // Predicated region
      $region41: #{actor_critic_forward.4} parent=39 // pred_check
        %p712 = pneg %p106
      $region42: #{actor_critic_forward.4} parent=39 // pred_check_branch
        %714 = sbr.rel (%p712) target = $region44
      $region43: #{actor_critic_forward.4} parent=39 // pred_region
        %s715 = smul.u32 50, %s15
        %p716 = scmp.lt.s32.totalorder %s715, 99
        %s717 = scalar_select %p716, %s715, 99
        %s718 = smul.addr %s717, 8
        %s719 = scalar_lea.vmem %s3, %s718
      $region44: #{actor_critic_forward.4} parent=39 // pred_fallthru
        _
    $region40: #{actor_critic_forward.4} parent=5 // pred_fallthru
      _
  $region6: #{actor_critic_forward.4} parent=0 // loop_footer
    %s13 = sadd.s32 1, %s9
  $region7: #{actor_critic_forward.4} parent=0 // loop_footer_branch
    %8 = sbr.rel target = $region3
  $region8: #{actor_critic_forward.4} parent=0 // loop_exit
    _

// kernel: actor_critic_forward.5
$region0: #{actor_critic_forward.5}
  #allocation0 [shape = 'u32[]', space=smem, size = 0x4, offset = 0x4, fixed_abs, tag = 'smem constant byte address 0x4 - core index']
  #allocation1 [shape = 'u32[144,128]{1,0:T(1,128)}', space=vmem, size = 0x12000, scoped, tag = 'internal scratch']
  %s0 = inlined_call_operand.vmem [shape: f32[168,512], index: 0, kind: input, shape index: {}]
  %s1 = inlined_call_operand.vmem [shape: bf16[512,128], index: 1, kind: input, shape index: {}]
  %s2 = inlined_call_operand.vmem [shape: f32[1,128], index: 2, kind: input, shape index: {}]
  %s3 = inlined_call_operand.vmem [shape: f32[168,128], index: 3, kind: output, shape index: {}]
  %s4 = sld [smem:[#allocation0]]
  $region22: #{actor_critic_forward.5} parent=0
    _
  %s6 = ssub.s32 1, %s4
  %s7 = scalar_select 0, %s6, %s4
  // Predicated region
  $region2: #{actor_critic_forward.5} parent=0 // pred_check
    _
  $region3: #{actor_critic_forward.5} parent=0 // pred_check_branch
    %9 = sbr.rel (0) target = $region5
  $region4: #{actor_critic_forward.5} parent=0 // pred_region
    _
  $region5: #{actor_critic_forward.5} parent=0 // pred_fallthru
    _
  // Predicated region
  $region6: #{actor_critic_forward.5} parent=0 // pred_check
    _
  $region7: #{actor_critic_forward.5} parent=0 // pred_check_branch
    %11 = sbr.rel (0) target = $region9
  $region8: #{actor_critic_forward.5} parent=0 // pred_region
    _
  $region9: #{actor_critic_forward.5} parent=0 // pred_fallthru
    _
  // Predicated region
  $region10: #{actor_critic_forward.5} parent=0 // pred_check
    _
  $region11: #{actor_critic_forward.5} parent=0 // pred_check_branch
    %13 = sbr.rel (0) target = $region13
  $region12: #{actor_critic_forward.5} parent=0 // pred_region
    _
  $region13: #{actor_critic_forward.5} parent=0 // pred_fallthru
    _
  %v15 = vld [vmem:[%s0] sm:$0xff]
  %v16 = vld [vmem:[%s0 + $0x8] sm:$0xff]
  %v17 = vld [vmem:[%s0 + $0x10] sm:$0xff]
  %v18 = vld [vmem:[%s0 + $0x18] sm:$0xff]
  %v19 = vld [vmem:[%s0 + $0x20] sm:$0xff]
  %v20 = vld [vmem:[%s0 + $0x28] sm:$0xff]
  %v21 = vld [vmem:[%s0 + $0x30] sm:$0xff]
  %v22 = vld [vmem:[%s0 + $0x38] sm:$0xff]
  %v23 = vld [vmem:[%s0 + $0x40] sm:$0xff]
  %v24 = vld [vmem:[%s0 + $0x48] sm:$0xff]
  %v25 = vld [vmem:[%s0 + $0x50] sm:$0xff]
  %v26 = vld [vmem:[%s0 + $0x58] sm:$0xff]
  %v27 = vld [vmem:[%s0 + $0x60] sm:$0xff]
  %v28 = vld [vmem:[%s0 + $0x68] sm:$0xff]
  %v29 = vld [vmem:[%s0 + $0x70] sm:$0xff]
  %v30 = vld [vmem:[%s0 + $0x78] sm:$0xff]
  %v31 = vld [vmem:[%s0 + $0x80] sm:$0xff]
  %v32 = vld [vmem:[%s0 + $0x88] sm:$0xff]
  %v33 = vld [vmem:[%s0 + $0x90] sm:$0xff]
  %v34 = vld [vmem:[%s0 + $0x98] sm:$0xff]
  %v35 = vld [vmem:[%s0 + $0xa0] sm:$0xff]
  %v36 = vld [vmem:[%s0 + $0xa8] sm:$0xff]
  %v37 = vld [vmem:[%s0 + $0xb0] sm:$0xff]
  %v38 = vld [vmem:[%s0 + $0xb8] sm:$0xff]
  %v39 = vld [vmem:[%s0 + $0xc0] sm:$0xff]
  %v40 = vld [vmem:[%s0 + $0xc8] sm:$0xff]
  %v41 = vld [vmem:[%s0 + $0xd0] sm:$0xff]
  %v42 = vld [vmem:[%s0 + $0xd8] sm:$0xff]
  %v43 = vld [vmem:[%s0 + $0xe0] sm:$0xff]
  %v44 = vld [vmem:[%s0 + $0xe8] sm:$0xff]
  %v45 = vld [vmem:[%s0 + $0xf0] sm:$0xff]
  %v46 = vld [vmem:[%s0 + $0xf8] sm:$0xff]
  %v47 = vld [vmem:[%s0 + $0x100] sm:$0xff]
  %v48 = vld [vmem:[%s0 + $0x108] sm:$0xff]
  %v49 = vld [vmem:[%s0 + $0x110] sm:$0xff]
  %v50 = vld [vmem:[%s0 + $0x118] sm:$0xff]
  %v51 = vld [vmem:[%s0 + $0x120] sm:$0xff]
  %v52 = vld [vmem:[%s0 + $0x128] sm:$0xff]
  %v53 = vld [vmem:[%s0 + $0x130] sm:$0xff]
  %v54 = vld [vmem:[%s0 + $0x138] sm:$0xff]
  %v55 = vld [vmem:[%s0 + $0x140] sm:$0xff]
  %v56 = vld [vmem:[%s0 + $0x148] sm:$0xff]
  %v57 = vld [vmem:[%s0 + $0x150] sm:$0xff]
  %v58 = vld [vmem:[%s0 + $0x158] sm:$0xff]
  %v59 = vld [vmem:[%s0 + $0x160] sm:$0xff]
  %v60 = vld [vmem:[%s0 + $0x168] sm:$0xff]
  %v61 = vld [vmem:[%s0 + $0x170] sm:$0xff]
  %v62 = vld [vmem:[%s0 + $0x178] sm:$0xff]
  %v63 = vld [vmem:[%s0 + $0x180] sm:$0xff]
  %v64 = vld [vmem:[%s0 + $0x188] sm:$0xff]
  %v65 = vld [vmem:[%s0 + $0x190] sm:$0xff]
  %v66 = vld [vmem:[%s0 + $0x198] sm:$0xff]
  %v67 = vld [vmem:[%s0 + $0x1a0] sm:$0xff]
  %v68 = vld [vmem:[%s0 + $0x1a8] sm:$0xff]
  %v69 = vld [vmem:[%s0 + $0x1b0] sm:$0xff]
  %v70 = vld [vmem:[%s0 + $0x1b8] sm:$0xff]
  %v71 = vld [vmem:[%s0 + $0x1c0] sm:$0xff]
  %v72 = vld [vmem:[%s0 + $0x1c8] sm:$0xff]
  %v73 = vld [vmem:[%s0 + $0x1d0] sm:$0xff]
  %v74 = vld [vmem:[%s0 + $0x1d8] sm:$0xff]
  %v75 = vld [vmem:[%s0 + $0x1e0] sm:$0xff]
  %v76 = vld [vmem:[%s0 + $0x1e8] sm:$0xff]
  %v77 = vld [vmem:[%s0 + $0x1f0] sm:$0xff]
  %v78 = vld [vmem:[%s0 + $0x1f8] sm:$0xff]
  %v79 = vld [vmem:[%s0 + $0x200] sm:$0xff]
  %v80 = vld [vmem:[%s0 + $0x208] sm:$0xff]
  %v81 = vld [vmem:[%s0 + $0x210] sm:$0xff]
  %v82 = vld [vmem:[%s0 + $0x218] sm:$0xff]
  %v83 = vld [vmem:[%s0 + $0x220] sm:$0xff]
  %v84 = vld [vmem:[%s0 + $0x228] sm:$0xff]
  %v85 = vld [vmem:[%s0 + $0x230] sm:$0xff]
  %v86 = vld [vmem:[%s0 + $0x238] sm:$0xff]
  %v87 = vld [vmem:[%s0 + $0x240] sm:$0xff]
  %v88 = vld [vmem:[%s0 + $0x248] sm:$0xff]
  %v89 = vld [vmem:[%s0 + $0x250] sm:$0xff]
  %v90 = vld [vmem:[%s0 + $0x258] sm:$0xff]
  %v91 = vld [vmem:[%s0 + $0x260] sm:$0xff]
  %v92 = vld [vmem:[%s0 + $0x268] sm:$0xff]
  %v93 = vld [vmem:[%s0 + $0x270] sm:$0xff]
  %v94 = vld [vmem:[%s0 + $0x278] sm:$0xff]
  %v95 = vld [vmem:[%s0 + $0x280] sm:$0xff]
  %v96 = vld [vmem:[%s0 + $0x288] sm:$0xff]
  %v97 = vld [vmem:[%s0 + $0x290] sm:$0xff]
  %v98 = vld [vmem:[%s0 + $0x298] sm:$0xff]
  %v99 = vpack.c.bf16 %v19, %v15
  %v100 = vpack.c.bf16 %v20, %v16
  %v101 = vpack.c.bf16 %v21, %v17
  %v102 = vpack.c.bf16 %v22, %v18
  %v103 = vpack.c.bf16 %v27, %v23
  %v104 = vpack.c.bf16 %v28, %v24
  %v105 = vpack.c.bf16 %v29, %v25
  %v106 = vpack.c.bf16 %v30, %v26
  %v107 = vpack.c.bf16 %v35, %v31
  %v108 = vpack.c.bf16 %v36, %v32
  %v109 = vpack.c.bf16 %v37, %v33
  %v110 = vpack.c.bf16 %v38, %v34
  %v111 = vpack.c.bf16 %v43, %v39
  %v112 = vpack.c.bf16 %v44, %v40
  %v113 = vpack.c.bf16 %v45, %v41
  %v114 = vpack.c.bf16 %v46, %v42
  %v115 = vpack.c.bf16 %v51, %v47
  %v116 = vpack.c.bf16 %v52, %v48
  %v117 = vpack.c.bf16 %v53, %v49
  %v118 = vpack.c.bf16 %v54, %v50
  %v119 = vpack.c.bf16 %v59, %v55
  %v120 = vpack.c.bf16 %v60, %v56
  %v121 = vpack.c.bf16 %v61, %v57
  %v122 = vpack.c.bf16 %v62, %v58
  %v123 = vpack.c.bf16 %v67, %v63
  %v124 = vpack.c.bf16 %v68, %v64
  %v125 = vpack.c.bf16 %v69, %v65
  %v126 = vpack.c.bf16 %v70, %v66
  %v127 = vpack.c.bf16 %v75, %v71
  %v128 = vpack.c.bf16 %v76, %v72
  %v129 = vpack.c.bf16 %v77, %v73
  %v130 = vpack.c.bf16 %v78, %v74
  %v131 = vpack.c.bf16 %v83, %v79
  %v132 = vpack.c.bf16 %v84, %v80
  %v133 = vpack.c.bf16 %v85, %v81
  %v134 = vpack.c.bf16 %v86, %v82
  %v135 = vpack.c.bf16 %v91, %v87
  %v136 = vpack.c.bf16 %v92, %v88
  %v137 = vpack.c.bf16 %v93, %v89
  %v138 = vpack.c.bf16 %v94, %v90
  %v139 = vpack.c.bf16 %v95, %v95
  %v140 = vpack.c.bf16 %v96, %v96
  %v141 = vpack.c.bf16 %v97, %v97
  %v142 = vpack.c.bf16 %v98, %v98
  %v143 = vld [vmem:[%s1] sm:$0xf]
  %v144 = vld [vmem:[%s1 + $0x4] sm:$0xf]
  %v145 = vld [vmem:[%s1 + $0x8] sm:$0xf]
  %v146 = vld [vmem:[%s1 + $0xc] sm:$0xf]
  %v147 = vld [vmem:[%s1 + $0x10] sm:$0xf]
  %v148 = vld [vmem:[%s1 + $0x14] sm:$0xf]
  %v149 = vld [vmem:[%s1 + $0x18] sm:$0xf]
  %v150 = vld [vmem:[%s1 + $0x1c] sm:$0xf]
  %v151 = vld [vmem:[%s1 + $0x20] sm:$0xf]
  %v152 = vld [vmem:[%s1 + $0x24] sm:$0xf]
  %v153 = vld [vmem:[%s1 + $0x28] sm:$0xf]
  %v154 = vld [vmem:[%s1 + $0x2c] sm:$0xf]
  %v155 = vld [vmem:[%s1 + $0x30] sm:$0xf]
  %v156 = vld [vmem:[%s1 + $0x34] sm:$0xf]
  %v157 = vld [vmem:[%s1 + $0x38] sm:$0xf]
  %v158 = vld [vmem:[%s1 + $0x3c] sm:$0xf]
  %v159 = vld [vmem:[%s1 + $0x40] sm:$0xf]
  %v160 = vld [vmem:[%s1 + $0x44] sm:$0xf]
  %v161 = vld [vmem:[%s1 + $0x48] sm:$0xf]
  %v162 = vld [vmem:[%s1 + $0x4c] sm:$0xf]
  %v163 = vld [vmem:[%s1 + $0x50] sm:$0xf]
  %v164 = vld [vmem:[%s1 + $0x54] sm:$0xf]
  %v165 = vld [vmem:[%s1 + $0x58] sm:$0xf]
  %v166 = vld [vmem:[%s1 + $0x5c] sm:$0xf]
  %v167 = vld [vmem:[%s1 + $0x60] sm:$0xf]
  %v168 = vld [vmem:[%s1 + $0x64] sm:$0xf]
  %v169 = vld [vmem:[%s1 + $0x68] sm:$0xf]
  %v170 = vld [vmem:[%s1 + $0x6c] sm:$0xf]
  %v171 = vld [vmem:[%s1 + $0x70] sm:$0xf]
  %v172 = vld [vmem:[%s1 + $0x74] sm:$0xf]
  %v173 = vld [vmem:[%s1 + $0x78] sm:$0xf]
  %v174 = vld [vmem:[%s1 + $0x7c] sm:$0xf]
  %v175 = vld [vmem:[%s1 + $0x80] sm:$0xf]
  %v176 = vld [vmem:[%s1 + $0x84] sm:$0xf]
  %v177 = vld [vmem:[%s1 + $0x88] sm:$0xf]
  %v178 = vld [vmem:[%s1 + $0x8c] sm:$0xf]
  %v179 = vld [vmem:[%s1 + $0x90] sm:$0xf]
  %v180 = vld [vmem:[%s1 + $0x94] sm:$0xf]
  %v181 = vld [vmem:[%s1 + $0x98] sm:$0xf]
  %v182 = vld [vmem:[%s1 + $0x9c] sm:$0xf]
  %v183 = vld [vmem:[%s1 + $0xa0] sm:$0xf]
  %v184 = vld [vmem:[%s1 + $0xa4] sm:$0xf]
  %v185 = vld [vmem:[%s1 + $0xa8] sm:$0xf]
  %v186 = vld [vmem:[%s1 + $0xac] sm:$0xf]
  %v187 = vld [vmem:[%s1 + $0xb0] sm:$0xf]
  %v188 = vld [vmem:[%s1 + $0xb4] sm:$0xf]
  %v189 = vld [vmem:[%s1 + $0xb8] sm:$0xf]
  %v190 = vld [vmem:[%s1 + $0xbc] sm:$0xf]
  %v191 = vld [vmem:[%s1 + $0xc0] sm:$0xf]
  %v192 = vld [vmem:[%s1 + $0xc4] sm:$0xf]
  %v193 = vld [vmem:[%s1 + $0xc8] sm:$0xf]
  %v194 = vld [vmem:[%s1 + $0xcc] sm:$0xf]
  %v195 = vld [vmem:[%s1 + $0xd0] sm:$0xf]
  %v196 = vld [vmem:[%s1 + $0xd4] sm:$0xf]
  %v197 = vld [vmem:[%s1 + $0xd8] sm:$0xf]
  %v198 = vld [vmem:[%s1 + $0xdc] sm:$0xf]
  %v199 = vld [vmem:[%s1 + $0xe0] sm:$0xf]
  %v200 = vld [vmem:[%s1 + $0xe4] sm:$0xf]
  %v201 = vld [vmem:[%s1 + $0xe8] sm:$0xf]
  %v202 = vld [vmem:[%s1 + $0xec] sm:$0xf]
  %v203 = vld [vmem:[%s1 + $0xf0] sm:$0xf]
  %v204 = vld [vmem:[%s1 + $0xf4] sm:$0xf]
  %v205 = vld [vmem:[%s1 + $0xf8] sm:$0xf]
  %v206 = vld [vmem:[%s1 + $0xfc] sm:$0xf]
  %v207 = vld [vmem:[%s2] sm:$0x1]
  %v209 = vlaneseq
  %v210 = vshrl.u32 %v209, 7
  %v211 = vsub.s32 0, %v210
  %v212 = vrot.slane %v207, %v211
  %v278 = vunpack.c.l.b16 %v143
  %v279 = vunpack.c.l.b16 %v144
  %v280 = vunpack.c.l.b16 %v145
  %v281 = vunpack.c.l.b16 %v146
  %v282 = vunpack.c.l.b16 %v147
  %v283 = vunpack.c.l.b16 %v148
  %v284 = vunpack.c.l.b16 %v149
  %v285 = vunpack.c.l.b16 %v150
  %v286 = vunpack.c.l.b16 %v151
  %v287 = vunpack.c.l.b16 %v152
  %v288 = vunpack.c.l.b16 %v153
  %v289 = vunpack.c.l.b16 %v154
  %v290 = vunpack.c.l.b16 %v155
  %v291 = vunpack.c.l.b16 %v156
  %v292 = vunpack.c.l.b16 %v157
  %v293 = vunpack.c.l.b16 %v158
  %v294 = vunpack.c.l.b16 %v159
  %v295 = vunpack.c.l.b16 %v160
  %v296 = vunpack.c.l.b16 %v161
  %v297 = vunpack.c.l.b16 %v162
  %v298 = vunpack.c.l.b16 %v163
  %v299 = vunpack.c.l.b16 %v164
  %v300 = vunpack.c.l.b16 %v165
  %v301 = vunpack.c.l.b16 %v166
  %v302 = vunpack.c.l.b16 %v167
  %v303 = vunpack.c.l.b16 %v168
  %v304 = vunpack.c.l.b16 %v169
  %v305 = vunpack.c.l.b16 %v170
  %v306 = vunpack.c.l.b16 %v171
  %v307 = vunpack.c.l.b16 %v172
  %v308 = vunpack.c.l.b16 %v173
  %v309 = vunpack.c.l.b16 %v174
  %v310 = vunpack.c.l.b16 %v175
  %v311 = vunpack.c.l.b16 %v176
  %v312 = vunpack.c.l.b16 %v177
  %v313 = vunpack.c.l.b16 %v178
  %v314 = vunpack.c.l.b16 %v179
  %v315 = vunpack.c.l.b16 %v180
  %v316 = vunpack.c.l.b16 %v181
  %v317 = vunpack.c.l.b16 %v182
  %v318 = vunpack.c.l.b16 %v183
  %v319 = vunpack.c.l.b16 %v184
  %v320 = vunpack.c.l.b16 %v185
  %v321 = vunpack.c.l.b16 %v186
  %v322 = vunpack.c.l.b16 %v187
  %v323 = vunpack.c.l.b16 %v188
  %v324 = vunpack.c.l.b16 %v189
  %v325 = vunpack.c.l.b16 %v190
  %v326 = vunpack.c.l.b16 %v191
  %v327 = vunpack.c.l.b16 %v192
  %v328 = vunpack.c.l.b16 %v193
  %v329 = vunpack.c.l.b16 %v194
  %v330 = vunpack.c.l.b16 %v195
  %v331 = vunpack.c.l.b16 %v196
  %v332 = vunpack.c.l.b16 %v197
  %v333 = vunpack.c.l.b16 %v198
  %v334 = vunpack.c.l.b16 %v199
  %v335 = vunpack.c.l.b16 %v200
  %v336 = vunpack.c.l.b16 %v201
  %v337 = vunpack.c.l.b16 %v202
  %v338 = vunpack.c.l.b16 %v203
  %v339 = vunpack.c.l.b16 %v204
  %v340 = vunpack.c.l.b16 %v205
  %v341 = vunpack.c.l.b16 %v206
  %v342 = vpack.c.b16 %v279, %v278
  %v343 = vpack.c.b16 %v281, %v280
  %v344 = vpack.c.b16 %v283, %v282
  %v345 = vpack.c.b16 %v285, %v284
  %v346 = vpack.c.b16 %v287, %v286
  %v347 = vpack.c.b16 %v289, %v288
  %v348 = vpack.c.b16 %v291, %v290
  %v349 = vpack.c.b16 %v293, %v292
  %v350 = vpack.c.b16 %v295, %v294
  %v351 = vpack.c.b16 %v297, %v296
  %v352 = vpack.c.b16 %v299, %v298
  %v353 = vpack.c.b16 %v301, %v300
  %v354 = vpack.c.b16 %v303, %v302
  %v355 = vpack.c.b16 %v305, %v304
  %v356 = vpack.c.b16 %v307, %v306
  %v357 = vpack.c.b16 %v309, %v308
  %v358 = vpack.c.b16 %v311, %v310
  %v359 = vpack.c.b16 %v313, %v312
  %v360 = vpack.c.b16 %v315, %v314
  %v361 = vpack.c.b16 %v317, %v316
  %v362 = vpack.c.b16 %v319, %v318
  %v363 = vpack.c.b16 %v321, %v320
  %v364 = vpack.c.b16 %v323, %v322
  %v365 = vpack.c.b16 %v325, %v324
  %v366 = vpack.c.b16 %v327, %v326
  %v367 = vpack.c.b16 %v329, %v328
  %v368 = vpack.c.b16 %v331, %v330
  %v369 = vpack.c.b16 %v333, %v332
  %v370 = vpack.c.b16 %v335, %v334
  %v371 = vpack.c.b16 %v337, %v336
  %v372 = vpack.c.b16 %v339, %v338
  %v373 = vpack.c.b16 %v341, %v340
  %406 = vmatprep.subr.bf16.mxu0 0
  %407 = vmatpush1.bf16.msra.mxu0 %v349
  %408 = vmatprep.subr.bf16.mxu0 0
  %409 = vmatpush1.bf16.msra.mxu0 %v348
  %410 = vmatprep.subr.bf16.mxu0 0
  %411 = vmatpush1.bf16.msra.mxu0 %v347
  %412 = vmatprep.subr.bf16.mxu0 0
  %413 = vmatpush1.bf16.msra.mxu0 %v346
  %414 = vmatprep.subr.bf16.mxu0 0
  %415 = vmatpush1.bf16.msra.mxu0 %v345
  %416 = vmatprep.subr.bf16.mxu0 0
  %417 = vmatpush1.bf16.msra.mxu0 %v344
  %418 = vmatprep.subr.bf16.mxu0 0
  %419 = vmatpush1.bf16.msra.mxu0 %v343
  %420 = vmatprep.subr.bf16.mxu0 0
  %421 = vmatpush1.bf16.msra.mxu0 %v342
  %422 = vmatprep.subr.bf16.mxu0 0
  %423 = vmatpush2.bf16.msra.mxu0 %v357
  %424 = vmatprep.subr.bf16.mxu0 0
  %425 = vmatpush2.bf16.msra.mxu0 %v356
  %426 = vmatprep.subr.bf16.mxu0 0
  %427 = vmatpush2.bf16.msra.mxu0 %v355
  %428 = vmatprep.subr.bf16.mxu0 0
  %429 = vmatpush2.bf16.msra.mxu0 %v354
  %430 = vmatprep.subr.bf16.mxu0 0
  %431 = vmatpush2.bf16.msra.mxu0 %v353
  %432 = vmatprep.subr.bf16.mxu0 0
  %433 = vmatpush2.bf16.msra.mxu0 %v352
  %434 = vmatprep.subr.bf16.mxu0 0
  %435 = vmatpush2.bf16.msra.mxu0 %v351
  %436 = vmatprep.subr.bf16.mxu0 0
  %437 = vmatpush2.bf16.msra.mxu0 %v350
  %438 = vmatprep.mubr.bf16.mxu0 %v100
  %439 = vmatmul.mubr.bf16.gmra.mxu0 %v99
  %v440 = vpop.f32.mrf.mxu0
  %v441 = vadd.f32 %v212, %v440
  %v442 = vpop.f32.mrf.mxu0
  %v443 = vpop.f32.mrf.mxu0
  %v444 = vadd.f32 %v212, %v443
  %v445 = vpop.f32.mrf.mxu0
  %446 = vmatprep.mubr.bf16.mxu0 %v104
  %447 = vmatmul.mubr.bf16.gmra.mxu0 %v103
  %v448 = vpop.f32.mrf.mxu0
  %v449 = vadd.f32 %v212, %v448
  %v450 = vpop.f32.mrf.mxu0
  %v451 = vpop.f32.mrf.mxu0
  %v452 = vadd.f32 %v212, %v451
  %v453 = vpop.f32.mrf.mxu0
  %454 = vmatprep.mubr.bf16.mxu0 %v108
  %455 = vmatmul.mubr.bf16.gmra.mxu0 %v107
  %v456 = vpop.f32.mrf.mxu0
  %v457 = vadd.f32 %v212, %v456
  %v458 = vpop.f32.mrf.mxu0
  %v459 = vpop.f32.mrf.mxu0
  %v460 = vadd.f32 %v212, %v459
  %v461 = vpop.f32.mrf.mxu0
  %462 = vmatprep.mubr.bf16.mxu0 %v112
  %463 = vmatmul.mubr.bf16.gmra.mxu0 %v111
  %v464 = vpop.f32.mrf.mxu0
  %v465 = vadd.f32 %v212, %v464
  %v466 = vpop.f32.mrf.mxu0
  %v467 = vpop.f32.mrf.mxu0
  %v468 = vadd.f32 %v212, %v467
  %v469 = vpop.f32.mrf.mxu0
  %470 = vmatprep.mubr.bf16.mxu0 %v116
  %471 = vmatmul.mubr.bf16.gmra.mxu0 %v115
  %v472 = vpop.f32.mrf.mxu0
  %v473 = vadd.f32 %v212, %v472
  %v474 = vpop.f32.mrf.mxu0
  %v475 = vpop.f32.mrf.mxu0
  %v476 = vadd.f32 %v212, %v475
  %v477 = vpop.f32.mrf.mxu0
  %478 = vmatprep.mubr.bf16.mxu0 %v120
  %479 = vmatmul.mubr.bf16.gmra.mxu0 %v119
  %v480 = vpop.f32.mrf.mxu0
  %v481 = vadd.f32 %v212, %v480
  %v482 = vpop.f32.mrf.mxu0
  %v483 = vpop.f32.mrf.mxu0
  %v484 = vadd.f32 %v212, %v483
  %v485 = vpop.f32.mrf.mxu0
  %486 = vmatprep.mubr.bf16.mxu0 %v124
  %487 = vmatmul.mubr.bf16.gmra.mxu0 %v123
  %v488 = vpop.f32.mrf.mxu0
  %v489 = vadd.f32 %v212, %v488
  %v490 = vpop.f32.mrf.mxu0
  %v491 = vpop.f32.mrf.mxu0
  %v492 = vadd.f32 %v212, %v491
  %v493 = vpop.f32.mrf.mxu0
  %494 = vmatprep.mubr.bf16.mxu0 %v128
  %495 = vmatmul.mubr.bf16.gmra.mxu0 %v127
  %v496 = vpop.f32.mrf.mxu0
  %v497 = vadd.f32 %v212, %v496
  %v498 = vpop.f32.mrf.mxu0
  %v499 = vpop.f32.mrf.mxu0
  %v500 = vadd.f32 %v212, %v499
  %v501 = vpop.f32.mrf.mxu0
  %502 = vmatprep.mubr.bf16.mxu0 %v132
  %503 = vmatmul.mubr.bf16.gmra.mxu0 %v131
  %v504 = vpop.f32.mrf.mxu0
  %v505 = vadd.f32 %v212, %v504
  %v506 = vpop.f32.mrf.mxu0
  %v507 = vpop.f32.mrf.mxu0
  %v508 = vadd.f32 %v212, %v507
  %v509 = vpop.f32.mrf.mxu0
  %510 = vmatprep.mubr.bf16.mxu0 %v136
  %511 = vmatmul.mubr.bf16.gmra.mxu0 %v135
  %v512 = vpop.f32.mrf.mxu0
  %v513 = vadd.f32 %v212, %v512
  %v514 = vpop.f32.mrf.mxu0
  %v515 = vpop.f32.mrf.mxu0
  %v516 = vadd.f32 %v212, %v515
  %v517 = vpop.f32.mrf.mxu0
  %518 = vmatprep.mubr.bf16.mxu0 %v140
  %519 = vmatmul.mubr.bf16.gmra.mxu0 %v139
  %v520 = vpop.f32.mrf.mxu0
  %v521 = vadd.f32 %v212, %v520
  %v522 = vpop.f32.mrf.mxu0
  %v523 = vpop.f32.mrf.mxu0
  %v524 = vpop.f32.mrf.mxu0
  %525 = vdwg.mxu0
  %526 = vmatprep.subr.bf16.mxu0 0
  %527 = vmatpush1.bf16.msra.mxu0 %v365
  %528 = vmatprep.subr.bf16.mxu0 0
  %529 = vmatpush1.bf16.msra.mxu0 %v364
  %530 = vmatprep.subr.bf16.mxu0 0
  %531 = vmatpush1.bf16.msra.mxu0 %v363
  %532 = vmatprep.subr.bf16.mxu0 0
  %533 = vmatpush1.bf16.msra.mxu0 %v362
  %534 = vmatprep.subr.bf16.mxu0 0
  %535 = vmatpush1.bf16.msra.mxu0 %v361
  %536 = vmatprep.subr.bf16.mxu0 0
  %537 = vmatpush1.bf16.msra.mxu0 %v360
  %538 = vmatprep.subr.bf16.mxu0 0
  %539 = vmatpush1.bf16.msra.mxu0 %v359
  %540 = vmatprep.subr.bf16.mxu0 0
  %541 = vmatpush1.bf16.msra.mxu0 %v358
  %542 = vmatprep.subr.bf16.mxu0 0
  %543 = vmatpush2.bf16.msra.mxu0 %v373
  %544 = vmatprep.subr.bf16.mxu0 0
  %545 = vmatpush2.bf16.msra.mxu0 %v372
  %546 = vmatprep.subr.bf16.mxu0 0
  %547 = vmatpush2.bf16.msra.mxu0 %v371
  %548 = vmatprep.subr.bf16.mxu0 0
  %549 = vmatpush2.bf16.msra.mxu0 %v370
  %550 = vmatprep.subr.bf16.mxu0 0
  %551 = vmatpush2.bf16.msra.mxu0 %v369
  %552 = vmatprep.subr.bf16.mxu0 0
  %553 = vmatpush2.bf16.msra.mxu0 %v368
  %554 = vmatprep.subr.bf16.mxu0 0
  %555 = vmatpush2.bf16.msra.mxu0 %v367
  %556 = vmatprep.subr.bf16.mxu0 0
  %557 = vmatpush2.bf16.msra.mxu0 %v366
  %558 = vmatprep.mubr.bf16.mxu0 %v102
  %559 = vmatmul.mubr.bf16.gmra.mxu0 %v101
  %v560 = vpop.f32.mrf.mxu0
  %v561 = vadd.f32 %v441, %v560
  %v562 = vpop.f32.mrf.mxu0
  %v563 = vpop.f32.mrf.mxu0
  %v564 = vadd.f32 %v444, %v563
  %v565 = vpop.f32.mrf.mxu0
  %566 = vmatprep.mubr.bf16.mxu0 %v106
  %567 = vmatmul.mubr.bf16.gmra.mxu0 %v105
  %v568 = vpop.f32.mrf.mxu0
  %v569 = vadd.f32 %v449, %v568
  %v570 = vpop.f32.mrf.mxu0
  %v571 = vpop.f32.mrf.mxu0
  %v572 = vadd.f32 %v452, %v571
  %v573 = vpop.f32.mrf.mxu0
  %574 = vmatprep.mubr.bf16.mxu0 %v110
  %575 = vmatmul.mubr.bf16.gmra.mxu0 %v109
  %v576 = vpop.f32.mrf.mxu0
  %v577 = vadd.f32 %v457, %v576
  %v578 = vpop.f32.mrf.mxu0
  %v579 = vpop.f32.mrf.mxu0
  %v580 = vadd.f32 %v460, %v579
  %v581 = vpop.f32.mrf.mxu0
  %582 = vmatprep.mubr.bf16.mxu0 %v114
  %583 = vmatmul.mubr.bf16.gmra.mxu0 %v113
  %v584 = vpop.f32.mrf.mxu0
  %v585 = vadd.f32 %v465, %v584
  %v586 = vpop.f32.mrf.mxu0
  %v587 = vpop.f32.mrf.mxu0
  %v588 = vadd.f32 %v468, %v587
  %v589 = vpop.f32.mrf.mxu0
  %590 = vmatprep.mubr.bf16.mxu0 %v118
  %591 = vmatmul.mubr.bf16.gmra.mxu0 %v117
  %v592 = vpop.f32.mrf.mxu0
  %v593 = vadd.f32 %v473, %v592
  %v594 = vpop.f32.mrf.mxu0
  %v595 = vpop.f32.mrf.mxu0
  %v596 = vadd.f32 %v476, %v595
  %v597 = vpop.f32.mrf.mxu0
  %598 = vmatprep.mubr.bf16.mxu0 %v122
  %599 = vmatmul.mubr.bf16.gmra.mxu0 %v121
  %v600 = vpop.f32.mrf.mxu0
  %v601 = vadd.f32 %v481, %v600
  %v602 = vpop.f32.mrf.mxu0
  %v603 = vpop.f32.mrf.mxu0
  %v604 = vadd.f32 %v484, %v603
  %v605 = vpop.f32.mrf.mxu0
  %606 = vmatprep.mubr.bf16.mxu0 %v126
  %607 = vmatmul.mubr.bf16.gmra.mxu0 %v125
  %v608 = vpop.f32.mrf.mxu0
  %v609 = vadd.f32 %v489, %v608
  %v610 = vpop.f32.mrf.mxu0
  %v611 = vpop.f32.mrf.mxu0
  %v612 = vadd.f32 %v492, %v611
  %v613 = vpop.f32.mrf.mxu0
  %614 = vmatprep.mubr.bf16.mxu0 %v130
  %615 = vmatmul.mubr.bf16.gmra.mxu0 %v129
  %v616 = vpop.f32.mrf.mxu0
  %v617 = vadd.f32 %v497, %v616
  %v618 = vpop.f32.mrf.mxu0
  %v619 = vpop.f32.mrf.mxu0
  %v620 = vadd.f32 %v500, %v619
  %v621 = vpop.f32.mrf.mxu0
  %622 = vmatprep.mubr.bf16.mxu0 %v134
  %623 = vmatmul.mubr.bf16.gmra.mxu0 %v133
  %v624 = vpop.f32.mrf.mxu0
  %v625 = vadd.f32 %v505, %v624
  %v626 = vpop.f32.mrf.mxu0
  %v627 = vpop.f32.mrf.mxu0
  %v628 = vadd.f32 %v508, %v627
  %v629 = vpop.f32.mrf.mxu0
  %630 = vmatprep.mubr.bf16.mxu0 %v138
  %631 = vmatmul.mubr.bf16.gmra.mxu0 %v137
  %v632 = vpop.f32.mrf.mxu0
  %v633 = vadd.f32 %v513, %v632
  %v634 = vpop.f32.mrf.mxu0
  %v635 = vpop.f32.mrf.mxu0
  %v636 = vadd.f32 %v516, %v635
  %v637 = vpop.f32.mrf.mxu0
  %638 = vmatprep.mubr.bf16.mxu0 %v142
  %639 = vmatmul.mubr.bf16.gmra.mxu0 %v141
  %v640 = vpop.f32.mrf.mxu0
  %v641 = vadd.f32 %v521, %v640
  %v642 = vpop.f32.mrf.mxu0
  %v643 = vpop.f32.mrf.mxu0
  %v644 = vpop.f32.mrf.mxu0
  %645 = vdwg.mxu0
  %v646 = vmax.f32 %v561, 0.0
  %v647 = vmax.f32 %v564, 0.0
  %v648 = vmax.f32 %v569, 0.0
  %v649 = vmax.f32 %v572, 0.0
  %v650 = vmax.f32 %v577, 0.0
  %v651 = vmax.f32 %v580, 0.0
  %v652 = vmax.f32 %v585, 0.0
  %v653 = vmax.f32 %v588, 0.0
  %v654 = vmax.f32 %v593, 0.0
  %v655 = vmax.f32 %v596, 0.0
  %v656 = vmax.f32 %v601, 0.0
  %v657 = vmax.f32 %v604, 0.0
  %v658 = vmax.f32 %v609, 0.0
  %v659 = vmax.f32 %v612, 0.0
  %v660 = vmax.f32 %v617, 0.0
  %v661 = vmax.f32 %v620, 0.0
  %v662 = vmax.f32 %v625, 0.0
  %v663 = vmax.f32 %v628, 0.0
  %v664 = vmax.f32 %v633, 0.0
  %v665 = vmax.f32 %v636, 0.0
  %v666 = vmax.f32 %v641, 0.0
  %667 = vst [vmem:[%s3] sm:$0xff] %v646
  %668 = vst [vmem:[%s3 + $0x8] sm:$0xff] %v647
  %669 = vst [vmem:[%s3 + $0x10] sm:$0xff] %v648
  %670 = vst [vmem:[%s3 + $0x18] sm:$0xff] %v649
  %671 = vst [vmem:[%s3 + $0x20] sm:$0xff] %v650
  %672 = vst [vmem:[%s3 + $0x28] sm:$0xff] %v651
  %673 = vst [vmem:[%s3 + $0x30] sm:$0xff] %v652
  %674 = vst [vmem:[%s3 + $0x38] sm:$0xff] %v653
  %675 = vst [vmem:[%s3 + $0x40] sm:$0xff] %v654
  %676 = vst [vmem:[%s3 + $0x48] sm:$0xff] %v655
  %677 = vst [vmem:[%s3 + $0x50] sm:$0xff] %v656
  %678 = vst [vmem:[%s3 + $0x58] sm:$0xff] %v657
  %679 = vst [vmem:[%s3 + $0x60] sm:$0xff] %v658
  %680 = vst [vmem:[%s3 + $0x68] sm:$0xff] %v659
  %681 = vst [vmem:[%s3 + $0x70] sm:$0xff] %v660
  %682 = vst [vmem:[%s3 + $0x78] sm:$0xff] %v661
  %683 = vst [vmem:[%s3 + $0x80] sm:$0xff] %v662
  %684 = vst [vmem:[%s3 + $0x88] sm:$0xff] %v663
  %685 = vst [vmem:[%s3 + $0x90] sm:$0xff] %v664
  %686 = vst [vmem:[%s3 + $0x98] sm:$0xff] %v665
  %687 = vst [vmem:[%s3 + $0xa0] sm:$0xff] %v666
  // Predicated region
  $region14: #{actor_critic_forward.5} parent=0 // pred_check
    _
  $region15: #{actor_critic_forward.5} parent=0 // pred_check_branch
    %689 = sbr.rel (0) target = $region17
  $region16: #{actor_critic_forward.5} parent=0 // pred_region
    _
  $region17: #{actor_critic_forward.5} parent=0 // pred_fallthru
    _
  // Predicated region
  $region18: #{actor_critic_forward.5} parent=0 // pred_check
    _
  $region19: #{actor_critic_forward.5} parent=0 // pred_check_branch
    %691 = sbr.rel (0) target = $region21
  $region20: #{actor_critic_forward.5} parent=0 // pred_region
    _
  $region21: #{actor_critic_forward.5} parent=0 // pred_fallthru
    _

// kernel: actor_critic_forward.6
$region0: #{actor_critic_forward.6}
  #allocation0 [shape = 'u32[]', space=smem, size = 0x4, offset = 0x4, fixed_abs, tag = 'smem constant byte address 0x4 - core index']
  #allocation1 [shape = 'u32[144,128]{1,0:T(1,128)}', space=vmem, size = 0x12000, scoped, tag = 'internal scratch']
  %s0 = inlined_call_operand.vmem [shape: f32[104,576], index: 0, kind: input, shape index: {}]
  %s1 = inlined_call_operand.vmem [shape: bf16[576,128], index: 1, kind: input, shape index: {}]
  %s2 = inlined_call_operand.vmem [shape: f32[1,128], index: 2, kind: input, shape index: {}]
  %s3 = inlined_call_operand.vmem [shape: f32[104,128], index: 3, kind: output, shape index: {}]
  %s4 = sld [smem:[#allocation0]]
  $region22: #{actor_critic_forward.6} parent=0
    _
  %s6 = ssub.s32 1, %s4
  %s7 = scalar_select 0, %s6, %s4
  // Predicated region
  $region2: #{actor_critic_forward.6} parent=0 // pred_check
    _
  $region3: #{actor_critic_forward.6} parent=0 // pred_check_branch
    %9 = sbr.rel (0) target = $region5
  $region4: #{actor_critic_forward.6} parent=0 // pred_region
    _
  $region5: #{actor_critic_forward.6} parent=0 // pred_fallthru
    _
  // Predicated region
  $region6: #{actor_critic_forward.6} parent=0 // pred_check
    _
  $region7: #{actor_critic_forward.6} parent=0 // pred_check_branch
    %11 = sbr.rel (0) target = $region9
  $region8: #{actor_critic_forward.6} parent=0 // pred_region
    _
  $region9: #{actor_critic_forward.6} parent=0 // pred_fallthru
    _
  // Predicated region
  $region10: #{actor_critic_forward.6} parent=0 // pred_check
    _
  $region11: #{actor_critic_forward.6} parent=0 // pred_check_branch
    %13 = sbr.rel (0) target = $region13
  $region12: #{actor_critic_forward.6} parent=0 // pred_region
    _
  $region13: #{actor_critic_forward.6} parent=0 // pred_fallthru
    _
  %v15 = vld [vmem:[%s0] sm:$0xff]
  %v16 = vld [vmem:[%s0 + $0x8] sm:$0xff]
  %v17 = vld [vmem:[%s0 + $0x10] sm:$0xff]
  %v18 = vld [vmem:[%s0 + $0x18] sm:$0xff]
  %v19 = vld [vmem:[%s0 + $0x20] sm:$0xff]
  %v20 = vld [vmem:[%s0 + $0x28] sm:$0xff]
  %v21 = vld [vmem:[%s0 + $0x30] sm:$0xff]
  %v22 = vld [vmem:[%s0 + $0x38] sm:$0xff]
  %v23 = vld [vmem:[%s0 + $0x40] sm:$0xff]
  %v24 = vld [vmem:[%s0 + $0x48] sm:$0xff]
  %v25 = vld [vmem:[%s0 + $0x50] sm:$0xff]
  %v26 = vld [vmem:[%s0 + $0x58] sm:$0xff]
  %v27 = vld [vmem:[%s0 + $0x60] sm:$0xff]
  %v28 = vld [vmem:[%s0 + $0x68] sm:$0xff]
  %v29 = vld [vmem:[%s0 + $0x70] sm:$0xff]
  %v30 = vld [vmem:[%s0 + $0x78] sm:$0xff]
  %v31 = vld [vmem:[%s0 + $0x80] sm:$0xff]
  %v32 = vld [vmem:[%s0 + $0x88] sm:$0xff]
  %v33 = vld [vmem:[%s0 + $0x90] sm:$0xff]
  %v34 = vld [vmem:[%s0 + $0x98] sm:$0xff]
  %v35 = vld [vmem:[%s0 + $0xa0] sm:$0xff]
  %v36 = vld [vmem:[%s0 + $0xa8] sm:$0xff]
  %v37 = vld [vmem:[%s0 + $0xb0] sm:$0xff]
  %v38 = vld [vmem:[%s0 + $0xb8] sm:$0xff]
  %v39 = vld [vmem:[%s0 + $0xc0] sm:$0xff]
  %v40 = vld [vmem:[%s0 + $0xc8] sm:$0xff]
  %v41 = vld [vmem:[%s0 + $0xd0] sm:$0xff]
  %v42 = vld [vmem:[%s0 + $0xd8] sm:$0xff]
  %v43 = vld [vmem:[%s0 + $0xe0] sm:$0xff]
  %v44 = vld [vmem:[%s0 + $0xe8] sm:$0xff]
  %v45 = vld [vmem:[%s0 + $0xf0] sm:$0xff]
  %v46 = vld [vmem:[%s0 + $0xf8] sm:$0xff]
  %v47 = vld [vmem:[%s0 + $0x100] sm:$0xff]
  %v48 = vld [vmem:[%s0 + $0x108] sm:$0xff]
  %v49 = vld [vmem:[%s0 + $0x110] sm:$0xff]
  %v50 = vld [vmem:[%s0 + $0x118] sm:$0xff]
  %v51 = vld [vmem:[%s0 + $0x120] sm:$0xff]
  %v52 = vld [vmem:[%s0 + $0x128] sm:$0xff]
  %v53 = vld [vmem:[%s0 + $0x130] sm:$0xff]
  %v54 = vld [vmem:[%s0 + $0x138] sm:$0xff]
  %v55 = vld [vmem:[%s0 + $0x140] sm:$0xff]
  %v56 = vld [vmem:[%s0 + $0x148] sm:$0xff]
  %v57 = vld [vmem:[%s0 + $0x150] sm:$0xff]
  %v58 = vld [vmem:[%s0 + $0x158] sm:$0xff]
  %v59 = vld [vmem:[%s0 + $0x160] sm:$0xff]
  %v60 = vld [vmem:[%s0 + $0x168] sm:$0xff]
  %v61 = vld [vmem:[%s0 + $0x170] sm:$0xff]
  %v62 = vld [vmem:[%s0 + $0x178] sm:$0xff]
  %v63 = vld [vmem:[%s0 + $0x180] sm:$0xff]
  %v64 = vld [vmem:[%s0 + $0x188] sm:$0xff]
  %v65 = vld [vmem:[%s0 + $0x190] sm:$0xff]
  %v66 = vld [vmem:[%s0 + $0x198] sm:$0xff]
  %v67 = vld [vmem:[%s0 + $0x1a0] sm:$0xff]
  %v68 = vld [vmem:[%s0 + $0x1a8] sm:$0xff]
  %v69 = vld [vmem:[%s0 + $0x1b0] sm:$0xff]
  %v70 = vld [vmem:[%s0 + $0x1b8] sm:$0xff]
  %v71 = vld [vmem:[%s0 + $0x1c0] sm:$0xff]
  %v72 = vld [vmem:[%s0 + $0x1c8] sm:$0xff]
  %v73 = vld [vmem:[%s0 + $0x1d0] sm:$0xff]
  %v74 = vld [vmem:[%s0 + $0x1d8] sm:$0xff]
  %v75 = vld [vmem:[%s0 + $0x1e0] sm:$0xff]
  %v76 = vld [vmem:[%s0 + $0x1e8] sm:$0xff]
  %v77 = vld [vmem:[%s0 + $0x1f0] sm:$0xff]
  %v78 = vld [vmem:[%s0 + $0x1f8] sm:$0xff]
  %v79 = vld [vmem:[%s0 + $0x200] sm:$0xff]
  %v80 = vpack.c.bf16 %v20, %v15
  %v81 = vpack.c.bf16 %v21, %v16
  %v82 = vpack.c.bf16 %v22, %v17
  %v83 = vpack.c.bf16 %v23, %v18
  %v84 = vpack.c.bf16 %v24, %v19
  %v85 = vpack.c.bf16 %v30, %v25
  %v86 = vpack.c.bf16 %v31, %v26
  %v87 = vpack.c.bf16 %v32, %v27
  %v88 = vpack.c.bf16 %v33, %v28
  %v89 = vpack.c.bf16 %v34, %v29
  %v90 = vpack.c.bf16 %v40, %v35
  %v91 = vpack.c.bf16 %v41, %v36
  %v92 = vpack.c.bf16 %v42, %v37
  %v93 = vpack.c.bf16 %v43, %v38
  %v94 = vpack.c.bf16 %v44, %v39
  %v95 = vpack.c.bf16 %v50, %v45
  %v96 = vpack.c.bf16 %v51, %v46
  %v97 = vpack.c.bf16 %v52, %v47
  %v98 = vpack.c.bf16 %v53, %v48
  %v99 = vpack.c.bf16 %v54, %v49
  %v100 = vpack.c.bf16 %v60, %v55
  %v101 = vpack.c.bf16 %v61, %v56
  %v102 = vpack.c.bf16 %v62, %v57
  %v103 = vpack.c.bf16 %v63, %v58
  %v104 = vpack.c.bf16 %v64, %v59
  %v105 = vpack.c.bf16 %v70, %v65
  %v106 = vpack.c.bf16 %v71, %v66
  %v107 = vpack.c.bf16 %v72, %v67
  %v108 = vpack.c.bf16 %v73, %v68
  %v109 = vpack.c.bf16 %v74, %v69
  %v110 = vpack.c.bf16 %v75, %v75
  %v111 = vpack.c.bf16 %v76, %v76
  %v112 = vpack.c.bf16 %v77, %v77
  %v113 = vpack.c.bf16 %v78, %v78
  %v114 = vpack.c.bf16 %v79, %v79
  %v115 = vld [vmem:[%s1] sm:$0xf]
  %v116 = vld [vmem:[%s1 + $0x4] sm:$0xf]
  %v117 = vld [vmem:[%s1 + $0x8] sm:$0xf]
  %v118 = vld [vmem:[%s1 + $0xc] sm:$0xf]
  %v119 = vld [vmem:[%s1 + $0x10] sm:$0xf]
  %v120 = vld [vmem:[%s1 + $0x14] sm:$0xf]
  %v121 = vld [vmem:[%s1 + $0x18] sm:$0xf]
  %v122 = vld [vmem:[%s1 + $0x1c] sm:$0xf]
  %v123 = vld [vmem:[%s1 + $0x20] sm:$0xf]
  %v124 = vld [vmem:[%s1 + $0x24] sm:$0xf]
  %v125 = vld [vmem:[%s1 + $0x28] sm:$0xf]
  %v126 = vld [vmem:[%s1 + $0x2c] sm:$0xf]
  %v127 = vld [vmem:[%s1 + $0x30] sm:$0xf]
  %v128 = vld [vmem:[%s1 + $0x34] sm:$0xf]
  %v129 = vld [vmem:[%s1 + $0x38] sm:$0xf]
  %v130 = vld [vmem:[%s1 + $0x3c] sm:$0xf]
  %v131 = vld [vmem:[%s1 + $0x40] sm:$0xf]
  %v132 = vld [vmem:[%s1 + $0x44] sm:$0xf]
  %v133 = vld [vmem:[%s1 + $0x48] sm:$0xf]
  %v134 = vld [vmem:[%s1 + $0x4c] sm:$0xf]
  %v135 = vld [vmem:[%s1 + $0x50] sm:$0xf]
  %v136 = vld [vmem:[%s1 + $0x54] sm:$0xf]
  %v137 = vld [vmem:[%s1 + $0x58] sm:$0xf]
  %v138 = vld [vmem:[%s1 + $0x5c] sm:$0xf]
  %v139 = vld [vmem:[%s1 + $0x60] sm:$0xf]
  %v140 = vld [vmem:[%s1 + $0x64] sm:$0xf]
  %v141 = vld [vmem:[%s1 + $0x68] sm:$0xf]
  %v142 = vld [vmem:[%s1 + $0x6c] sm:$0xf]
  %v143 = vld [vmem:[%s1 + $0x70] sm:$0xf]
  %v144 = vld [vmem:[%s1 + $0x74] sm:$0xf]
  %v145 = vld [vmem:[%s1 + $0x78] sm:$0xf]
  %v146 = vld [vmem:[%s1 + $0x7c] sm:$0xf]
  %v147 = vld [vmem:[%s1 + $0x80] sm:$0xf]
  %v148 = vld [vmem:[%s1 + $0x84] sm:$0xf]
  %v149 = vld [vmem:[%s1 + $0x88] sm:$0xf]
  %v150 = vld [vmem:[%s1 + $0x8c] sm:$0xf]
  %v151 = vld [vmem:[%s1 + $0x90] sm:$0xf]
  %v152 = vld [vmem:[%s1 + $0x94] sm:$0xf]
  %v153 = vld [vmem:[%s1 + $0x98] sm:$0xf]
  %v154 = vld [vmem:[%s1 + $0x9c] sm:$0xf]
  %v155 = vld [vmem:[%s1 + $0xa0] sm:$0xf]
  %v156 = vld [vmem:[%s1 + $0xa4] sm:$0xf]
  %v157 = vld [vmem:[%s1 + $0xa8] sm:$0xf]
  %v158 = vld [vmem:[%s1 + $0xac] sm:$0xf]
  %v159 = vld [vmem:[%s1 + $0xb0] sm:$0xf]
  %v160 = vld [vmem:[%s1 + $0xb4] sm:$0xf]
  %v161 = vld [vmem:[%s1 + $0xb8] sm:$0xf]
  %v162 = vld [vmem:[%s1 + $0xbc] sm:$0xf]
  %v163 = vld [vmem:[%s1 + $0xc0] sm:$0xf]
  %v164 = vld [vmem:[%s1 + $0xc4] sm:$0xf]
  %v165 = vld [vmem:[%s1 + $0xc8] sm:$0xf]
  %v166 = vld [vmem:[%s1 + $0xcc] sm:$0xf]
  %v167 = vld [vmem:[%s1 + $0xd0] sm:$0xf]
  %v168 = vld [vmem:[%s1 + $0xd4] sm:$0xf]
  %v169 = vld [vmem:[%s1 + $0xd8] sm:$0xf]
  %v170 = vld [vmem:[%s1 + $0xdc] sm:$0xf]
  %v171 = vld [vmem:[%s1 + $0xe0] sm:$0xf]
  %v172 = vld [vmem:[%s1 + $0xe4] sm:$0xf]
  %v173 = vld [vmem:[%s1 + $0xe8] sm:$0xf]
  %v174 = vld [vmem:[%s1 + $0xec] sm:$0xf]
  %v175 = vld [vmem:[%s1 + $0xf0] sm:$0xf]
  %v176 = vld [vmem:[%s1 + $0xf4] sm:$0xf]
  %v177 = vld [vmem:[%s1 + $0xf8] sm:$0xf]
  %v178 = vld [vmem:[%s1 + $0xfc] sm:$0xf]
  %v179 = vld [vmem:[%s1 + $0x100] sm:$0xf]
  %v180 = vld [vmem:[%s1 + $0x104] sm:$0xf]
  %v181 = vld [vmem:[%s1 + $0x108] sm:$0xf]
  %v182 = vld [vmem:[%s1 + $0x10c] sm:$0xf]
  %v183 = vld [vmem:[%s1 + $0x110] sm:$0xf]
  %v184 = vld [vmem:[%s1 + $0x114] sm:$0xf]
  %v185 = vld [vmem:[%s1 + $0x118] sm:$0xf]
  %v186 = vld [vmem:[%s1 + $0x11c] sm:$0xf]
  %v187 = vld [vmem:[%s2] sm:$0x1]
  %v189 = vlaneseq
  %v190 = vshrl.u32 %v189, 7
  %v191 = vsub.s32 0, %v190
  %v192 = vrot.slane %v187, %v191
  %v266 = vunpack.c.l.b16 %v115
  %v267 = vunpack.c.l.b16 %v116
  %v268 = vunpack.c.l.b16 %v117
  %v269 = vunpack.c.l.b16 %v118
  %v270 = vunpack.c.l.b16 %v119
  %v271 = vunpack.c.l.b16 %v120
  %v272 = vunpack.c.l.b16 %v121
  %v273 = vunpack.c.l.b16 %v122
  %v274 = vunpack.c.l.b16 %v123
  %v275 = vunpack.c.l.b16 %v124
  %v276 = vunpack.c.l.b16 %v125
  %v277 = vunpack.c.l.b16 %v126
  %v278 = vunpack.c.l.b16 %v127
  %v279 = vunpack.c.l.b16 %v128
  %v280 = vunpack.c.l.b16 %v129
  %v281 = vunpack.c.l.b16 %v130
  %v282 = vunpack.c.l.b16 %v131
  %v283 = vunpack.c.l.b16 %v132
  %v284 = vunpack.c.l.b16 %v133
  %v285 = vunpack.c.l.b16 %v134
  %v286 = vunpack.c.l.b16 %v135
  %v287 = vunpack.c.l.b16 %v136
  %v288 = vunpack.c.l.b16 %v137
  %v289 = vunpack.c.l.b16 %v138
  %v290 = vunpack.c.l.b16 %v139
  %v291 = vunpack.c.l.b16 %v140
  %v292 = vunpack.c.l.b16 %v141
  %v293 = vunpack.c.l.b16 %v142
  %v294 = vunpack.c.l.b16 %v143
  %v295 = vunpack.c.l.b16 %v144
  %v296 = vunpack.c.l.b16 %v145
  %v297 = vunpack.c.l.b16 %v146
  %v298 = vunpack.c.l.b16 %v147
  %v299 = vunpack.c.l.b16 %v148
  %v300 = vunpack.c.l.b16 %v149
  %v301 = vunpack.c.l.b16 %v150
  %v302 = vunpack.c.l.b16 %v151
  %v303 = vunpack.c.l.b16 %v152
  %v304 = vunpack.c.l.b16 %v153
  %v305 = vunpack.c.l.b16 %v154
  %v306 = vunpack.c.l.b16 %v155
  %v307 = vunpack.c.l.b16 %v156
  %v308 = vunpack.c.l.b16 %v157
  %v309 = vunpack.c.l.b16 %v158
  %v310 = vunpack.c.l.b16 %v159
  %v311 = vunpack.c.l.b16 %v160
  %v312 = vunpack.c.l.b16 %v161
  %v313 = vunpack.c.l.b16 %v162
  %v314 = vunpack.c.l.b16 %v163
  %v315 = vunpack.c.l.b16 %v164
  %v316 = vunpack.c.l.b16 %v165
  %v317 = vunpack.c.l.b16 %v166
  %v318 = vunpack.c.l.b16 %v167
  %v319 = vunpack.c.l.b16 %v168
  %v320 = vunpack.c.l.b16 %v169
  %v321 = vunpack.c.l.b16 %v170
  %v322 = vunpack.c.l.b16 %v171
  %v323 = vunpack.c.l.b16 %v172
  %v324 = vunpack.c.l.b16 %v173
  %v325 = vunpack.c.l.b16 %v174
  %v326 = vunpack.c.l.b16 %v175
  %v327 = vunpack.c.l.b16 %v176
  %v328 = vunpack.c.l.b16 %v177
  %v329 = vunpack.c.l.b16 %v178
  %v330 = vunpack.c.l.b16 %v179
  %v331 = vunpack.c.l.b16 %v180
  %v332 = vunpack.c.l.b16 %v181
  %v333 = vunpack.c.l.b16 %v182
  %v334 = vunpack.c.l.b16 %v183
  %v335 = vunpack.c.l.b16 %v184
  %v336 = vunpack.c.l.b16 %v185
  %v337 = vunpack.c.l.b16 %v186
  %v338 = vpack.c.b16 %v267, %v266
  %v339 = vpack.c.b16 %v269, %v268
  %v340 = vpack.c.b16 %v271, %v270
  %v341 = vpack.c.b16 %v273, %v272
  %v342 = vpack.c.b16 %v275, %v274
  %v343 = vpack.c.b16 %v277, %v276
  %v344 = vpack.c.b16 %v279, %v278
  %v345 = vpack.c.b16 %v281, %v280
  %v346 = vpack.c.b16 %v283, %v282
  %v347 = vpack.c.b16 %v285, %v284
  %v348 = vpack.c.b16 %v287, %v286
  %v349 = vpack.c.b16 %v289, %v288
  %v350 = vpack.c.b16 %v291, %v290
  %v351 = vpack.c.b16 %v293, %v292
  %v352 = vpack.c.b16 %v295, %v294
  %v353 = vpack.c.b16 %v297, %v296
  %v354 = vpack.c.b16 %v299, %v298
  %v355 = vpack.c.b16 %v301, %v300
  %v356 = vpack.c.b16 %v303, %v302
  %v357 = vpack.c.b16 %v305, %v304
  %v358 = vpack.c.b16 %v307, %v306
  %v359 = vpack.c.b16 %v309, %v308
  %v360 = vpack.c.b16 %v311, %v310
  %v361 = vpack.c.b16 %v313, %v312
  %v362 = vpack.c.b16 %v315, %v314
  %v363 = vpack.c.b16 %v317, %v316
  %v364 = vpack.c.b16 %v319, %v318
  %v365 = vpack.c.b16 %v321, %v320
  %v366 = vpack.c.b16 %v323, %v322
  %v367 = vpack.c.b16 %v325, %v324
  %v368 = vpack.c.b16 %v327, %v326
  %v369 = vpack.c.b16 %v329, %v328
  %v370 = vpack.c.b16 %v331, %v330
  %v371 = vpack.c.b16 %v333, %v332
  %v372 = vpack.c.b16 %v335, %v334
  %v373 = vpack.c.b16 %v337, %v336
  %vm410 = vcmask 523264
  %v412 = vsel %vm410, %v84, 0
  %v415 = vsel %vm410, %v89, 0
  %v418 = vsel %vm410, %v94, 0
  %v421 = vsel %vm410, %v99, 0
  %v424 = vsel %vm410, %v104, 0
  %v427 = vsel %vm410, %v109, 0
  %v430 = vsel %vm410, %v114, 0
  %432 = vmatprep.subr.bf16.mxu0 0
  %433 = vmatpush1.bf16.msra.mxu0 %v345
  %434 = vmatprep.subr.bf16.mxu0 0
  %435 = vmatpush1.bf16.msra.mxu0 %v344
  %436 = vmatprep.subr.bf16.mxu0 0
  %437 = vmatpush1.bf16.msra.mxu0 %v343
  %438 = vmatprep.subr.bf16.mxu0 0
  %439 = vmatpush1.bf16.msra.mxu0 %v342
  %440 = vmatprep.subr.bf16.mxu0 0
  %441 = vmatpush1.bf16.msra.mxu0 %v341
  %442 = vmatprep.subr.bf16.mxu0 0
  %443 = vmatpush1.bf16.msra.mxu0 %v340
  %444 = vmatprep.subr.bf16.mxu0 0
  %445 = vmatpush1.bf16.msra.mxu0 %v339
  %446 = vmatprep.subr.bf16.mxu0 0
  %447 = vmatpush1.bf16.msra.mxu0 %v338
  %448 = vmatprep.subr.bf16.mxu0 0
  %449 = vmatpush2.bf16.msra.mxu0 %v353
  %450 = vmatprep.subr.bf16.mxu0 0
  %451 = vmatpush2.bf16.msra.mxu0 %v352
  %452 = vmatprep.subr.bf16.mxu0 0
  %453 = vmatpush2.bf16.msra.mxu0 %v351
  %454 = vmatprep.subr.bf16.mxu0 0
  %455 = vmatpush2.bf16.msra.mxu0 %v350
  %456 = vmatprep.subr.bf16.mxu0 0
  %457 = vmatpush2.bf16.msra.mxu0 %v349
  %458 = vmatprep.subr.bf16.mxu0 0
  %459 = vmatpush2.bf16.msra.mxu0 %v348
  %460 = vmatprep.subr.bf16.mxu0 0
  %461 = vmatpush2.bf16.msra.mxu0 %v347
  %462 = vmatprep.subr.bf16.mxu0 0
  %463 = vmatpush2.bf16.msra.mxu0 %v346
  %464 = vmatprep.mubr.bf16.mxu0 %v81
  %465 = vmatmul.mubr.bf16.gmra.mxu0 %v80
  %v466 = vpop.f32.mrf.mxu0
  %v467 = vadd.f32 %v192, %v466
  %v468 = vpop.f32.mrf.mxu0
  %v469 = vpop.f32.mrf.mxu0
  %v470 = vadd.f32 %v192, %v469
  %v471 = vpop.f32.mrf.mxu0
  %472 = vmatprep.mubr.bf16.mxu0 %v86
  %473 = vmatmul.mubr.bf16.gmra.mxu0 %v85
  %v474 = vpop.f32.mrf.mxu0
  %v475 = vadd.f32 %v192, %v474
  %v476 = vpop.f32.mrf.mxu0
  %v477 = vpop.f32.mrf.mxu0
  %v478 = vadd.f32 %v192, %v477
  %v479 = vpop.f32.mrf.mxu0
  %480 = vmatprep.mubr.bf16.mxu0 %v91
  %481 = vmatmul.mubr.bf16.gmra.mxu0 %v90
  %v482 = vpop.f32.mrf.mxu0
  %v483 = vadd.f32 %v192, %v482
  %v484 = vpop.f32.mrf.mxu0
  %v485 = vpop.f32.mrf.mxu0
  %v486 = vadd.f32 %v192, %v485
  %v487 = vpop.f32.mrf.mxu0
  %488 = vmatprep.mubr.bf16.mxu0 %v96
  %489 = vmatmul.mubr.bf16.gmra.mxu0 %v95
  %v490 = vpop.f32.mrf.mxu0
  %v491 = vadd.f32 %v192, %v490
  %v492 = vpop.f32.mrf.mxu0
  %v493 = vpop.f32.mrf.mxu0
  %v494 = vadd.f32 %v192, %v493
  %v495 = vpop.f32.mrf.mxu0
  %496 = vmatprep.mubr.bf16.mxu0 %v101
  %497 = vmatmul.mubr.bf16.gmra.mxu0 %v100
  %v498 = vpop.f32.mrf.mxu0
  %v499 = vadd.f32 %v192, %v498
  %v500 = vpop.f32.mrf.mxu0
  %v501 = vpop.f32.mrf.mxu0
  %v502 = vadd.f32 %v192, %v501
  %v503 = vpop.f32.mrf.mxu0
  %504 = vmatprep.mubr.bf16.mxu0 %v106
  %505 = vmatmul.mubr.bf16.gmra.mxu0 %v105
  %v506 = vpop.f32.mrf.mxu0
  %v507 = vadd.f32 %v192, %v506
  %v508 = vpop.f32.mrf.mxu0
  %v509 = vpop.f32.mrf.mxu0
  %v510 = vadd.f32 %v192, %v509
  %v511 = vpop.f32.mrf.mxu0
  %512 = vmatprep.mubr.bf16.mxu0 %v111
  %513 = vmatmul.mubr.bf16.gmra.mxu0 %v110
  %v514 = vpop.f32.mrf.mxu0
  %v515 = vadd.f32 %v192, %v514
  %v516 = vpop.f32.mrf.mxu0
  %v517 = vpop.f32.mrf.mxu0
  %v518 = vpop.f32.mrf.mxu0
  %519 = vdwg.mxu0
  %520 = vmatprep.subr.bf16.mxu0 0
  %521 = vmatpush1.bf16.msra.mxu0 %v361
  %522 = vmatprep.subr.bf16.mxu0 0
  %523 = vmatpush1.bf16.msra.mxu0 %v360
  %524 = vmatprep.subr.bf16.mxu0 0
  %525 = vmatpush1.bf16.msra.mxu0 %v359
  %526 = vmatprep.subr.bf16.mxu0 0
  %527 = vmatpush1.bf16.msra.mxu0 %v358
  %528 = vmatprep.subr.bf16.mxu0 0
  %529 = vmatpush1.bf16.msra.mxu0 %v357
  %530 = vmatprep.subr.bf16.mxu0 0
  %531 = vmatpush1.bf16.msra.mxu0 %v356
  %532 = vmatprep.subr.bf16.mxu0 0
  %533 = vmatpush1.bf16.msra.mxu0 %v355
  %534 = vmatprep.subr.bf16.mxu0 0
  %535 = vmatpush1.bf16.msra.mxu0 %v354
  %536 = vmatprep.subr.bf16.mxu0 0
  %537 = vmatpush2.bf16.msra.mxu0 %v369
  %538 = vmatprep.subr.bf16.mxu0 0
  %539 = vmatpush2.bf16.msra.mxu0 %v368
  %540 = vmatprep.subr.bf16.mxu0 0
  %541 = vmatpush2.bf16.msra.mxu0 %v367
  %542 = vmatprep.subr.bf16.mxu0 0
  %543 = vmatpush2.bf16.msra.mxu0 %v366
  %544 = vmatprep.subr.bf16.mxu0 0
  %545 = vmatpush2.bf16.msra.mxu0 %v365
  %546 = vmatprep.subr.bf16.mxu0 0
  %547 = vmatpush2.bf16.msra.mxu0 %v364
  %548 = vmatprep.subr.bf16.mxu0 0
  %549 = vmatpush2.bf16.msra.mxu0 %v363
  %550 = vmatprep.subr.bf16.mxu0 0
  %551 = vmatpush2.bf16.msra.mxu0 %v362
  %552 = vmatprep.mubr.bf16.mxu0 %v83
  %553 = vmatmul.mubr.bf16.gmra.mxu0 %v82
  %v554 = vpop.f32.mrf.mxu0
  %v555 = vadd.f32 %v467, %v554
  %v556 = vpop.f32.mrf.mxu0
  %v557 = vpop.f32.mrf.mxu0
  %v558 = vadd.f32 %v470, %v557
  %v559 = vpop.f32.mrf.mxu0
  %560 = vmatprep.mubr.bf16.mxu0 %v88
  %561 = vmatmul.mubr.bf16.gmra.mxu0 %v87
  %v562 = vpop.f32.mrf.mxu0
  %v563 = vadd.f32 %v475, %v562
  %v564 = vpop.f32.mrf.mxu0
  %v565 = vpop.f32.mrf.mxu0
  %v566 = vadd.f32 %v478, %v565
  %v567 = vpop.f32.mrf.mxu0
  %568 = vmatprep.mubr.bf16.mxu0 %v93
  %569 = vmatmul.mubr.bf16.gmra.mxu0 %v92
  %v570 = vpop.f32.mrf.mxu0
  %v571 = vadd.f32 %v483, %v570
  %v572 = vpop.f32.mrf.mxu0
  %v573 = vpop.f32.mrf.mxu0
  %v574 = vadd.f32 %v486, %v573
  %v575 = vpop.f32.mrf.mxu0
  %576 = vmatprep.mubr.bf16.mxu0 %v98
  %577 = vmatmul.mubr.bf16.gmra.mxu0 %v97
  %v578 = vpop.f32.mrf.mxu0
  %v579 = vadd.f32 %v491, %v578
  %v580 = vpop.f32.mrf.mxu0
  %v581 = vpop.f32.mrf.mxu0
  %v582 = vadd.f32 %v494, %v581
  %v583 = vpop.f32.mrf.mxu0
  %584 = vmatprep.mubr.bf16.mxu0 %v103
  %585 = vmatmul.mubr.bf16.gmra.mxu0 %v102
  %v586 = vpop.f32.mrf.mxu0
  %v587 = vadd.f32 %v499, %v586
  %v588 = vpop.f32.mrf.mxu0
  %v589 = vpop.f32.mrf.mxu0
  %v590 = vadd.f32 %v502, %v589
  %v591 = vpop.f32.mrf.mxu0
  %592 = vmatprep.mubr.bf16.mxu0 %v108
  %593 = vmatmul.mubr.bf16.gmra.mxu0 %v107
  %v594 = vpop.f32.mrf.mxu0
  %v595 = vadd.f32 %v507, %v594
  %v596 = vpop.f32.mrf.mxu0
  %v597 = vpop.f32.mrf.mxu0
  %v598 = vadd.f32 %v510, %v597
  %v599 = vpop.f32.mrf.mxu0
  %600 = vmatprep.mubr.bf16.mxu0 %v113
  %601 = vmatmul.mubr.bf16.gmra.mxu0 %v112
  %v602 = vpop.f32.mrf.mxu0
  %v603 = vadd.f32 %v515, %v602
  %v604 = vpop.f32.mrf.mxu0
  %v605 = vpop.f32.mrf.mxu0
  %v606 = vpop.f32.mrf.mxu0
  %607 = vdwg.mxu0
  %608 = vmatprep.subr.bf16.mxu0 0
  %609 = vmatpush1.bf16.msra.mxu0 0
  %610 = vmatprep.subr.bf16.mxu0 0
  %611 = vmatpush1.bf16.msra.mxu0 0
  %612 = vmatprep.subr.bf16.mxu0 0
  %613 = vmatpush1.bf16.msra.mxu0 0
  %614 = vmatprep.subr.bf16.mxu0 0
  %615 = vmatpush1.bf16.msra.mxu0 0
  %616 = vmatprep.subr.bf16.mxu0 0
  %617 = vmatpush1.bf16.msra.mxu0 %v373
  %618 = vmatprep.subr.bf16.mxu0 0
  %619 = vmatpush1.bf16.msra.mxu0 %v372
  %620 = vmatprep.subr.bf16.mxu0 0
  %621 = vmatpush1.bf16.msra.mxu0 %v371
  %622 = vmatprep.subr.bf16.mxu0 0
  %623 = vmatpush1.bf16.msra.mxu0 %v370
  %624 = vmatprep.subr.bf16.mxu0 0
  %625 = vmatpush2.bf16.msra.mxu0 0
  %626 = vmatprep.subr.bf16.mxu0 0
  %627 = vmatpush2.bf16.msra.mxu0 0
  %628 = vmatprep.subr.bf16.mxu0 0
  %629 = vmatpush2.bf16.msra.mxu0 0
  %630 = vmatprep.subr.bf16.mxu0 0
  %631 = vmatpush2.bf16.msra.mxu0 0
  %632 = vmatprep.subr.bf16.mxu0 0
  %633 = vmatpush2.bf16.msra.mxu0 0
  %634 = vmatprep.subr.bf16.mxu0 0
  %635 = vmatpush2.bf16.msra.mxu0 0
  %636 = vmatprep.subr.bf16.mxu0 0
  %637 = vmatpush2.bf16.msra.mxu0 0
  %638 = vmatprep.subr.bf16.mxu0 0
  %639 = vmatpush2.bf16.msra.mxu0 0
  %640 = vmatprep.mubr.bf16.mxu0 0
  %641 = vmatmul.mubr.bf16.gmra.mxu0 %v412
  %v642 = vpop.f32.mrf.mxu0
  %v643 = vadd.f32 %v555, %v642
  %v644 = vpop.f32.mrf.mxu0
  %v645 = vpop.f32.mrf.mxu0
  %v646 = vadd.f32 %v558, %v645
  %v647 = vpop.f32.mrf.mxu0
  %648 = vmatprep.mubr.bf16.mxu0 0
  %649 = vmatmul.mubr.bf16.gmra.mxu0 %v415
  %v650 = vpop.f32.mrf.mxu0
  %v651 = vadd.f32 %v563, %v650
  %v652 = vpop.f32.mrf.mxu0
  %v653 = vpop.f32.mrf.mxu0
  %v654 = vadd.f32 %v566, %v653
  %v655 = vpop.f32.mrf.mxu0
  %656 = vmatprep.mubr.bf16.mxu0 0
  %657 = vmatmul.mubr.bf16.gmra.mxu0 %v418
  %v658 = vpop.f32.mrf.mxu0
  %v659 = vadd.f32 %v571, %v658
  %v660 = vpop.f32.mrf.mxu0
  %v661 = vpop.f32.mrf.mxu0
  %v662 = vadd.f32 %v574, %v661
  %v663 = vpop.f32.mrf.mxu0
  %664 = vmatprep.mubr.bf16.mxu0 0
  %665 = vmatmul.mubr.bf16.gmra.mxu0 %v421
  %v666 = vpop.f32.mrf.mxu0
  %v667 = vadd.f32 %v579, %v666
  %v668 = vpop.f32.mrf.mxu0
  %v669 = vpop.f32.mrf.mxu0
  %v670 = vadd.f32 %v582, %v669
  %v671 = vpop.f32.mrf.mxu0
  %672 = vmatprep.mubr.bf16.mxu0 0
  %673 = vmatmul.mubr.bf16.gmra.mxu0 %v424
  %v674 = vpop.f32.mrf.mxu0
  %v675 = vadd.f32 %v587, %v674
  %v676 = vpop.f32.mrf.mxu0
  %v677 = vpop.f32.mrf.mxu0
  %v678 = vadd.f32 %v590, %v677
  %v679 = vpop.f32.mrf.mxu0
  %680 = vmatprep.mubr.bf16.mxu0 0
  %681 = vmatmul.mubr.bf16.gmra.mxu0 %v427
  %v682 = vpop.f32.mrf.mxu0
  %v683 = vadd.f32 %v595, %v682
  %v684 = vpop.f32.mrf.mxu0
  %v685 = vpop.f32.mrf.mxu0
  %v686 = vadd.f32 %v598, %v685
  %v687 = vpop.f32.mrf.mxu0
  %688 = vmatprep.mubr.bf16.mxu0 0
  %689 = vmatmul.mubr.bf16.gmra.mxu0 %v430
  %v690 = vpop.f32.mrf.mxu0
  %v691 = vadd.f32 %v603, %v690
  %v692 = vpop.f32.mrf.mxu0
  %v693 = vpop.f32.mrf.mxu0
  %v694 = vpop.f32.mrf.mxu0
  %695 = vdwg.mxu0
  %v696 = vmax.f32 %v643, 0.0
  %v697 = vmax.f32 %v646, 0.0
  %v698 = vmax.f32 %v651, 0.0
  %v699 = vmax.f32 %v654, 0.0
  %v700 = vmax.f32 %v659, 0.0
  %v701 = vmax.f32 %v662, 0.0
  %v702 = vmax.f32 %v667, 0.0
  %v703 = vmax.f32 %v670, 0.0
  %v704 = vmax.f32 %v675, 0.0
  %v705 = vmax.f32 %v678, 0.0
  %v706 = vmax.f32 %v683, 0.0
  %v707 = vmax.f32 %v686, 0.0
  %v708 = vmax.f32 %v691, 0.0
  %709 = vst [vmem:[%s3] sm:$0xff] %v696
  %710 = vst [vmem:[%s3 + $0x8] sm:$0xff] %v697
  %711 = vst [vmem:[%s3 + $0x10] sm:$0xff] %v698
  %712 = vst [vmem:[%s3 + $0x18] sm:$0xff] %v699
  %713 = vst [vmem:[%s3 + $0x20] sm:$0xff] %v700
  %714 = vst [vmem:[%s3 + $0x28] sm:$0xff] %v701
  %715 = vst [vmem:[%s3 + $0x30] sm:$0xff] %v702
  %716 = vst [vmem:[%s3 + $0x38] sm:$0xff] %v703
  %717 = vst [vmem:[%s3 + $0x40] sm:$0xff] %v704
  %718 = vst [vmem:[%s3 + $0x48] sm:$0xff] %v705
  %719 = vst [vmem:[%s3 + $0x50] sm:$0xff] %v706
  %720 = vst [vmem:[%s3 + $0x58] sm:$0xff] %v707
  %721 = vst [vmem:[%s3 + $0x60] sm:$0xff] %v708
  // Predicated region
  $region14: #{actor_critic_forward.6} parent=0 // pred_check
    _
  $region15: #{actor_critic_forward.6} parent=0 // pred_check_branch
    %723 = sbr.rel (0) target = $region17
  $region16: #{actor_critic_forward.6} parent=0 // pred_region
    _
  $region17: #{actor_critic_forward.6} parent=0 // pred_fallthru
    _
  // Predicated region
  $region18: #{actor_critic_forward.6} parent=0 // pred_check
    _
  $region19: #{actor_critic_forward.6} parent=0 // pred_check_branch
    %725 = sbr.rel (0) target = $region21
  $region20: #{actor_critic_forward.6} parent=0 // pred_region
    _
  $region21: #{actor_critic_forward.6} parent=0 // pred_fallthru
    _

// kernel: actor_critic_forward.7
$region0: #{actor_critic_forward.7}
  #allocation0 [shape = 'u32[]', space=smem, size = 0x4, offset = 0x4, fixed_abs, tag = 'smem constant byte address 0x4 - core index']
  #allocation1 [shape = 'u32[144,128]{1,0:T(1,128)}', space=vmem, size = 0x12000, scoped, tag = 'internal scratch']
  %s0 = inlined_call_operand.vmem [shape: f32[8,3136], index: 0, kind: input, shape index: {}]
  %s1 = inlined_call_operand.vmem [shape: bf16[3136,512], index: 1, kind: input, shape index: {}]
  %s2 = inlined_call_operand.vmem [shape: f32[1,512], index: 2, kind: input, shape index: {}]
  %s3 = inlined_call_operand.vmem [shape: bf16[512,128], index: 3, kind: input, shape index: {}]
  %s4 = inlined_call_operand.vmem [shape: f32[1,128], index: 4, kind: input, shape index: {}]
  %s5 = inlined_call_operand.vmem [shape: f32[8,128], index: 5, kind: output, shape index: {}]
  %s6 = sld [smem:[#allocation0]]
  $region30: #{actor_critic_forward.7} parent=0
    _
  %s8 = ssub.s32 1, %s6
  %s9 = scalar_select 0, %s8, %s6
  // Predicated region
  $region2: #{actor_critic_forward.7} parent=0 // pred_check
    _
  $region3: #{actor_critic_forward.7} parent=0 // pred_check_branch
    %11 = sbr.rel (0) target = $region5
  $region4: #{actor_critic_forward.7} parent=0 // pred_region
    _
  $region5: #{actor_critic_forward.7} parent=0 // pred_fallthru
    _
  // Predicated region
  $region6: #{actor_critic_forward.7} parent=0 // pred_check
    _
  $region7: #{actor_critic_forward.7} parent=0 // pred_check_branch
    %13 = sbr.rel (0) target = $region9
  $region8: #{actor_critic_forward.7} parent=0 // pred_region
    _
  $region9: #{actor_critic_forward.7} parent=0 // pred_fallthru
    _
  // Predicated region
  $region10: #{actor_critic_forward.7} parent=0 // pred_check
    _
  $region11: #{actor_critic_forward.7} parent=0 // pred_check_branch
    %15 = sbr.rel (0) target = $region13
  $region12: #{actor_critic_forward.7} parent=0 // pred_region
    _
  $region13: #{actor_critic_forward.7} parent=0 // pred_fallthru
    _
  // Predicated region
  $region14: #{actor_critic_forward.7} parent=0 // pred_check
    _
  $region15: #{actor_critic_forward.7} parent=0 // pred_check_branch
    %17 = sbr.rel (0) target = $region17
  $region16: #{actor_critic_forward.7} parent=0 // pred_region
    _
  $region17: #{actor_critic_forward.7} parent=0 // pred_fallthru
    _
  // Predicated region
  $region18: #{actor_critic_forward.7} parent=0 // pred_check
    _
  $region19: #{actor_critic_forward.7} parent=0 // pred_check_branch
    %19 = sbr.rel (0) target = $region21
  $region20: #{actor_critic_forward.7} parent=0 // pred_region
    _
  $region21: #{actor_critic_forward.7} parent=0 // pred_fallthru
    _
  %v21 = vld [vmem:[%s0] sm:$0xff]
  %v22 = vld [vmem:[%s0 + $0x8] sm:$0xff]
  %v23 = vld [vmem:[%s0 + $0x10] sm:$0xff]
  %v24 = vld [vmem:[%s0 + $0x18] sm:$0xff]
  %v25 = vld [vmem:[%s0 + $0x20] sm:$0xff]
  %v26 = vld [vmem:[%s0 + $0x28] sm:$0xff]
  %v27 = vld [vmem:[%s0 + $0x30] sm:$0xff]
  %v28 = vld [vmem:[%s0 + $0x38] sm:$0xff]
  %v29 = vld [vmem:[%s0 + $0x40] sm:$0xff]
  %v30 = vld [vmem:[%s0 + $0x48] sm:$0xff]
  %v31 = vld [vmem:[%s0 + $0x50] sm:$0xff]
  %v32 = vld [vmem:[%s0 + $0x58] sm:$0xff]
  %v33 = vld [vmem:[%s0 + $0x60] sm:$0xff]
  %v34 = vld [vmem:[%s0 + $0x68] sm:$0xff]
  %v35 = vld [vmem:[%s0 + $0x70] sm:$0xff]
  %v36 = vld [vmem:[%s0 + $0x78] sm:$0xff]
  %v37 = vld [vmem:[%s0 + $0x80] sm:$0xff]
  %v38 = vld [vmem:[%s0 + $0x88] sm:$0xff]
  %v39 = vld [vmem:[%s0 + $0x90] sm:$0xff]
  %v40 = vld [vmem:[%s0 + $0x98] sm:$0xff]
  %v41 = vld [vmem:[%s0 + $0xa0] sm:$0xff]
  %v42 = vld [vmem:[%s0 + $0xa8] sm:$0xff]
  %v43 = vld [vmem:[%s0 + $0xb0] sm:$0xff]
  %v44 = vld [vmem:[%s0 + $0xb8] sm:$0xff]
  %v45 = vld [vmem:[%s0 + $0xc0] sm:$0xff]
  %v46 = vpack.c.bf16 %v21, %v21
  %v47 = vpack.c.bf16 %v22, %v22
  %v48 = vpack.c.bf16 %v23, %v23
  %v49 = vpack.c.bf16 %v24, %v24
  %v50 = vpack.c.bf16 %v25, %v25
  %v51 = vpack.c.bf16 %v26, %v26
  %v52 = vpack.c.bf16 %v27, %v27
  %v53 = vpack.c.bf16 %v28, %v28
  %v54 = vpack.c.bf16 %v29, %v29
  %v55 = vpack.c.bf16 %v30, %v30
  %v56 = vpack.c.bf16 %v31, %v31
  %v57 = vpack.c.bf16 %v32, %v32
  %v58 = vpack.c.bf16 %v33, %v33
  %v59 = vpack.c.bf16 %v34, %v34
  %v60 = vpack.c.bf16 %v35, %v35
  %v61 = vpack.c.bf16 %v36, %v36
  %v62 = vpack.c.bf16 %v37, %v37
  %v63 = vpack.c.bf16 %v38, %v38
  %v64 = vpack.c.bf16 %v39, %v39
  %v65 = vpack.c.bf16 %v40, %v40
  %v66 = vpack.c.bf16 %v41, %v41
  %v67 = vpack.c.bf16 %v42, %v42
  %v68 = vpack.c.bf16 %v43, %v43
  %v69 = vpack.c.bf16 %v44, %v44
  %v70 = vpack.c.bf16 %v45, %v45
  %v71 = vld [vmem:[%s1] sm:$0xff]
  %v72 = vld [vmem:[%s1 + $0x8] sm:$0xff]
  %v73 = vld [vmem:[%s1 + $0x10] sm:$0xff]
  %v74 = vld [vmem:[%s1 + $0x18] sm:$0xff]
  %v75 = vld [vmem:[%s1 + $0x20] sm:$0xff]
  %v76 = vld [vmem:[%s1 + $0x28] sm:$0xff]
  %v77 = vld [vmem:[%s1 + $0x30] sm:$0xff]
  %v78 = vld [vmem:[%s1 + $0x38] sm:$0xff]
  %v79 = vld [vmem:[%s1 + $0x40] sm:$0xff]
  %v80 = vld [vmem:[%s1 + $0x48] sm:$0xff]
  %v81 = vld [vmem:[%s1 + $0x50] sm:$0xff]
  %v82 = vld [vmem:[%s1 + $0x58] sm:$0xff]
  %v83 = vld [vmem:[%s1 + $0x60] sm:$0xff]
  %v84 = vld [vmem:[%s1 + $0x68] sm:$0xff]
  %v85 = vld [vmem:[%s1 + $0x70] sm:$0xff]
  %v86 = vld [vmem:[%s1 + $0x78] sm:$0xff]
  %v87 = vld [vmem:[%s1 + $0x80] sm:$0xff]
  %v88 = vld [vmem:[%s1 + $0x88] sm:$0xff]
  %v89 = vld [vmem:[%s1 + $0x90] sm:$0xff]
  %v90 = vld [vmem:[%s1 + $0x98] sm:$0xff]
  %v91 = vld [vmem:[%s1 + $0xa0] sm:$0xff]
  %v92 = vld [vmem:[%s1 + $0xa8] sm:$0xff]
  %v93 = vld [vmem:[%s1 + $0xb0] sm:$0xff]
  %v94 = vld [vmem:[%s1 + $0xb8] sm:$0xff]
  %v95 = vld [vmem:[%s1 + $0xc0] sm:$0xff]
  %v96 = vld [vmem:[%s1 + $0xc8] sm:$0xff]
  %v97 = vld [vmem:[%s1 + $0xd0] sm:$0xff]
  %v98 = vld [vmem:[%s1 + $0xd8] sm:$0xff]
  %v99 = vld [vmem:[%s1 + $0xe0] sm:$0xff]
  %v100 = vld [vmem:[%s1 + $0xe8] sm:$0xff]
  %v101 = vld [vmem:[%s1 + $0xf0] sm:$0xff]
  %v102 = vld [vmem:[%s1 + $0xf8] sm:$0xff]
  %v103 = vld [vmem:[%s1 + $0x100] sm:$0xff]
  %v104 = vld [vmem:[%s1 + $0x108] sm:$0xff]
  %v105 = vld [vmem:[%s1 + $0x110] sm:$0xff]
  %v106 = vld [vmem:[%s1 + $0x118] sm:$0xff]
  %v107 = vld [vmem:[%s1 + $0x120] sm:$0xff]
  %v108 = vld [vmem:[%s1 + $0x128] sm:$0xff]
  %v109 = vld [vmem:[%s1 + $0x130] sm:$0xff]
  %v110 = vld [vmem:[%s1 + $0x138] sm:$0xff]
  %v111 = vld [vmem:[%s1 + $0x140] sm:$0xff]
  %v112 = vld [vmem:[%s1 + $0x148] sm:$0xff]
  %v113 = vld [vmem:[%s1 + $0x150] sm:$0xff]
  %v114 = vld [vmem:[%s1 + $0x158] sm:$0xff]
  %v115 = vld [vmem:[%s1 + $0x160] sm:$0xff]
  %v116 = vld [vmem:[%s1 + $0x168] sm:$0xff]
  %v117 = vld [vmem:[%s1 + $0x170] sm:$0xff]
  %v118 = vld [vmem:[%s1 + $0x178] sm:$0xff]
  %v119 = vld [vmem:[%s1 + $0x180] sm:$0xff]
  %v120 = vld [vmem:[%s1 + $0x188] sm:$0xff]
  %v121 = vld [vmem:[%s1 + $0x190] sm:$0xff]
  %v122 = vld [vmem:[%s1 + $0x198] sm:$0xff]
  %v123 = vld [vmem:[%s1 + $0x1a0] sm:$0xff]
  %v124 = vld [vmem:[%s1 + $0x1a8] sm:$0xff]
  %v125 = vld [vmem:[%s1 + $0x1b0] sm:$0xff]
  %v126 = vld [vmem:[%s1 + $0x1b8] sm:$0xff]
  %v127 = vld [vmem:[%s1 + $0x1c0] sm:$0xff]
  %v128 = vld [vmem:[%s1 + $0x1c8] sm:$0xff]
  %v129 = vld [vmem:[%s1 + $0x1d0] sm:$0xff]
  %v130 = vld [vmem:[%s1 + $0x1d8] sm:$0xff]
  %v131 = vld [vmem:[%s1 + $0x1e0] sm:$0xff]
  %v132 = vld [vmem:[%s1 + $0x1e8] sm:$0xff]
  %v133 = vld [vmem:[%s1 + $0x1f0] sm:$0xff]
  %v134 = vld [vmem:[%s1 + $0x1f8] sm:$0xff]
  %v135 = vld [vmem:[%s1 + $0x200] sm:$0xff]
  %v136 = vld [vmem:[%s1 + $0x208] sm:$0xff]
  %v137 = vld [vmem:[%s1 + $0x210] sm:$0xff]
  %v138 = vld [vmem:[%s1 + $0x218] sm:$0xff]
  %v139 = vld [vmem:[%s1 + $0x220] sm:$0xff]
  %v140 = vld [vmem:[%s1 + $0x228] sm:$0xff]
  %v141 = vld [vmem:[%s1 + $0x230] sm:$0xff]
  %v142 = vld [vmem:[%s1 + $0x238] sm:$0xff]
  %v143 = vld [vmem:[%s1 + $0x240] sm:$0xff]
  %v144 = vld [vmem:[%s1 + $0x248] sm:$0xff]
  %v145 = vld [vmem:[%s1 + $0x250] sm:$0xff]
  %v146 = vld [vmem:[%s1 + $0x258] sm:$0xff]
  %v147 = vld [vmem:[%s1 + $0x260] sm:$0xff]
  %v148 = vld [vmem:[%s1 + $0x268] sm:$0xff]
  %v149 = vld [vmem:[%s1 + $0x270] sm:$0xff]
  %v150 = vld [vmem:[%s1 + $0x278] sm:$0xff]
  %v151 = vld [vmem:[%s1 + $0x280] sm:$0xff]
  %v152 = vld [vmem:[%s1 + $0x288] sm:$0xff]
  %v153 = vld [vmem:[%s1 + $0x290] sm:$0xff]
  %v154 = vld [vmem:[%s1 + $0x298] sm:$0xff]
  %v155 = vld [vmem:[%s1 + $0x2a0] sm:$0xff]
  %v156 = vld [vmem:[%s1 + $0x2a8] sm:$0xff]
  %v157 = vld [vmem:[%s1 + $0x2b0] sm:$0xff]
  %v158 = vld [vmem:[%s1 + $0x2b8] sm:$0xff]
  %v159 = vld [vmem:[%s1 + $0x2c0] sm:$0xff]
  %v160 = vld [vmem:[%s1 + $0x2c8] sm:$0xff]
  %v161 = vld [vmem:[%s1 + $0x2d0] sm:$0xff]
  %v162 = vld [vmem:[%s1 + $0x2d8] sm:$0xff]
  %v163 = vld [vmem:[%s1 + $0x2e0] sm:$0xff]
  %v164 = vld [vmem:[%s1 + $0x2e8] sm:$0xff]
  %v165 = vld [vmem:[%s1 + $0x2f0] sm:$0xff]
  %v166 = vld [vmem:[%s1 + $0x2f8] sm:$0xff]
  %v167 = vld [vmem:[%s1 + $0x300] sm:$0xff]
  %v168 = vld [vmem:[%s1 + $0x308] sm:$0xff]
  %v169 = vld [vmem:[%s1 + $0x310] sm:$0xff]
  %v170 = vld [vmem:[%s1 + $0x318] sm:$0xff]
  %v171 = vld [vmem:[%s1 + $0x320] sm:$0xff]
  %v172 = vld [vmem:[%s1 + $0x328] sm:$0xff]
  %v173 = vld [vmem:[%s1 + $0x330] sm:$0xff]
  %v174 = vld [vmem:[%s1 + $0x338] sm:$0xff]
  %v175 = vld [vmem:[%s1 + $0x340] sm:$0xff]
  %v176 = vld [vmem:[%s1 + $0x348] sm:$0xff]
  %v177 = vld [vmem:[%s1 + $0x350] sm:$0xff]
  %v178 = vld [vmem:[%s1 + $0x358] sm:$0xff]
  %v179 = vld [vmem:[%s1 + $0x360] sm:$0xff]
  %v180 = vld [vmem:[%s1 + $0x368] sm:$0xff]
  %v181 = vld [vmem:[%s1 + $0x370] sm:$0xff]
  %v182 = vld [vmem:[%s1 + $0x378] sm:$0xff]
  %v183 = vld [vmem:[%s1 + $0x380] sm:$0xff]
  %v184 = vld [vmem:[%s1 + $0x388] sm:$0xff]
  %v185 = vld [vmem:[%s1 + $0x390] sm:$0xff]
  %v186 = vld [vmem:[%s1 + $0x398] sm:$0xff]
  %v187 = vld [vmem:[%s1 + $0x3a0] sm:$0xff]
  %v188 = vld [vmem:[%s1 + $0x3a8] sm:$0xff]
  %v189 = vld [vmem:[%s1 + $0x3b0] sm:$0xff]
  %v190 = vld [vmem:[%s1 + $0x3b8] sm:$0xff]
  %v191 = vld [vmem:[%s1 + $0x3c0] sm:$0xff]
  %v192 = vld [vmem:[%s1 + $0x3c8] sm:$0xff]
  %v193 = vld [vmem:[%s1 + $0x3d0] sm:$0xff]
  %v194 = vld [vmem:[%s1 + $0x3d8] sm:$0xff]
  %v195 = vld [vmem:[%s1 + $0x3e0] sm:$0xff]
  %v196 = vld [vmem:[%s1 + $0x3e8] sm:$0xff]
  %v197 = vld [vmem:[%s1 + $0x3f0] sm:$0xff]
  %v198 = vld [vmem:[%s1 + $0x3f8] sm:$0xff]
  %v199 = vld [vmem:[%s1 + $0x400] sm:$0xff]
  %v200 = vld [vmem:[%s1 + $0x408] sm:$0xff]
  %v201 = vld [vmem:[%s1 + $0x410] sm:$0xff]
  %v202 = vld [vmem:[%s1 + $0x418] sm:$0xff]
  %v203 = vld [vmem:[%s1 + $0x420] sm:$0xff]
  %v204 = vld [vmem:[%s1 + $0x428] sm:$0xff]
  %v205 = vld [vmem:[%s1 + $0x430] sm:$0xff]
  %v206 = vld [vmem:[%s1 + $0x438] sm:$0xff]
  %v207 = vld [vmem:[%s1 + $0x440] sm:$0xff]
  %v208 = vld [vmem:[%s1 + $0x448] sm:$0xff]
  %v209 = vld [vmem:[%s1 + $0x450] sm:$0xff]
  %v210 = vld [vmem:[%s1 + $0x458] sm:$0xff]
  %v211 = vld [vmem:[%s1 + $0x460] sm:$0xff]
  %v212 = vld [vmem:[%s1 + $0x468] sm:$0xff]
  %v213 = vld [vmem:[%s1 + $0x470] sm:$0xff]
  %v214 = vld [vmem:[%s1 + $0x478] sm:$0xff]
  %v215 = vld [vmem:[%s1 + $0x480] sm:$0xff]
  %v216 = vld [vmem:[%s1 + $0x488] sm:$0xff]
  %v217 = vld [vmem:[%s1 + $0x490] sm:$0xff]
  %v218 = vld [vmem:[%s1 + $0x498] sm:$0xff]
  %v219 = vld [vmem:[%s1 + $0x4a0] sm:$0xff]
  %v220 = vld [vmem:[%s1 + $0x4a8] sm:$0xff]
  %v221 = vld [vmem:[%s1 + $0x4b0] sm:$0xff]
  %v222 = vld [vmem:[%s1 + $0x4b8] sm:$0xff]
  %v223 = vld [vmem:[%s1 + $0x4c0] sm:$0xff]
  %v224 = vld [vmem:[%s1 + $0x4c8] sm:$0xff]
  %v225 = vld [vmem:[%s1 + $0x4d0] sm:$0xff]
  %v226 = vld [vmem:[%s1 + $0x4d8] sm:$0xff]
  %v227 = vld [vmem:[%s1 + $0x4e0] sm:$0xff]
  %v228 = vld [vmem:[%s1 + $0x4e8] sm:$0xff]
  %v229 = vld [vmem:[%s1 + $0x4f0] sm:$0xff]
  %v230 = vld [vmem:[%s1 + $0x4f8] sm:$0xff]
  %v231 = vld [vmem:[%s1 + $0x500] sm:$0xff]
  %v232 = vld [vmem:[%s1 + $0x508] sm:$0xff]
  %v233 = vld [vmem:[%s1 + $0x510] sm:$0xff]
  %v234 = vld [vmem:[%s1 + $0x518] sm:$0xff]
  %v235 = vld [vmem:[%s1 + $0x520] sm:$0xff]
  %v236 = vld [vmem:[%s1 + $0x528] sm:$0xff]
  %v237 = vld [vmem:[%s1 + $0x530] sm:$0xff]
  %v238 = vld [vmem:[%s1 + $0x538] sm:$0xff]
  %v239 = vld [vmem:[%s1 + $0x540] sm:$0xff]
  %v240 = vld [vmem:[%s1 + $0x548] sm:$0xff]
  %v241 = vld [vmem:[%s1 + $0x550] sm:$0xff]
  %v242 = vld [vmem:[%s1 + $0x558] sm:$0xff]
  %v243 = vld [vmem:[%s1 + $0x560] sm:$0xff]
  %v244 = vld [vmem:[%s1 + $0x568] sm:$0xff]
  %v245 = vld [vmem:[%s1 + $0x570] sm:$0xff]
  %v246 = vld [vmem:[%s1 + $0x578] sm:$0xff]
  %v247 = vld [vmem:[%s1 + $0x580] sm:$0xff]
  %v248 = vld [vmem:[%s1 + $0x588] sm:$0xff]
  %v249 = vld [vmem:[%s1 + $0x590] sm:$0xff]
  %v250 = vld [vmem:[%s1 + $0x598] sm:$0xff]
  %v251 = vld [vmem:[%s1 + $0x5a0] sm:$0xff]
  %v252 = vld [vmem:[%s1 + $0x5a8] sm:$0xff]
  %v253 = vld [vmem:[%s1 + $0x5b0] sm:$0xff]
  %v254 = vld [vmem:[%s1 + $0x5b8] sm:$0xff]
  %v255 = vld [vmem:[%s1 + $0x5c0] sm:$0xff]
  %v256 = vld [vmem:[%s1 + $0x5c8] sm:$0xff]
  %v257 = vld [vmem:[%s1 + $0x5d0] sm:$0xff]
  %v258 = vld [vmem:[%s1 + $0x5d8] sm:$0xff]
  %v259 = vld [vmem:[%s1 + $0x5e0] sm:$0xff]
  %v260 = vld [vmem:[%s1 + $0x5e8] sm:$0xff]
  %v261 = vld [vmem:[%s1 + $0x5f0] sm:$0xff]
  %v262 = vld [vmem:[%s1 + $0x5f8] sm:$0xff]
  %v263 = vld [vmem:[%s1 + $0x600] sm:$0xff]
  %v264 = vld [vmem:[%s1 + $0x608] sm:$0xff]
  %v265 = vld [vmem:[%s1 + $0x610] sm:$0xff]
  %v266 = vld [vmem:[%s1 + $0x618] sm:$0xff]
  %v267 = vld [vmem:[%s1 + $0x620] sm:$0xff]
  %v268 = vld [vmem:[%s1 + $0x628] sm:$0xff]
  %v269 = vld [vmem:[%s1 + $0x630] sm:$0xff]
  %v270 = vld [vmem:[%s1 + $0x638] sm:$0xff]
  %v271 = vld [vmem:[%s1 + $0x640] sm:$0xff]
  %v272 = vld [vmem:[%s1 + $0x648] sm:$0xff]
  %v273 = vld [vmem:[%s1 + $0x650] sm:$0xff]
  %v274 = vld [vmem:[%s1 + $0x658] sm:$0xff]
  %v275 = vld [vmem:[%s1 + $0x660] sm:$0xff]
  %v276 = vld [vmem:[%s1 + $0x668] sm:$0xff]
  %v277 = vld [vmem:[%s1 + $0x670] sm:$0xff]
  %v278 = vld [vmem:[%s1 + $0x678] sm:$0xff]
  %v279 = vld [vmem:[%s1 + $0x680] sm:$0xff]
  %v280 = vld [vmem:[%s1 + $0x688] sm:$0xff]
  %v281 = vld [vmem:[%s1 + $0x690] sm:$0xff]
  %v282 = vld [vmem:[%s1 + $0x698] sm:$0xff]
  %v283 = vld [vmem:[%s1 + $0x6a0] sm:$0xff]
  %v284 = vld [vmem:[%s1 + $0x6a8] sm:$0xff]
  %v285 = vld [vmem:[%s1 + $0x6b0] sm:$0xff]
  %v286 = vld [vmem:[%s1 + $0x6b8] sm:$0xff]
  %v287 = vld [vmem:[%s1 + $0x6c0] sm:$0xff]
  %v288 = vld [vmem:[%s1 + $0x6c8] sm:$0xff]
  %v289 = vld [vmem:[%s1 + $0x6d0] sm:$0xff]
  %v290 = vld [vmem:[%s1 + $0x6d8] sm:$0xff]
  %v291 = vld [vmem:[%s1 + $0x6e0] sm:$0xff]
  %v292 = vld [vmem:[%s1 + $0x6e8] sm:$0xff]
  %v293 = vld [vmem:[%s1 + $0x6f0] sm:$0xff]
  %v294 = vld [vmem:[%s1 + $0x6f8] sm:$0xff]
  %v295 = vld [vmem:[%s1 + $0x700] sm:$0xff]
  %v296 = vld [vmem:[%s1 + $0x708] sm:$0xff]
  %v297 = vld [vmem:[%s1 + $0x710] sm:$0xff]
  %v298 = vld [vmem:[%s1 + $0x718] sm:$0xff]
  %v299 = vld [vmem:[%s1 + $0x720] sm:$0xff]
  %v300 = vld [vmem:[%s1 + $0x728] sm:$0xff]
  %v301 = vld [vmem:[%s1 + $0x730] sm:$0xff]
  %v302 = vld [vmem:[%s1 + $0x738] sm:$0xff]
  %v303 = vld [vmem:[%s1 + $0x740] sm:$0xff]
  %v304 = vld [vmem:[%s1 + $0x748] sm:$0xff]
  %v305 = vld [vmem:[%s1 + $0x750] sm:$0xff]
  %v306 = vld [vmem:[%s1 + $0x758] sm:$0xff]
  %v307 = vld [vmem:[%s1 + $0x760] sm:$0xff]
  %v308 = vld [vmem:[%s1 + $0x768] sm:$0xff]
  %v309 = vld [vmem:[%s1 + $0x770] sm:$0xff]
  %v310 = vld [vmem:[%s1 + $0x778] sm:$0xff]
  %v311 = vld [vmem:[%s1 + $0x780] sm:$0xff]
  %v312 = vld [vmem:[%s1 + $0x788] sm:$0xff]
  %v313 = vld [vmem:[%s1 + $0x790] sm:$0xff]
  %v314 = vld [vmem:[%s1 + $0x798] sm:$0xff]
  %v315 = vld [vmem:[%s1 + $0x7a0] sm:$0xff]
  %v316 = vld [vmem:[%s1 + $0x7a8] sm:$0xff]
  %v317 = vld [vmem:[%s1 + $0x7b0] sm:$0xff]
  %v318 = vld [vmem:[%s1 + $0x7b8] sm:$0xff]
  %v319 = vld [vmem:[%s1 + $0x7c0] sm:$0xff]
  %v320 = vld [vmem:[%s1 + $0x7c8] sm:$0xff]
  %v321 = vld [vmem:[%s1 + $0x7d0] sm:$0xff]
  %v322 = vld [vmem:[%s1 + $0x7d8] sm:$0xff]
  %v323 = vld [vmem:[%s1 + $0x7e0] sm:$0xff]
  %v324 = vld [vmem:[%s1 + $0x7e8] sm:$0xff]
  %v325 = vld [vmem:[%s1 + $0x7f0] sm:$0xff]
  %v326 = vld [vmem:[%s1 + $0x7f8] sm:$0xff]
  %v327 = vld [vmem:[%s1 + $0x800] sm:$0xff]
  %v328 = vld [vmem:[%s1 + $0x808] sm:$0xff]
  %v329 = vld [vmem:[%s1 + $0x810] sm:$0xff]
  %v330 = vld [vmem:[%s1 + $0x818] sm:$0xff]
  %v331 = vld [vmem:[%s1 + $0x820] sm:$0xff]
  %v332 = vld [vmem:[%s1 + $0x828] sm:$0xff]
  %v333 = vld [vmem:[%s1 + $0x830] sm:$0xff]
  %v334 = vld [vmem:[%s1 + $0x838] sm:$0xff]
  %v335 = vld [vmem:[%s1 + $0x840] sm:$0xff]
  %v336 = vld [vmem:[%s1 + $0x848] sm:$0xff]
  %v337 = vld [vmem:[%s1 + $0x850] sm:$0xff]
  %v338 = vld [vmem:[%s1 + $0x858] sm:$0xff]
  %v339 = vld [vmem:[%s1 + $0x860] sm:$0xff]
  %v340 = vld [vmem:[%s1 + $0x868] sm:$0xff]
  %v341 = vld [vmem:[%s1 + $0x870] sm:$0xff]
  %v342 = vld [vmem:[%s1 + $0x878] sm:$0xff]
  %v343 = vld [vmem:[%s1 + $0x880] sm:$0xff]
  %v344 = vld [vmem:[%s1 + $0x888] sm:$0xff]
  %v345 = vld [vmem:[%s1 + $0x890] sm:$0xff]
  %v346 = vld [vmem:[%s1 + $0x898] sm:$0xff]
  %v347 = vld [vmem:[%s1 + $0x8a0] sm:$0xff]
  %v348 = vld [vmem:[%s1 + $0x8a8] sm:$0xff]
  %v349 = vld [vmem:[%s1 + $0x8b0] sm:$0xff]
  %v350 = vld [vmem:[%s1 + $0x8b8] sm:$0xff]
  %v351 = vld [vmem:[%s1 + $0x8c0] sm:$0xff]
  %v352 = vld [vmem:[%s1 + $0x8c8] sm:$0xff]
  %v353 = vld [vmem:[%s1 + $0x8d0] sm:$0xff]
  %v354 = vld [vmem:[%s1 + $0x8d8] sm:$0xff]
  %v355 = vld [vmem:[%s1 + $0x8e0] sm:$0xff]
  %v356 = vld [vmem:[%s1 + $0x8e8] sm:$0xff]
  %v357 = vld [vmem:[%s1 + $0x8f0] sm:$0xff]
  %v358 = vld [vmem:[%s1 + $0x8f8] sm:$0xff]
  %v359 = vld [vmem:[%s1 + $0x900] sm:$0xff]
  %v360 = vld [vmem:[%s1 + $0x908] sm:$0xff]
  %v361 = vld [vmem:[%s1 + $0x910] sm:$0xff]
  %v362 = vld [vmem:[%s1 + $0x918] sm:$0xff]
  %v363 = vld [vmem:[%s1 + $0x920] sm:$0xff]
  %v364 = vld [vmem:[%s1 + $0x928] sm:$0xff]
  %v365 = vld [vmem:[%s1 + $0x930] sm:$0xff]
  %v366 = vld [vmem:[%s1 + $0x938] sm:$0xff]
  %v367 = vld [vmem:[%s1 + $0x940] sm:$0xff]
  %v368 = vld [vmem:[%s1 + $0x948] sm:$0xff]
  %v369 = vld [vmem:[%s1 + $0x950] sm:$0xff]
  %v370 = vld [vmem:[%s1 + $0x958] sm:$0xff]
  %v371 = vld [vmem:[%s1 + $0x960] sm:$0xff]
  %v372 = vld [vmem:[%s1 + $0x968] sm:$0xff]
  %v373 = vld [vmem:[%s1 + $0x970] sm:$0xff]
  %v374 = vld [vmem:[%s1 + $0x978] sm:$0xff]
  %v375 = vld [vmem:[%s1 + $0x980] sm:$0xff]
  %v376 = vld [vmem:[%s1 + $0x988] sm:$0xff]
  %v377 = vld [vmem:[%s1 + $0x990] sm:$0xff]
  %v378 = vld [vmem:[%s1 + $0x998] sm:$0xff]
  %v379 = vld [vmem:[%s1 + $0x9a0] sm:$0xff]
  %v380 = vld [vmem:[%s1 + $0x9a8] sm:$0xff]
  %v381 = vld [vmem:[%s1 + $0x9b0] sm:$0xff]
  %v382 = vld [vmem:[%s1 + $0x9b8] sm:$0xff]
  %v383 = vld [vmem:[%s1 + $0x9c0] sm:$0xff]
  %v384 = vld [vmem:[%s1 + $0x9c8] sm:$0xff]
  %v385 = vld [vmem:[%s1 + $0x9d0] sm:$0xff]
  %v386 = vld [vmem:[%s1 + $0x9d8] sm:$0xff]
  %v387 = vld [vmem:[%s1 + $0x9e0] sm:$0xff]
  %v388 = vld [vmem:[%s1 + $0x9e8] sm:$0xff]
  %v389 = vld [vmem:[%s1 + $0x9f0] sm:$0xff]
  %v390 = vld [vmem:[%s1 + $0x9f8] sm:$0xff]
  %v391 = vld [vmem:[%s1 + $0xa00] sm:$0xff]
  %v392 = vld [vmem:[%s1 + $0xa08] sm:$0xff]
  %v393 = vld [vmem:[%s1 + $0xa10] sm:$0xff]
  %v394 = vld [vmem:[%s1 + $0xa18] sm:$0xff]
  %v395 = vld [vmem:[%s1 + $0xa20] sm:$0xff]
  %v396 = vld [vmem:[%s1 + $0xa28] sm:$0xff]
  %v397 = vld [vmem:[%s1 + $0xa30] sm:$0xff]
  %v398 = vld [vmem:[%s1 + $0xa38] sm:$0xff]
  %v399 = vld [vmem:[%s1 + $0xa40] sm:$0xff]
  %v400 = vld [vmem:[%s1 + $0xa48] sm:$0xff]
  %v401 = vld [vmem:[%s1 + $0xa50] sm:$0xff]
  %v402 = vld [vmem:[%s1 + $0xa58] sm:$0xff]
  %v403 = vld [vmem:[%s1 + $0xa60] sm:$0xff]
  %v404 = vld [vmem:[%s1 + $0xa68] sm:$0xff]
  %v405 = vld [vmem:[%s1 + $0xa70] sm:$0xff]
  %v406 = vld [vmem:[%s1 + $0xa78] sm:$0xff]
  %v407 = vld [vmem:[%s1 + $0xa80] sm:$0xff]
  %v408 = vld [vmem:[%s1 + $0xa88] sm:$0xff]
  %v409 = vld [vmem:[%s1 + $0xa90] sm:$0xff]
  %v410 = vld [vmem:[%s1 + $0xa98] sm:$0xff]
  %v411 = vld [vmem:[%s1 + $0xaa0] sm:$0xff]
  %v412 = vld [vmem:[%s1 + $0xaa8] sm:$0xff]
  %v413 = vld [vmem:[%s1 + $0xab0] sm:$0xff]
  %v414 = vld [vmem:[%s1 + $0xab8] sm:$0xff]
  %v415 = vld [vmem:[%s1 + $0xac0] sm:$0xff]
  %v416 = vld [vmem:[%s1 + $0xac8] sm:$0xff]
  %v417 = vld [vmem:[%s1 + $0xad0] sm:$0xff]
  %v418 = vld [vmem:[%s1 + $0xad8] sm:$0xff]
  %v419 = vld [vmem:[%s1 + $0xae0] sm:$0xff]
  %v420 = vld [vmem:[%s1 + $0xae8] sm:$0xff]
  %v421 = vld [vmem:[%s1 + $0xaf0] sm:$0xff]
  %v422 = vld [vmem:[%s1 + $0xaf8] sm:$0xff]
  %v423 = vld [vmem:[%s1 + $0xb00] sm:$0xff]
  %v424 = vld [vmem:[%s1 + $0xb08] sm:$0xff]
  %v425 = vld [vmem:[%s1 + $0xb10] sm:$0xff]
  %v426 = vld [vmem:[%s1 + $0xb18] sm:$0xff]
  %v427 = vld [vmem:[%s1 + $0xb20] sm:$0xff]
  %v428 = vld [vmem:[%s1 + $0xb28] sm:$0xff]
  %v429 = vld [vmem:[%s1 + $0xb30] sm:$0xff]
  %v430 = vld [vmem:[%s1 + $0xb38] sm:$0xff]
  %v431 = vld [vmem:[%s1 + $0xb40] sm:$0xff]
  %v432 = vld [vmem:[%s1 + $0xb48] sm:$0xff]
  %v433 = vld [vmem:[%s1 + $0xb50] sm:$0xff]
  %v434 = vld [vmem:[%s1 + $0xb58] sm:$0xff]
  %v435 = vld [vmem:[%s1 + $0xb60] sm:$0xff]
  %v436 = vld [vmem:[%s1 + $0xb68] sm:$0xff]
  %v437 = vld [vmem:[%s1 + $0xb70] sm:$0xff]
  %v438 = vld [vmem:[%s1 + $0xb78] sm:$0xff]
  %v439 = vld [vmem:[%s1 + $0xb80] sm:$0xff]
  %v440 = vld [vmem:[%s1 + $0xb88] sm:$0xff]
  %v441 = vld [vmem:[%s1 + $0xb90] sm:$0xff]
  %v442 = vld [vmem:[%s1 + $0xb98] sm:$0xff]
  %v443 = vld [vmem:[%s1 + $0xba0] sm:$0xff]
  %v444 = vld [vmem:[%s1 + $0xba8] sm:$0xff]
  %v445 = vld [vmem:[%s1 + $0xbb0] sm:$0xff]
  %v446 = vld [vmem:[%s1 + $0xbb8] sm:$0xff]
  %v447 = vld [vmem:[%s1 + $0xbc0] sm:$0xff]
  %v448 = vld [vmem:[%s1 + $0xbc8] sm:$0xff]
  %v449 = vld [vmem:[%s1 + $0xbd0] sm:$0xff]
  %v450 = vld [vmem:[%s1 + $0xbd8] sm:$0xff]
  %v451 = vld [vmem:[%s1 + $0xbe0] sm:$0xff]
  %v452 = vld [vmem:[%s1 + $0xbe8] sm:$0xff]
  %v453 = vld [vmem:[%s1 + $0xbf0] sm:$0xff]
  %v454 = vld [vmem:[%s1 + $0xbf8] sm:$0xff]
  %v455 = vld [vmem:[%s1 + $0xc00] sm:$0xff]
  %v456 = vld [vmem:[%s1 + $0xc08] sm:$0xff]
  %v457 = vld [vmem:[%s1 + $0xc10] sm:$0xff]
  %v458 = vld [vmem:[%s1 + $0xc18] sm:$0xff]
  %v459 = vld [vmem:[%s1 + $0xc20] sm:$0xff]
  %v460 = vld [vmem:[%s1 + $0xc28] sm:$0xff]
  %v461 = vld [vmem:[%s1 + $0xc30] sm:$0xff]
  %v462 = vld [vmem:[%s1 + $0xc38] sm:$0xff]
  %v463 = vld [vmem:[%s1 + $0xc40] sm:$0xff]
  %v464 = vld [vmem:[%s1 + $0xc48] sm:$0xff]
  %v465 = vld [vmem:[%s1 + $0xc50] sm:$0xff]
  %v466 = vld [vmem:[%s1 + $0xc58] sm:$0xff]
  %v467 = vld [vmem:[%s1 + $0xc60] sm:$0xff]
  %v468 = vld [vmem:[%s1 + $0xc68] sm:$0xff]
  %v469 = vld [vmem:[%s1 + $0xc70] sm:$0xff]
  %v470 = vld [vmem:[%s1 + $0xc78] sm:$0xff]
  %v471 = vld [vmem:[%s1 + $0xc80] sm:$0xff]
  %v472 = vld [vmem:[%s1 + $0xc88] sm:$0xff]
  %v473 = vld [vmem:[%s1 + $0xc90] sm:$0xff]
  %v474 = vld [vmem:[%s1 + $0xc98] sm:$0xff]
  %v475 = vld [vmem:[%s1 + $0xca0] sm:$0xff]
  %v476 = vld [vmem:[%s1 + $0xca8] sm:$0xff]
  %v477 = vld [vmem:[%s1 + $0xcb0] sm:$0xff]
  %v478 = vld [vmem:[%s1 + $0xcb8] sm:$0xff]
  %v479 = vld [vmem:[%s1 + $0xcc0] sm:$0xff]
  %v480 = vld [vmem:[%s1 + $0xcc8] sm:$0xff]
  %v481 = vld [vmem:[%s1 + $0xcd0] sm:$0xff]
  %v482 = vld [vmem:[%s1 + $0xcd8] sm:$0xff]
  %v483 = vld [vmem:[%s1 + $0xce0] sm:$0xff]
  %v484 = vld [vmem:[%s1 + $0xce8] sm:$0xff]
  %v485 = vld [vmem:[%s1 + $0xcf0] sm:$0xff]
  %v486 = vld [vmem:[%s1 + $0xcf8] sm:$0xff]
  %v487 = vld [vmem:[%s1 + $0xd00] sm:$0xff]
  %v488 = vld [vmem:[%s1 + $0xd08] sm:$0xff]
  %v489 = vld [vmem:[%s1 + $0xd10] sm:$0xff]
  %v490 = vld [vmem:[%s1 + $0xd18] sm:$0xff]
  %v491 = vld [vmem:[%s1 + $0xd20] sm:$0xff]
  %v492 = vld [vmem:[%s1 + $0xd28] sm:$0xff]
  %v493 = vld [vmem:[%s1 + $0xd30] sm:$0xff]
  %v494 = vld [vmem:[%s1 + $0xd38] sm:$0xff]
  %v495 = vld [vmem:[%s1 + $0xd40] sm:$0xff]
  %v496 = vld [vmem:[%s1 + $0xd48] sm:$0xff]
  %v497 = vld [vmem:[%s1 + $0xd50] sm:$0xff]
  %v498 = vld [vmem:[%s1 + $0xd58] sm:$0xff]
  %v499 = vld [vmem:[%s1 + $0xd60] sm:$0xff]
  %v500 = vld [vmem:[%s1 + $0xd68] sm:$0xff]
  %v501 = vld [vmem:[%s1 + $0xd70] sm:$0xff]
  %v502 = vld [vmem:[%s1 + $0xd78] sm:$0xff]
  %v503 = vld [vmem:[%s1 + $0xd80] sm:$0xff]
  %v504 = vld [vmem:[%s1 + $0xd88] sm:$0xff]
  %v505 = vld [vmem:[%s1 + $0xd90] sm:$0xff]
  %v506 = vld [vmem:[%s1 + $0xd98] sm:$0xff]
  %v507 = vld [vmem:[%s1 + $0xda0] sm:$0xff]
  %v508 = vld [vmem:[%s1 + $0xda8] sm:$0xff]
  %v509 = vld [vmem:[%s1 + $0xdb0] sm:$0xff]
  %v510 = vld [vmem:[%s1 + $0xdb8] sm:$0xff]
  %v511 = vld [vmem:[%s1 + $0xdc0] sm:$0xff]
  %v512 = vld [vmem:[%s1 + $0xdc8] sm:$0xff]
  %v513 = vld [vmem:[%s1 + $0xdd0] sm:$0xff]
  %v514 = vld [vmem:[%s1 + $0xdd8] sm:$0xff]
  %v515 = vld [vmem:[%s1 + $0xde0] sm:$0xff]
  %v516 = vld [vmem:[%s1 + $0xde8] sm:$0xff]
  %v517 = vld [vmem:[%s1 + $0xdf0] sm:$0xff]
  %v518 = vld [vmem:[%s1 + $0xdf8] sm:$0xff]
  %v519 = vld [vmem:[%s1 + $0xe00] sm:$0xff]
  %v520 = vld [vmem:[%s1 + $0xe08] sm:$0xff]
  %v521 = vld [vmem:[%s1 + $0xe10] sm:$0xff]
  %v522 = vld [vmem:[%s1 + $0xe18] sm:$0xff]
  %v523 = vld [vmem:[%s1 + $0xe20] sm:$0xff]
  %v524 = vld [vmem:[%s1 + $0xe28] sm:$0xff]
  %v525 = vld [vmem:[%s1 + $0xe30] sm:$0xff]
  %v526 = vld [vmem:[%s1 + $0xe38] sm:$0xff]
  %v527 = vld [vmem:[%s1 + $0xe40] sm:$0xff]
  %v528 = vld [vmem:[%s1 + $0xe48] sm:$0xff]
  %v529 = vld [vmem:[%s1 + $0xe50] sm:$0xff]
  %v530 = vld [vmem:[%s1 + $0xe58] sm:$0xff]
  %v531 = vld [vmem:[%s1 + $0xe60] sm:$0xff]
  %v532 = vld [vmem:[%s1 + $0xe68] sm:$0xff]
  %v533 = vld [vmem:[%s1 + $0xe70] sm:$0xff]
  %v534 = vld [vmem:[%s1 + $0xe78] sm:$0xff]
  %v535 = vld [vmem:[%s1 + $0xe80] sm:$0xff]
  %v536 = vld [vmem:[%s1 + $0xe88] sm:$0xff]
  %v537 = vld [vmem:[%s1 + $0xe90] sm:$0xff]
  %v538 = vld [vmem:[%s1 + $0xe98] sm:$0xff]
  %v539 = vld [vmem:[%s1 + $0xea0] sm:$0xff]
  %v540 = vld [vmem:[%s1 + $0xea8] sm:$0xff]
  %v541 = vld [vmem:[%s1 + $0xeb0] sm:$0xff]
  %v542 = vld [vmem:[%s1 + $0xeb8] sm:$0xff]
  %v543 = vld [vmem:[%s1 + $0xec0] sm:$0xff]
  %v544 = vld [vmem:[%s1 + $0xec8] sm:$0xff]
  %v545 = vld [vmem:[%s1 + $0xed0] sm:$0xff]
  %v546 = vld [vmem:[%s1 + $0xed8] sm:$0xff]
  %v547 = vld [vmem:[%s1 + $0xee0] sm:$0xff]
  %v548 = vld [vmem:[%s1 + $0xee8] sm:$0xff]
  %v549 = vld [vmem:[%s1 + $0xef0] sm:$0xff]
  %v550 = vld [vmem:[%s1 + $0xef8] sm:$0xff]
  %v551 = vld [vmem:[%s1 + $0xf00] sm:$0xff]
  %v552 = vld [vmem:[%s1 + $0xf08] sm:$0xff]
  %v553 = vld [vmem:[%s1 + $0xf10] sm:$0xff]
  %v554 = vld [vmem:[%s1 + $0xf18] sm:$0xff]
  %v555 = vld [vmem:[%s1 + $0xf20] sm:$0xff]
  %v556 = vld [vmem:[%s1 + $0xf28] sm:$0xff]
  %v557 = vld [vmem:[%s1 + $0xf30] sm:$0xff]
  %v558 = vld [vmem:[%s1 + $0xf38] sm:$0xff]
  %v559 = vld [vmem:[%s1 + $0xf40] sm:$0xff]
  %v560 = vld [vmem:[%s1 + $0xf48] sm:$0xff]
  %v561 = vld [vmem:[%s1 + $0xf50] sm:$0xff]
  %v562 = vld [vmem:[%s1 + $0xf58] sm:$0xff]
  %v563 = vld [vmem:[%s1 + $0xf60] sm:$0xff]
  %v564 = vld [vmem:[%s1 + $0xf68] sm:$0xff]
  %v565 = vld [vmem:[%s1 + $0xf70] sm:$0xff]
  %v566 = vld [vmem:[%s1 + $0xf78] sm:$0xff]
  %v567 = vld [vmem:[%s1 + $0xf80] sm:$0xff]
  %v568 = vld [vmem:[%s1 + $0xf88] sm:$0xff]
  %v569 = vld [vmem:[%s1 + $0xf90] sm:$0xff]
  %v570 = vld [vmem:[%s1 + $0xf98] sm:$0xff]
  %v571 = vld [vmem:[%s1 + $0xfa0] sm:$0xff]
  %v572 = vld [vmem:[%s1 + $0xfa8] sm:$0xff]
  %v573 = vld [vmem:[%s1 + $0xfb0] sm:$0xff]
  %v574 = vld [vmem:[%s1 + $0xfb8] sm:$0xff]
  %v575 = vld [vmem:[%s1 + $0xfc0] sm:$0xff]
  %v576 = vld [vmem:[%s1 + $0xfc8] sm:$0xff]
  %v577 = vld [vmem:[%s1 + $0xfd0] sm:$0xff]
  %v578 = vld [vmem:[%s1 + $0xfd8] sm:$0xff]
  %v579 = vld [vmem:[%s1 + $0xfe0] sm:$0xff]
  %v580 = vld [vmem:[%s1 + $0xfe8] sm:$0xff]
  %v581 = vld [vmem:[%s1 + $0xff0] sm:$0xff]
  %v582 = vld [vmem:[%s1 + $0xff8] sm:$0xff]
  %v583 = vld [vmem:[%s1 + $0x1000] sm:$0xff]
  %v584 = vld [vmem:[%s1 + $0x1008] sm:$0xff]
  %v585 = vld [vmem:[%s1 + $0x1010] sm:$0xff]
  %v586 = vld [vmem:[%s1 + $0x1018] sm:$0xff]
  %v587 = vld [vmem:[%s1 + $0x1020] sm:$0xff]
  %v588 = vld [vmem:[%s1 + $0x1028] sm:$0xff]
  %v589 = vld [vmem:[%s1 + $0x1030] sm:$0xff]
  %v590 = vld [vmem:[%s1 + $0x1038] sm:$0xff]
  %v591 = vld [vmem:[%s1 + $0x1040] sm:$0xff]
  %v592 = vld [vmem:[%s1 + $0x1048] sm:$0xff]
  %v593 = vld [vmem:[%s1 + $0x1050] sm:$0xff]
  %v594 = vld [vmem:[%s1 + $0x1058] sm:$0xff]
  %v595 = vld [vmem:[%s1 + $0x1060] sm:$0xff]
  %v596 = vld [vmem:[%s1 + $0x1068] sm:$0xff]
  %v597 = vld [vmem:[%s1 + $0x1070] sm:$0xff]
  %v598 = vld [vmem:[%s1 + $0x1078] sm:$0xff]
  %v599 = vld [vmem:[%s1 + $0x1080] sm:$0xff]
  %v600 = vld [vmem:[%s1 + $0x1088] sm:$0xff]
  %v601 = vld [vmem:[%s1 + $0x1090] sm:$0xff]
  %v602 = vld [vmem:[%s1 + $0x1098] sm:$0xff]
  %v603 = vld [vmem:[%s1 + $0x10a0] sm:$0xff]
  %v604 = vld [vmem:[%s1 + $0x10a8] sm:$0xff]
  %v605 = vld [vmem:[%s1 + $0x10b0] sm:$0xff]
  %v606 = vld [vmem:[%s1 + $0x10b8] sm:$0xff]
  %v607 = vld [vmem:[%s1 + $0x10c0] sm:$0xff]
  %v608 = vld [vmem:[%s1 + $0x10c8] sm:$0xff]
  %v609 = vld [vmem:[%s1 + $0x10d0] sm:$0xff]
  %v610 = vld [vmem:[%s1 + $0x10d8] sm:$0xff]
  %v611 = vld [vmem:[%s1 + $0x10e0] sm:$0xff]
  %v612 = vld [vmem:[%s1 + $0x10e8] sm:$0xff]
  %v613 = vld [vmem:[%s1 + $0x10f0] sm:$0xff]
  %v614 = vld [vmem:[%s1 + $0x10f8] sm:$0xff]
  %v615 = vld [vmem:[%s1 + $0x1100] sm:$0xff]
  %v616 = vld [vmem:[%s1 + $0x1108] sm:$0xff]
  %v617 = vld [vmem:[%s1 + $0x1110] sm:$0xff]
  %v618 = vld [vmem:[%s1 + $0x1118] sm:$0xff]
  %v619 = vld [vmem:[%s1 + $0x1120] sm:$0xff]
  %v620 = vld [vmem:[%s1 + $0x1128] sm:$0xff]
  %v621 = vld [vmem:[%s1 + $0x1130] sm:$0xff]
  %v622 = vld [vmem:[%s1 + $0x1138] sm:$0xff]
  %v623 = vld [vmem:[%s1 + $0x1140] sm:$0xff]
  %v624 = vld [vmem:[%s1 + $0x1148] sm:$0xff]
  %v625 = vld [vmem:[%s1 + $0x1150] sm:$0xff]
  %v626 = vld [vmem:[%s1 + $0x1158] sm:$0xff]
  %v627 = vld [vmem:[%s1 + $0x1160] sm:$0xff]
  %v628 = vld [vmem:[%s1 + $0x1168] sm:$0xff]
  %v629 = vld [vmem:[%s1 + $0x1170] sm:$0xff]
  %v630 = vld [vmem:[%s1 + $0x1178] sm:$0xff]
  %v631 = vld [vmem:[%s1 + $0x1180] sm:$0xff]
  %v632 = vld [vmem:[%s1 + $0x1188] sm:$0xff]
  %v633 = vld [vmem:[%s1 + $0x1190] sm:$0xff]
  %v634 = vld [vmem:[%s1 + $0x1198] sm:$0xff]
  %v635 = vld [vmem:[%s1 + $0x11a0] sm:$0xff]
  %v636 = vld [vmem:[%s1 + $0x11a8] sm:$0xff]
  %v637 = vld [vmem:[%s1 + $0x11b0] sm:$0xff]
  %v638 = vld [vmem:[%s1 + $0x11b8] sm:$0xff]
  %v639 = vld [vmem:[%s1 + $0x11c0] sm:$0xff]
  %v640 = vld [vmem:[%s1 + $0x11c8] sm:$0xff]
  %v641 = vld [vmem:[%s1 + $0x11d0] sm:$0xff]
  %v642 = vld [vmem:[%s1 + $0x11d8] sm:$0xff]
  %v643 = vld [vmem:[%s1 + $0x11e0] sm:$0xff]
  %v644 = vld [vmem:[%s1 + $0x11e8] sm:$0xff]
  %v645 = vld [vmem:[%s1 + $0x11f0] sm:$0xff]
  %v646 = vld [vmem:[%s1 + $0x11f8] sm:$0xff]
  %v647 = vld [vmem:[%s1 + $0x1200] sm:$0xff]
  %v648 = vld [vmem:[%s1 + $0x1208] sm:$0xff]
  %v649 = vld [vmem:[%s1 + $0x1210] sm:$0xff]
  %v650 = vld [vmem:[%s1 + $0x1218] sm:$0xff]
  %v651 = vld [vmem:[%s1 + $0x1220] sm:$0xff]
  %v652 = vld [vmem:[%s1 + $0x1228] sm:$0xff]
  %v653 = vld [vmem:[%s1 + $0x1230] sm:$0xff]
  %v654 = vld [vmem:[%s1 + $0x1238] sm:$0xff]
  %v655 = vld [vmem:[%s1 + $0x1240] sm:$0xff]
  %v656 = vld [vmem:[%s1 + $0x1248] sm:$0xff]
  %v657 = vld [vmem:[%s1 + $0x1250] sm:$0xff]
  %v658 = vld [vmem:[%s1 + $0x1258] sm:$0xff]
  %v659 = vld [vmem:[%s1 + $0x1260] sm:$0xff]
  %v660 = vld [vmem:[%s1 + $0x1268] sm:$0xff]
  %v661 = vld [vmem:[%s1 + $0x1270] sm:$0xff]
  %v662 = vld [vmem:[%s1 + $0x1278] sm:$0xff]
  %v663 = vld [vmem:[%s1 + $0x1280] sm:$0xff]
  %v664 = vld [vmem:[%s1 + $0x1288] sm:$0xff]
  %v665 = vld [vmem:[%s1 + $0x1290] sm:$0xff]
  %v666 = vld [vmem:[%s1 + $0x1298] sm:$0xff]
  %v667 = vld [vmem:[%s1 + $0x12a0] sm:$0xff]
  %v668 = vld [vmem:[%s1 + $0x12a8] sm:$0xff]
  %v669 = vld [vmem:[%s1 + $0x12b0] sm:$0xff]
  %v670 = vld [vmem:[%s1 + $0x12b8] sm:$0xff]
  %v671 = vld [vmem:[%s1 + $0x12c0] sm:$0xff]
  %v672 = vld [vmem:[%s1 + $0x12c8] sm:$0xff]
  %v673 = vld [vmem:[%s1 + $0x12d0] sm:$0xff]
  %v674 = vld [vmem:[%s1 + $0x12d8] sm:$0xff]
  %v675 = vld [vmem:[%s1 + $0x12e0] sm:$0xff]
  %v676 = vld [vmem:[%s1 + $0x12e8] sm:$0xff]
  %v677 = vld [vmem:[%s1 + $0x12f0] sm:$0xff]
  %v678 = vld [vmem:[%s1 + $0x12f8] sm:$0xff]
  %v679 = vld [vmem:[%s1 + $0x1300] sm:$0xff]
  %v680 = vld [vmem:[%s1 + $0x1308] sm:$0xff]
  %v681 = vld [vmem:[%s1 + $0x1310] sm:$0xff]
  %v682 = vld [vmem:[%s1 + $0x1318] sm:$0xff]
  %v683 = vld [vmem:[%s1 + $0x1320] sm:$0xff]
  %v684 = vld [vmem:[%s1 + $0x1328] sm:$0xff]
  %v685 = vld [vmem:[%s1 + $0x1330] sm:$0xff]
  %v686 = vld [vmem:[%s1 + $0x1338] sm:$0xff]
  %v687 = vld [vmem:[%s1 + $0x1340] sm:$0xff]
  %v688 = vld [vmem:[%s1 + $0x1348] sm:$0xff]
  %v689 = vld [vmem:[%s1 + $0x1350] sm:$0xff]
  %v690 = vld [vmem:[%s1 + $0x1358] sm:$0xff]
  %v691 = vld [vmem:[%s1 + $0x1360] sm:$0xff]
  %v692 = vld [vmem:[%s1 + $0x1368] sm:$0xff]
  %v693 = vld [vmem:[%s1 + $0x1370] sm:$0xff]
  %v694 = vld [vmem:[%s1 + $0x1378] sm:$0xff]
  %v695 = vld [vmem:[%s1 + $0x1380] sm:$0xff]
  %v696 = vld [vmem:[%s1 + $0x1388] sm:$0xff]
  %v697 = vld [vmem:[%s1 + $0x1390] sm:$0xff]
  %v698 = vld [vmem:[%s1 + $0x1398] sm:$0xff]
  %v699 = vld [vmem:[%s1 + $0x13a0] sm:$0xff]
  %v700 = vld [vmem:[%s1 + $0x13a8] sm:$0xff]
  %v701 = vld [vmem:[%s1 + $0x13b0] sm:$0xff]
  %v702 = vld [vmem:[%s1 + $0x13b8] sm:$0xff]
  %v703 = vld [vmem:[%s1 + $0x13c0] sm:$0xff]
  %v704 = vld [vmem:[%s1 + $0x13c8] sm:$0xff]
  %v705 = vld [vmem:[%s1 + $0x13d0] sm:$0xff]
  %v706 = vld [vmem:[%s1 + $0x13d8] sm:$0xff]
  %v707 = vld [vmem:[%s1 + $0x13e0] sm:$0xff]
  %v708 = vld [vmem:[%s1 + $0x13e8] sm:$0xff]
  %v709 = vld [vmem:[%s1 + $0x13f0] sm:$0xff]
  %v710 = vld [vmem:[%s1 + $0x13f8] sm:$0xff]
  %v711 = vld [vmem:[%s1 + $0x1400] sm:$0xff]
  %v712 = vld [vmem:[%s1 + $0x1408] sm:$0xff]
  %v713 = vld [vmem:[%s1 + $0x1410] sm:$0xff]
  %v714 = vld [vmem:[%s1 + $0x1418] sm:$0xff]
  %v715 = vld [vmem:[%s1 + $0x1420] sm:$0xff]
  %v716 = vld [vmem:[%s1 + $0x1428] sm:$0xff]
  %v717 = vld [vmem:[%s1 + $0x1430] sm:$0xff]
  %v718 = vld [vmem:[%s1 + $0x1438] sm:$0xff]
  %v719 = vld [vmem:[%s1 + $0x1440] sm:$0xff]
  %v720 = vld [vmem:[%s1 + $0x1448] sm:$0xff]
  %v721 = vld [vmem:[%s1 + $0x1450] sm:$0xff]
  %v722 = vld [vmem:[%s1 + $0x1458] sm:$0xff]
  %v723 = vld [vmem:[%s1 + $0x1460] sm:$0xff]
  %v724 = vld [vmem:[%s1 + $0x1468] sm:$0xff]
  %v725 = vld [vmem:[%s1 + $0x1470] sm:$0xff]
  %v726 = vld [vmem:[%s1 + $0x1478] sm:$0xff]
  %v727 = vld [vmem:[%s1 + $0x1480] sm:$0xff]
  %v728 = vld [vmem:[%s1 + $0x1488] sm:$0xff]
  %v729 = vld [vmem:[%s1 + $0x1490] sm:$0xff]
  %v730 = vld [vmem:[%s1 + $0x1498] sm:$0xff]
  %v731 = vld [vmem:[%s1 + $0x14a0] sm:$0xff]
  %v732 = vld [vmem:[%s1 + $0x14a8] sm:$0xff]
  %v733 = vld [vmem:[%s1 + $0x14b0] sm:$0xff]
  %v734 = vld [vmem:[%s1 + $0x14b8] sm:$0xff]
  %v735 = vld [vmem:[%s1 + $0x14c0] sm:$0xff]
  %v736 = vld [vmem:[%s1 + $0x14c8] sm:$0xff]
  %v737 = vld [vmem:[%s1 + $0x14d0] sm:$0xff]
  %v738 = vld [vmem:[%s1 + $0x14d8] sm:$0xff]
  %v739 = vld [vmem:[%s1 + $0x14e0] sm:$0xff]
  %v740 = vld [vmem:[%s1 + $0x14e8] sm:$0xff]
  %v741 = vld [vmem:[%s1 + $0x14f0] sm:$0xff]
  %v742 = vld [vmem:[%s1 + $0x14f8] sm:$0xff]
  %v743 = vld [vmem:[%s1 + $0x1500] sm:$0xff]
  %v744 = vld [vmem:[%s1 + $0x1508] sm:$0xff]
  %v745 = vld [vmem:[%s1 + $0x1510] sm:$0xff]
  %v746 = vld [vmem:[%s1 + $0x1518] sm:$0xff]
  %v747 = vld [vmem:[%s1 + $0x1520] sm:$0xff]
  %v748 = vld [vmem:[%s1 + $0x1528] sm:$0xff]
  %v749 = vld [vmem:[%s1 + $0x1530] sm:$0xff]
  %v750 = vld [vmem:[%s1 + $0x1538] sm:$0xff]
  %v751 = vld [vmem:[%s1 + $0x1540] sm:$0xff]
  %v752 = vld [vmem:[%s1 + $0x1548] sm:$0xff]
  %v753 = vld [vmem:[%s1 + $0x1550] sm:$0xff]
  %v754 = vld [vmem:[%s1 + $0x1558] sm:$0xff]
  %v755 = vld [vmem:[%s1 + $0x1560] sm:$0xff]
  %v756 = vld [vmem:[%s1 + $0x1568] sm:$0xff]
  %v757 = vld [vmem:[%s1 + $0x1570] sm:$0xff]
  %v758 = vld [vmem:[%s1 + $0x1578] sm:$0xff]
  %v759 = vld [vmem:[%s1 + $0x1580] sm:$0xff]
  %v760 = vld [vmem:[%s1 + $0x1588] sm:$0xff]
  %v761 = vld [vmem:[%s1 + $0x1590] sm:$0xff]
  %v762 = vld [vmem:[%s1 + $0x1598] sm:$0xff]
  %v763 = vld [vmem:[%s1 + $0x15a0] sm:$0xff]
  %v764 = vld [vmem:[%s1 + $0x15a8] sm:$0xff]
  %v765 = vld [vmem:[%s1 + $0x15b0] sm:$0xff]
  %v766 = vld [vmem:[%s1 + $0x15b8] sm:$0xff]
  %v767 = vld [vmem:[%s1 + $0x15c0] sm:$0xff]
  %v768 = vld [vmem:[%s1 + $0x15c8] sm:$0xff]
  %v769 = vld [vmem:[%s1 + $0x15d0] sm:$0xff]
  %v770 = vld [vmem:[%s1 + $0x15d8] sm:$0xff]
  %v771 = vld [vmem:[%s1 + $0x15e0] sm:$0xff]
  %v772 = vld [vmem:[%s1 + $0x15e8] sm:$0xff]
  %v773 = vld [vmem:[%s1 + $0x15f0] sm:$0xff]
  %v774 = vld [vmem:[%s1 + $0x15f8] sm:$0xff]
  %v775 = vld [vmem:[%s1 + $0x1600] sm:$0xff]
  %v776 = vld [vmem:[%s1 + $0x1608] sm:$0xff]
  %v777 = vld [vmem:[%s1 + $0x1610] sm:$0xff]
  %v778 = vld [vmem:[%s1 + $0x1618] sm:$0xff]
  %v779 = vld [vmem:[%s1 + $0x1620] sm:$0xff]
  %v780 = vld [vmem:[%s1 + $0x1628] sm:$0xff]
  %v781 = vld [vmem:[%s1 + $0x1630] sm:$0xff]
  %v782 = vld [vmem:[%s1 + $0x1638] sm:$0xff]
  %v783 = vld [vmem:[%s1 + $0x1640] sm:$0xff]
  %v784 = vld [vmem:[%s1 + $0x1648] sm:$0xff]
  %v785 = vld [vmem:[%s1 + $0x1650] sm:$0xff]
  %v786 = vld [vmem:[%s1 + $0x1658] sm:$0xff]
  %v787 = vld [vmem:[%s1 + $0x1660] sm:$0xff]
  %v788 = vld [vmem:[%s1 + $0x1668] sm:$0xff]
  %v789 = vld [vmem:[%s1 + $0x1670] sm:$0xff]
  %v790 = vld [vmem:[%s1 + $0x1678] sm:$0xff]
  %v791 = vld [vmem:[%s1 + $0x1680] sm:$0xff]
  %v792 = vld [vmem:[%s1 + $0x1688] sm:$0xff]
  %v793 = vld [vmem:[%s1 + $0x1690] sm:$0xff]
  %v794 = vld [vmem:[%s1 + $0x1698] sm:$0xff]
  %v795 = vld [vmem:[%s1 + $0x16a0] sm:$0xff]
  %v796 = vld [vmem:[%s1 + $0x16a8] sm:$0xff]
  %v797 = vld [vmem:[%s1 + $0x16b0] sm:$0xff]
  %v798 = vld [vmem:[%s1 + $0x16b8] sm:$0xff]
  %v799 = vld [vmem:[%s1 + $0x16c0] sm:$0xff]
  %v800 = vld [vmem:[%s1 + $0x16c8] sm:$0xff]
  %v801 = vld [vmem:[%s1 + $0x16d0] sm:$0xff]
  %v802 = vld [vmem:[%s1 + $0x16d8] sm:$0xff]
  %v803 = vld [vmem:[%s1 + $0x16e0] sm:$0xff]
  %v804 = vld [vmem:[%s1 + $0x16e8] sm:$0xff]
  %v805 = vld [vmem:[%s1 + $0x16f0] sm:$0xff]
  %v806 = vld [vmem:[%s1 + $0x16f8] sm:$0xff]
  %v807 = vld [vmem:[%s1 + $0x1700] sm:$0xff]
  %v808 = vld [vmem:[%s1 + $0x1708] sm:$0xff]
  %v809 = vld [vmem:[%s1 + $0x1710] sm:$0xff]
  %v810 = vld [vmem:[%s1 + $0x1718] sm:$0xff]
  %v811 = vld [vmem:[%s1 + $0x1720] sm:$0xff]
  %v812 = vld [vmem:[%s1 + $0x1728] sm:$0xff]
  %v813 = vld [vmem:[%s1 + $0x1730] sm:$0xff]
  %v814 = vld [vmem:[%s1 + $0x1738] sm:$0xff]
  %v815 = vld [vmem:[%s1 + $0x1740] sm:$0xff]
  %v816 = vld [vmem:[%s1 + $0x1748] sm:$0xff]
  %v817 = vld [vmem:[%s1 + $0x1750] sm:$0xff]
  %v818 = vld [vmem:[%s1 + $0x1758] sm:$0xff]
  %v819 = vld [vmem:[%s1 + $0x1760] sm:$0xff]
  %v820 = vld [vmem:[%s1 + $0x1768] sm:$0xff]
  %v821 = vld [vmem:[%s1 + $0x1770] sm:$0xff]
  %v822 = vld [vmem:[%s1 + $0x1778] sm:$0xff]
  %v823 = vld [vmem:[%s1 + $0x1780] sm:$0xff]
  %v824 = vld [vmem:[%s1 + $0x1788] sm:$0xff]
  %v825 = vld [vmem:[%s1 + $0x1790] sm:$0xff]
  %v826 = vld [vmem:[%s1 + $0x1798] sm:$0xff]
  %v827 = vld [vmem:[%s1 + $0x17a0] sm:$0xff]
  %v828 = vld [vmem:[%s1 + $0x17a8] sm:$0xff]
  %v829 = vld [vmem:[%s1 + $0x17b0] sm:$0xff]
  %v830 = vld [vmem:[%s1 + $0x17b8] sm:$0xff]
  %v831 = vld [vmem:[%s1 + $0x17c0] sm:$0xff]
  %v832 = vld [vmem:[%s1 + $0x17c8] sm:$0xff]
  %v833 = vld [vmem:[%s1 + $0x17d0] sm:$0xff]
  %v834 = vld [vmem:[%s1 + $0x17d8] sm:$0xff]
  %v835 = vld [vmem:[%s1 + $0x17e0] sm:$0xff]
  %v836 = vld [vmem:[%s1 + $0x17e8] sm:$0xff]
  %v837 = vld [vmem:[%s1 + $0x17f0] sm:$0xff]
  %v838 = vld [vmem:[%s1 + $0x17f8] sm:$0xff]
  %v839 = vld [vmem:[%s1 + $0x1800] sm:$0xff]
  %v840 = vld [vmem:[%s1 + $0x1808] sm:$0xff]
  %v841 = vld [vmem:[%s1 + $0x1810] sm:$0xff]
  %v842 = vld [vmem:[%s1 + $0x1818] sm:$0xff]
  %v843 = vld [vmem:[%s1 + $0x1820] sm:$0xff]
  %v844 = vld [vmem:[%s1 + $0x1828] sm:$0xff]
  %v845 = vld [vmem:[%s1 + $0x1830] sm:$0xff]
  %v846 = vld [vmem:[%s1 + $0x1838] sm:$0xff]
  %v847 = vld [vmem:[%s1 + $0x1840] sm:$0xff]
  %v848 = vld [vmem:[%s1 + $0x1848] sm:$0xff]
  %v849 = vld [vmem:[%s1 + $0x1850] sm:$0xff]
  %v850 = vld [vmem:[%s1 + $0x1858] sm:$0xff]
  %v851 = vld [vmem:[%s1 + $0x1860] sm:$0xff]
  %v852 = vld [vmem:[%s1 + $0x1868] sm:$0xff]
  %v853 = vld [vmem:[%s1 + $0x1870] sm:$0xff]
  %v854 = vld [vmem:[%s1 + $0x1878] sm:$0xff]
  %v855 = vld [vmem:[%s2] sm:$0xf]
  %v857 = vlaneseq
  %v858 = vshrl.u32 %v857, 7
  %v859 = vsub.s32 0, %v858
  %v860 = vrot.slane %v855, %v859
  %v861 = vlaneseq
  %v862 = vshrl.u32 %v861, 7
  %v863 = vsub.s32 1, %v862
  %v864 = vrot.slane %v855, %v863
  %v865 = vlaneseq
  %v866 = vshrl.u32 %v865, 7
  %v867 = vsub.s32 2, %v866
  %v868 = vrot.slane %v855, %v867
  %v869 = vlaneseq
  %v870 = vshrl.u32 %v869, 7
  %v871 = vsub.s32 3, %v870
  %v872 = vrot.slane %v855, %v871
  %v1661 = vunpack.c.l.b16 %v71
  %v1662 = vunpack.c.h.b16 %v71
  %v1663 = vunpack.c.l.b16 %v72
  %v1664 = vunpack.c.h.b16 %v72
  %v1665 = vunpack.c.l.b16 %v73
  %v1666 = vunpack.c.h.b16 %v73
  %v1667 = vunpack.c.l.b16 %v74
  %v1668 = vunpack.c.h.b16 %v74
  %v1669 = vunpack.c.l.b16 %v75
  %v1670 = vunpack.c.h.b16 %v75
  %v1671 = vunpack.c.l.b16 %v76
  %v1672 = vunpack.c.h.b16 %v76
  %v1673 = vunpack.c.l.b16 %v77
  %v1674 = vunpack.c.h.b16 %v77
  %v1675 = vunpack.c.l.b16 %v78
  %v1676 = vunpack.c.h.b16 %v78
  %v1677 = vunpack.c.l.b16 %v79
  %v1678 = vunpack.c.h.b16 %v79
  %v1679 = vunpack.c.l.b16 %v80
  %v1680 = vunpack.c.h.b16 %v80
  %v1681 = vunpack.c.l.b16 %v81
  %v1682 = vunpack.c.h.b16 %v81
  %v1683 = vunpack.c.l.b16 %v82
  %v1684 = vunpack.c.h.b16 %v82
  %v1685 = vunpack.c.l.b16 %v83
  %v1686 = vunpack.c.h.b16 %v83
  %v1687 = vunpack.c.l.b16 %v84
  %v1688 = vunpack.c.h.b16 %v84
  %v1689 = vunpack.c.l.b16 %v85
  %v1690 = vunpack.c.h.b16 %v85
  %v1691 = vunpack.c.l.b16 %v86
  %v1692 = vunpack.c.h.b16 %v86
  %v1693 = vunpack.c.l.b16 %v87
  %v1694 = vunpack.c.h.b16 %v87
  %v1695 = vunpack.c.l.b16 %v88
  %v1696 = vunpack.c.h.b16 %v88
  %v1697 = vunpack.c.l.b16 %v89
  %v1698 = vunpack.c.h.b16 %v89
  %v1699 = vunpack.c.l.b16 %v90
  %v1700 = vunpack.c.h.b16 %v90
  %v1701 = vunpack.c.l.b16 %v91
  %v1702 = vunpack.c.h.b16 %v91
  %v1703 = vunpack.c.l.b16 %v92
  %v1704 = vunpack.c.h.b16 %v92
  %v1705 = vunpack.c.l.b16 %v93
  %v1706 = vunpack.c.h.b16 %v93
  %v1707 = vunpack.c.l.b16 %v94
  %v1708 = vunpack.c.h.b16 %v94
  %v1709 = vunpack.c.l.b16 %v95
  %v1710 = vunpack.c.h.b16 %v95
  %v1711 = vunpack.c.l.b16 %v96
  %v1712 = vunpack.c.h.b16 %v96
  %v1713 = vunpack.c.l.b16 %v97
  %v1714 = vunpack.c.h.b16 %v97
  %v1715 = vunpack.c.l.b16 %v98
  %v1716 = vunpack.c.h.b16 %v98
  %v1717 = vunpack.c.l.b16 %v99
  %v1718 = vunpack.c.h.b16 %v99
  %v1719 = vunpack.c.l.b16 %v100
  %v1720 = vunpack.c.h.b16 %v100
  %v1721 = vunpack.c.l.b16 %v101
  %v1722 = vunpack.c.h.b16 %v101
  %v1723 = vunpack.c.l.b16 %v102
  %v1724 = vunpack.c.h.b16 %v102
  %v1725 = vunpack.c.l.b16 %v103
  %v1726 = vunpack.c.h.b16 %v103
  %v1727 = vunpack.c.l.b16 %v104
  %v1728 = vunpack.c.h.b16 %v104
  %v1729 = vunpack.c.l.b16 %v105
  %v1730 = vunpack.c.h.b16 %v105
  %v1731 = vunpack.c.l.b16 %v106
  %v1732 = vunpack.c.h.b16 %v106
  %v1733 = vunpack.c.l.b16 %v107
  %v1734 = vunpack.c.h.b16 %v107
  %v1735 = vunpack.c.l.b16 %v108
  %v1736 = vunpack.c.h.b16 %v108
  %v1737 = vunpack.c.l.b16 %v109
  %v1738 = vunpack.c.h.b16 %v109
  %v1739 = vunpack.c.l.b16 %v110
  %v1740 = vunpack.c.h.b16 %v110
  %v1741 = vunpack.c.l.b16 %v111
  %v1742 = vunpack.c.h.b16 %v111
  %v1743 = vunpack.c.l.b16 %v112
  %v1744 = vunpack.c.h.b16 %v112
  %v1745 = vunpack.c.l.b16 %v113
  %v1746 = vunpack.c.h.b16 %v113
  %v1747 = vunpack.c.l.b16 %v114
  %v1748 = vunpack.c.h.b16 %v114
  %v1749 = vunpack.c.l.b16 %v115
  %v1750 = vunpack.c.h.b16 %v115
  %v1751 = vunpack.c.l.b16 %v116
  %v1752 = vunpack.c.h.b16 %v116
  %v1753 = vunpack.c.l.b16 %v117
  %v1754 = vunpack.c.h.b16 %v117
  %v1755 = vunpack.c.l.b16 %v118
  %v1756 = vunpack.c.h.b16 %v118
  %v1757 = vunpack.c.l.b16 %v119
  %v1758 = vunpack.c.h.b16 %v119
  %v1759 = vunpack.c.l.b16 %v120
  %v1760 = vunpack.c.h.b16 %v120
  %v1761 = vunpack.c.l.b16 %v121
  %v1762 = vunpack.c.h.b16 %v121
  %v1763 = vunpack.c.l.b16 %v122
  %v1764 = vunpack.c.h.b16 %v122
  %v1765 = vunpack.c.l.b16 %v123
  %v1766 = vunpack.c.h.b16 %v123
  %v1767 = vunpack.c.l.b16 %v124
  %v1768 = vunpack.c.h.b16 %v124
  %v1769 = vunpack.c.l.b16 %v125
  %v1770 = vunpack.c.h.b16 %v125
  %v1771 = vunpack.c.l.b16 %v126
  %v1772 = vunpack.c.h.b16 %v126
  %v1773 = vunpack.c.l.b16 %v127
  %v1774 = vunpack.c.h.b16 %v127
  %v1775 = vunpack.c.l.b16 %v128
  %v1776 = vunpack.c.h.b16 %v128
  %v1777 = vunpack.c.l.b16 %v129
  %v1778 = vunpack.c.h.b16 %v129
  %v1779 = vunpack.c.l.b16 %v130
  %v1780 = vunpack.c.h.b16 %v130
  %v1781 = vunpack.c.l.b16 %v131
  %v1782 = vunpack.c.h.b16 %v131
  %v1783 = vunpack.c.l.b16 %v132
  %v1784 = vunpack.c.h.b16 %v132
  %v1785 = vunpack.c.l.b16 %v133
  %v1786 = vunpack.c.h.b16 %v133
  %v1787 = vunpack.c.l.b16 %v134
  %v1788 = vunpack.c.h.b16 %v134
  %v1789 = vunpack.c.l.b16 %v135
  %v1790 = vunpack.c.h.b16 %v135
  %v1791 = vunpack.c.l.b16 %v136
  %v1792 = vunpack.c.h.b16 %v136
  %v1793 = vunpack.c.l.b16 %v137
  %v1794 = vunpack.c.h.b16 %v137
  %v1795 = vunpack.c.l.b16 %v138
  %v1796 = vunpack.c.h.b16 %v138
  %v1797 = vunpack.c.l.b16 %v139
  %v1798 = vunpack.c.h.b16 %v139
  %v1799 = vunpack.c.l.b16 %v140
  %v1800 = vunpack.c.h.b16 %v140
  %v1801 = vunpack.c.l.b16 %v141
  %v1802 = vunpack.c.h.b16 %v141
  %v1803 = vunpack.c.l.b16 %v142
  %v1804 = vunpack.c.h.b16 %v142
  %v1805 = vunpack.c.l.b16 %v143
  %v1806 = vunpack.c.h.b16 %v143
  %v1807 = vunpack.c.l.b16 %v144
  %v1808 = vunpack.c.h.b16 %v144
  %v1809 = vunpack.c.l.b16 %v145
  %v1810 = vunpack.c.h.b16 %v145
  %v1811 = vunpack.c.l.b16 %v146
  %v1812 = vunpack.c.h.b16 %v146
  %v1813 = vunpack.c.l.b16 %v147
  %v1814 = vunpack.c.h.b16 %v147
  %v1815 = vunpack.c.l.b16 %v148
  %v1816 = vunpack.c.h.b16 %v148
  %v1817 = vunpack.c.l.b16 %v149
  %v1818 = vunpack.c.h.b16 %v149
  %v1819 = vunpack.c.l.b16 %v150
  %v1820 = vunpack.c.h.b16 %v150
  %v1821 = vunpack.c.l.b16 %v151
  %v1822 = vunpack.c.h.b16 %v151
  %v1823 = vunpack.c.l.b16 %v152
  %v1824 = vunpack.c.h.b16 %v152
  %v1825 = vunpack.c.l.b16 %v153
  %v1826 = vunpack.c.h.b16 %v153
  %v1827 = vunpack.c.l.b16 %v154
  %v1828 = vunpack.c.h.b16 %v154
  %v1829 = vunpack.c.l.b16 %v155
  %v1830 = vunpack.c.h.b16 %v155
  %v1831 = vunpack.c.l.b16 %v156
  %v1832 = vunpack.c.h.b16 %v156
  %v1833 = vunpack.c.l.b16 %v157
  %v1834 = vunpack.c.h.b16 %v157
  %v1835 = vunpack.c.l.b16 %v158
  %v1836 = vunpack.c.h.b16 %v158
  %v1837 = vunpack.c.l.b16 %v159
  %v1838 = vunpack.c.h.b16 %v159
  %v1839 = vunpack.c.l.b16 %v160
  %v1840 = vunpack.c.h.b16 %v160
  %v1841 = vunpack.c.l.b16 %v161
  %v1842 = vunpack.c.h.b16 %v161
  %v1843 = vunpack.c.l.b16 %v162
  %v1844 = vunpack.c.h.b16 %v162
  %v1845 = vunpack.c.l.b16 %v163
  %v1846 = vunpack.c.h.b16 %v163
  %v1847 = vunpack.c.l.b16 %v164
  %v1848 = vunpack.c.h.b16 %v164
  %v1849 = vunpack.c.l.b16 %v165
  %v1850 = vunpack.c.h.b16 %v165
  %v1851 = vunpack.c.l.b16 %v166
  %v1852 = vunpack.c.h.b16 %v166
  %v1853 = vunpack.c.l.b16 %v167
  %v1854 = vunpack.c.h.b16 %v167
  %v1855 = vunpack.c.l.b16 %v168
  %v1856 = vunpack.c.h.b16 %v168
  %v1857 = vunpack.c.l.b16 %v169
  %v1858 = vunpack.c.h.b16 %v169
  %v1859 = vunpack.c.l.b16 %v170
  %v1860 = vunpack.c.h.b16 %v170
  %v1861 = vunpack.c.l.b16 %v171
  %v1862 = vunpack.c.h.b16 %v171
  %v1863 = vunpack.c.l.b16 %v172
  %v1864 = vunpack.c.h.b16 %v172
  %v1865 = vunpack.c.l.b16 %v173
  %v1866 = vunpack.c.h.b16 %v173
  %v1867 = vunpack.c.l.b16 %v174
  %v1868 = vunpack.c.h.b16 %v174
  %v1869 = vunpack.c.l.b16 %v175
  %v1870 = vunpack.c.h.b16 %v175
  %v1871 = vunpack.c.l.b16 %v176
  %v1872 = vunpack.c.h.b16 %v176
  %v1873 = vunpack.c.l.b16 %v177
  %v1874 = vunpack.c.h.b16 %v177
  %v1875 = vunpack.c.l.b16 %v178
  %v1876 = vunpack.c.h.b16 %v178
  %v1877 = vunpack.c.l.b16 %v179
  %v1878 = vunpack.c.h.b16 %v179
  %v1879 = vunpack.c.l.b16 %v180
  %v1880 = vunpack.c.h.b16 %v180
  %v1881 = vunpack.c.l.b16 %v181
  %v1882 = vunpack.c.h.b16 %v181
  %v1883 = vunpack.c.l.b16 %v182
  %v1884 = vunpack.c.h.b16 %v182
  %v1885 = vunpack.c.l.b16 %v183
  %v1886 = vunpack.c.h.b16 %v183
  %v1887 = vunpack.c.l.b16 %v184
  %v1888 = vunpack.c.h.b16 %v184
  %v1889 = vunpack.c.l.b16 %v185
  %v1890 = vunpack.c.h.b16 %v185
  %v1891 = vunpack.c.l.b16 %v186
  %v1892 = vunpack.c.h.b16 %v186
  %v1893 = vunpack.c.l.b16 %v187
  %v1894 = vunpack.c.h.b16 %v187
  %v1895 = vunpack.c.l.b16 %v188
  %v1896 = vunpack.c.h.b16 %v188
  %v1897 = vunpack.c.l.b16 %v189
  %v1898 = vunpack.c.h.b16 %v189
  %v1899 = vunpack.c.l.b16 %v190
  %v1900 = vunpack.c.h.b16 %v190
  %v1901 = vunpack.c.l.b16 %v191
  %v1902 = vunpack.c.h.b16 %v191
  %v1903 = vunpack.c.l.b16 %v192
  %v1904 = vunpack.c.h.b16 %v192
  %v1905 = vunpack.c.l.b16 %v193
  %v1906 = vunpack.c.h.b16 %v193
  %v1907 = vunpack.c.l.b16 %v194
  %v1908 = vunpack.c.h.b16 %v194
  %v1909 = vunpack.c.l.b16 %v195
  %v1910 = vunpack.c.h.b16 %v195
  %v1911 = vunpack.c.l.b16 %v196
  %v1912 = vunpack.c.h.b16 %v196
  %v1913 = vunpack.c.l.b16 %v197
  %v1914 = vunpack.c.h.b16 %v197
  %v1915 = vunpack.c.l.b16 %v198
  %v1916 = vunpack.c.h.b16 %v198
  %v1917 = vunpack.c.l.b16 %v199
  %v1918 = vunpack.c.h.b16 %v199
  %v1919 = vunpack.c.l.b16 %v200
  %v1920 = vunpack.c.h.b16 %v200
  %v1921 = vunpack.c.l.b16 %v201
  %v1922 = vunpack.c.h.b16 %v201
  %v1923 = vunpack.c.l.b16 %v202
  %v1924 = vunpack.c.h.b16 %v202
  %v1925 = vunpack.c.l.b16 %v203
  %v1926 = vunpack.c.h.b16 %v203
  %v1927 = vunpack.c.l.b16 %v204
  %v1928 = vunpack.c.h.b16 %v204
  %v1929 = vunpack.c.l.b16 %v205
  %v1930 = vunpack.c.h.b16 %v205
  %v1931 = vunpack.c.l.b16 %v206
  %v1932 = vunpack.c.h.b16 %v206
  %v1933 = vunpack.c.l.b16 %v207
  %v1934 = vunpack.c.h.b16 %v207
  %v1935 = vunpack.c.l.b16 %v208
  %v1936 = vunpack.c.h.b16 %v208
  %v1937 = vunpack.c.l.b16 %v209
  %v1938 = vunpack.c.h.b16 %v209
  %v1939 = vunpack.c.l.b16 %v210
  %v1940 = vunpack.c.h.b16 %v210
  %v1941 = vunpack.c.l.b16 %v211
  %v1942 = vunpack.c.h.b16 %v211
  %v1943 = vunpack.c.l.b16 %v212
  %v1944 = vunpack.c.h.b16 %v212
  %v1945 = vunpack.c.l.b16 %v213
  %v1946 = vunpack.c.h.b16 %v213
  %v1947 = vunpack.c.l.b16 %v214
  %v1948 = vunpack.c.h.b16 %v214
  %v1949 = vunpack.c.l.b16 %v215
  %v1950 = vunpack.c.h.b16 %v215
  %v1951 = vunpack.c.l.b16 %v216
  %v1952 = vunpack.c.h.b16 %v216
  %v1953 = vunpack.c.l.b16 %v217
  %v1954 = vunpack.c.h.b16 %v217
  %v1955 = vunpack.c.l.b16 %v218
  %v1956 = vunpack.c.h.b16 %v218
  %v1957 = vunpack.c.l.b16 %v219
  %v1958 = vunpack.c.h.b16 %v219
  %v1959 = vunpack.c.l.b16 %v220
  %v1960 = vunpack.c.h.b16 %v220
  %v1961 = vunpack.c.l.b16 %v221
  %v1962 = vunpack.c.h.b16 %v221
  %v1963 = vunpack.c.l.b16 %v222
  %v1964 = vunpack.c.h.b16 %v222
  %v1965 = vunpack.c.l.b16 %v223
  %v1966 = vunpack.c.h.b16 %v223
  %v1967 = vunpack.c.l.b16 %v224
  %v1968 = vunpack.c.h.b16 %v224
  %v1969 = vunpack.c.l.b16 %v225
  %v1970 = vunpack.c.h.b16 %v225
  %v1971 = vunpack.c.l.b16 %v226
  %v1972 = vunpack.c.h.b16 %v226
  %v1973 = vunpack.c.l.b16 %v227
  %v1974 = vunpack.c.h.b16 %v227
  %v1975 = vunpack.c.l.b16 %v228
  %v1976 = vunpack.c.h.b16 %v228
  %v1977 = vunpack.c.l.b16 %v229
  %v1978 = vunpack.c.h.b16 %v229
  %v1979 = vunpack.c.l.b16 %v230
  %v1980 = vunpack.c.h.b16 %v230
  %v1981 = vunpack.c.l.b16 %v231
  %v1982 = vunpack.c.h.b16 %v231
  %v1983 = vunpack.c.l.b16 %v232
  %v1984 = vunpack.c.h.b16 %v232
  %v1985 = vunpack.c.l.b16 %v233
  %v1986 = vunpack.c.h.b16 %v233
  %v1987 = vunpack.c.l.b16 %v234
  %v1988 = vunpack.c.h.b16 %v234
  %v1989 = vunpack.c.l.b16 %v235
  %v1990 = vunpack.c.h.b16 %v235
  %v1991 = vunpack.c.l.b16 %v236
  %v1992 = vunpack.c.h.b16 %v236
  %v1993 = vunpack.c.l.b16 %v237
  %v1994 = vunpack.c.h.b16 %v237
  %v1995 = vunpack.c.l.b16 %v238
  %v1996 = vunpack.c.h.b16 %v238
  %v1997 = vunpack.c.l.b16 %v239
  %v1998 = vunpack.c.h.b16 %v239
  %v1999 = vunpack.c.l.b16 %v240
  %v2000 = vunpack.c.h.b16 %v240
  %v2001 = vunpack.c.l.b16 %v241
  %v2002 = vunpack.c.h.b16 %v241
  %v2003 = vunpack.c.l.b16 %v242
  %v2004 = vunpack.c.h.b16 %v242
  %v2005 = vunpack.c.l.b16 %v243
  %v2006 = vunpack.c.h.b16 %v243
  %v2007 = vunpack.c.l.b16 %v244
  %v2008 = vunpack.c.h.b16 %v244
  %v2009 = vunpack.c.l.b16 %v245
  %v2010 = vunpack.c.h.b16 %v245
  %v2011 = vunpack.c.l.b16 %v246
  %v2012 = vunpack.c.h.b16 %v246
  %v2013 = vunpack.c.l.b16 %v247
  %v2014 = vunpack.c.h.b16 %v247
  %v2015 = vunpack.c.l.b16 %v248
  %v2016 = vunpack.c.h.b16 %v248
  %v2017 = vunpack.c.l.b16 %v249
  %v2018 = vunpack.c.h.b16 %v249
  %v2019 = vunpack.c.l.b16 %v250
  %v2020 = vunpack.c.h.b16 %v250
  %v2021 = vunpack.c.l.b16 %v251
  %v2022 = vunpack.c.h.b16 %v251
  %v2023 = vunpack.c.l.b16 %v252
  %v2024 = vunpack.c.h.b16 %v252
  %v2025 = vunpack.c.l.b16 %v253
  %v2026 = vunpack.c.h.b16 %v253
  %v2027 = vunpack.c.l.b16 %v254
  %v2028 = vunpack.c.h.b16 %v254
  %v2029 = vunpack.c.l.b16 %v255
  %v2030 = vunpack.c.h.b16 %v255
  %v2031 = vunpack.c.l.b16 %v256
  %v2032 = vunpack.c.h.b16 %v256
  %v2033 = vunpack.c.l.b16 %v257
  %v2034 = vunpack.c.h.b16 %v257
  %v2035 = vunpack.c.l.b16 %v258
  %v2036 = vunpack.c.h.b16 %v258
  %v2037 = vunpack.c.l.b16 %v259
  %v2038 = vunpack.c.h.b16 %v259
  %v2039 = vunpack.c.l.b16 %v260
  %v2040 = vunpack.c.h.b16 %v260
  %v2041 = vunpack.c.l.b16 %v261
  %v2042 = vunpack.c.h.b16 %v261
  %v2043 = vunpack.c.l.b16 %v262
  %v2044 = vunpack.c.h.b16 %v262
  %v2045 = vunpack.c.l.b16 %v263
  %v2046 = vunpack.c.h.b16 %v263
  %v2047 = vunpack.c.l.b16 %v264
  %v2048 = vunpack.c.h.b16 %v264
  %v2049 = vunpack.c.l.b16 %v265
  %v2050 = vunpack.c.h.b16 %v265
  %v2051 = vunpack.c.l.b16 %v266
  %v2052 = vunpack.c.h.b16 %v266
  %v2053 = vunpack.c.l.b16 %v267
  %v2054 = vunpack.c.h.b16 %v267
  %v2055 = vunpack.c.l.b16 %v268
  %v2056 = vunpack.c.h.b16 %v268
  %v2057 = vunpack.c.l.b16 %v269
  %v2058 = vunpack.c.h.b16 %v269
  %v2059 = vunpack.c.l.b16 %v270
  %v2060 = vunpack.c.h.b16 %v270
  %v2061 = vunpack.c.l.b16 %v271
  %v2062 = vunpack.c.h.b16 %v271
  %v2063 = vunpack.c.l.b16 %v272
  %v2064 = vunpack.c.h.b16 %v272
  %v2065 = vunpack.c.l.b16 %v273
  %v2066 = vunpack.c.h.b16 %v273
  %v2067 = vunpack.c.l.b16 %v274
  %v2068 = vunpack.c.h.b16 %v274
  %v2069 = vunpack.c.l.b16 %v275
  %v2070 = vunpack.c.h.b16 %v275
  %v2071 = vunpack.c.l.b16 %v276
  %v2072 = vunpack.c.h.b16 %v276
  %v2073 = vunpack.c.l.b16 %v277
  %v2074 = vunpack.c.h.b16 %v277
  %v2075 = vunpack.c.l.b16 %v278
  %v2076 = vunpack.c.h.b16 %v278
  %v2077 = vunpack.c.l.b16 %v279
  %v2078 = vunpack.c.h.b16 %v279
  %v2079 = vunpack.c.l.b16 %v280
  %v2080 = vunpack.c.h.b16 %v280
  %v2081 = vunpack.c.l.b16 %v281
  %v2082 = vunpack.c.h.b16 %v281
  %v2083 = vunpack.c.l.b16 %v282
  %v2084 = vunpack.c.h.b16 %v282
  %v2085 = vunpack.c.l.b16 %v283
  %v2086 = vunpack.c.h.b16 %v283
  %v2087 = vunpack.c.l.b16 %v284
  %v2088 = vunpack.c.h.b16 %v284
  %v2089 = vunpack.c.l.b16 %v285
  %v2090 = vunpack.c.h.b16 %v285
  %v2091 = vunpack.c.l.b16 %v286
  %v2092 = vunpack.c.h.b16 %v286
  %v2093 = vunpack.c.l.b16 %v287
  %v2094 = vunpack.c.h.b16 %v287
  %v2095 = vunpack.c.l.b16 %v288
  %v2096 = vunpack.c.h.b16 %v288
  %v2097 = vunpack.c.l.b16 %v289
  %v2098 = vunpack.c.h.b16 %v289
  %v2099 = vunpack.c.l.b16 %v290
  %v2100 = vunpack.c.h.b16 %v290
  %v2101 = vunpack.c.l.b16 %v291
  %v2102 = vunpack.c.h.b16 %v291
  %v2103 = vunpack.c.l.b16 %v292
  %v2104 = vunpack.c.h.b16 %v292
  %v2105 = vunpack.c.l.b16 %v293
  %v2106 = vunpack.c.h.b16 %v293
  %v2107 = vunpack.c.l.b16 %v294
  %v2108 = vunpack.c.h.b16 %v294
  %v2109 = vunpack.c.l.b16 %v295
  %v2110 = vunpack.c.h.b16 %v295
  %v2111 = vunpack.c.l.b16 %v296
  %v2112 = vunpack.c.h.b16 %v296
  %v2113 = vunpack.c.l.b16 %v297
  %v2114 = vunpack.c.h.b16 %v297
  %v2115 = vunpack.c.l.b16 %v298
  %v2116 = vunpack.c.h.b16 %v298
  %v2117 = vunpack.c.l.b16 %v299
  %v2118 = vunpack.c.h.b16 %v299
  %v2119 = vunpack.c.l.b16 %v300
  %v2120 = vunpack.c.h.b16 %v300
  %v2121 = vunpack.c.l.b16 %v301
  %v2122 = vunpack.c.h.b16 %v301
  %v2123 = vunpack.c.l.b16 %v302
  %v2124 = vunpack.c.h.b16 %v302
  %v2125 = vunpack.c.l.b16 %v303
  %v2126 = vunpack.c.h.b16 %v303
  %v2127 = vunpack.c.l.b16 %v304
  %v2128 = vunpack.c.h.b16 %v304
  %v2129 = vunpack.c.l.b16 %v305
  %v2130 = vunpack.c.h.b16 %v305
  %v2131 = vunpack.c.l.b16 %v306
  %v2132 = vunpack.c.h.b16 %v306
  %v2133 = vunpack.c.l.b16 %v307
  %v2134 = vunpack.c.h.b16 %v307
  %v2135 = vunpack.c.l.b16 %v308
  %v2136 = vunpack.c.h.b16 %v308
  %v2137 = vunpack.c.l.b16 %v309
  %v2138 = vunpack.c.h.b16 %v309
  %v2139 = vunpack.c.l.b16 %v310
  %v2140 = vunpack.c.h.b16 %v310
  %v2141 = vunpack.c.l.b16 %v311
  %v2142 = vunpack.c.h.b16 %v311
  %v2143 = vunpack.c.l.b16 %v312
  %v2144 = vunpack.c.h.b16 %v312
  %v2145 = vunpack.c.l.b16 %v313
  %v2146 = vunpack.c.h.b16 %v313
  %v2147 = vunpack.c.l.b16 %v314
  %v2148 = vunpack.c.h.b16 %v314
  %v2149 = vunpack.c.l.b16 %v315
  %v2150 = vunpack.c.h.b16 %v315
  %v2151 = vunpack.c.l.b16 %v316
  %v2152 = vunpack.c.h.b16 %v316
  %v2153 = vunpack.c.l.b16 %v317
  %v2154 = vunpack.c.h.b16 %v317
  %v2155 = vunpack.c.l.b16 %v318
  %v2156 = vunpack.c.h.b16 %v318
  %v2157 = vunpack.c.l.b16 %v319
  %v2158 = vunpack.c.h.b16 %v319
  %v2159 = vunpack.c.l.b16 %v320
  %v2160 = vunpack.c.h.b16 %v320
  %v2161 = vunpack.c.l.b16 %v321
  %v2162 = vunpack.c.h.b16 %v321
  %v2163 = vunpack.c.l.b16 %v322
  %v2164 = vunpack.c.h.b16 %v322
  %v2165 = vunpack.c.l.b16 %v323
  %v2166 = vunpack.c.h.b16 %v323
  %v2167 = vunpack.c.l.b16 %v324
  %v2168 = vunpack.c.h.b16 %v324
  %v2169 = vunpack.c.l.b16 %v325
  %v2170 = vunpack.c.h.b16 %v325
  %v2171 = vunpack.c.l.b16 %v326
  %v2172 = vunpack.c.h.b16 %v326
  %v2173 = vunpack.c.l.b16 %v327
  %v2174 = vunpack.c.h.b16 %v327
  %v2175 = vunpack.c.l.b16 %v328
  %v2176 = vunpack.c.h.b16 %v328
  %v2177 = vunpack.c.l.b16 %v329
  %v2178 = vunpack.c.h.b16 %v329
  %v2179 = vunpack.c.l.b16 %v330
  %v2180 = vunpack.c.h.b16 %v330
  %v2181 = vunpack.c.l.b16 %v331
  %v2182 = vunpack.c.h.b16 %v331
  %v2183 = vunpack.c.l.b16 %v332
  %v2184 = vunpack.c.h.b16 %v332
  %v2185 = vunpack.c.l.b16 %v333
  %v2186 = vunpack.c.h.b16 %v333
  %v2187 = vunpack.c.l.b16 %v334
  %v2188 = vunpack.c.h.b16 %v334
  %v2189 = vunpack.c.l.b16 %v335
  %v2190 = vunpack.c.h.b16 %v335
  %v2191 = vunpack.c.l.b16 %v336
  %v2192 = vunpack.c.h.b16 %v336
  %v2193 = vunpack.c.l.b16 %v337
  %v2194 = vunpack.c.h.b16 %v337
  %v2195 = vunpack.c.l.b16 %v338
  %v2196 = vunpack.c.h.b16 %v338
  %v2197 = vunpack.c.l.b16 %v339
  %v2198 = vunpack.c.h.b16 %v339
  %v2199 = vunpack.c.l.b16 %v340
  %v2200 = vunpack.c.h.b16 %v340
  %v2201 = vunpack.c.l.b16 %v341
  %v2202 = vunpack.c.h.b16 %v341
  %v2203 = vunpack.c.l.b16 %v342
  %v2204 = vunpack.c.h.b16 %v342
  %v2205 = vunpack.c.l.b16 %v343
  %v2206 = vunpack.c.h.b16 %v343
  %v2207 = vunpack.c.l.b16 %v344
  %v2208 = vunpack.c.h.b16 %v344
  %v2209 = vunpack.c.l.b16 %v345
  %v2210 = vunpack.c.h.b16 %v345
  %v2211 = vunpack.c.l.b16 %v346
  %v2212 = vunpack.c.h.b16 %v346
  %v2213 = vunpack.c.l.b16 %v347
  %v2214 = vunpack.c.h.b16 %v347
  %v2215 = vunpack.c.l.b16 %v348
  %v2216 = vunpack.c.h.b16 %v348
  %v2217 = vunpack.c.l.b16 %v349
  %v2218 = vunpack.c.h.b16 %v349
  %v2219 = vunpack.c.l.b16 %v350
  %v2220 = vunpack.c.h.b16 %v350
  %v2221 = vunpack.c.l.b16 %v351
  %v2222 = vunpack.c.h.b16 %v351
  %v2223 = vunpack.c.l.b16 %v352
  %v2224 = vunpack.c.h.b16 %v352
  %v2225 = vunpack.c.l.b16 %v353
  %v2226 = vunpack.c.h.b16 %v353
  %v2227 = vunpack.c.l.b16 %v354
  %v2228 = vunpack.c.h.b16 %v354
  %v2229 = vunpack.c.l.b16 %v355
  %v2230 = vunpack.c.h.b16 %v355
  %v2231 = vunpack.c.l.b16 %v356
  %v2232 = vunpack.c.h.b16 %v356
  %v2233 = vunpack.c.l.b16 %v357
  %v2234 = vunpack.c.h.b16 %v357
  %v2235 = vunpack.c.l.b16 %v358
  %v2236 = vunpack.c.h.b16 %v358
  %v2237 = vunpack.c.l.b16 %v359
  %v2238 = vunpack.c.h.b16 %v359
  %v2239 = vunpack.c.l.b16 %v360
  %v2240 = vunpack.c.h.b16 %v360
  %v2241 = vunpack.c.l.b16 %v361
  %v2242 = vunpack.c.h.b16 %v361
  %v2243 = vunpack.c.l.b16 %v362
  %v2244 = vunpack.c.h.b16 %v362
  %v2245 = vunpack.c.l.b16 %v363
  %v2246 = vunpack.c.h.b16 %v363
  %v2247 = vunpack.c.l.b16 %v364
  %v2248 = vunpack.c.h.b16 %v364
  %v2249 = vunpack.c.l.b16 %v365
  %v2250 = vunpack.c.h.b16 %v365
  %v2251 = vunpack.c.l.b16 %v366
  %v2252 = vunpack.c.h.b16 %v366
  %v2253 = vunpack.c.l.b16 %v367
  %v2254 = vunpack.c.h.b16 %v367
  %v2255 = vunpack.c.l.b16 %v368
  %v2256 = vunpack.c.h.b16 %v368
  %v2257 = vunpack.c.l.b16 %v369
  %v2258 = vunpack.c.h.b16 %v369
  %v2259 = vunpack.c.l.b16 %v370
  %v2260 = vunpack.c.h.b16 %v370
  %v2261 = vunpack.c.l.b16 %v371
  %v2262 = vunpack.c.h.b16 %v371
  %v2263 = vunpack.c.l.b16 %v372
  %v2264 = vunpack.c.h.b16 %v372
  %v2265 = vunpack.c.l.b16 %v373
  %v2266 = vunpack.c.h.b16 %v373
  %v2267 = vunpack.c.l.b16 %v374
  %v2268 = vunpack.c.h.b16 %v374
  %v2269 = vunpack.c.l.b16 %v375
  %v2270 = vunpack.c.h.b16 %v375
  %v2271 = vunpack.c.l.b16 %v376
  %v2272 = vunpack.c.h.b16 %v376
  %v2273 = vunpack.c.l.b16 %v377
  %v2274 = vunpack.c.h.b16 %v377
  %v2275 = vunpack.c.l.b16 %v378
  %v2276 = vunpack.c.h.b16 %v378
  %v2277 = vunpack.c.l.b16 %v379
  %v2278 = vunpack.c.h.b16 %v379
  %v2279 = vunpack.c.l.b16 %v380
  %v2280 = vunpack.c.h.b16 %v380
  %v2281 = vunpack.c.l.b16 %v381
  %v2282 = vunpack.c.h.b16 %v381
  %v2283 = vunpack.c.l.b16 %v382
  %v2284 = vunpack.c.h.b16 %v382
  %v2285 = vunpack.c.l.b16 %v383
  %v2286 = vunpack.c.h.b16 %v383
  %v2287 = vunpack.c.l.b16 %v384
  %v2288 = vunpack.c.h.b16 %v384
  %v2289 = vunpack.c.l.b16 %v385
  %v2290 = vunpack.c.h.b16 %v385
  %v2291 = vunpack.c.l.b16 %v386
  %v2292 = vunpack.c.h.b16 %v386
  %v2293 = vunpack.c.l.b16 %v387
  %v2294 = vunpack.c.h.b16 %v387
  %v2295 = vunpack.c.l.b16 %v388
  %v2296 = vunpack.c.h.b16 %v388
  %v2297 = vunpack.c.l.b16 %v389
  %v2298 = vunpack.c.h.b16 %v389
  %v2299 = vunpack.c.l.b16 %v390
  %v2300 = vunpack.c.h.b16 %v390
  %v2301 = vunpack.c.l.b16 %v391
  %v2302 = vunpack.c.h.b16 %v391
  %v2303 = vunpack.c.l.b16 %v392
  %v2304 = vunpack.c.h.b16 %v392
  %v2305 = vunpack.c.l.b16 %v393
  %v2306 = vunpack.c.h.b16 %v393
  %v2307 = vunpack.c.l.b16 %v394
  %v2308 = vunpack.c.h.b16 %v394
  %v2309 = vunpack.c.l.b16 %v395
  %v2310 = vunpack.c.h.b16 %v395
  %v2311 = vunpack.c.l.b16 %v396
  %v2312 = vunpack.c.h.b16 %v396
  %v2313 = vunpack.c.l.b16 %v397
  %v2314 = vunpack.c.h.b16 %v397
  %v2315 = vunpack.c.l.b16 %v398
  %v2316 = vunpack.c.h.b16 %v398
  %v2317 = vunpack.c.l.b16 %v399
  %v2318 = vunpack.c.h.b16 %v399
  %v2319 = vunpack.c.l.b16 %v400
  %v2320 = vunpack.c.h.b16 %v400
  %v2321 = vunpack.c.l.b16 %v401
  %v2322 = vunpack.c.h.b16 %v401
  %v2323 = vunpack.c.l.b16 %v402
  %v2324 = vunpack.c.h.b16 %v402
  %v2325 = vunpack.c.l.b16 %v403
  %v2326 = vunpack.c.h.b16 %v403
  %v2327 = vunpack.c.l.b16 %v404
  %v2328 = vunpack.c.h.b16 %v404
  %v2329 = vunpack.c.l.b16 %v405
  %v2330 = vunpack.c.h.b16 %v405
  %v2331 = vunpack.c.l.b16 %v406
  %v2332 = vunpack.c.h.b16 %v406
  %v2333 = vunpack.c.l.b16 %v407
  %v2334 = vunpack.c.h.b16 %v407
  %v2335 = vunpack.c.l.b16 %v408
  %v2336 = vunpack.c.h.b16 %v408
  %v2337 = vunpack.c.l.b16 %v409
  %v2338 = vunpack.c.h.b16 %v409
  %v2339 = vunpack.c.l.b16 %v410
  %v2340 = vunpack.c.h.b16 %v410
  %v2341 = vunpack.c.l.b16 %v411
  %v2342 = vunpack.c.h.b16 %v411
  %v2343 = vunpack.c.l.b16 %v412
  %v2344 = vunpack.c.h.b16 %v412
  %v2345 = vunpack.c.l.b16 %v413
  %v2346 = vunpack.c.h.b16 %v413
  %v2347 = vunpack.c.l.b16 %v414
  %v2348 = vunpack.c.h.b16 %v414
  %v2349 = vunpack.c.l.b16 %v415
  %v2350 = vunpack.c.h.b16 %v415
  %v2351 = vunpack.c.l.b16 %v416
  %v2352 = vunpack.c.h.b16 %v416
  %v2353 = vunpack.c.l.b16 %v417
  %v2354 = vunpack.c.h.b16 %v417
  %v2355 = vunpack.c.l.b16 %v418
  %v2356 = vunpack.c.h.b16 %v418
  %v2357 = vunpack.c.l.b16 %v419
  %v2358 = vunpack.c.h.b16 %v419
  %v2359 = vunpack.c.l.b16 %v420
  %v2360 = vunpack.c.h.b16 %v420
  %v2361 = vunpack.c.l.b16 %v421
  %v2362 = vunpack.c.h.b16 %v421
  %v2363 = vunpack.c.l.b16 %v422
  %v2364 = vunpack.c.h.b16 %v422
  %v2365 = vunpack.c.l.b16 %v423
  %v2366 = vunpack.c.h.b16 %v423
  %v2367 = vunpack.c.l.b16 %v424
  %v2368 = vunpack.c.h.b16 %v424
  %v2369 = vunpack.c.l.b16 %v425
  %v2370 = vunpack.c.h.b16 %v425
  %v2371 = vunpack.c.l.b16 %v426
  %v2372 = vunpack.c.h.b16 %v426
  %v2373 = vunpack.c.l.b16 %v427
  %v2374 = vunpack.c.h.b16 %v427
  %v2375 = vunpack.c.l.b16 %v428
  %v2376 = vunpack.c.h.b16 %v428
  %v2377 = vunpack.c.l.b16 %v429
  %v2378 = vunpack.c.h.b16 %v429
  %v2379 = vunpack.c.l.b16 %v430
  %v2380 = vunpack.c.h.b16 %v430
  %v2381 = vunpack.c.l.b16 %v431
  %v2382 = vunpack.c.h.b16 %v431
  %v2383 = vunpack.c.l.b16 %v432
  %v2384 = vunpack.c.h.b16 %v432
  %v2385 = vunpack.c.l.b16 %v433
  %v2386 = vunpack.c.h.b16 %v433
  %v2387 = vunpack.c.l.b16 %v434
  %v2388 = vunpack.c.h.b16 %v434
  %v2389 = vunpack.c.l.b16 %v435
  %v2390 = vunpack.c.h.b16 %v435
  %v2391 = vunpack.c.l.b16 %v436
  %v2392 = vunpack.c.h.b16 %v436
  %v2393 = vunpack.c.l.b16 %v437
  %v2394 = vunpack.c.h.b16 %v437
  %v2395 = vunpack.c.l.b16 %v438
  %v2396 = vunpack.c.h.b16 %v438
  %v2397 = vunpack.c.l.b16 %v439
  %v2398 = vunpack.c.h.b16 %v439
  %v2399 = vunpack.c.l.b16 %v440
  %v2400 = vunpack.c.h.b16 %v440
  %v2401 = vunpack.c.l.b16 %v441
  %v2402 = vunpack.c.h.b16 %v441
  %v2403 = vunpack.c.l.b16 %v442
  %v2404 = vunpack.c.h.b16 %v442
  %v2405 = vunpack.c.l.b16 %v443
  %v2406 = vunpack.c.h.b16 %v443
  %v2407 = vunpack.c.l.b16 %v444
  %v2408 = vunpack.c.h.b16 %v444
  %v2409 = vunpack.c.l.b16 %v445
  %v2410 = vunpack.c.h.b16 %v445
  %v2411 = vunpack.c.l.b16 %v446
  %v2412 = vunpack.c.h.b16 %v446
  %v2413 = vunpack.c.l.b16 %v447
  %v2414 = vunpack.c.h.b16 %v447
  %v2415 = vunpack.c.l.b16 %v448
  %v2416 = vunpack.c.h.b16 %v448
  %v2417 = vunpack.c.l.b16 %v449
  %v2418 = vunpack.c.h.b16 %v449
  %v2419 = vunpack.c.l.b16 %v450
  %v2420 = vunpack.c.h.b16 %v450
  %v2421 = vunpack.c.l.b16 %v451
  %v2422 = vunpack.c.h.b16 %v451
  %v2423 = vunpack.c.l.b16 %v452
  %v2424 = vunpack.c.h.b16 %v452
  %v2425 = vunpack.c.l.b16 %v453
  %v2426 = vunpack.c.h.b16 %v453
  %v2427 = vunpack.c.l.b16 %v454
  %v2428 = vunpack.c.h.b16 %v454
  %v2429 = vunpack.c.l.b16 %v455
  %v2430 = vunpack.c.h.b16 %v455
  %v2431 = vunpack.c.l.b16 %v456
  %v2432 = vunpack.c.h.b16 %v456
  %v2433 = vunpack.c.l.b16 %v457
  %v2434 = vunpack.c.h.b16 %v457
  %v2435 = vunpack.c.l.b16 %v458
  %v2436 = vunpack.c.h.b16 %v458
  %v2437 = vunpack.c.l.b16 %v459
  %v2438 = vunpack.c.h.b16 %v459
  %v2439 = vunpack.c.l.b16 %v460
  %v2440 = vunpack.c.h.b16 %v460
  %v2441 = vunpack.c.l.b16 %v461
  %v2442 = vunpack.c.h.b16 %v461
  %v2443 = vunpack.c.l.b16 %v462
  %v2444 = vunpack.c.h.b16 %v462
  %v2445 = vunpack.c.l.b16 %v463
  %v2446 = vunpack.c.h.b16 %v463
  %v2447 = vunpack.c.l.b16 %v464
  %v2448 = vunpack.c.h.b16 %v464
  %v2449 = vunpack.c.l.b16 %v465
  %v2450 = vunpack.c.h.b16 %v465
  %v2451 = vunpack.c.l.b16 %v466
  %v2452 = vunpack.c.h.b16 %v466
  %v2453 = vunpack.c.l.b16 %v467
  %v2454 = vunpack.c.h.b16 %v467
  %v2455 = vunpack.c.l.b16 %v468
  %v2456 = vunpack.c.h.b16 %v468
  %v2457 = vunpack.c.l.b16 %v469
  %v2458 = vunpack.c.h.b16 %v469
  %v2459 = vunpack.c.l.b16 %v470
  %v2460 = vunpack.c.h.b16 %v470
  %v2461 = vunpack.c.l.b16 %v471
  %v2462 = vunpack.c.h.b16 %v471
  %v2463 = vunpack.c.l.b16 %v472
  %v2464 = vunpack.c.h.b16 %v472
  %v2465 = vunpack.c.l.b16 %v473
  %v2466 = vunpack.c.h.b16 %v473
  %v2467 = vunpack.c.l.b16 %v474
  %v2468 = vunpack.c.h.b16 %v474
  %v2469 = vunpack.c.l.b16 %v475
  %v2470 = vunpack.c.h.b16 %v475
  %v2471 = vunpack.c.l.b16 %v476
  %v2472 = vunpack.c.h.b16 %v476
  %v2473 = vunpack.c.l.b16 %v477
  %v2474 = vunpack.c.h.b16 %v477
  %v2475 = vunpack.c.l.b16 %v478
  %v2476 = vunpack.c.h.b16 %v478
  %v2477 = vunpack.c.l.b16 %v479
  %v2478 = vunpack.c.h.b16 %v479
  %v2479 = vunpack.c.l.b16 %v480
  %v2480 = vunpack.c.h.b16 %v480
  %v2481 = vunpack.c.l.b16 %v481
  %v2482 = vunpack.c.h.b16 %v481
  %v2483 = vunpack.c.l.b16 %v482
  %v2484 = vunpack.c.h.b16 %v482
  %v2485 = vunpack.c.l.b16 %v483
  %v2486 = vunpack.c.h.b16 %v483
  %v2487 = vunpack.c.l.b16 %v484
  %v2488 = vunpack.c.h.b16 %v484
  %v2489 = vunpack.c.l.b16 %v485
  %v2490 = vunpack.c.h.b16 %v485
  %v2491 = vunpack.c.l.b16 %v486
  %v2492 = vunpack.c.h.b16 %v486
  %v2493 = vunpack.c.l.b16 %v487
  %v2494 = vunpack.c.h.b16 %v487
  %v2495 = vunpack.c.l.b16 %v488
  %v2496 = vunpack.c.h.b16 %v488
  %v2497 = vunpack.c.l.b16 %v489
  %v2498 = vunpack.c.h.b16 %v489
  %v2499 = vunpack.c.l.b16 %v490
  %v2500 = vunpack.c.h.b16 %v490
  %v2501 = vunpack.c.l.b16 %v491
  %v2502 = vunpack.c.h.b16 %v491
  %v2503 = vunpack.c.l.b16 %v492
  %v2504 = vunpack.c.h.b16 %v492
  %v2505 = vunpack.c.l.b16 %v493
  %v2506 = vunpack.c.h.b16 %v493
  %v2507 = vunpack.c.l.b16 %v494
  %v2508 = vunpack.c.h.b16 %v494
  %v2509 = vunpack.c.l.b16 %v495
  %v2510 = vunpack.c.h.b16 %v495
  %v2511 = vunpack.c.l.b16 %v496
  %v2512 = vunpack.c.h.b16 %v496
  %v2513 = vunpack.c.l.b16 %v497
  %v2514 = vunpack.c.h.b16 %v497
  %v2515 = vunpack.c.l.b16 %v498
  %v2516 = vunpack.c.h.b16 %v498
  %v2517 = vunpack.c.l.b16 %v499
  %v2518 = vunpack.c.h.b16 %v499
  %v2519 = vunpack.c.l.b16 %v500
  %v2520 = vunpack.c.h.b16 %v500
  %v2521 = vunpack.c.l.b16 %v501
  %v2522 = vunpack.c.h.b16 %v501
  %v2523 = vunpack.c.l.b16 %v502
  %v2524 = vunpack.c.h.b16 %v502
  %v2525 = vunpack.c.l.b16 %v503
  %v2526 = vunpack.c.h.b16 %v503
  %v2527 = vunpack.c.l.b16 %v504
  %v2528 = vunpack.c.h.b16 %v504
  %v2529 = vunpack.c.l.b16 %v505
  %v2530 = vunpack.c.h.b16 %v505
  %v2531 = vunpack.c.l.b16 %v506
  %v2532 = vunpack.c.h.b16 %v506
  %v2533 = vunpack.c.l.b16 %v507
  %v2534 = vunpack.c.h.b16 %v507
  %v2535 = vunpack.c.l.b16 %v508
  %v2536 = vunpack.c.h.b16 %v508
  %v2537 = vunpack.c.l.b16 %v509
  %v2538 = vunpack.c.h.b16 %v509
  %v2539 = vunpack.c.l.b16 %v510
  %v2540 = vunpack.c.h.b16 %v510
  %v2541 = vunpack.c.l.b16 %v511
  %v2542 = vunpack.c.h.b16 %v511
  %v2543 = vunpack.c.l.b16 %v512
  %v2544 = vunpack.c.h.b16 %v512
  %v2545 = vunpack.c.l.b16 %v513
  %v2546 = vunpack.c.h.b16 %v513
  %v2547 = vunpack.c.l.b16 %v514
  %v2548 = vunpack.c.h.b16 %v514
  %v2549 = vunpack.c.l.b16 %v515
  %v2550 = vunpack.c.h.b16 %v515
  %v2551 = vunpack.c.l.b16 %v516
  %v2552 = vunpack.c.h.b16 %v516
  %v2553 = vunpack.c.l.b16 %v517
  %v2554 = vunpack.c.h.b16 %v517
  %v2555 = vunpack.c.l.b16 %v518
  %v2556 = vunpack.c.h.b16 %v518
  %v2557 = vunpack.c.l.b16 %v519
  %v2558 = vunpack.c.h.b16 %v519
  %v2559 = vunpack.c.l.b16 %v520
  %v2560 = vunpack.c.h.b16 %v520
  %v2561 = vunpack.c.l.b16 %v521
  %v2562 = vunpack.c.h.b16 %v521
  %v2563 = vunpack.c.l.b16 %v522
  %v2564 = vunpack.c.h.b16 %v522
  %v2565 = vunpack.c.l.b16 %v523
  %v2566 = vunpack.c.h.b16 %v523
  %v2567 = vunpack.c.l.b16 %v524
  %v2568 = vunpack.c.h.b16 %v524
  %v2569 = vunpack.c.l.b16 %v525
  %v2570 = vunpack.c.h.b16 %v525
  %v2571 = vunpack.c.l.b16 %v526
  %v2572 = vunpack.c.h.b16 %v526
  %v2573 = vunpack.c.l.b16 %v527
  %v2574 = vunpack.c.h.b16 %v527
  %v2575 = vunpack.c.l.b16 %v528
  %v2576 = vunpack.c.h.b16 %v528
  %v2577 = vunpack.c.l.b16 %v529
  %v2578 = vunpack.c.h.b16 %v529
  %v2579 = vunpack.c.l.b16 %v530
  %v2580 = vunpack.c.h.b16 %v530
  %v2581 = vunpack.c.l.b16 %v531
  %v2582 = vunpack.c.h.b16 %v531
  %v2583 = vunpack.c.l.b16 %v532
  %v2584 = vunpack.c.h.b16 %v532
  %v2585 = vunpack.c.l.b16 %v533
  %v2586 = vunpack.c.h.b16 %v533
  %v2587 = vunpack.c.l.b16 %v534
  %v2588 = vunpack.c.h.b16 %v534
  %v2589 = vunpack.c.l.b16 %v535
  %v2590 = vunpack.c.h.b16 %v535
  %v2591 = vunpack.c.l.b16 %v536
  %v2592 = vunpack.c.h.b16 %v536
  %v2593 = vunpack.c.l.b16 %v537
  %v2594 = vunpack.c.h.b16 %v537
  %v2595 = vunpack.c.l.b16 %v538
  %v2596 = vunpack.c.h.b16 %v538
  %v2597 = vunpack.c.l.b16 %v539
  %v2598 = vunpack.c.h.b16 %v539
  %v2599 = vunpack.c.l.b16 %v540
  %v2600 = vunpack.c.h.b16 %v540
  %v2601 = vunpack.c.l.b16 %v541
  %v2602 = vunpack.c.h.b16 %v541
  %v2603 = vunpack.c.l.b16 %v542
  %v2604 = vunpack.c.h.b16 %v542
  %v2605 = vunpack.c.l.b16 %v543
  %v2606 = vunpack.c.h.b16 %v543
  %v2607 = vunpack.c.l.b16 %v544
  %v2608 = vunpack.c.h.b16 %v544
  %v2609 = vunpack.c.l.b16 %v545
  %v2610 = vunpack.c.h.b16 %v545
  %v2611 = vunpack.c.l.b16 %v546
  %v2612 = vunpack.c.h.b16 %v546
  %v2613 = vunpack.c.l.b16 %v547
  %v2614 = vunpack.c.h.b16 %v547
  %v2615 = vunpack.c.l.b16 %v548
  %v2616 = vunpack.c.h.b16 %v548
  %v2617 = vunpack.c.l.b16 %v549
  %v2618 = vunpack.c.h.b16 %v549
  %v2619 = vunpack.c.l.b16 %v550
  %v2620 = vunpack.c.h.b16 %v550
  %v2621 = vunpack.c.l.b16 %v551
  %v2622 = vunpack.c.h.b16 %v551
  %v2623 = vunpack.c.l.b16 %v552
  %v2624 = vunpack.c.h.b16 %v552
  %v2625 = vunpack.c.l.b16 %v553
  %v2626 = vunpack.c.h.b16 %v553
  %v2627 = vunpack.c.l.b16 %v554
  %v2628 = vunpack.c.h.b16 %v554
  %v2629 = vunpack.c.l.b16 %v555
  %v2630 = vunpack.c.h.b16 %v555
  %v2631 = vunpack.c.l.b16 %v556
  %v2632 = vunpack.c.h.b16 %v556
  %v2633 = vunpack.c.l.b16 %v557
  %v2634 = vunpack.c.h.b16 %v557
  %v2635 = vunpack.c.l.b16 %v558
  %v2636 = vunpack.c.h.b16 %v558
  %v2637 = vunpack.c.l.b16 %v559
  %v2638 = vunpack.c.h.b16 %v559
  %v2639 = vunpack.c.l.b16 %v560
  %v2640 = vunpack.c.h.b16 %v560
  %v2641 = vunpack.c.l.b16 %v561
  %v2642 = vunpack.c.h.b16 %v561
  %v2643 = vunpack.c.l.b16 %v562
  %v2644 = vunpack.c.h.b16 %v562
  %v2645 = vunpack.c.l.b16 %v563
  %v2646 = vunpack.c.h.b16 %v563
  %v2647 = vunpack.c.l.b16 %v564
  %v2648 = vunpack.c.h.b16 %v564
  %v2649 = vunpack.c.l.b16 %v565
  %v2650 = vunpack.c.h.b16 %v565
  %v2651 = vunpack.c.l.b16 %v566
  %v2652 = vunpack.c.h.b16 %v566
  %v2653 = vunpack.c.l.b16 %v567
  %v2654 = vunpack.c.h.b16 %v567
  %v2655 = vunpack.c.l.b16 %v568
  %v2656 = vunpack.c.h.b16 %v568
  %v2657 = vunpack.c.l.b16 %v569
  %v2658 = vunpack.c.h.b16 %v569
  %v2659 = vunpack.c.l.b16 %v570
  %v2660 = vunpack.c.h.b16 %v570
  %v2661 = vunpack.c.l.b16 %v571
  %v2662 = vunpack.c.h.b16 %v571
  %v2663 = vunpack.c.l.b16 %v572
  %v2664 = vunpack.c.h.b16 %v572
  %v2665 = vunpack.c.l.b16 %v573
  %v2666 = vunpack.c.h.b16 %v573
  %v2667 = vunpack.c.l.b16 %v574
  %v2668 = vunpack.c.h.b16 %v574
  %v2669 = vunpack.c.l.b16 %v575
  %v2670 = vunpack.c.h.b16 %v575
  %v2671 = vunpack.c.l.b16 %v576
  %v2672 = vunpack.c.h.b16 %v576
  %v2673 = vunpack.c.l.b16 %v577
  %v2674 = vunpack.c.h.b16 %v577
  %v2675 = vunpack.c.l.b16 %v578
  %v2676 = vunpack.c.h.b16 %v578
  %v2677 = vunpack.c.l.b16 %v579
  %v2678 = vunpack.c.h.b16 %v579
  %v2679 = vunpack.c.l.b16 %v580
  %v2680 = vunpack.c.h.b16 %v580
  %v2681 = vunpack.c.l.b16 %v581
  %v2682 = vunpack.c.h.b16 %v581
  %v2683 = vunpack.c.l.b16 %v582
  %v2684 = vunpack.c.h.b16 %v582
  %v2685 = vunpack.c.l.b16 %v583
  %v2686 = vunpack.c.h.b16 %v583
  %v2687 = vunpack.c.l.b16 %v584
  %v2688 = vunpack.c.h.b16 %v584
  %v2689 = vunpack.c.l.b16 %v585
  %v2690 = vunpack.c.h.b16 %v585
  %v2691 = vunpack.c.l.b16 %v586
  %v2692 = vunpack.c.h.b16 %v586
  %v2693 = vunpack.c.l.b16 %v587
  %v2694 = vunpack.c.h.b16 %v587
  %v2695 = vunpack.c.l.b16 %v588
  %v2696 = vunpack.c.h.b16 %v588
  %v2697 = vunpack.c.l.b16 %v589
  %v2698 = vunpack.c.h.b16 %v589
  %v2699 = vunpack.c.l.b16 %v590
  %v2700 = vunpack.c.h.b16 %v590
  %v2701 = vunpack.c.l.b16 %v591
  %v2702 = vunpack.c.h.b16 %v591
  %v2703 = vunpack.c.l.b16 %v592
  %v2704 = vunpack.c.h.b16 %v592
  %v2705 = vunpack.c.l.b16 %v593
  %v2706 = vunpack.c.h.b16 %v593
  %v2707 = vunpack.c.l.b16 %v594
  %v2708 = vunpack.c.h.b16 %v594
  %v2709 = vunpack.c.l.b16 %v595
  %v2710 = vunpack.c.h.b16 %v595
  %v2711 = vunpack.c.l.b16 %v596
  %v2712 = vunpack.c.h.b16 %v596
  %v2713 = vunpack.c.l.b16 %v597
  %v2714 = vunpack.c.h.b16 %v597
  %v2715 = vunpack.c.l.b16 %v598
  %v2716 = vunpack.c.h.b16 %v598
  %v2717 = vunpack.c.l.b16 %v599
  %v2718 = vunpack.c.h.b16 %v599
  %v2719 = vunpack.c.l.b16 %v600
  %v2720 = vunpack.c.h.b16 %v600
  %v2721 = vunpack.c.l.b16 %v601
  %v2722 = vunpack.c.h.b16 %v601
  %v2723 = vunpack.c.l.b16 %v602
  %v2724 = vunpack.c.h.b16 %v602
  %v2725 = vunpack.c.l.b16 %v603
  %v2726 = vunpack.c.h.b16 %v603
  %v2727 = vunpack.c.l.b16 %v604
  %v2728 = vunpack.c.h.b16 %v604
  %v2729 = vunpack.c.l.b16 %v605
  %v2730 = vunpack.c.h.b16 %v605
  %v2731 = vunpack.c.l.b16 %v606
  %v2732 = vunpack.c.h.b16 %v606
  %v2733 = vunpack.c.l.b16 %v607
  %v2734 = vunpack.c.h.b16 %v607
  %v2735 = vunpack.c.l.b16 %v608
  %v2736 = vunpack.c.h.b16 %v608
  %v2737 = vunpack.c.l.b16 %v609
  %v2738 = vunpack.c.h.b16 %v609
  %v2739 = vunpack.c.l.b16 %v610
  %v2740 = vunpack.c.h.b16 %v610
  %v2741 = vunpack.c.l.b16 %v611
  %v2742 = vunpack.c.h.b16 %v611
  %v2743 = vunpack.c.l.b16 %v612
  %v2744 = vunpack.c.h.b16 %v612
  %v2745 = vunpack.c.l.b16 %v613
  %v2746 = vunpack.c.h.b16 %v613
  %v2747 = vunpack.c.l.b16 %v614
  %v2748 = vunpack.c.h.b16 %v614
  %v2749 = vunpack.c.l.b16 %v615
  %v2750 = vunpack.c.h.b16 %v615
  %v2751 = vunpack.c.l.b16 %v616
  %v2752 = vunpack.c.h.b16 %v616
  %v2753 = vunpack.c.l.b16 %v617
  %v2754 = vunpack.c.h.b16 %v617
  %v2755 = vunpack.c.l.b16 %v618
  %v2756 = vunpack.c.h.b16 %v618
  %v2757 = vunpack.c.l.b16 %v619
  %v2758 = vunpack.c.h.b16 %v619
  %v2759 = vunpack.c.l.b16 %v620
  %v2760 = vunpack.c.h.b16 %v620
  %v2761 = vunpack.c.l.b16 %v621
  %v2762 = vunpack.c.h.b16 %v621
  %v2763 = vunpack.c.l.b16 %v622
  %v2764 = vunpack.c.h.b16 %v622
  %v2765 = vunpack.c.l.b16 %v623
  %v2766 = vunpack.c.h.b16 %v623
  %v2767 = vunpack.c.l.b16 %v624
  %v2768 = vunpack.c.h.b16 %v624
  %v2769 = vunpack.c.l.b16 %v625
  %v2770 = vunpack.c.h.b16 %v625
  %v2771 = vunpack.c.l.b16 %v626
  %v2772 = vunpack.c.h.b16 %v626
  %v2773 = vunpack.c.l.b16 %v627
  %v2774 = vunpack.c.h.b16 %v627
  %v2775 = vunpack.c.l.b16 %v628
  %v2776 = vunpack.c.h.b16 %v628
  %v2777 = vunpack.c.l.b16 %v629
  %v2778 = vunpack.c.h.b16 %v629
  %v2779 = vunpack.c.l.b16 %v630
  %v2780 = vunpack.c.h.b16 %v630
  %v2781 = vunpack.c.l.b16 %v631
  %v2782 = vunpack.c.h.b16 %v631
  %v2783 = vunpack.c.l.b16 %v632
  %v2784 = vunpack.c.h.b16 %v632
  %v2785 = vunpack.c.l.b16 %v633
  %v2786 = vunpack.c.h.b16 %v633
  %v2787 = vunpack.c.l.b16 %v634
  %v2788 = vunpack.c.h.b16 %v634
  %v2789 = vunpack.c.l.b16 %v635
  %v2790 = vunpack.c.h.b16 %v635
  %v2791 = vunpack.c.l.b16 %v636
  %v2792 = vunpack.c.h.b16 %v636
  %v2793 = vunpack.c.l.b16 %v637
  %v2794 = vunpack.c.h.b16 %v637
  %v2795 = vunpack.c.l.b16 %v638
  %v2796 = vunpack.c.h.b16 %v638
  %v2797 = vunpack.c.l.b16 %v639
  %v2798 = vunpack.c.h.b16 %v639
  %v2799 = vunpack.c.l.b16 %v640
  %v2800 = vunpack.c.h.b16 %v640
  %v2801 = vunpack.c.l.b16 %v641
  %v2802 = vunpack.c.h.b16 %v641
  %v2803 = vunpack.c.l.b16 %v642
  %v2804 = vunpack.c.h.b16 %v642
  %v2805 = vunpack.c.l.b16 %v643
  %v2806 = vunpack.c.h.b16 %v643
  %v2807 = vunpack.c.l.b16 %v644
  %v2808 = vunpack.c.h.b16 %v644
  %v2809 = vunpack.c.l.b16 %v645
  %v2810 = vunpack.c.h.b16 %v645
  %v2811 = vunpack.c.l.b16 %v646
  %v2812 = vunpack.c.h.b16 %v646
  %v2813 = vunpack.c.l.b16 %v647
  %v2814 = vunpack.c.h.b16 %v647
  %v2815 = vunpack.c.l.b16 %v648
  %v2816 = vunpack.c.h.b16 %v648
  %v2817 = vunpack.c.l.b16 %v649
  %v2818 = vunpack.c.h.b16 %v649
  %v2819 = vunpack.c.l.b16 %v650
  %v2820 = vunpack.c.h.b16 %v650
  %v2821 = vunpack.c.l.b16 %v651
  %v2822 = vunpack.c.h.b16 %v651
  %v2823 = vunpack.c.l.b16 %v652
  %v2824 = vunpack.c.h.b16 %v652
  %v2825 = vunpack.c.l.b16 %v653
  %v2826 = vunpack.c.h.b16 %v653
  %v2827 = vunpack.c.l.b16 %v654
  %v2828 = vunpack.c.h.b16 %v654
  %v2829 = vunpack.c.l.b16 %v655
  %v2830 = vunpack.c.h.b16 %v655
  %v2831 = vunpack.c.l.b16 %v656
  %v2832 = vunpack.c.h.b16 %v656
  %v2833 = vunpack.c.l.b16 %v657
  %v2834 = vunpack.c.h.b16 %v657
  %v2835 = vunpack.c.l.b16 %v658
  %v2836 = vunpack.c.h.b16 %v658
  %v2837 = vunpack.c.l.b16 %v659
  %v2838 = vunpack.c.h.b16 %v659
  %v2839 = vunpack.c.l.b16 %v660
  %v2840 = vunpack.c.h.b16 %v660
  %v2841 = vunpack.c.l.b16 %v661
  %v2842 = vunpack.c.h.b16 %v661
  %v2843 = vunpack.c.l.b16 %v662
  %v2844 = vunpack.c.h.b16 %v662
  %v2845 = vunpack.c.l.b16 %v663
  %v2846 = vunpack.c.h.b16 %v663
  %v2847 = vunpack.c.l.b16 %v664
  %v2848 = vunpack.c.h.b16 %v664
  %v2849 = vunpack.c.l.b16 %v665
  %v2850 = vunpack.c.h.b16 %v665
  %v2851 = vunpack.c.l.b16 %v666
  %v2852 = vunpack.c.h.b16 %v666
  %v2853 = vunpack.c.l.b16 %v667
  %v2854 = vunpack.c.h.b16 %v667
  %v2855 = vunpack.c.l.b16 %v668
  %v2856 = vunpack.c.h.b16 %v668
  %v2857 = vunpack.c.l.b16 %v669
  %v2858 = vunpack.c.h.b16 %v669
  %v2859 = vunpack.c.l.b16 %v670
  %v2860 = vunpack.c.h.b16 %v670
  %v2861 = vunpack.c.l.b16 %v671
  %v2862 = vunpack.c.h.b16 %v671
  %v2863 = vunpack.c.l.b16 %v672
  %v2864 = vunpack.c.h.b16 %v672
  %v2865 = vunpack.c.l.b16 %v673
  %v2866 = vunpack.c.h.b16 %v673
  %v2867 = vunpack.c.l.b16 %v674
  %v2868 = vunpack.c.h.b16 %v674
  %v2869 = vunpack.c.l.b16 %v675
  %v2870 = vunpack.c.h.b16 %v675
  %v2871 = vunpack.c.l.b16 %v676
  %v2872 = vunpack.c.h.b16 %v676
  %v2873 = vunpack.c.l.b16 %v677
  %v2874 = vunpack.c.h.b16 %v677
  %v2875 = vunpack.c.l.b16 %v678
  %v2876 = vunpack.c.h.b16 %v678
  %v2877 = vunpack.c.l.b16 %v679
  %v2878 = vunpack.c.h.b16 %v679
  %v2879 = vunpack.c.l.b16 %v680
  %v2880 = vunpack.c.h.b16 %v680
  %v2881 = vunpack.c.l.b16 %v681
  %v2882 = vunpack.c.h.b16 %v681
  %v2883 = vunpack.c.l.b16 %v682
  %v2884 = vunpack.c.h.b16 %v682
  %v2885 = vunpack.c.l.b16 %v683
  %v2886 = vunpack.c.h.b16 %v683
  %v2887 = vunpack.c.l.b16 %v684
  %v2888 = vunpack.c.h.b16 %v684
  %v2889 = vunpack.c.l.b16 %v685
  %v2890 = vunpack.c.h.b16 %v685
  %v2891 = vunpack.c.l.b16 %v686
  %v2892 = vunpack.c.h.b16 %v686
  %v2893 = vunpack.c.l.b16 %v687
  %v2894 = vunpack.c.h.b16 %v687
  %v2895 = vunpack.c.l.b16 %v688
  %v2896 = vunpack.c.h.b16 %v688
  %v2897 = vunpack.c.l.b16 %v689
  %v2898 = vunpack.c.h.b16 %v689
  %v2899 = vunpack.c.l.b16 %v690
  %v2900 = vunpack.c.h.b16 %v690
  %v2901 = vunpack.c.l.b16 %v691
  %v2902 = vunpack.c.h.b16 %v691
  %v2903 = vunpack.c.l.b16 %v692
  %v2904 = vunpack.c.h.b16 %v692
  %v2905 = vunpack.c.l.b16 %v693
  %v2906 = vunpack.c.h.b16 %v693
  %v2907 = vunpack.c.l.b16 %v694
  %v2908 = vunpack.c.h.b16 %v694
  %v2909 = vunpack.c.l.b16 %v695
  %v2910 = vunpack.c.h.b16 %v695
  %v2911 = vunpack.c.l.b16 %v696
  %v2912 = vunpack.c.h.b16 %v696
  %v2913 = vunpack.c.l.b16 %v697
  %v2914 = vunpack.c.h.b16 %v697
  %v2915 = vunpack.c.l.b16 %v698
  %v2916 = vunpack.c.h.b16 %v698
  %v2917 = vunpack.c.l.b16 %v699
  %v2918 = vunpack.c.h.b16 %v699
  %v2919 = vunpack.c.l.b16 %v700
  %v2920 = vunpack.c.h.b16 %v700
  %v2921 = vunpack.c.l.b16 %v701
  %v2922 = vunpack.c.h.b16 %v701
  %v2923 = vunpack.c.l.b16 %v702
  %v2924 = vunpack.c.h.b16 %v702
  %v2925 = vunpack.c.l.b16 %v703
  %v2926 = vunpack.c.h.b16 %v703
  %v2927 = vunpack.c.l.b16 %v704
  %v2928 = vunpack.c.h.b16 %v704
  %v2929 = vunpack.c.l.b16 %v705
  %v2930 = vunpack.c.h.b16 %v705
  %v2931 = vunpack.c.l.b16 %v706
  %v2932 = vunpack.c.h.b16 %v706
  %v2933 = vunpack.c.l.b16 %v707
  %v2934 = vunpack.c.h.b16 %v707
  %v2935 = vunpack.c.l.b16 %v708
  %v2936 = vunpack.c.h.b16 %v708
  %v2937 = vunpack.c.l.b16 %v709
  %v2938 = vunpack.c.h.b16 %v709
  %v2939 = vunpack.c.l.b16 %v710
  %v2940 = vunpack.c.h.b16 %v710
  %v2941 = vunpack.c.l.b16 %v711
  %v2942 = vunpack.c.h.b16 %v711
  %v2943 = vunpack.c.l.b16 %v712
  %v2944 = vunpack.c.h.b16 %v712
  %v2945 = vunpack.c.l.b16 %v713
  %v2946 = vunpack.c.h.b16 %v713
  %v2947 = vunpack.c.l.b16 %v714
  %v2948 = vunpack.c.h.b16 %v714
  %v2949 = vunpack.c.l.b16 %v715
  %v2950 = vunpack.c.h.b16 %v715
  %v2951 = vunpack.c.l.b16 %v716
  %v2952 = vunpack.c.h.b16 %v716
  %v2953 = vunpack.c.l.b16 %v717
  %v2954 = vunpack.c.h.b16 %v717
  %v2955 = vunpack.c.l.b16 %v718
  %v2956 = vunpack.c.h.b16 %v718
  %v2957 = vunpack.c.l.b16 %v719
  %v2958 = vunpack.c.h.b16 %v719
  %v2959 = vunpack.c.l.b16 %v720
  %v2960 = vunpack.c.h.b16 %v720
  %v2961 = vunpack.c.l.b16 %v721
  %v2962 = vunpack.c.h.b16 %v721
  %v2963 = vunpack.c.l.b16 %v722
  %v2964 = vunpack.c.h.b16 %v722
  %v2965 = vunpack.c.l.b16 %v723
  %v2966 = vunpack.c.h.b16 %v723
  %v2967 = vunpack.c.l.b16 %v724
  %v2968 = vunpack.c.h.b16 %v724
  %v2969 = vunpack.c.l.b16 %v725
  %v2970 = vunpack.c.h.b16 %v725
  %v2971 = vunpack.c.l.b16 %v726
  %v2972 = vunpack.c.h.b16 %v726
  %v2973 = vunpack.c.l.b16 %v727
  %v2974 = vunpack.c.h.b16 %v727
  %v2975 = vunpack.c.l.b16 %v728
  %v2976 = vunpack.c.h.b16 %v728
  %v2977 = vunpack.c.l.b16 %v729
  %v2978 = vunpack.c.h.b16 %v729
  %v2979 = vunpack.c.l.b16 %v730
  %v2980 = vunpack.c.h.b16 %v730
  %v2981 = vunpack.c.l.b16 %v731
  %v2982 = vunpack.c.h.b16 %v731
  %v2983 = vunpack.c.l.b16 %v732
  %v2984 = vunpack.c.h.b16 %v732
  %v2985 = vunpack.c.l.b16 %v733
  %v2986 = vunpack.c.h.b16 %v733
  %v2987 = vunpack.c.l.b16 %v734
  %v2988 = vunpack.c.h.b16 %v734
  %v2989 = vunpack.c.l.b16 %v735
  %v2990 = vunpack.c.h.b16 %v735
  %v2991 = vunpack.c.l.b16 %v736
  %v2992 = vunpack.c.h.b16 %v736
  %v2993 = vunpack.c.l.b16 %v737
  %v2994 = vunpack.c.h.b16 %v737
  %v2995 = vunpack.c.l.b16 %v738
  %v2996 = vunpack.c.h.b16 %v738
  %v2997 = vunpack.c.l.b16 %v739
  %v2998 = vunpack.c.h.b16 %v739
  %v2999 = vunpack.c.l.b16 %v740
  %v3000 = vunpack.c.h.b16 %v740
  %v3001 = vunpack.c.l.b16 %v741
  %v3002 = vunpack.c.h.b16 %v741
  %v3003 = vunpack.c.l.b16 %v742
  %v3004 = vunpack.c.h.b16 %v742
  %v3005 = vunpack.c.l.b16 %v743
  %v3006 = vunpack.c.h.b16 %v743
  %v3007 = vunpack.c.l.b16 %v744
  %v3008 = vunpack.c.h.b16 %v744
  %v3009 = vunpack.c.l.b16 %v745
  %v3010 = vunpack.c.h.b16 %v745
  %v3011 = vunpack.c.l.b16 %v746
  %v3012 = vunpack.c.h.b16 %v746
  %v3013 = vunpack.c.l.b16 %v747
  %v3014 = vunpack.c.h.b16 %v747
  %v3015 = vunpack.c.l.b16 %v748
  %v3016 = vunpack.c.h.b16 %v748
  %v3017 = vunpack.c.l.b16 %v749
  %v3018 = vunpack.c.h.b16 %v749
  %v3019 = vunpack.c.l.b16 %v750
  %v3020 = vunpack.c.h.b16 %v750
  %v3021 = vunpack.c.l.b16 %v751
  %v3022 = vunpack.c.h.b16 %v751
  %v3023 = vunpack.c.l.b16 %v752
  %v3024 = vunpack.c.h.b16 %v752
  %v3025 = vunpack.c.l.b16 %v753
  %v3026 = vunpack.c.h.b16 %v753
  %v3027 = vunpack.c.l.b16 %v754
  %v3028 = vunpack.c.h.b16 %v754
  %v3029 = vunpack.c.l.b16 %v755
  %v3030 = vunpack.c.h.b16 %v755
  %v3031 = vunpack.c.l.b16 %v756
  %v3032 = vunpack.c.h.b16 %v756
  %v3033 = vunpack.c.l.b16 %v757
  %v3034 = vunpack.c.h.b16 %v757
  %v3035 = vunpack.c.l.b16 %v758
  %v3036 = vunpack.c.h.b16 %v758
  %v3037 = vunpack.c.l.b16 %v759
  %v3038 = vunpack.c.h.b16 %v759
  %v3039 = vunpack.c.l.b16 %v760
  %v3040 = vunpack.c.h.b16 %v760
  %v3041 = vunpack.c.l.b16 %v761
  %v3042 = vunpack.c.h.b16 %v761
  %v3043 = vunpack.c.l.b16 %v762
  %v3044 = vunpack.c.h.b16 %v762
  %v3045 = vunpack.c.l.b16 %v763
  %v3046 = vunpack.c.h.b16 %v763
  %v3047 = vunpack.c.l.b16 %v764
  %v3048 = vunpack.c.h.b16 %v764
  %v3049 = vunpack.c.l.b16 %v765
  %v3050 = vunpack.c.h.b16 %v765
  %v3051 = vunpack.c.l.b16 %v766
  %v3052 = vunpack.c.h.b16 %v766
  %v3053 = vunpack.c.l.b16 %v767
  %v3054 = vunpack.c.h.b16 %v767
  %v3055 = vunpack.c.l.b16 %v768
  %v3056 = vunpack.c.h.b16 %v768
  %v3057 = vunpack.c.l.b16 %v769
  %v3058 = vunpack.c.h.b16 %v769
  %v3059 = vunpack.c.l.b16 %v770
  %v3060 = vunpack.c.h.b16 %v770
  %v3061 = vunpack.c.l.b16 %v771
  %v3062 = vunpack.c.h.b16 %v771
  %v3063 = vunpack.c.l.b16 %v772
  %v3064 = vunpack.c.h.b16 %v772
  %v3065 = vunpack.c.l.b16 %v773
  %v3066 = vunpack.c.h.b16 %v773
  %v3067 = vunpack.c.l.b16 %v774
  %v3068 = vunpack.c.h.b16 %v774
  %v3069 = vunpack.c.l.b16 %v775
  %v3070 = vunpack.c.h.b16 %v775
  %v3071 = vunpack.c.l.b16 %v776
  %v3072 = vunpack.c.h.b16 %v776
  %v3073 = vunpack.c.l.b16 %v777
  %v3074 = vunpack.c.h.b16 %v777
  %v3075 = vunpack.c.l.b16 %v778
  %v3076 = vunpack.c.h.b16 %v778
  %v3077 = vunpack.c.l.b16 %v779
  %v3078 = vunpack.c.h.b16 %v779
  %v3079 = vunpack.c.l.b16 %v780
  %v3080 = vunpack.c.h.b16 %v780
  %v3081 = vunpack.c.l.b16 %v781
  %v3082 = vunpack.c.h.b16 %v781
  %v3083 = vunpack.c.l.b16 %v782
  %v3084 = vunpack.c.h.b16 %v782
  %v3085 = vunpack.c.l.b16 %v783
  %v3086 = vunpack.c.h.b16 %v783
  %v3087 = vunpack.c.l.b16 %v784
  %v3088 = vunpack.c.h.b16 %v784
  %v3089 = vunpack.c.l.b16 %v785
  %v3090 = vunpack.c.h.b16 %v785
  %v3091 = vunpack.c.l.b16 %v786
  %v3092 = vunpack.c.h.b16 %v786
  %v3093 = vunpack.c.l.b16 %v787
  %v3094 = vunpack.c.h.b16 %v787
  %v3095 = vunpack.c.l.b16 %v788
  %v3096 = vunpack.c.h.b16 %v788
  %v3097 = vunpack.c.l.b16 %v789
  %v3098 = vunpack.c.h.b16 %v789
  %v3099 = vunpack.c.l.b16 %v790
  %v3100 = vunpack.c.h.b16 %v790
  %v3101 = vunpack.c.l.b16 %v791
  %v3102 = vunpack.c.h.b16 %v791
  %v3103 = vunpack.c.l.b16 %v792
  %v3104 = vunpack.c.h.b16 %v792
  %v3105 = vunpack.c.l.b16 %v793
  %v3106 = vunpack.c.h.b16 %v793
  %v3107 = vunpack.c.l.b16 %v794
  %v3108 = vunpack.c.h.b16 %v794
  %v3109 = vunpack.c.l.b16 %v795
  %v3110 = vunpack.c.h.b16 %v795
  %v3111 = vunpack.c.l.b16 %v796
  %v3112 = vunpack.c.h.b16 %v796
  %v3113 = vunpack.c.l.b16 %v797
  %v3114 = vunpack.c.h.b16 %v797
  %v3115 = vunpack.c.l.b16 %v798
  %v3116 = vunpack.c.h.b16 %v798
  %v3117 = vunpack.c.l.b16 %v799
  %v3118 = vunpack.c.h.b16 %v799
  %v3119 = vunpack.c.l.b16 %v800
  %v3120 = vunpack.c.h.b16 %v800
  %v3121 = vunpack.c.l.b16 %v801
  %v3122 = vunpack.c.h.b16 %v801
  %v3123 = vunpack.c.l.b16 %v802
  %v3124 = vunpack.c.h.b16 %v802
  %v3125 = vunpack.c.l.b16 %v803
  %v3126 = vunpack.c.h.b16 %v803
  %v3127 = vunpack.c.l.b16 %v804
  %v3128 = vunpack.c.h.b16 %v804
  %v3129 = vunpack.c.l.b16 %v805
  %v3130 = vunpack.c.h.b16 %v805
  %v3131 = vunpack.c.l.b16 %v806
  %v3132 = vunpack.c.h.b16 %v806
  %v3133 = vunpack.c.l.b16 %v807
  %v3134 = vunpack.c.h.b16 %v807
  %v3135 = vunpack.c.l.b16 %v808
  %v3136 = vunpack.c.h.b16 %v808
  %v3137 = vunpack.c.l.b16 %v809
  %v3138 = vunpack.c.h.b16 %v809
  %v3139 = vunpack.c.l.b16 %v810
  %v3140 = vunpack.c.h.b16 %v810
  %v3141 = vunpack.c.l.b16 %v811
  %v3142 = vunpack.c.h.b16 %v811
  %v3143 = vunpack.c.l.b16 %v812
  %v3144 = vunpack.c.h.b16 %v812
  %v3145 = vunpack.c.l.b16 %v813
  %v3146 = vunpack.c.h.b16 %v813
  %v3147 = vunpack.c.l.b16 %v814
  %v3148 = vunpack.c.h.b16 %v814
  %v3149 = vunpack.c.l.b16 %v815
  %v3150 = vunpack.c.h.b16 %v815
  %v3151 = vunpack.c.l.b16 %v816
  %v3152 = vunpack.c.h.b16 %v816
  %v3153 = vunpack.c.l.b16 %v817
  %v3154 = vunpack.c.h.b16 %v817
  %v3155 = vunpack.c.l.b16 %v818
  %v3156 = vunpack.c.h.b16 %v818
  %v3157 = vunpack.c.l.b16 %v819
  %v3158 = vunpack.c.h.b16 %v819
  %v3159 = vunpack.c.l.b16 %v820
  %v3160 = vunpack.c.h.b16 %v820
  %v3161 = vunpack.c.l.b16 %v821
  %v3162 = vunpack.c.h.b16 %v821
  %v3163 = vunpack.c.l.b16 %v822
  %v3164 = vunpack.c.h.b16 %v822
  %v3165 = vunpack.c.l.b16 %v823
  %v3166 = vunpack.c.h.b16 %v823
  %v3167 = vunpack.c.l.b16 %v824
  %v3168 = vunpack.c.h.b16 %v824
  %v3169 = vunpack.c.l.b16 %v825
  %v3170 = vunpack.c.h.b16 %v825
  %v3171 = vunpack.c.l.b16 %v826
  %v3172 = vunpack.c.h.b16 %v826
  %v3173 = vunpack.c.l.b16 %v827
  %v3174 = vunpack.c.h.b16 %v827
  %v3175 = vunpack.c.l.b16 %v828
  %v3176 = vunpack.c.h.b16 %v828
  %v3177 = vunpack.c.l.b16 %v829
  %v3178 = vunpack.c.h.b16 %v829
  %v3179 = vunpack.c.l.b16 %v830
  %v3180 = vunpack.c.h.b16 %v830
  %v3181 = vunpack.c.l.b16 %v831
  %v3182 = vunpack.c.h.b16 %v831
  %v3183 = vunpack.c.l.b16 %v832
  %v3184 = vunpack.c.h.b16 %v832
  %v3185 = vunpack.c.l.b16 %v833
  %v3186 = vunpack.c.h.b16 %v833
  %v3187 = vunpack.c.l.b16 %v834
  %v3188 = vunpack.c.h.b16 %v834
  %v3189 = vunpack.c.l.b16 %v835
  %v3190 = vunpack.c.h.b16 %v835
  %v3191 = vunpack.c.l.b16 %v836
  %v3192 = vunpack.c.h.b16 %v836
  %v3193 = vunpack.c.l.b16 %v837
  %v3194 = vunpack.c.h.b16 %v837
  %v3195 = vunpack.c.l.b16 %v838
  %v3196 = vunpack.c.h.b16 %v838
  %v3197 = vunpack.c.l.b16 %v839
  %v3198 = vunpack.c.h.b16 %v839
  %v3199 = vunpack.c.l.b16 %v840
  %v3200 = vunpack.c.h.b16 %v840
  %v3201 = vunpack.c.l.b16 %v841
  %v3202 = vunpack.c.h.b16 %v841
  %v3203 = vunpack.c.l.b16 %v842
  %v3204 = vunpack.c.h.b16 %v842
  %v3205 = vunpack.c.l.b16 %v843
  %v3206 = vunpack.c.h.b16 %v843
  %v3207 = vunpack.c.l.b16 %v844
  %v3208 = vunpack.c.h.b16 %v844
  %v3209 = vunpack.c.l.b16 %v845
  %v3210 = vunpack.c.h.b16 %v845
  %v3211 = vunpack.c.l.b16 %v846
  %v3212 = vunpack.c.h.b16 %v846
  %v3213 = vunpack.c.l.b16 %v847
  %v3214 = vunpack.c.h.b16 %v847
  %v3215 = vunpack.c.l.b16 %v848
  %v3216 = vunpack.c.h.b16 %v848
  %v3217 = vunpack.c.l.b16 %v849
  %v3218 = vunpack.c.h.b16 %v849
  %v3219 = vunpack.c.l.b16 %v850
  %v3220 = vunpack.c.h.b16 %v850
  %v3221 = vunpack.c.l.b16 %v851
  %v3222 = vunpack.c.h.b16 %v851
  %v3223 = vunpack.c.l.b16 %v852
  %v3224 = vunpack.c.h.b16 %v852
  %v3225 = vunpack.c.l.b16 %v853
  %v3226 = vunpack.c.h.b16 %v853
  %v3227 = vunpack.c.l.b16 %v854
  %v3228 = vunpack.c.h.b16 %v854
  %v3229 = vpack.c.b16 %v1665, %v1661
  %v3230 = vpack.c.b16 %v1666, %v1662
  %v3231 = vpack.c.b16 %v1667, %v1663
  %v3232 = vpack.c.b16 %v1668, %v1664
  %v3233 = vpack.c.b16 %v1673, %v1669
  %v3234 = vpack.c.b16 %v1674, %v1670
  %v3235 = vpack.c.b16 %v1675, %v1671
  %v3236 = vpack.c.b16 %v1676, %v1672
  %v3237 = vpack.c.b16 %v1681, %v1677
  %v3238 = vpack.c.b16 %v1682, %v1678
  %v3239 = vpack.c.b16 %v1683, %v1679
  %v3240 = vpack.c.b16 %v1684, %v1680
  %v3241 = vpack.c.b16 %v1689, %v1685
  %v3242 = vpack.c.b16 %v1690, %v1686
  %v3243 = vpack.c.b16 %v1691, %v1687
  %v3244 = vpack.c.b16 %v1692, %v1688
  %v3245 = vpack.c.b16 %v1697, %v1693
  %v3246 = vpack.c.b16 %v1698, %v1694
  %v3247 = vpack.c.b16 %v1699, %v1695
  %v3248 = vpack.c.b16 %v1700, %v1696
  %v3249 = vpack.c.b16 %v1705, %v1701
  %v3250 = vpack.c.b16 %v1706, %v1702
  %v3251 = vpack.c.b16 %v1707, %v1703
  %v3252 = vpack.c.b16 %v1708, %v1704
  %v3253 = vpack.c.b16 %v1713, %v1709
  %v3254 = vpack.c.b16 %v1714, %v1710
  %v3255 = vpack.c.b16 %v1715, %v1711
  %v3256 = vpack.c.b16 %v1716, %v1712
  %v3257 = vpack.c.b16 %v1721, %v1717
  %v3258 = vpack.c.b16 %v1722, %v1718
  %v3259 = vpack.c.b16 %v1723, %v1719
  %v3260 = vpack.c.b16 %v1724, %v1720
  %v3261 = vpack.c.b16 %v1729, %v1725
  %v3262 = vpack.c.b16 %v1730, %v1726
  %v3263 = vpack.c.b16 %v1731, %v1727
  %v3264 = vpack.c.b16 %v1732, %v1728
  %v3265 = vpack.c.b16 %v1737, %v1733
  %v3266 = vpack.c.b16 %v1738, %v1734
  %v3267 = vpack.c.b16 %v1739, %v1735
  %v3268 = vpack.c.b16 %v1740, %v1736
  %v3269 = vpack.c.b16 %v1745, %v1741
  %v3270 = vpack.c.b16 %v1746, %v1742
  %v3271 = vpack.c.b16 %v1747, %v1743
  %v3272 = vpack.c.b16 %v1748, %v1744
  %v3273 = vpack.c.b16 %v1753, %v1749
  %v3274 = vpack.c.b16 %v1754, %v1750
  %v3275 = vpack.c.b16 %v1755, %v1751
  %v3276 = vpack.c.b16 %v1756, %v1752
  %v3277 = vpack.c.b16 %v1761, %v1757
  %v3278 = vpack.c.b16 %v1762, %v1758
  %v3279 = vpack.c.b16 %v1763, %v1759
  %v3280 = vpack.c.b16 %v1764, %v1760
  %v3281 = vpack.c.b16 %v1769, %v1765
  %v3282 = vpack.c.b16 %v1770, %v1766
  %v3283 = vpack.c.b16 %v1771, %v1767
  %v3284 = vpack.c.b16 %v1772, %v1768
  %v3285 = vpack.c.b16 %v1777, %v1773
  %v3286 = vpack.c.b16 %v1778, %v1774
  %v3287 = vpack.c.b16 %v1779, %v1775
  %v3288 = vpack.c.b16 %v1780, %v1776
  %v3289 = vpack.c.b16 %v1785, %v1781
  %v3290 = vpack.c.b16 %v1786, %v1782
  %v3291 = vpack.c.b16 %v1787, %v1783
  %v3292 = vpack.c.b16 %v1788, %v1784
  %v3293 = vpack.c.b16 %v1793, %v1789
  %v3294 = vpack.c.b16 %v1794, %v1790
  %v3295 = vpack.c.b16 %v1795, %v1791
  %v3296 = vpack.c.b16 %v1796, %v1792
  %v3297 = vpack.c.b16 %v1801, %v1797
  %v3298 = vpack.c.b16 %v1802, %v1798
  %v3299 = vpack.c.b16 %v1803, %v1799
  %v3300 = vpack.c.b16 %v1804, %v1800
  %v3301 = vpack.c.b16 %v1809, %v1805
  %v3302 = vpack.c.b16 %v1810, %v1806
  %v3303 = vpack.c.b16 %v1811, %v1807
  %v3304 = vpack.c.b16 %v1812, %v1808
  %v3305 = vpack.c.b16 %v1817, %v1813
  %v3306 = vpack.c.b16 %v1818, %v1814
  %v3307 = vpack.c.b16 %v1819, %v1815
  %v3308 = vpack.c.b16 %v1820, %v1816
  %v3309 = vpack.c.b16 %v1825, %v1821
  %v3310 = vpack.c.b16 %v1826, %v1822
  %v3311 = vpack.c.b16 %v1827, %v1823
  %v3312 = vpack.c.b16 %v1828, %v1824
  %v3313 = vpack.c.b16 %v1833, %v1829
  %v3314 = vpack.c.b16 %v1834, %v1830
  %v3315 = vpack.c.b16 %v1835, %v1831
  %v3316 = vpack.c.b16 %v1836, %v1832
  %v3317 = vpack.c.b16 %v1841, %v1837
  %v3318 = vpack.c.b16 %v1842, %v1838
  %v3319 = vpack.c.b16 %v1843, %v1839
  %v3320 = vpack.c.b16 %v1844, %v1840
  %v3321 = vpack.c.b16 %v1849, %v1845
  %v3322 = vpack.c.b16 %v1850, %v1846
  %v3323 = vpack.c.b16 %v1851, %v1847
  %v3324 = vpack.c.b16 %v1852, %v1848
  %v3325 = vpack.c.b16 %v1857, %v1853
  %v3326 = vpack.c.b16 %v1858, %v1854
  %v3327 = vpack.c.b16 %v1859, %v1855
  %v3328 = vpack.c.b16 %v1860, %v1856
  %v3329 = vpack.c.b16 %v1865, %v1861
  %v3330 = vpack.c.b16 %v1866, %v1862
  %v3331 = vpack.c.b16 %v1867, %v1863
  %v3332 = vpack.c.b16 %v1868, %v1864
  %v3333 = vpack.c.b16 %v1873, %v1869
  %v3334 = vpack.c.b16 %v1874, %v1870
  %v3335 = vpack.c.b16 %v1875, %v1871
  %v3336 = vpack.c.b16 %v1876, %v1872
  %v3337 = vpack.c.b16 %v1881, %v1877
  %v3338 = vpack.c.b16 %v1882, %v1878
  %v3339 = vpack.c.b16 %v1883, %v1879
  %v3340 = vpack.c.b16 %v1884, %v1880
  %v3341 = vpack.c.b16 %v1889, %v1885
  %v3342 = vpack.c.b16 %v1890, %v1886
  %v3343 = vpack.c.b16 %v1891, %v1887
  %v3344 = vpack.c.b16 %v1892, %v1888
  %v3345 = vpack.c.b16 %v1897, %v1893
  %v3346 = vpack.c.b16 %v1898, %v1894
  %v3347 = vpack.c.b16 %v1899, %v1895
  %v3348 = vpack.c.b16 %v1900, %v1896
  %v3349 = vpack.c.b16 %v1905, %v1901
  %v3350 = vpack.c.b16 %v1906, %v1902
  %v3351 = vpack.c.b16 %v1907, %v1903
  %v3352 = vpack.c.b16 %v1908, %v1904
  %v3353 = vpack.c.b16 %v1913, %v1909
  %v3354 = vpack.c.b16 %v1914, %v1910
  %v3355 = vpack.c.b16 %v1915, %v1911
  %v3356 = vpack.c.b16 %v1916, %v1912
  %v3357 = vpack.c.b16 %v1921, %v1917
  %v3358 = vpack.c.b16 %v1922, %v1918
  %v3359 = vpack.c.b16 %v1923, %v1919
  %v3360 = vpack.c.b16 %v1924, %v1920
  %v3361 = vpack.c.b16 %v1929, %v1925
  %v3362 = vpack.c.b16 %v1930, %v1926
  %v3363 = vpack.c.b16 %v1931, %v1927
  %v3364 = vpack.c.b16 %v1932, %v1928
  %v3365 = vpack.c.b16 %v1937, %v1933
  %v3366 = vpack.c.b16 %v1938, %v1934
  %v3367 = vpack.c.b16 %v1939, %v1935
  %v3368 = vpack.c.b16 %v1940, %v1936
  %v3369 = vpack.c.b16 %v1945, %v1941
  %v3370 = vpack.c.b16 %v1946, %v1942
  %v3371 = vpack.c.b16 %v1947, %v1943
  %v3372 = vpack.c.b16 %v1948, %v1944
  %v3373 = vpack.c.b16 %v1953, %v1949
  %v3374 = vpack.c.b16 %v1954, %v1950
  %v3375 = vpack.c.b16 %v1955, %v1951
  %v3376 = vpack.c.b16 %v1956, %v1952
  %v3377 = vpack.c.b16 %v1961, %v1957
  %v3378 = vpack.c.b16 %v1962, %v1958
  %v3379 = vpack.c.b16 %v1963, %v1959
  %v3380 = vpack.c.b16 %v1964, %v1960
  %v3381 = vpack.c.b16 %v1969, %v1965
  %v3382 = vpack.c.b16 %v1970, %v1966
  %v3383 = vpack.c.b16 %v1971, %v1967
  %v3384 = vpack.c.b16 %v1972, %v1968
  %v3385 = vpack.c.b16 %v1977, %v1973
  %v3386 = vpack.c.b16 %v1978, %v1974
  %v3387 = vpack.c.b16 %v1979, %v1975
  %v3388 = vpack.c.b16 %v1980, %v1976
  %v3389 = vpack.c.b16 %v1985, %v1981
  %v3390 = vpack.c.b16 %v1986, %v1982
  %v3391 = vpack.c.b16 %v1987, %v1983
  %v3392 = vpack.c.b16 %v1988, %v1984
  %v3393 = vpack.c.b16 %v1993, %v1989
  %v3394 = vpack.c.b16 %v1994, %v1990
  %v3395 = vpack.c.b16 %v1995, %v1991
  %v3396 = vpack.c.b16 %v1996, %v1992
  %v3397 = vpack.c.b16 %v2001, %v1997
  %v3398 = vpack.c.b16 %v2002, %v1998
  %v3399 = vpack.c.b16 %v2003, %v1999
  %v3400 = vpack.c.b16 %v2004, %v2000
  %v3401 = vpack.c.b16 %v2009, %v2005
  %v3402 = vpack.c.b16 %v2010, %v2006
  %v3403 = vpack.c.b16 %v2011, %v2007
  %v3404 = vpack.c.b16 %v2012, %v2008
  %v3405 = vpack.c.b16 %v2017, %v2013
  %v3406 = vpack.c.b16 %v2018, %v2014
  %v3407 = vpack.c.b16 %v2019, %v2015
  %v3408 = vpack.c.b16 %v2020, %v2016
  %v3409 = vpack.c.b16 %v2025, %v2021
  %v3410 = vpack.c.b16 %v2026, %v2022
  %v3411 = vpack.c.b16 %v2027, %v2023
  %v3412 = vpack.c.b16 %v2028, %v2024
  %v3413 = vpack.c.b16 %v2033, %v2029
  %v3414 = vpack.c.b16 %v2034, %v2030
  %v3415 = vpack.c.b16 %v2035, %v2031
  %v3416 = vpack.c.b16 %v2036, %v2032
  %v3417 = vpack.c.b16 %v2041, %v2037
  %v3418 = vpack.c.b16 %v2042, %v2038
  %v3419 = vpack.c.b16 %v2043, %v2039
  %v3420 = vpack.c.b16 %v2044, %v2040
  %v3421 = vpack.c.b16 %v2049, %v2045
  %v3422 = vpack.c.b16 %v2050, %v2046
  %v3423 = vpack.c.b16 %v2051, %v2047
  %v3424 = vpack.c.b16 %v2052, %v2048
  %v3425 = vpack.c.b16 %v2057, %v2053
  %v3426 = vpack.c.b16 %v2058, %v2054
  %v3427 = vpack.c.b16 %v2059, %v2055
  %v3428 = vpack.c.b16 %v2060, %v2056
  %v3429 = vpack.c.b16 %v2065, %v2061
  %v3430 = vpack.c.b16 %v2066, %v2062
  %v3431 = vpack.c.b16 %v2067, %v2063
  %v3432 = vpack.c.b16 %v2068, %v2064
  %v3433 = vpack.c.b16 %v2073, %v2069
  %v3434 = vpack.c.b16 %v2074, %v2070
  %v3435 = vpack.c.b16 %v2075, %v2071
  %v3436 = vpack.c.b16 %v2076, %v2072
  %v3437 = vpack.c.b16 %v2081, %v2077
  %v3438 = vpack.c.b16 %v2082, %v2078
  %v3439 = vpack.c.b16 %v2083, %v2079
  %v3440 = vpack.c.b16 %v2084, %v2080
  %v3441 = vpack.c.b16 %v2089, %v2085
  %v3442 = vpack.c.b16 %v2090, %v2086
  %v3443 = vpack.c.b16 %v2091, %v2087
  %v3444 = vpack.c.b16 %v2092, %v2088
  %v3445 = vpack.c.b16 %v2097, %v2093
  %v3446 = vpack.c.b16 %v2098, %v2094
  %v3447 = vpack.c.b16 %v2099, %v2095
  %v3448 = vpack.c.b16 %v2100, %v2096
  %v3449 = vpack.c.b16 %v2105, %v2101
  %v3450 = vpack.c.b16 %v2106, %v2102
  %v3451 = vpack.c.b16 %v2107, %v2103
  %v3452 = vpack.c.b16 %v2108, %v2104
  %v3453 = vpack.c.b16 %v2113, %v2109
  %v3454 = vpack.c.b16 %v2114, %v2110
  %v3455 = vpack.c.b16 %v2115, %v2111
  %v3456 = vpack.c.b16 %v2116, %v2112
  %v3457 = vpack.c.b16 %v2121, %v2117
  %v3458 = vpack.c.b16 %v2122, %v2118
  %v3459 = vpack.c.b16 %v2123, %v2119
  %v3460 = vpack.c.b16 %v2124, %v2120
  %v3461 = vpack.c.b16 %v2129, %v2125
  %v3462 = vpack.c.b16 %v2130, %v2126
  %v3463 = vpack.c.b16 %v2131, %v2127
  %v3464 = vpack.c.b16 %v2132, %v2128
  %v3465 = vpack.c.b16 %v2137, %v2133
  %v3466 = vpack.c.b16 %v2138, %v2134
  %v3467 = vpack.c.b16 %v2139, %v2135
  %v3468 = vpack.c.b16 %v2140, %v2136
  %v3469 = vpack.c.b16 %v2145, %v2141
  %v3470 = vpack.c.b16 %v2146, %v2142
  %v3471 = vpack.c.b16 %v2147, %v2143
  %v3472 = vpack.c.b16 %v2148, %v2144
  %v3473 = vpack.c.b16 %v2153, %v2149
  %v3474 = vpack.c.b16 %v2154, %v2150
  %v3475 = vpack.c.b16 %v2155, %v2151
  %v3476 = vpack.c.b16 %v2156, %v2152
  %v3477 = vpack.c.b16 %v2161, %v2157
  %v3478 = vpack.c.b16 %v2162, %v2158
  %v3479 = vpack.c.b16 %v2163, %v2159
  %v3480 = vpack.c.b16 %v2164, %v2160
  %v3481 = vpack.c.b16 %v2169, %v2165
  %v3482 = vpack.c.b16 %v2170, %v2166
  %v3483 = vpack.c.b16 %v2171, %v2167
  %v3484 = vpack.c.b16 %v2172, %v2168
  %v3485 = vpack.c.b16 %v2177, %v2173
  %v3486 = vpack.c.b16 %v2178, %v2174
  %v3487 = vpack.c.b16 %v2179, %v2175
  %v3488 = vpack.c.b16 %v2180, %v2176
  %v3489 = vpack.c.b16 %v2185, %v2181
  %v3490 = vpack.c.b16 %v2186, %v2182
  %v3491 = vpack.c.b16 %v2187, %v2183
  %v3492 = vpack.c.b16 %v2188, %v2184
  %v3493 = vpack.c.b16 %v2193, %v2189
  %v3494 = vpack.c.b16 %v2194, %v2190
  %v3495 = vpack.c.b16 %v2195, %v2191
  %v3496 = vpack.c.b16 %v2196, %v2192
  %v3497 = vpack.c.b16 %v2201, %v2197
  %v3498 = vpack.c.b16 %v2202, %v2198
  %v3499 = vpack.c.b16 %v2203, %v2199
  %v3500 = vpack.c.b16 %v2204, %v2200
  %v3501 = vpack.c.b16 %v2209, %v2205
  %v3502 = vpack.c.b16 %v2210, %v2206
  %v3503 = vpack.c.b16 %v2211, %v2207
  %v3504 = vpack.c.b16 %v2212, %v2208
  %v3505 = vpack.c.b16 %v2217, %v2213
  %v3506 = vpack.c.b16 %v2218, %v2214
  %v3507 = vpack.c.b16 %v2219, %v2215
  %v3508 = vpack.c.b16 %v2220, %v2216
  %v3509 = vpack.c.b16 %v2225, %v2221
  %v3510 = vpack.c.b16 %v2226, %v2222
  %v3511 = vpack.c.b16 %v2227, %v2223
  %v3512 = vpack.c.b16 %v2228, %v2224
  %v3513 = vpack.c.b16 %v2233, %v2229
  %v3514 = vpack.c.b16 %v2234, %v2230
  %v3515 = vpack.c.b16 %v2235, %v2231
  %v3516 = vpack.c.b16 %v2236, %v2232
  %v3517 = vpack.c.b16 %v2241, %v2237
  %v3518 = vpack.c.b16 %v2242, %v2238
  %v3519 = vpack.c.b16 %v2243, %v2239
  %v3520 = vpack.c.b16 %v2244, %v2240
  %v3521 = vpack.c.b16 %v2249, %v2245
  %v3522 = vpack.c.b16 %v2250, %v2246
  %v3523 = vpack.c.b16 %v2251, %v2247
  %v3524 = vpack.c.b16 %v2252, %v2248
  %v3525 = vpack.c.b16 %v2257, %v2253
  %v3526 = vpack.c.b16 %v2258, %v2254
  %v3527 = vpack.c.b16 %v2259, %v2255
  %v3528 = vpack.c.b16 %v2260, %v2256
  %v3529 = vpack.c.b16 %v2265, %v2261
  %v3530 = vpack.c.b16 %v2266, %v2262
  %v3531 = vpack.c.b16 %v2267, %v2263
  %v3532 = vpack.c.b16 %v2268, %v2264
  %v3533 = vpack.c.b16 %v2273, %v2269
  %v3534 = vpack.c.b16 %v2274, %v2270
  %v3535 = vpack.c.b16 %v2275, %v2271
  %v3536 = vpack.c.b16 %v2276, %v2272
  %v3537 = vpack.c.b16 %v2281, %v2277
  %v3538 = vpack.c.b16 %v2282, %v2278
  %v3539 = vpack.c.b16 %v2283, %v2279
  %v3540 = vpack.c.b16 %v2284, %v2280
  %v3541 = vpack.c.b16 %v2289, %v2285
  %v3542 = vpack.c.b16 %v2290, %v2286
  %v3543 = vpack.c.b16 %v2291, %v2287
  %v3544 = vpack.c.b16 %v2292, %v2288
  %v3545 = vpack.c.b16 %v2297, %v2293
  %v3546 = vpack.c.b16 %v2298, %v2294
  %v3547 = vpack.c.b16 %v2299, %v2295
  %v3548 = vpack.c.b16 %v2300, %v2296
  %v3549 = vpack.c.b16 %v2305, %v2301
  %v3550 = vpack.c.b16 %v2306, %v2302
  %v3551 = vpack.c.b16 %v2307, %v2303
  %v3552 = vpack.c.b16 %v2308, %v2304
  %v3553 = vpack.c.b16 %v2313, %v2309
  %v3554 = vpack.c.b16 %v2314, %v2310
  %v3555 = vpack.c.b16 %v2315, %v2311
  %v3556 = vpack.c.b16 %v2316, %v2312
  %v3557 = vpack.c.b16 %v2321, %v2317
  %v3558 = vpack.c.b16 %v2322, %v2318
  %v3559 = vpack.c.b16 %v2323, %v2319
  %v3560 = vpack.c.b16 %v2324, %v2320
  %v3561 = vpack.c.b16 %v2329, %v2325
  %v3562 = vpack.c.b16 %v2330, %v2326
  %v3563 = vpack.c.b16 %v2331, %v2327
  %v3564 = vpack.c.b16 %v2332, %v2328
  %v3565 = vpack.c.b16 %v2337, %v2333
  %v3566 = vpack.c.b16 %v2338, %v2334
  %v3567 = vpack.c.b16 %v2339, %v2335
  %v3568 = vpack.c.b16 %v2340, %v2336
  %v3569 = vpack.c.b16 %v2345, %v2341
  %v3570 = vpack.c.b16 %v2346, %v2342
  %v3571 = vpack.c.b16 %v2347, %v2343
  %v3572 = vpack.c.b16 %v2348, %v2344
  %v3573 = vpack.c.b16 %v2353, %v2349
  %v3574 = vpack.c.b16 %v2354, %v2350
  %v3575 = vpack.c.b16 %v2355, %v2351
  %v3576 = vpack.c.b16 %v2356, %v2352
  %v3577 = vpack.c.b16 %v2361, %v2357
  %v3578 = vpack.c.b16 %v2362, %v2358
  %v3579 = vpack.c.b16 %v2363, %v2359
  %v3580 = vpack.c.b16 %v2364, %v2360
  %v3581 = vpack.c.b16 %v2369, %v2365
  %v3582 = vpack.c.b16 %v2370, %v2366
  %v3583 = vpack.c.b16 %v2371, %v2367
  %v3584 = vpack.c.b16 %v2372, %v2368
  %v3585 = vpack.c.b16 %v2377, %v2373
  %v3586 = vpack.c.b16 %v2378, %v2374
  %v3587 = vpack.c.b16 %v2379, %v2375
  %v3588 = vpack.c.b16 %v2380, %v2376
  %v3589 = vpack.c.b16 %v2385, %v2381
  %v3590 = vpack.c.b16 %v2386, %v2382
  %v3591 = vpack.c.b16 %v2387, %v2383
  %v3592 = vpack.c.b16 %v2388, %v2384
  %v3593 = vpack.c.b16 %v2393, %v2389
  %v3594 = vpack.c.b16 %v2394, %v2390
  %v3595 = vpack.c.b16 %v2395, %v2391
  %v3596 = vpack.c.b16 %v2396, %v2392
  %v3597 = vpack.c.b16 %v2401, %v2397
  %v3598 = vpack.c.b16 %v2402, %v2398
  %v3599 = vpack.c.b16 %v2403, %v2399
  %v3600 = vpack.c.b16 %v2404, %v2400
  %v3601 = vpack.c.b16 %v2409, %v2405
  %v3602 = vpack.c.b16 %v2410, %v2406
  %v3603 = vpack.c.b16 %v2411, %v2407
  %v3604 = vpack.c.b16 %v2412, %v2408
  %v3605 = vpack.c.b16 %v2417, %v2413
  %v3606 = vpack.c.b16 %v2418, %v2414
  %v3607 = vpack.c.b16 %v2419, %v2415
  %v3608 = vpack.c.b16 %v2420, %v2416
  %v3609 = vpack.c.b16 %v2425, %v2421
  %v3610 = vpack.c.b16 %v2426, %v2422
  %v3611 = vpack.c.b16 %v2427, %v2423
  %v3612 = vpack.c.b16 %v2428, %v2424
  %v3613 = vpack.c.b16 %v2433, %v2429
  %v3614 = vpack.c.b16 %v2434, %v2430
  %v3615 = vpack.c.b16 %v2435, %v2431
  %v3616 = vpack.c.b16 %v2436, %v2432
  %v3617 = vpack.c.b16 %v2441, %v2437
  %v3618 = vpack.c.b16 %v2442, %v2438
  %v3619 = vpack.c.b16 %v2443, %v2439
  %v3620 = vpack.c.b16 %v2444, %v2440
  %v3621 = vpack.c.b16 %v2449, %v2445
  %v3622 = vpack.c.b16 %v2450, %v2446
  %v3623 = vpack.c.b16 %v2451, %v2447
  %v3624 = vpack.c.b16 %v2452, %v2448
  %v3625 = vpack.c.b16 %v2457, %v2453
  %v3626 = vpack.c.b16 %v2458, %v2454
  %v3627 = vpack.c.b16 %v2459, %v2455
  %v3628 = vpack.c.b16 %v2460, %v2456
  %v3629 = vpack.c.b16 %v2465, %v2461
  %v3630 = vpack.c.b16 %v2466, %v2462
  %v3631 = vpack.c.b16 %v2467, %v2463
  %v3632 = vpack.c.b16 %v2468, %v2464
  %v3633 = vpack.c.b16 %v2473, %v2469
  %v3634 = vpack.c.b16 %v2474, %v2470
  %v3635 = vpack.c.b16 %v2475, %v2471
  %v3636 = vpack.c.b16 %v2476, %v2472
  %v3637 = vpack.c.b16 %v2481, %v2477
  %v3638 = vpack.c.b16 %v2482, %v2478
  %v3639 = vpack.c.b16 %v2483, %v2479
  %v3640 = vpack.c.b16 %v2484, %v2480
  %v3641 = vpack.c.b16 %v2489, %v2485
  %v3642 = vpack.c.b16 %v2490, %v2486
  %v3643 = vpack.c.b16 %v2491, %v2487
  %v3644 = vpack.c.b16 %v2492, %v2488
  %v3645 = vpack.c.b16 %v2497, %v2493
  %v3646 = vpack.c.b16 %v2498, %v2494
  %v3647 = vpack.c.b16 %v2499, %v2495
  %v3648 = vpack.c.b16 %v2500, %v2496
  %v3649 = vpack.c.b16 %v2505, %v2501
  %v3650 = vpack.c.b16 %v2506, %v2502
  %v3651 = vpack.c.b16 %v2507, %v2503
  %v3652 = vpack.c.b16 %v2508, %v2504
  %v3653 = vpack.c.b16 %v2513, %v2509
  %v3654 = vpack.c.b16 %v2514, %v2510
  %v3655 = vpack.c.b16 %v2515, %v2511
  %v3656 = vpack.c.b16 %v2516, %v2512
  %v3657 = vpack.c.b16 %v2521, %v2517
  %v3658 = vpack.c.b16 %v2522, %v2518
  %v3659 = vpack.c.b16 %v2523, %v2519
  %v3660 = vpack.c.b16 %v2524, %v2520
  %v3661 = vpack.c.b16 %v2529, %v2525
  %v3662 = vpack.c.b16 %v2530, %v2526
  %v3663 = vpack.c.b16 %v2531, %v2527
  %v3664 = vpack.c.b16 %v2532, %v2528
  %v3665 = vpack.c.b16 %v2537, %v2533
  %v3666 = vpack.c.b16 %v2538, %v2534
  %v3667 = vpack.c.b16 %v2539, %v2535
  %v3668 = vpack.c.b16 %v2540, %v2536
  %v3669 = vpack.c.b16 %v2545, %v2541
  %v3670 = vpack.c.b16 %v2546, %v2542
  %v3671 = vpack.c.b16 %v2547, %v2543
  %v3672 = vpack.c.b16 %v2548, %v2544
  %v3673 = vpack.c.b16 %v2553, %v2549
  %v3674 = vpack.c.b16 %v2554, %v2550
  %v3675 = vpack.c.b16 %v2555, %v2551
  %v3676 = vpack.c.b16 %v2556, %v2552
  %v3677 = vpack.c.b16 %v2561, %v2557
  %v3678 = vpack.c.b16 %v2562, %v2558
  %v3679 = vpack.c.b16 %v2563, %v2559
  %v3680 = vpack.c.b16 %v2564, %v2560
  %v3681 = vpack.c.b16 %v2569, %v2565
  %v3682 = vpack.c.b16 %v2570, %v2566
  %v3683 = vpack.c.b16 %v2571, %v2567
  %v3684 = vpack.c.b16 %v2572, %v2568
  %v3685 = vpack.c.b16 %v2577, %v2573
  %v3686 = vpack.c.b16 %v2578, %v2574
  %v3687 = vpack.c.b16 %v2579, %v2575
  %v3688 = vpack.c.b16 %v2580, %v2576
  %v3689 = vpack.c.b16 %v2585, %v2581
  %v3690 = vpack.c.b16 %v2586, %v2582
  %v3691 = vpack.c.b16 %v2587, %v2583
  %v3692 = vpack.c.b16 %v2588, %v2584
  %v3693 = vpack.c.b16 %v2593, %v2589
  %v3694 = vpack.c.b16 %v2594, %v2590
  %v3695 = vpack.c.b16 %v2595, %v2591
  %v3696 = vpack.c.b16 %v2596, %v2592
  %v3697 = vpack.c.b16 %v2601, %v2597
  %v3698 = vpack.c.b16 %v2602, %v2598
  %v3699 = vpack.c.b16 %v2603, %v2599
  %v3700 = vpack.c.b16 %v2604, %v2600
  %v3701 = vpack.c.b16 %v2609, %v2605
  %v3702 = vpack.c.b16 %v2610, %v2606
  %v3703 = vpack.c.b16 %v2611, %v2607
  %v3704 = vpack.c.b16 %v2612, %v2608
  %v3705 = vpack.c.b16 %v2617, %v2613
  %v3706 = vpack.c.b16 %v2618, %v2614
  %v3707 = vpack.c.b16 %v2619, %v2615
  %v3708 = vpack.c.b16 %v2620, %v2616
  %v3709 = vpack.c.b16 %v2625, %v2621
  %v3710 = vpack.c.b16 %v2626, %v2622
  %v3711 = vpack.c.b16 %v2627, %v2623
  %v3712 = vpack.c.b16 %v2628, %v2624
  %v3713 = vpack.c.b16 %v2633, %v2629
  %v3714 = vpack.c.b16 %v2634, %v2630
  %v3715 = vpack.c.b16 %v2635, %v2631
  %v3716 = vpack.c.b16 %v2636, %v2632
  %v3717 = vpack.c.b16 %v2641, %v2637
  %v3718 = vpack.c.b16 %v2642, %v2638
  %v3719 = vpack.c.b16 %v2643, %v2639
  %v3720 = vpack.c.b16 %v2644, %v2640
  %v3721 = vpack.c.b16 %v2649, %v2645
  %v3722 = vpack.c.b16 %v2650, %v2646
  %v3723 = vpack.c.b16 %v2651, %v2647
  %v3724 = vpack.c.b16 %v2652, %v2648
  %v3725 = vpack.c.b16 %v2657, %v2653
  %v3726 = vpack.c.b16 %v2658, %v2654
  %v3727 = vpack.c.b16 %v2659, %v2655
  %v3728 = vpack.c.b16 %v2660, %v2656
  %v3729 = vpack.c.b16 %v2665, %v2661
  %v3730 = vpack.c.b16 %v2666, %v2662
  %v3731 = vpack.c.b16 %v2667, %v2663
  %v3732 = vpack.c.b16 %v2668, %v2664
  %v3733 = vpack.c.b16 %v2673, %v2669
  %v3734 = vpack.c.b16 %v2674, %v2670
  %v3735 = vpack.c.b16 %v2675, %v2671
  %v3736 = vpack.c.b16 %v2676, %v2672
  %v3737 = vpack.c.b16 %v2681, %v2677
  %v3738 = vpack.c.b16 %v2682, %v2678
  %v3739 = vpack.c.b16 %v2683, %v2679
  %v3740 = vpack.c.b16 %v2684, %v2680
  %v3741 = vpack.c.b16 %v2689, %v2685
  %v3742 = vpack.c.b16 %v2690, %v2686
  %v3743 = vpack.c.b16 %v2691, %v2687
  %v3744 = vpack.c.b16 %v2692, %v2688
  %v3745 = vpack.c.b16 %v2697, %v2693
  %v3746 = vpack.c.b16 %v2698, %v2694
  %v3747 = vpack.c.b16 %v2699, %v2695
  %v3748 = vpack.c.b16 %v2700, %v2696
  %v3749 = vpack.c.b16 %v2705, %v2701
  %v3750 = vpack.c.b16 %v2706, %v2702
  %v3751 = vpack.c.b16 %v2707, %v2703
  %v3752 = vpack.c.b16 %v2708, %v2704
  %v3753 = vpack.c.b16 %v2713, %v2709
  %v3754 = vpack.c.b16 %v2714, %v2710
  %v3755 = vpack.c.b16 %v2715, %v2711
  %v3756 = vpack.c.b16 %v2716, %v2712
  %v3757 = vpack.c.b16 %v2721, %v2717
  %v3758 = vpack.c.b16 %v2722, %v2718
  %v3759 = vpack.c.b16 %v2723, %v2719
  %v3760 = vpack.c.b16 %v2724, %v2720
  %v3761 = vpack.c.b16 %v2729, %v2725
  %v3762 = vpack.c.b16 %v2730, %v2726
  %v3763 = vpack.c.b16 %v2731, %v2727
  %v3764 = vpack.c.b16 %v2732, %v2728
  %v3765 = vpack.c.b16 %v2737, %v2733
  %v3766 = vpack.c.b16 %v2738, %v2734
  %v3767 = vpack.c.b16 %v2739, %v2735
  %v3768 = vpack.c.b16 %v2740, %v2736
  %v3769 = vpack.c.b16 %v2745, %v2741
  %v3770 = vpack.c.b16 %v2746, %v2742
  %v3771 = vpack.c.b16 %v2747, %v2743
  %v3772 = vpack.c.b16 %v2748, %v2744
  %v3773 = vpack.c.b16 %v2753, %v2749
  %v3774 = vpack.c.b16 %v2754, %v2750
  %v3775 = vpack.c.b16 %v2755, %v2751
  %v3776 = vpack.c.b16 %v2756, %v2752
  %v3777 = vpack.c.b16 %v2761, %v2757
  %v3778 = vpack.c.b16 %v2762, %v2758
  %v3779 = vpack.c.b16 %v2763, %v2759
  %v3780 = vpack.c.b16 %v2764, %v2760
  %v3781 = vpack.c.b16 %v2769, %v2765
  %v3782 = vpack.c.b16 %v2770, %v2766
  %v3783 = vpack.c.b16 %v2771, %v2767
  %v3784 = vpack.c.b16 %v2772, %v2768
  %v3785 = vpack.c.b16 %v2777, %v2773
  %v3786 = vpack.c.b16 %v2778, %v2774
  %v3787 = vpack.c.b16 %v2779, %v2775
  %v3788 = vpack.c.b16 %v2780, %v2776
  %v3789 = vpack.c.b16 %v2785, %v2781
  %v3790 = vpack.c.b16 %v2786, %v2782
  %v3791 = vpack.c.b16 %v2787, %v2783
  %v3792 = vpack.c.b16 %v2788, %v2784
  %v3793 = vpack.c.b16 %v2793, %v2789
  %v3794 = vpack.c.b16 %v2794, %v2790
  %v3795 = vpack.c.b16 %v2795, %v2791
  %v3796 = vpack.c.b16 %v2796, %v2792
  %v3797 = vpack.c.b16 %v2801, %v2797
  %v3798 = vpack.c.b16 %v2802, %v2798
  %v3799 = vpack.c.b16 %v2803, %v2799
  %v3800 = vpack.c.b16 %v2804, %v2800
  %v3801 = vpack.c.b16 %v2809, %v2805
  %v3802 = vpack.c.b16 %v2810, %v2806
  %v3803 = vpack.c.b16 %v2811, %v2807
  %v3804 = vpack.c.b16 %v2812, %v2808
  %v3805 = vpack.c.b16 %v2817, %v2813
  %v3806 = vpack.c.b16 %v2818, %v2814
  %v3807 = vpack.c.b16 %v2819, %v2815
  %v3808 = vpack.c.b16 %v2820, %v2816
  %v3809 = vpack.c.b16 %v2825, %v2821
  %v3810 = vpack.c.b16 %v2826, %v2822
  %v3811 = vpack.c.b16 %v2827, %v2823
  %v3812 = vpack.c.b16 %v2828, %v2824
  %v3813 = vpack.c.b16 %v2833, %v2829
  %v3814 = vpack.c.b16 %v2834, %v2830
  %v3815 = vpack.c.b16 %v2835, %v2831
  %v3816 = vpack.c.b16 %v2836, %v2832
  %v3817 = vpack.c.b16 %v2841, %v2837
  %v3818 = vpack.c.b16 %v2842, %v2838
  %v3819 = vpack.c.b16 %v2843, %v2839
  %v3820 = vpack.c.b16 %v2844, %v2840
  %v3821 = vpack.c.b16 %v2849, %v2845
  %v3822 = vpack.c.b16 %v2850, %v2846
  %v3823 = vpack.c.b16 %v2851, %v2847
  %v3824 = vpack.c.b16 %v2852, %v2848
  %v3825 = vpack.c.b16 %v2857, %v2853
  %v3826 = vpack.c.b16 %v2858, %v2854
  %v3827 = vpack.c.b16 %v2859, %v2855
  %v3828 = vpack.c.b16 %v2860, %v2856
  %v3829 = vpack.c.b16 %v2865, %v2861
  %v3830 = vpack.c.b16 %v2866, %v2862
  %v3831 = vpack.c.b16 %v2867, %v2863
  %v3832 = vpack.c.b16 %v2868, %v2864
  %v3833 = vpack.c.b16 %v2873, %v2869
  %v3834 = vpack.c.b16 %v2874, %v2870
  %v3835 = vpack.c.b16 %v2875, %v2871
  %v3836 = vpack.c.b16 %v2876, %v2872
  %v3837 = vpack.c.b16 %v2881, %v2877
  %v3838 = vpack.c.b16 %v2882, %v2878
  %v3839 = vpack.c.b16 %v2883, %v2879
  %v3840 = vpack.c.b16 %v2884, %v2880
  %v3841 = vpack.c.b16 %v2889, %v2885
  %v3842 = vpack.c.b16 %v2890, %v2886
  %v3843 = vpack.c.b16 %v2891, %v2887
  %v3844 = vpack.c.b16 %v2892, %v2888
  %v3845 = vpack.c.b16 %v2897, %v2893
  %v3846 = vpack.c.b16 %v2898, %v2894
  %v3847 = vpack.c.b16 %v2899, %v2895
  %v3848 = vpack.c.b16 %v2900, %v2896
  %v3849 = vpack.c.b16 %v2905, %v2901
  %v3850 = vpack.c.b16 %v2906, %v2902
  %v3851 = vpack.c.b16 %v2907, %v2903
  %v3852 = vpack.c.b16 %v2908, %v2904
  %v3853 = vpack.c.b16 %v2913, %v2909
  %v3854 = vpack.c.b16 %v2914, %v2910
  %v3855 = vpack.c.b16 %v2915, %v2911
  %v3856 = vpack.c.b16 %v2916, %v2912
  %v3857 = vpack.c.b16 %v2921, %v2917
  %v3858 = vpack.c.b16 %v2922, %v2918
  %v3859 = vpack.c.b16 %v2923, %v2919
  %v3860 = vpack.c.b16 %v2924, %v2920
  %v3861 = vpack.c.b16 %v2929, %v2925
  %v3862 = vpack.c.b16 %v2930, %v2926
  %v3863 = vpack.c.b16 %v2931, %v2927
  %v3864 = vpack.c.b16 %v2932, %v2928
  %v3865 = vpack.c.b16 %v2937, %v2933
  %v3866 = vpack.c.b16 %v2938, %v2934
  %v3867 = vpack.c.b16 %v2939, %v2935
  %v3868 = vpack.c.b16 %v2940, %v2936
  %v3869 = vpack.c.b16 %v2945, %v2941
  %v3870 = vpack.c.b16 %v2946, %v2942
  %v3871 = vpack.c.b16 %v2947, %v2943
  %v3872 = vpack.c.b16 %v2948, %v2944
  %v3873 = vpack.c.b16 %v2953, %v2949
  %v3874 = vpack.c.b16 %v2954, %v2950
  %v3875 = vpack.c.b16 %v2955, %v2951
  %v3876 = vpack.c.b16 %v2956, %v2952
  %v3877 = vpack.c.b16 %v2961, %v2957
  %v3878 = vpack.c.b16 %v2962, %v2958
  %v3879 = vpack.c.b16 %v2963, %v2959
  %v3880 = vpack.c.b16 %v2964, %v2960
  %v3881 = vpack.c.b16 %v2969, %v2965
  %v3882 = vpack.c.b16 %v2970, %v2966
  %v3883 = vpack.c.b16 %v2971, %v2967
  %v3884 = vpack.c.b16 %v2972, %v2968
  %v3885 = vpack.c.b16 %v2977, %v2973
  %v3886 = vpack.c.b16 %v2978, %v2974
  %v3887 = vpack.c.b16 %v2979, %v2975
  %v3888 = vpack.c.b16 %v2980, %v2976
  %v3889 = vpack.c.b16 %v2985, %v2981
  %v3890 = vpack.c.b16 %v2986, %v2982
  %v3891 = vpack.c.b16 %v2987, %v2983
  %v3892 = vpack.c.b16 %v2988, %v2984
  %v3893 = vpack.c.b16 %v2993, %v2989
  %v3894 = vpack.c.b16 %v2994, %v2990
  %v3895 = vpack.c.b16 %v2995, %v2991
  %v3896 = vpack.c.b16 %v2996, %v2992
  %v3897 = vpack.c.b16 %v3001, %v2997
  %v3898 = vpack.c.b16 %v3002, %v2998
  %v3899 = vpack.c.b16 %v3003, %v2999
  %v3900 = vpack.c.b16 %v3004, %v3000
  %v3901 = vpack.c.b16 %v3009, %v3005
  %v3902 = vpack.c.b16 %v3010, %v3006
  %v3903 = vpack.c.b16 %v3011, %v3007
  %v3904 = vpack.c.b16 %v3012, %v3008
  %v3905 = vpack.c.b16 %v3017, %v3013
  %v3906 = vpack.c.b16 %v3018, %v3014
  %v3907 = vpack.c.b16 %v3019, %v3015
  %v3908 = vpack.c.b16 %v3020, %v3016
  %v3909 = vpack.c.b16 %v3025, %v3021
  %v3910 = vpack.c.b16 %v3026, %v3022
  %v3911 = vpack.c.b16 %v3027, %v3023
  %v3912 = vpack.c.b16 %v3028, %v3024
  %v3913 = vpack.c.b16 %v3033, %v3029
  %v3914 = vpack.c.b16 %v3034, %v3030
  %v3915 = vpack.c.b16 %v3035, %v3031
  %v3916 = vpack.c.b16 %v3036, %v3032
  %v3917 = vpack.c.b16 %v3041, %v3037
  %v3918 = vpack.c.b16 %v3042, %v3038
  %v3919 = vpack.c.b16 %v3043, %v3039
  %v3920 = vpack.c.b16 %v3044, %v3040
  %v3921 = vpack.c.b16 %v3049, %v3045
  %v3922 = vpack.c.b16 %v3050, %v3046
  %v3923 = vpack.c.b16 %v3051, %v3047
  %v3924 = vpack.c.b16 %v3052, %v3048
  %v3925 = vpack.c.b16 %v3057, %v3053
  %v3926 = vpack.c.b16 %v3058, %v3054
  %v3927 = vpack.c.b16 %v3059, %v3055
  %v3928 = vpack.c.b16 %v3060, %v3056
  %v3929 = vpack.c.b16 %v3065, %v3061
  %v3930 = vpack.c.b16 %v3066, %v3062
  %v3931 = vpack.c.b16 %v3067, %v3063
  %v3932 = vpack.c.b16 %v3068, %v3064
  %v3933 = vpack.c.b16 %v3073, %v3069
  %v3934 = vpack.c.b16 %v3074, %v3070
  %v3935 = vpack.c.b16 %v3075, %v3071
  %v3936 = vpack.c.b16 %v3076, %v3072
  %v3937 = vpack.c.b16 %v3081, %v3077
  %v3938 = vpack.c.b16 %v3082, %v3078
  %v3939 = vpack.c.b16 %v3083, %v3079
  %v3940 = vpack.c.b16 %v3084, %v3080
  %v3941 = vpack.c.b16 %v3089, %v3085
  %v3942 = vpack.c.b16 %v3090, %v3086
  %v3943 = vpack.c.b16 %v3091, %v3087
  %v3944 = vpack.c.b16 %v3092, %v3088
  %v3945 = vpack.c.b16 %v3097, %v3093
  %v3946 = vpack.c.b16 %v3098, %v3094
  %v3947 = vpack.c.b16 %v3099, %v3095
  %v3948 = vpack.c.b16 %v3100, %v3096
  %v3949 = vpack.c.b16 %v3105, %v3101
  %v3950 = vpack.c.b16 %v3106, %v3102
  %v3951 = vpack.c.b16 %v3107, %v3103
  %v3952 = vpack.c.b16 %v3108, %v3104
  %v3953 = vpack.c.b16 %v3113, %v3109
  %v3954 = vpack.c.b16 %v3114, %v3110
  %v3955 = vpack.c.b16 %v3115, %v3111
  %v3956 = vpack.c.b16 %v3116, %v3112
  %v3957 = vpack.c.b16 %v3121, %v3117
  %v3958 = vpack.c.b16 %v3122, %v3118
  %v3959 = vpack.c.b16 %v3123, %v3119
  %v3960 = vpack.c.b16 %v3124, %v3120
  %v3961 = vpack.c.b16 %v3129, %v3125
  %v3962 = vpack.c.b16 %v3130, %v3126
  %v3963 = vpack.c.b16 %v3131, %v3127
  %v3964 = vpack.c.b16 %v3132, %v3128
  %v3965 = vpack.c.b16 %v3137, %v3133
  %v3966 = vpack.c.b16 %v3138, %v3134
  %v3967 = vpack.c.b16 %v3139, %v3135
  %v3968 = vpack.c.b16 %v3140, %v3136
  %v3969 = vpack.c.b16 %v3145, %v3141
  %v3970 = vpack.c.b16 %v3146, %v3142
  %v3971 = vpack.c.b16 %v3147, %v3143
  %v3972 = vpack.c.b16 %v3148, %v3144
  %v3973 = vpack.c.b16 %v3153, %v3149
  %v3974 = vpack.c.b16 %v3154, %v3150
  %v3975 = vpack.c.b16 %v3155, %v3151
  %v3976 = vpack.c.b16 %v3156, %v3152
  %v3977 = vpack.c.b16 %v3161, %v3157
  %v3978 = vpack.c.b16 %v3162, %v3158
  %v3979 = vpack.c.b16 %v3163, %v3159
  %v3980 = vpack.c.b16 %v3164, %v3160
  %v3981 = vpack.c.b16 %v3169, %v3165
  %v3982 = vpack.c.b16 %v3170, %v3166
  %v3983 = vpack.c.b16 %v3171, %v3167
  %v3984 = vpack.c.b16 %v3172, %v3168
  %v3985 = vpack.c.b16 %v3177, %v3173
  %v3986 = vpack.c.b16 %v3178, %v3174
  %v3987 = vpack.c.b16 %v3179, %v3175
  %v3988 = vpack.c.b16 %v3180, %v3176
  %v3989 = vpack.c.b16 %v3185, %v3181
  %v3990 = vpack.c.b16 %v3186, %v3182
  %v3991 = vpack.c.b16 %v3187, %v3183
  %v3992 = vpack.c.b16 %v3188, %v3184
  %v3993 = vpack.c.b16 %v3193, %v3189
  %v3994 = vpack.c.b16 %v3194, %v3190
  %v3995 = vpack.c.b16 %v3195, %v3191
  %v3996 = vpack.c.b16 %v3196, %v3192
  %v3997 = vpack.c.b16 %v3201, %v3197
  %v3998 = vpack.c.b16 %v3202, %v3198
  %v3999 = vpack.c.b16 %v3203, %v3199
  %v4000 = vpack.c.b16 %v3204, %v3200
  %v4001 = vpack.c.b16 %v3209, %v3205
  %v4002 = vpack.c.b16 %v3210, %v3206
  %v4003 = vpack.c.b16 %v3211, %v3207
  %v4004 = vpack.c.b16 %v3212, %v3208
  %v4005 = vpack.c.b16 %v3217, %v3213
  %v4006 = vpack.c.b16 %v3218, %v3214
  %v4007 = vpack.c.b16 %v3219, %v3215
  %v4008 = vpack.c.b16 %v3220, %v3216
  %v4009 = vpack.c.b16 %v3225, %v3221
  %v4010 = vpack.c.b16 %v3226, %v3222
  %v4011 = vpack.c.b16 %v3227, %v3223
  %v4012 = vpack.c.b16 %v3228, %v3224
  %vm4797 = vcmask 523264
  %v4799 = vsel %vm4797, %v70, 0
  %4801 = vmatprep.subr.bf16.mxu0 %v3258
  %4802 = vmatpush1.bf16.msra.mxu0 %v3257
  %4803 = vmatprep.subr.bf16.mxu0 %v3254
  %4804 = vmatpush1.bf16.msra.mxu0 %v3253
  %4805 = vmatprep.subr.bf16.mxu0 %v3250
  %4806 = vmatpush1.bf16.msra.mxu0 %v3249
  %4807 = vmatprep.subr.bf16.mxu0 %v3246
  %4808 = vmatpush1.bf16.msra.mxu0 %v3245
  %4809 = vmatprep.subr.bf16.mxu0 %v3242
  %4810 = vmatpush1.bf16.msra.mxu0 %v3241
  %4811 = vmatprep.subr.bf16.mxu0 %v3238
  %4812 = vmatpush1.bf16.msra.mxu0 %v3237
  %4813 = vmatprep.subr.bf16.mxu0 %v3234
  %4814 = vmatpush1.bf16.msra.mxu0 %v3233
  %4815 = vmatprep.subr.bf16.mxu0 %v3230
  %4816 = vmatpush1.bf16.msra.mxu0 %v3229
  %4817 = vmatprep.subr.bf16.mxu0 %v3290
  %4818 = vmatpush2.bf16.msra.mxu0 %v3289
  %4819 = vmatprep.subr.bf16.mxu0 %v3286
  %4820 = vmatpush2.bf16.msra.mxu0 %v3285
  %4821 = vmatprep.subr.bf16.mxu0 %v3282
  %4822 = vmatpush2.bf16.msra.mxu0 %v3281
  %4823 = vmatprep.subr.bf16.mxu0 %v3278
  %4824 = vmatpush2.bf16.msra.mxu0 %v3277
  %4825 = vmatprep.subr.bf16.mxu0 %v3274
  %4826 = vmatpush2.bf16.msra.mxu0 %v3273
  %4827 = vmatprep.subr.bf16.mxu0 %v3270
  %4828 = vmatpush2.bf16.msra.mxu0 %v3269
  %4829 = vmatprep.subr.bf16.mxu0 %v3266
  %4830 = vmatpush2.bf16.msra.mxu0 %v3265
  %4831 = vmatprep.subr.bf16.mxu0 %v3262
  %4832 = vmatpush2.bf16.msra.mxu0 %v3261
  %4833 = vmatprep.mubr.bf16.mxu0 %v47
  %4834 = vmatmul.mubr.bf16.gmra.mxu0 %v46
  %v4835 = vpop.f32.mrf.mxu0
  %v4836 = vadd.f32 %v860, %v4835
  %v4837 = vpop.f32.mrf.mxu0
  %v4838 = vadd.f32 %v864, %v4837
  %v4839 = vpop.f32.mrf.mxu0
  %v4840 = vpop.f32.mrf.mxu0
  %4841 = vdwg.mxu0
  %4842 = vmatprep.subr.bf16.mxu0 %v3322
  %4843 = vmatpush1.bf16.msra.mxu0 %v3321
  %4844 = vmatprep.subr.bf16.mxu0 %v3318
  %4845 = vmatpush1.bf16.msra.mxu0 %v3317
  %4846 = vmatprep.subr.bf16.mxu0 %v3314
  %4847 = vmatpush1.bf16.msra.mxu0 %v3313
  %4848 = vmatprep.subr.bf16.mxu0 %v3310
  %4849 = vmatpush1.bf16.msra.mxu0 %v3309
  %4850 = vmatprep.subr.bf16.mxu0 %v3306
  %4851 = vmatpush1.bf16.msra.mxu0 %v3305
  %4852 = vmatprep.subr.bf16.mxu0 %v3302
  %4853 = vmatpush1.bf16.msra.mxu0 %v3301
  %4854 = vmatprep.subr.bf16.mxu0 %v3298
  %4855 = vmatpush1.bf16.msra.mxu0 %v3297
  %4856 = vmatprep.subr.bf16.mxu0 %v3294
  %4857 = vmatpush1.bf16.msra.mxu0 %v3293
  %4858 = vmatprep.subr.bf16.mxu0 %v3354
  %4859 = vmatpush2.bf16.msra.mxu0 %v3353
  %4860 = vmatprep.subr.bf16.mxu0 %v3350
  %4861 = vmatpush2.bf16.msra.mxu0 %v3349
  %4862 = vmatprep.subr.bf16.mxu0 %v3346
  %4863 = vmatpush2.bf16.msra.mxu0 %v3345
  %4864 = vmatprep.subr.bf16.mxu0 %v3342
  %4865 = vmatpush2.bf16.msra.mxu0 %v3341
  %4866 = vmatprep.subr.bf16.mxu0 %v3338
  %4867 = vmatpush2.bf16.msra.mxu0 %v3337
  %4868 = vmatprep.subr.bf16.mxu0 %v3334
  %4869 = vmatpush2.bf16.msra.mxu0 %v3333
  %4870 = vmatprep.subr.bf16.mxu0 %v3330
  %4871 = vmatpush2.bf16.msra.mxu0 %v3329
  %4872 = vmatprep.subr.bf16.mxu0 %v3326
  %4873 = vmatpush2.bf16.msra.mxu0 %v3325
  %4874 = vmatprep.mubr.bf16.mxu0 %v49
  %4875 = vmatmul.mubr.bf16.gmra.mxu0 %v48
  %v4876 = vpop.f32.mrf.mxu0
  %v4877 = vadd.f32 %v4836, %v4876
  %v4878 = vpop.f32.mrf.mxu0
  %v4879 = vadd.f32 %v4838, %v4878
  %v4880 = vpop.f32.mrf.mxu0
  %v4881 = vpop.f32.mrf.mxu0
  %4882 = vdwg.mxu0
  %4883 = vmatprep.subr.bf16.mxu0 %v3386
  %4884 = vmatpush1.bf16.msra.mxu0 %v3385
  %4885 = vmatprep.subr.bf16.mxu0 %v3382
  %4886 = vmatpush1.bf16.msra.mxu0 %v3381
  %4887 = vmatprep.subr.bf16.mxu0 %v3378
  %4888 = vmatpush1.bf16.msra.mxu0 %v3377
  %4889 = vmatprep.subr.bf16.mxu0 %v3374
  %4890 = vmatpush1.bf16.msra.mxu0 %v3373
  %4891 = vmatprep.subr.bf16.mxu0 %v3370
  %4892 = vmatpush1.bf16.msra.mxu0 %v3369
  %4893 = vmatprep.subr.bf16.mxu0 %v3366
  %4894 = vmatpush1.bf16.msra.mxu0 %v3365
  %4895 = vmatprep.subr.bf16.mxu0 %v3362
  %4896 = vmatpush1.bf16.msra.mxu0 %v3361
  %4897 = vmatprep.subr.bf16.mxu0 %v3358
  %4898 = vmatpush1.bf16.msra.mxu0 %v3357
  %4899 = vmatprep.subr.bf16.mxu0 %v3418
  %4900 = vmatpush2.bf16.msra.mxu0 %v3417
  %4901 = vmatprep.subr.bf16.mxu0 %v3414
  %4902 = vmatpush2.bf16.msra.mxu0 %v3413
  %4903 = vmatprep.subr.bf16.mxu0 %v3410
  %4904 = vmatpush2.bf16.msra.mxu0 %v3409
  %4905 = vmatprep.subr.bf16.mxu0 %v3406
  %4906 = vmatpush2.bf16.msra.mxu0 %v3405
  %4907 = vmatprep.subr.bf16.mxu0 %v3402
  %4908 = vmatpush2.bf16.msra.mxu0 %v3401
  %4909 = vmatprep.subr.bf16.mxu0 %v3398
  %4910 = vmatpush2.bf16.msra.mxu0 %v3397
  %4911 = vmatprep.subr.bf16.mxu0 %v3394
  %4912 = vmatpush2.bf16.msra.mxu0 %v3393
  %4913 = vmatprep.subr.bf16.mxu0 %v3390
  %4914 = vmatpush2.bf16.msra.mxu0 %v3389
  %4915 = vmatprep.mubr.bf16.mxu0 %v51
  %4916 = vmatmul.mubr.bf16.gmra.mxu0 %v50
  %v4917 = vpop.f32.mrf.mxu0
  %v4918 = vadd.f32 %v4877, %v4917
  %v4919 = vpop.f32.mrf.mxu0
  %v4920 = vadd.f32 %v4879, %v4919
  %v4921 = vpop.f32.mrf.mxu0
  %v4922 = vpop.f32.mrf.mxu0
  %4923 = vdwg.mxu0
  %4924 = vmatprep.subr.bf16.mxu0 %v3450
  %4925 = vmatpush1.bf16.msra.mxu0 %v3449
  %4926 = vmatprep.subr.bf16.mxu0 %v3446
  %4927 = vmatpush1.bf16.msra.mxu0 %v3445
  %4928 = vmatprep.subr.bf16.mxu0 %v3442
  %4929 = vmatpush1.bf16.msra.mxu0 %v3441
  %4930 = vmatprep.subr.bf16.mxu0 %v3438
  %4931 = vmatpush1.bf16.msra.mxu0 %v3437
  %4932 = vmatprep.subr.bf16.mxu0 %v3434
  %4933 = vmatpush1.bf16.msra.mxu0 %v3433
  %4934 = vmatprep.subr.bf16.mxu0 %v3430
  %4935 = vmatpush1.bf16.msra.mxu0 %v3429
  %4936 = vmatprep.subr.bf16.mxu0 %v3426
  %4937 = vmatpush1.bf16.msra.mxu0 %v3425
  %4938 = vmatprep.subr.bf16.mxu0 %v3422
  %4939 = vmatpush1.bf16.msra.mxu0 %v3421
  %4940 = vmatprep.subr.bf16.mxu0 %v3482
  %4941 = vmatpush2.bf16.msra.mxu0 %v3481
  %4942 = vmatprep.subr.bf16.mxu0 %v3478
  %4943 = vmatpush2.bf16.msra.mxu0 %v3477
  %4944 = vmatprep.subr.bf16.mxu0 %v3474
  %4945 = vmatpush2.bf16.msra.mxu0 %v3473
  %4946 = vmatprep.subr.bf16.mxu0 %v3470
  %4947 = vmatpush2.bf16.msra.mxu0 %v3469
  %4948 = vmatprep.subr.bf16.mxu0 %v3466
  %4949 = vmatpush2.bf16.msra.mxu0 %v3465
  %4950 = vmatprep.subr.bf16.mxu0 %v3462
  %4951 = vmatpush2.bf16.msra.mxu0 %v3461
  %4952 = vmatprep.subr.bf16.mxu0 %v3458
  %4953 = vmatpush2.bf16.msra.mxu0 %v3457
  %4954 = vmatprep.subr.bf16.mxu0 %v3454
  %4955 = vmatpush2.bf16.msra.mxu0 %v3453
  %4956 = vmatprep.mubr.bf16.mxu0 %v53
  %4957 = vmatmul.mubr.bf16.gmra.mxu0 %v52
  %v4958 = vpop.f32.mrf.mxu0
  %v4959 = vadd.f32 %v4918, %v4958
  %v4960 = vpop.f32.mrf.mxu0
  %v4961 = vadd.f32 %v4920, %v4960
  %v4962 = vpop.f32.mrf.mxu0
  %v4963 = vpop.f32.mrf.mxu0
  %4964 = vdwg.mxu0
  %4965 = vmatprep.subr.bf16.mxu0 %v3514
  %4966 = vmatpush1.bf16.msra.mxu0 %v3513
  %4967 = vmatprep.subr.bf16.mxu0 %v3510
  %4968 = vmatpush1.bf16.msra.mxu0 %v3509
  %4969 = vmatprep.subr.bf16.mxu0 %v3506
  %4970 = vmatpush1.bf16.msra.mxu0 %v3505
  %4971 = vmatprep.subr.bf16.mxu0 %v3502
  %4972 = vmatpush1.bf16.msra.mxu0 %v3501
  %4973 = vmatprep.subr.bf16.mxu0 %v3498
  %4974 = vmatpush1.bf16.msra.mxu0 %v3497
  %4975 = vmatprep.subr.bf16.mxu0 %v3494
  %4976 = vmatpush1.bf16.msra.mxu0 %v3493
  %4977 = vmatprep.subr.bf16.mxu0 %v3490
  %4978 = vmatpush1.bf16.msra.mxu0 %v3489
  %4979 = vmatprep.subr.bf16.mxu0 %v3486
  %4980 = vmatpush1.bf16.msra.mxu0 %v3485
  %4981 = vmatprep.subr.bf16.mxu0 %v3546
  %4982 = vmatpush2.bf16.msra.mxu0 %v3545
  %4983 = vmatprep.subr.bf16.mxu0 %v3542
  %4984 = vmatpush2.bf16.msra.mxu0 %v3541
  %4985 = vmatprep.subr.bf16.mxu0 %v3538
  %4986 = vmatpush2.bf16.msra.mxu0 %v3537
  %4987 = vmatprep.subr.bf16.mxu0 %v3534
  %4988 = vmatpush2.bf16.msra.mxu0 %v3533
  %4989 = vmatprep.subr.bf16.mxu0 %v3530
  %4990 = vmatpush2.bf16.msra.mxu0 %v3529
  %4991 = vmatprep.subr.bf16.mxu0 %v3526
  %4992 = vmatpush2.bf16.msra.mxu0 %v3525
  %4993 = vmatprep.subr.bf16.mxu0 %v3522
  %4994 = vmatpush2.bf16.msra.mxu0 %v3521
  %4995 = vmatprep.subr.bf16.mxu0 %v3518
  %4996 = vmatpush2.bf16.msra.mxu0 %v3517
  %4997 = vmatprep.mubr.bf16.mxu0 %v55
  %4998 = vmatmul.mubr.bf16.gmra.mxu0 %v54
  %v4999 = vpop.f32.mrf.mxu0
  %v5000 = vadd.f32 %v4959, %v4999
  %v5001 = vpop.f32.mrf.mxu0
  %v5002 = vadd.f32 %v4961, %v5001
  %v5003 = vpop.f32.mrf.mxu0
  %v5004 = vpop.f32.mrf.mxu0
  %5005 = vdwg.mxu0
  %5006 = vmatprep.subr.bf16.mxu0 %v3578
  %5007 = vmatpush1.bf16.msra.mxu0 %v3577
  %5008 = vmatprep.subr.bf16.mxu0 %v3574
  %5009 = vmatpush1.bf16.msra.mxu0 %v3573
  %5010 = vmatprep.subr.bf16.mxu0 %v3570
  %5011 = vmatpush1.bf16.msra.mxu0 %v3569
  %5012 = vmatprep.subr.bf16.mxu0 %v3566
  %5013 = vmatpush1.bf16.msra.mxu0 %v3565
  %5014 = vmatprep.subr.bf16.mxu0 %v3562
  %5015 = vmatpush1.bf16.msra.mxu0 %v3561
  %5016 = vmatprep.subr.bf16.mxu0 %v3558
  %5017 = vmatpush1.bf16.msra.mxu0 %v3557
  %5018 = vmatprep.subr.bf16.mxu0 %v3554
  %5019 = vmatpush1.bf16.msra.mxu0 %v3553
  %5020 = vmatprep.subr.bf16.mxu0 %v3550
  %5021 = vmatpush1.bf16.msra.mxu0 %v3549
  %5022 = vmatprep.subr.bf16.mxu0 %v3610
  %5023 = vmatpush2.bf16.msra.mxu0 %v3609
  %5024 = vmatprep.subr.bf16.mxu0 %v3606
  %5025 = vmatpush2.bf16.msra.mxu0 %v3605
  %5026 = vmatprep.subr.bf16.mxu0 %v3602
  %5027 = vmatpush2.bf16.msra.mxu0 %v3601
  %5028 = vmatprep.subr.bf16.mxu0 %v3598
  %5029 = vmatpush2.bf16.msra.mxu0 %v3597
  %5030 = vmatprep.subr.bf16.mxu0 %v3594
  %5031 = vmatpush2.bf16.msra.mxu0 %v3593
  %5032 = vmatprep.subr.bf16.mxu0 %v3590
  %5033 = vmatpush2.bf16.msra.mxu0 %v3589
  %5034 = vmatprep.subr.bf16.mxu0 %v3586
  %5035 = vmatpush2.bf16.msra.mxu0 %v3585
  %5036 = vmatprep.subr.bf16.mxu0 %v3582
  %5037 = vmatpush2.bf16.msra.mxu0 %v3581
  %5038 = vmatprep.mubr.bf16.mxu0 %v57
  %5039 = vmatmul.mubr.bf16.gmra.mxu0 %v56
  %v5040 = vpop.f32.mrf.mxu0
  %v5041 = vadd.f32 %v5000, %v5040
  %v5042 = vpop.f32.mrf.mxu0
  %v5043 = vadd.f32 %v5002, %v5042
  %v5044 = vpop.f32.mrf.mxu0
  %v5045 = vpop.f32.mrf.mxu0
  %5046 = vdwg.mxu0
  %5047 = vmatprep.subr.bf16.mxu0 %v3642
  %5048 = vmatpush1.bf16.msra.mxu0 %v3641
  %5049 = vmatprep.subr.bf16.mxu0 %v3638
  %5050 = vmatpush1.bf16.msra.mxu0 %v3637
  %5051 = vmatprep.subr.bf16.mxu0 %v3634
  %5052 = vmatpush1.bf16.msra.mxu0 %v3633
  %5053 = vmatprep.subr.bf16.mxu0 %v3630
  %5054 = vmatpush1.bf16.msra.mxu0 %v3629
  %5055 = vmatprep.subr.bf16.mxu0 %v3626
  %5056 = vmatpush1.bf16.msra.mxu0 %v3625
  %5057 = vmatprep.subr.bf16.mxu0 %v3622
  %5058 = vmatpush1.bf16.msra.mxu0 %v3621
  %5059 = vmatprep.subr.bf16.mxu0 %v3618
  %5060 = vmatpush1.bf16.msra.mxu0 %v3617
  %5061 = vmatprep.subr.bf16.mxu0 %v3614
  %5062 = vmatpush1.bf16.msra.mxu0 %v3613
  %5063 = vmatprep.subr.bf16.mxu0 %v3674
  %5064 = vmatpush2.bf16.msra.mxu0 %v3673
  %5065 = vmatprep.subr.bf16.mxu0 %v3670
  %5066 = vmatpush2.bf16.msra.mxu0 %v3669
  %5067 = vmatprep.subr.bf16.mxu0 %v3666
  %5068 = vmatpush2.bf16.msra.mxu0 %v3665
  %5069 = vmatprep.subr.bf16.mxu0 %v3662
  %5070 = vmatpush2.bf16.msra.mxu0 %v3661
  %5071 = vmatprep.subr.bf16.mxu0 %v3658
  %5072 = vmatpush2.bf16.msra.mxu0 %v3657
  %5073 = vmatprep.subr.bf16.mxu0 %v3654
  %5074 = vmatpush2.bf16.msra.mxu0 %v3653
  %5075 = vmatprep.subr.bf16.mxu0 %v3650
  %5076 = vmatpush2.bf16.msra.mxu0 %v3649
  %5077 = vmatprep.subr.bf16.mxu0 %v3646
  %5078 = vmatpush2.bf16.msra.mxu0 %v3645
  %5079 = vmatprep.mubr.bf16.mxu0 %v59
  %5080 = vmatmul.mubr.bf16.gmra.mxu0 %v58
  %v5081 = vpop.f32.mrf.mxu0
  %v5082 = vadd.f32 %v5041, %v5081
  %v5083 = vpop.f32.mrf.mxu0
  %v5084 = vadd.f32 %v5043, %v5083
  %v5085 = vpop.f32.mrf.mxu0
  %v5086 = vpop.f32.mrf.mxu0
  %5087 = vdwg.mxu0
  %5088 = vmatprep.subr.bf16.mxu0 %v3706
  %5089 = vmatpush1.bf16.msra.mxu0 %v3705
  %5090 = vmatprep.subr.bf16.mxu0 %v3702
  %5091 = vmatpush1.bf16.msra.mxu0 %v3701
  %5092 = vmatprep.subr.bf16.mxu0 %v3698
  %5093 = vmatpush1.bf16.msra.mxu0 %v3697
  %5094 = vmatprep.subr.bf16.mxu0 %v3694
  %5095 = vmatpush1.bf16.msra.mxu0 %v3693
  %5096 = vmatprep.subr.bf16.mxu0 %v3690
  %5097 = vmatpush1.bf16.msra.mxu0 %v3689
  %5098 = vmatprep.subr.bf16.mxu0 %v3686
  %5099 = vmatpush1.bf16.msra.mxu0 %v3685
  %5100 = vmatprep.subr.bf16.mxu0 %v3682
  %5101 = vmatpush1.bf16.msra.mxu0 %v3681
  %5102 = vmatprep.subr.bf16.mxu0 %v3678
  %5103 = vmatpush1.bf16.msra.mxu0 %v3677
  %5104 = vmatprep.subr.bf16.mxu0 %v3738
  %5105 = vmatpush2.bf16.msra.mxu0 %v3737
  %5106 = vmatprep.subr.bf16.mxu0 %v3734
  %5107 = vmatpush2.bf16.msra.mxu0 %v3733
  %5108 = vmatprep.subr.bf16.mxu0 %v3730
  %5109 = vmatpush2.bf16.msra.mxu0 %v3729
  %5110 = vmatprep.subr.bf16.mxu0 %v3726
  %5111 = vmatpush2.bf16.msra.mxu0 %v3725
  %5112 = vmatprep.subr.bf16.mxu0 %v3722
  %5113 = vmatpush2.bf16.msra.mxu0 %v3721
  %5114 = vmatprep.subr.bf16.mxu0 %v3718
  %5115 = vmatpush2.bf16.msra.mxu0 %v3717
  %5116 = vmatprep.subr.bf16.mxu0 %v3714
  %5117 = vmatpush2.bf16.msra.mxu0 %v3713
  %5118 = vmatprep.subr.bf16.mxu0 %v3710
  %5119 = vmatpush2.bf16.msra.mxu0 %v3709
  %5120 = vmatprep.mubr.bf16.mxu0 %v61
  %5121 = vmatmul.mubr.bf16.gmra.mxu0 %v60
  %v5122 = vpop.f32.mrf.mxu0
  %v5123 = vadd.f32 %v5082, %v5122
  %v5124 = vpop.f32.mrf.mxu0
  %v5125 = vadd.f32 %v5084, %v5124
  %v5126 = vpop.f32.mrf.mxu0
  %v5127 = vpop.f32.mrf.mxu0
  %5128 = vdwg.mxu0
  %5129 = vmatprep.subr.bf16.mxu0 %v3770
  %5130 = vmatpush1.bf16.msra.mxu0 %v3769
  %5131 = vmatprep.subr.bf16.mxu0 %v3766
  %5132 = vmatpush1.bf16.msra.mxu0 %v3765
  %5133 = vmatprep.subr.bf16.mxu0 %v3762
  %5134 = vmatpush1.bf16.msra.mxu0 %v3761
  %5135 = vmatprep.subr.bf16.mxu0 %v3758
  %5136 = vmatpush1.bf16.msra.mxu0 %v3757
  %5137 = vmatprep.subr.bf16.mxu0 %v3754
  %5138 = vmatpush1.bf16.msra.mxu0 %v3753
  %5139 = vmatprep.subr.bf16.mxu0 %v3750
  %5140 = vmatpush1.bf16.msra.mxu0 %v3749
  %5141 = vmatprep.subr.bf16.mxu0 %v3746
  %5142 = vmatpush1.bf16.msra.mxu0 %v3745
  %5143 = vmatprep.subr.bf16.mxu0 %v3742
  %5144 = vmatpush1.bf16.msra.mxu0 %v3741
  %5145 = vmatprep.subr.bf16.mxu0 %v3802
  %5146 = vmatpush2.bf16.msra.mxu0 %v3801
  %5147 = vmatprep.subr.bf16.mxu0 %v3798
  %5148 = vmatpush2.bf16.msra.mxu0 %v3797
  %5149 = vmatprep.subr.bf16.mxu0 %v3794
  %5150 = vmatpush2.bf16.msra.mxu0 %v3793
  %5151 = vmatprep.subr.bf16.mxu0 %v3790
  %5152 = vmatpush2.bf16.msra.mxu0 %v3789
  %5153 = vmatprep.subr.bf16.mxu0 %v3786
  %5154 = vmatpush2.bf16.msra.mxu0 %v3785
  %5155 = vmatprep.subr.bf16.mxu0 %v3782
  %5156 = vmatpush2.bf16.msra.mxu0 %v3781
  %5157 = vmatprep.subr.bf16.mxu0 %v3778
  %5158 = vmatpush2.bf16.msra.mxu0 %v3777
  %5159 = vmatprep.subr.bf16.mxu0 %v3774
  %5160 = vmatpush2.bf16.msra.mxu0 %v3773
  %5161 = vmatprep.mubr.bf16.mxu0 %v63
  %5162 = vmatmul.mubr.bf16.gmra.mxu0 %v62
  %v5163 = vpop.f32.mrf.mxu0
  %v5164 = vadd.f32 %v5123, %v5163
  %v5165 = vpop.f32.mrf.mxu0
  %v5166 = vadd.f32 %v5125, %v5165
  %v5167 = vpop.f32.mrf.mxu0
  %v5168 = vpop.f32.mrf.mxu0
  %5169 = vdwg.mxu0
  %5170 = vmatprep.subr.bf16.mxu0 %v3834
  %5171 = vmatpush1.bf16.msra.mxu0 %v3833
  %5172 = vmatprep.subr.bf16.mxu0 %v3830
  %5173 = vmatpush1.bf16.msra.mxu0 %v3829
  %5174 = vmatprep.subr.bf16.mxu0 %v3826
  %5175 = vmatpush1.bf16.msra.mxu0 %v3825
  %5176 = vmatprep.subr.bf16.mxu0 %v3822
  %5177 = vmatpush1.bf16.msra.mxu0 %v3821
  %5178 = vmatprep.subr.bf16.mxu0 %v3818
  %5179 = vmatpush1.bf16.msra.mxu0 %v3817
  %5180 = vmatprep.subr.bf16.mxu0 %v3814
  %5181 = vmatpush1.bf16.msra.mxu0 %v3813
  %5182 = vmatprep.subr.bf16.mxu0 %v3810
  %5183 = vmatpush1.bf16.msra.mxu0 %v3809
  %5184 = vmatprep.subr.bf16.mxu0 %v3806
  %5185 = vmatpush1.bf16.msra.mxu0 %v3805
  %5186 = vmatprep.subr.bf16.mxu0 %v3866
  %5187 = vmatpush2.bf16.msra.mxu0 %v3865
  %5188 = vmatprep.subr.bf16.mxu0 %v3862
  %5189 = vmatpush2.bf16.msra.mxu0 %v3861
  %5190 = vmatprep.subr.bf16.mxu0 %v3858
  %5191 = vmatpush2.bf16.msra.mxu0 %v3857
  %5192 = vmatprep.subr.bf16.mxu0 %v3854
  %5193 = vmatpush2.bf16.msra.mxu0 %v3853
  %5194 = vmatprep.subr.bf16.mxu0 %v3850
  %5195 = vmatpush2.bf16.msra.mxu0 %v3849
  %5196 = vmatprep.subr.bf16.mxu0 %v3846
  %5197 = vmatpush2.bf16.msra.mxu0 %v3845
  %5198 = vmatprep.subr.bf16.mxu0 %v3842
  %5199 = vmatpush2.bf16.msra.mxu0 %v3841
  %5200 = vmatprep.subr.bf16.mxu0 %v3838
  %5201 = vmatpush2.bf16.msra.mxu0 %v3837
  %5202 = vmatprep.mubr.bf16.mxu0 %v65
  %5203 = vmatmul.mubr.bf16.gmra.mxu0 %v64
  %v5204 = vpop.f32.mrf.mxu0
  %v5205 = vadd.f32 %v5164, %v5204
  %v5206 = vpop.f32.mrf.mxu0
  %v5207 = vadd.f32 %v5166, %v5206
  %v5208 = vpop.f32.mrf.mxu0
  %v5209 = vpop.f32.mrf.mxu0
  %5210 = vdwg.mxu0
  %5211 = vmatprep.subr.bf16.mxu0 %v3898
  %5212 = vmatpush1.bf16.msra.mxu0 %v3897
  %5213 = vmatprep.subr.bf16.mxu0 %v3894
  %5214 = vmatpush1.bf16.msra.mxu0 %v3893
  %5215 = vmatprep.subr.bf16.mxu0 %v3890
  %5216 = vmatpush1.bf16.msra.mxu0 %v3889
  %5217 = vmatprep.subr.bf16.mxu0 %v3886
  %5218 = vmatpush1.bf16.msra.mxu0 %v3885
  %5219 = vmatprep.subr.bf16.mxu0 %v3882
  %5220 = vmatpush1.bf16.msra.mxu0 %v3881
  %5221 = vmatprep.subr.bf16.mxu0 %v3878
  %5222 = vmatpush1.bf16.msra.mxu0 %v3877
  %5223 = vmatprep.subr.bf16.mxu0 %v3874
  %5224 = vmatpush1.bf16.msra.mxu0 %v3873
  %5225 = vmatprep.subr.bf16.mxu0 %v3870
  %5226 = vmatpush1.bf16.msra.mxu0 %v3869
  %5227 = vmatprep.subr.bf16.mxu0 %v3930
  %5228 = vmatpush2.bf16.msra.mxu0 %v3929
  %5229 = vmatprep.subr.bf16.mxu0 %v3926
  %5230 = vmatpush2.bf16.msra.mxu0 %v3925
  %5231 = vmatprep.subr.bf16.mxu0 %v3922
  %5232 = vmatpush2.bf16.msra.mxu0 %v3921
  %5233 = vmatprep.subr.bf16.mxu0 %v3918
  %5234 = vmatpush2.bf16.msra.mxu0 %v3917
  %5235 = vmatprep.subr.bf16.mxu0 %v3914
  %5236 = vmatpush2.bf16.msra.mxu0 %v3913
  %5237 = vmatprep.subr.bf16.mxu0 %v3910
  %5238 = vmatpush2.bf16.msra.mxu0 %v3909
  %5239 = vmatprep.subr.bf16.mxu0 %v3906
  %5240 = vmatpush2.bf16.msra.mxu0 %v3905
  %5241 = vmatprep.subr.bf16.mxu0 %v3902
  %5242 = vmatpush2.bf16.msra.mxu0 %v3901
  %5243 = vmatprep.mubr.bf16.mxu0 %v67
  %5244 = vmatmul.mubr.bf16.gmra.mxu0 %v66
  %v5245 = vpop.f32.mrf.mxu0
  %v5246 = vadd.f32 %v5205, %v5245
  %v5247 = vpop.f32.mrf.mxu0
  %v5248 = vadd.f32 %v5207, %v5247
  %v5249 = vpop.f32.mrf.mxu0
  %v5250 = vpop.f32.mrf.mxu0
  %5251 = vdwg.mxu0
  %5252 = vmatprep.subr.bf16.mxu0 %v3962
  %5253 = vmatpush1.bf16.msra.mxu0 %v3961
  %5254 = vmatprep.subr.bf16.mxu0 %v3958
  %5255 = vmatpush1.bf16.msra.mxu0 %v3957
  %5256 = vmatprep.subr.bf16.mxu0 %v3954
  %5257 = vmatpush1.bf16.msra.mxu0 %v3953
  %5258 = vmatprep.subr.bf16.mxu0 %v3950
  %5259 = vmatpush1.bf16.msra.mxu0 %v3949
  %5260 = vmatprep.subr.bf16.mxu0 %v3946
  %5261 = vmatpush1.bf16.msra.mxu0 %v3945
  %5262 = vmatprep.subr.bf16.mxu0 %v3942
  %5263 = vmatpush1.bf16.msra.mxu0 %v3941
  %5264 = vmatprep.subr.bf16.mxu0 %v3938
  %5265 = vmatpush1.bf16.msra.mxu0 %v3937
  %5266 = vmatprep.subr.bf16.mxu0 %v3934
  %5267 = vmatpush1.bf16.msra.mxu0 %v3933
  %5268 = vmatprep.subr.bf16.mxu0 %v3994
  %5269 = vmatpush2.bf16.msra.mxu0 %v3993
  %5270 = vmatprep.subr.bf16.mxu0 %v3990
  %5271 = vmatpush2.bf16.msra.mxu0 %v3989
  %5272 = vmatprep.subr.bf16.mxu0 %v3986
  %5273 = vmatpush2.bf16.msra.mxu0 %v3985
  %5274 = vmatprep.subr.bf16.mxu0 %v3982
  %5275 = vmatpush2.bf16.msra.mxu0 %v3981
  %5276 = vmatprep.subr.bf16.mxu0 %v3978
  %5277 = vmatpush2.bf16.msra.mxu0 %v3977
  %5278 = vmatprep.subr.bf16.mxu0 %v3974
  %5279 = vmatpush2.bf16.msra.mxu0 %v3973
  %5280 = vmatprep.subr.bf16.mxu0 %v3970
  %5281 = vmatpush2.bf16.msra.mxu0 %v3969
  %5282 = vmatprep.subr.bf16.mxu0 %v3966
  %5283 = vmatpush2.bf16.msra.mxu0 %v3965
  %5284 = vmatprep.mubr.bf16.mxu0 %v69
  %5285 = vmatmul.mubr.bf16.gmra.mxu0 %v68
  %v5286 = vpop.f32.mrf.mxu0
  %v5287 = vadd.f32 %v5246, %v5286
  %v5288 = vpop.f32.mrf.mxu0
  %v5289 = vadd.f32 %v5248, %v5288
  %v5290 = vpop.f32.mrf.mxu0
  %v5291 = vpop.f32.mrf.mxu0
  %5292 = vdwg.mxu0
  %5293 = vmatprep.subr.bf16.mxu0 0
  %5294 = vmatpush1.bf16.msra.mxu0 0
  %5295 = vmatprep.subr.bf16.mxu0 0
  %5296 = vmatpush1.bf16.msra.mxu0 0
  %5297 = vmatprep.subr.bf16.mxu0 0
  %5298 = vmatpush1.bf16.msra.mxu0 0
  %5299 = vmatprep.subr.bf16.mxu0 0
  %5300 = vmatpush1.bf16.msra.mxu0 0
  %5301 = vmatprep.subr.bf16.mxu0 %v4010
  %5302 = vmatpush1.bf16.msra.mxu0 %v4009
  %5303 = vmatprep.subr.bf16.mxu0 %v4006
  %5304 = vmatpush1.bf16.msra.mxu0 %v4005
  %5305 = vmatprep.subr.bf16.mxu0 %v4002
  %5306 = vmatpush1.bf16.msra.mxu0 %v4001
  %5307 = vmatprep.subr.bf16.mxu0 %v3998
  %5308 = vmatpush1.bf16.msra.mxu0 %v3997
  %5309 = vmatprep.subr.bf16.mxu0 0
  %5310 = vmatpush2.bf16.msra.mxu0 0
  %5311 = vmatprep.subr.bf16.mxu0 0
  %5312 = vmatpush2.bf16.msra.mxu0 0
  %5313 = vmatprep.subr.bf16.mxu0 0
  %5314 = vmatpush2.bf16.msra.mxu0 0
  %5315 = vmatprep.subr.bf16.mxu0 0
  %5316 = vmatpush2.bf16.msra.mxu0 0
  %5317 = vmatprep.subr.bf16.mxu0 0
  %5318 = vmatpush2.bf16.msra.mxu0 0
  %5319 = vmatprep.subr.bf16.mxu0 0
  %5320 = vmatpush2.bf16.msra.mxu0 0
  %5321 = vmatprep.subr.bf16.mxu0 0
  %5322 = vmatpush2.bf16.msra.mxu0 0
  %5323 = vmatprep.subr.bf16.mxu0 0
  %5324 = vmatpush2.bf16.msra.mxu0 0
  %5325 = vmatprep.mubr.bf16.mxu0 0
  %5326 = vmatmul.mubr.bf16.gmra.mxu0 %v4799
  %v5327 = vpop.f32.mrf.mxu0
  %v5328 = vadd.f32 %v5287, %v5327
  %v5329 = vpop.f32.mrf.mxu0
  %v5330 = vadd.f32 %v5289, %v5329
  %v5331 = vpop.f32.mrf.mxu0
  %v5332 = vpop.f32.mrf.mxu0
  %5333 = vdwg.mxu0
  %5334 = vmatprep.subr.bf16.mxu0 %v3260
  %5335 = vmatpush1.bf16.msra.mxu0 %v3259
  %5336 = vmatprep.subr.bf16.mxu0 %v3256
  %5337 = vmatpush1.bf16.msra.mxu0 %v3255
  %5338 = vmatprep.subr.bf16.mxu0 %v3252
  %5339 = vmatpush1.bf16.msra.mxu0 %v3251
  %5340 = vmatprep.subr.bf16.mxu0 %v3248
  %5341 = vmatpush1.bf16.msra.mxu0 %v3247
  %5342 = vmatprep.subr.bf16.mxu0 %v3244
  %5343 = vmatpush1.bf16.msra.mxu0 %v3243
  %5344 = vmatprep.subr.bf16.mxu0 %v3240
  %5345 = vmatpush1.bf16.msra.mxu0 %v3239
  %5346 = vmatprep.subr.bf16.mxu0 %v3236
  %5347 = vmatpush1.bf16.msra.mxu0 %v3235
  %5348 = vmatprep.subr.bf16.mxu0 %v3232
  %5349 = vmatpush1.bf16.msra.mxu0 %v3231
  %5350 = vmatprep.subr.bf16.mxu0 %v3292
  %5351 = vmatpush2.bf16.msra.mxu0 %v3291
  %5352 = vmatprep.subr.bf16.mxu0 %v3288
  %5353 = vmatpush2.bf16.msra.mxu0 %v3287
  %5354 = vmatprep.subr.bf16.mxu0 %v3284
  %5355 = vmatpush2.bf16.msra.mxu0 %v3283
  %5356 = vmatprep.subr.bf16.mxu0 %v3280
  %5357 = vmatpush2.bf16.msra.mxu0 %v3279
  %5358 = vmatprep.subr.bf16.mxu0 %v3276
  %5359 = vmatpush2.bf16.msra.mxu0 %v3275
  %5360 = vmatprep.subr.bf16.mxu0 %v3272
  %5361 = vmatpush2.bf16.msra.mxu0 %v3271
  %5362 = vmatprep.subr.bf16.mxu0 %v3268
  %5363 = vmatpush2.bf16.msra.mxu0 %v3267
  %5364 = vmatprep.subr.bf16.mxu0 %v3264
  %5365 = vmatpush2.bf16.msra.mxu0 %v3263
  %5366 = vmatprep.mubr.bf16.mxu0 %v47
  %5367 = vmatmul.mubr.bf16.gmra.mxu0 %v46
  %v5368 = vpop.f32.mrf.mxu0
  %v5369 = vadd.f32 %v868, %v5368
  %v5370 = vpop.f32.mrf.mxu0
  %v5371 = vadd.f32 %v872, %v5370
  %v5372 = vpop.f32.mrf.mxu0
  %v5373 = vpop.f32.mrf.mxu0
  %5374 = vdwg.mxu0
  %5375 = vmatprep.subr.bf16.mxu0 %v3324
  %5376 = vmatpush1.bf16.msra.mxu0 %v3323
  %5377 = vmatprep.subr.bf16.mxu0 %v3320
  %5378 = vmatpush1.bf16.msra.mxu0 %v3319
  %5379 = vmatprep.subr.bf16.mxu0 %v3316
  %5380 = vmatpush1.bf16.msra.mxu0 %v3315
  %5381 = vmatprep.subr.bf16.mxu0 %v3312
  %5382 = vmatpush1.bf16.msra.mxu0 %v3311
  %5383 = vmatprep.subr.bf16.mxu0 %v3308
  %5384 = vmatpush1.bf16.msra.mxu0 %v3307
  %5385 = vmatprep.subr.bf16.mxu0 %v3304
  %5386 = vmatpush1.bf16.msra.mxu0 %v3303
  %5387 = vmatprep.subr.bf16.mxu0 %v3300
  %5388 = vmatpush1.bf16.msra.mxu0 %v3299
  %5389 = vmatprep.subr.bf16.mxu0 %v3296
  %5390 = vmatpush1.bf16.msra.mxu0 %v3295
  %5391 = vmatprep.subr.bf16.mxu0 %v3356
  %5392 = vmatpush2.bf16.msra.mxu0 %v3355
  %5393 = vmatprep.subr.bf16.mxu0 %v3352
  %5394 = vmatpush2.bf16.msra.mxu0 %v3351
  %5395 = vmatprep.subr.bf16.mxu0 %v3348
  %5396 = vmatpush2.bf16.msra.mxu0 %v3347
  %5397 = vmatprep.subr.bf16.mxu0 %v3344
  %5398 = vmatpush2.bf16.msra.mxu0 %v3343
  %5399 = vmatprep.subr.bf16.mxu0 %v3340
  %5400 = vmatpush2.bf16.msra.mxu0 %v3339
  %5401 = vmatprep.subr.bf16.mxu0 %v3336
  %5402 = vmatpush2.bf16.msra.mxu0 %v3335
  %5403 = vmatprep.subr.bf16.mxu0 %v3332
  %5404 = vmatpush2.bf16.msra.mxu0 %v3331
  %5405 = vmatprep.subr.bf16.mxu0 %v3328
  %5406 = vmatpush2.bf16.msra.mxu0 %v3327
  %5407 = vmatprep.mubr.bf16.mxu0 %v49
  %5408 = vmatmul.mubr.bf16.gmra.mxu0 %v48
  %v5409 = vpop.f32.mrf.mxu0
  %v5410 = vadd.f32 %v5369, %v5409
  %v5411 = vpop.f32.mrf.mxu0
  %v5412 = vadd.f32 %v5371, %v5411
  %v5413 = vpop.f32.mrf.mxu0
  %v5414 = vpop.f32.mrf.mxu0
  %5415 = vdwg.mxu0
  %5416 = vmatprep.subr.bf16.mxu0 %v3388
  %5417 = vmatpush1.bf16.msra.mxu0 %v3387
  %5418 = vmatprep.subr.bf16.mxu0 %v3384
  %5419 = vmatpush1.bf16.msra.mxu0 %v3383
  %5420 = vmatprep.subr.bf16.mxu0 %v3380
  %5421 = vmatpush1.bf16.msra.mxu0 %v3379
  %5422 = vmatprep.subr.bf16.mxu0 %v3376
  %5423 = vmatpush1.bf16.msra.mxu0 %v3375
  %5424 = vmatprep.subr.bf16.mxu0 %v3372
  %5425 = vmatpush1.bf16.msra.mxu0 %v3371
  %5426 = vmatprep.subr.bf16.mxu0 %v3368
  %5427 = vmatpush1.bf16.msra.mxu0 %v3367
  %5428 = vmatprep.subr.bf16.mxu0 %v3364
  %5429 = vmatpush1.bf16.msra.mxu0 %v3363
  %5430 = vmatprep.subr.bf16.mxu0 %v3360
  %5431 = vmatpush1.bf16.msra.mxu0 %v3359
  %5432 = vmatprep.subr.bf16.mxu0 %v3420
  %5433 = vmatpush2.bf16.msra.mxu0 %v3419
  %5434 = vmatprep.subr.bf16.mxu0 %v3416
  %5435 = vmatpush2.bf16.msra.mxu0 %v3415
  %5436 = vmatprep.subr.bf16.mxu0 %v3412
  %5437 = vmatpush2.bf16.msra.mxu0 %v3411
  %5438 = vmatprep.subr.bf16.mxu0 %v3408
  %5439 = vmatpush2.bf16.msra.mxu0 %v3407
  %5440 = vmatprep.subr.bf16.mxu0 %v3404
  %5441 = vmatpush2.bf16.msra.mxu0 %v3403
  %5442 = vmatprep.subr.bf16.mxu0 %v3400
  %5443 = vmatpush2.bf16.msra.mxu0 %v3399
  %5444 = vmatprep.subr.bf16.mxu0 %v3396
  %5445 = vmatpush2.bf16.msra.mxu0 %v3395
  %5446 = vmatprep.subr.bf16.mxu0 %v3392
  %5447 = vmatpush2.bf16.msra.mxu0 %v3391
  %5448 = vmatprep.mubr.bf16.mxu0 %v51
  %5449 = vmatmul.mubr.bf16.gmra.mxu0 %v50
  %v5450 = vpop.f32.mrf.mxu0
  %v5451 = vadd.f32 %v5410, %v5450
  %v5452 = vpop.f32.mrf.mxu0
  %v5453 = vadd.f32 %v5412, %v5452
  %v5454 = vpop.f32.mrf.mxu0
  %v5455 = vpop.f32.mrf.mxu0
  %5456 = vdwg.mxu0
  %5457 = vmatprep.subr.bf16.mxu0 %v3452
  %5458 = vmatpush1.bf16.msra.mxu0 %v3451
  %5459 = vmatprep.subr.bf16.mxu0 %v3448
  %5460 = vmatpush1.bf16.msra.mxu0 %v3447
  %5461 = vmatprep.subr.bf16.mxu0 %v3444
  %5462 = vmatpush1.bf16.msra.mxu0 %v3443
  %5463 = vmatprep.subr.bf16.mxu0 %v3440
  %5464 = vmatpush1.bf16.msra.mxu0 %v3439
  %5465 = vmatprep.subr.bf16.mxu0 %v3436
  %5466 = vmatpush1.bf16.msra.mxu0 %v3435
  %5467 = vmatprep.subr.bf16.mxu0 %v3432
  %5468 = vmatpush1.bf16.msra.mxu0 %v3431
  %5469 = vmatprep.subr.bf16.mxu0 %v3428
  %5470 = vmatpush1.bf16.msra.mxu0 %v3427
  %5471 = vmatprep.subr.bf16.mxu0 %v3424
  %5472 = vmatpush1.bf16.msra.mxu0 %v3423
  %5473 = vmatprep.subr.bf16.mxu0 %v3484
  %5474 = vmatpush2.bf16.msra.mxu0 %v3483
  %5475 = vmatprep.subr.bf16.mxu0 %v3480
  %5476 = vmatpush2.bf16.msra.mxu0 %v3479
  %5477 = vmatprep.subr.bf16.mxu0 %v3476
  %5478 = vmatpush2.bf16.msra.mxu0 %v3475
  %5479 = vmatprep.subr.bf16.mxu0 %v3472
  %5480 = vmatpush2.bf16.msra.mxu0 %v3471
  %5481 = vmatprep.subr.bf16.mxu0 %v3468
  %5482 = vmatpush2.bf16.msra.mxu0 %v3467
  %5483 = vmatprep.subr.bf16.mxu0 %v3464
  %5484 = vmatpush2.bf16.msra.mxu0 %v3463
  %5485 = vmatprep.subr.bf16.mxu0 %v3460
  %5486 = vmatpush2.bf16.msra.mxu0 %v3459
  %5487 = vmatprep.subr.bf16.mxu0 %v3456
  %5488 = vmatpush2.bf16.msra.mxu0 %v3455
  %5489 = vmatprep.mubr.bf16.mxu0 %v53
  %5490 = vmatmul.mubr.bf16.gmra.mxu0 %v52
  %v5491 = vpop.f32.mrf.mxu0
  %v5492 = vadd.f32 %v5451, %v5491
  %v5493 = vpop.f32.mrf.mxu0
  %v5494 = vadd.f32 %v5453, %v5493
  %v5495 = vpop.f32.mrf.mxu0
  %v5496 = vpop.f32.mrf.mxu0
  %5497 = vdwg.mxu0
  %5498 = vmatprep.subr.bf16.mxu0 %v3516
  %5499 = vmatpush1.bf16.msra.mxu0 %v3515
  %5500 = vmatprep.subr.bf16.mxu0 %v3512
  %5501 = vmatpush1.bf16.msra.mxu0 %v3511
  %5502 = vmatprep.subr.bf16.mxu0 %v3508
  %5503 = vmatpush1.bf16.msra.mxu0 %v3507
  %5504 = vmatprep.subr.bf16.mxu0 %v3504
  %5505 = vmatpush1.bf16.msra.mxu0 %v3503
  %5506 = vmatprep.subr.bf16.mxu0 %v3500
  %5507 = vmatpush1.bf16.msra.mxu0 %v3499
  %5508 = vmatprep.subr.bf16.mxu0 %v3496
  %5509 = vmatpush1.bf16.msra.mxu0 %v3495
  %5510 = vmatprep.subr.bf16.mxu0 %v3492
  %5511 = vmatpush1.bf16.msra.mxu0 %v3491
  %5512 = vmatprep.subr.bf16.mxu0 %v3488
  %5513 = vmatpush1.bf16.msra.mxu0 %v3487
  %5514 = vmatprep.subr.bf16.mxu0 %v3548
  %5515 = vmatpush2.bf16.msra.mxu0 %v3547
  %5516 = vmatprep.subr.bf16.mxu0 %v3544
  %5517 = vmatpush2.bf16.msra.mxu0 %v3543
  %5518 = vmatprep.subr.bf16.mxu0 %v3540
  %5519 = vmatpush2.bf16.msra.mxu0 %v3539
  %5520 = vmatprep.subr.bf16.mxu0 %v3536
  %5521 = vmatpush2.bf16.msra.mxu0 %v3535
  %5522 = vmatprep.subr.bf16.mxu0 %v3532
  %5523 = vmatpush2.bf16.msra.mxu0 %v3531
  %5524 = vmatprep.subr.bf16.mxu0 %v3528
  %5525 = vmatpush2.bf16.msra.mxu0 %v3527
  %5526 = vmatprep.subr.bf16.mxu0 %v3524
  %5527 = vmatpush2.bf16.msra.mxu0 %v3523
  %5528 = vmatprep.subr.bf16.mxu0 %v3520
  %5529 = vmatpush2.bf16.msra.mxu0 %v3519
  %5530 = vmatprep.mubr.bf16.mxu0 %v55
  %5531 = vmatmul.mubr.bf16.gmra.mxu0 %v54
  %v5532 = vpop.f32.mrf.mxu0
  %v5533 = vadd.f32 %v5492, %v5532
  %v5534 = vpop.f32.mrf.mxu0
  %v5535 = vadd.f32 %v5494, %v5534
  %v5536 = vpop.f32.mrf.mxu0
  %v5537 = vpop.f32.mrf.mxu0
  %5538 = vdwg.mxu0
  %5539 = vmatprep.subr.bf16.mxu0 %v3580
  %5540 = vmatpush1.bf16.msra.mxu0 %v3579
  %5541 = vmatprep.subr.bf16.mxu0 %v3576
  %5542 = vmatpush1.bf16.msra.mxu0 %v3575
  %5543 = vmatprep.subr.bf16.mxu0 %v3572
  %5544 = vmatpush1.bf16.msra.mxu0 %v3571
  %5545 = vmatprep.subr.bf16.mxu0 %v3568
  %5546 = vmatpush1.bf16.msra.mxu0 %v3567
  %5547 = vmatprep.subr.bf16.mxu0 %v3564
  %5548 = vmatpush1.bf16.msra.mxu0 %v3563
  %5549 = vmatprep.subr.bf16.mxu0 %v3560
  %5550 = vmatpush1.bf16.msra.mxu0 %v3559
  %5551 = vmatprep.subr.bf16.mxu0 %v3556
  %5552 = vmatpush1.bf16.msra.mxu0 %v3555
  %5553 = vmatprep.subr.bf16.mxu0 %v3552
  %5554 = vmatpush1.bf16.msra.mxu0 %v3551
  %5555 = vmatprep.subr.bf16.mxu0 %v3612
  %5556 = vmatpush2.bf16.msra.mxu0 %v3611
  %5557 = vmatprep.subr.bf16.mxu0 %v3608
  %5558 = vmatpush2.bf16.msra.mxu0 %v3607
  %5559 = vmatprep.subr.bf16.mxu0 %v3604
  %5560 = vmatpush2.bf16.msra.mxu0 %v3603
  %5561 = vmatprep.subr.bf16.mxu0 %v3600
  %5562 = vmatpush2.bf16.msra.mxu0 %v3599
  %5563 = vmatprep.subr.bf16.mxu0 %v3596
  %5564 = vmatpush2.bf16.msra.mxu0 %v3595
  %5565 = vmatprep.subr.bf16.mxu0 %v3592
  %5566 = vmatpush2.bf16.msra.mxu0 %v3591
  %5567 = vmatprep.subr.bf16.mxu0 %v3588
  %5568 = vmatpush2.bf16.msra.mxu0 %v3587
  %5569 = vmatprep.subr.bf16.mxu0 %v3584
  %5570 = vmatpush2.bf16.msra.mxu0 %v3583
  %5571 = vmatprep.mubr.bf16.mxu0 %v57
  %5572 = vmatmul.mubr.bf16.gmra.mxu0 %v56
  %v5573 = vpop.f32.mrf.mxu0
  %v5574 = vadd.f32 %v5533, %v5573
  %v5575 = vpop.f32.mrf.mxu0
  %v5576 = vadd.f32 %v5535, %v5575
  %v5577 = vpop.f32.mrf.mxu0
  %v5578 = vpop.f32.mrf.mxu0
  %5579 = vdwg.mxu0
  %5580 = vmatprep.subr.bf16.mxu0 %v3644
  %5581 = vmatpush1.bf16.msra.mxu0 %v3643
  %5582 = vmatprep.subr.bf16.mxu0 %v3640
  %5583 = vmatpush1.bf16.msra.mxu0 %v3639
  %5584 = vmatprep.subr.bf16.mxu0 %v3636
  %5585 = vmatpush1.bf16.msra.mxu0 %v3635
  %5586 = vmatprep.subr.bf16.mxu0 %v3632
  %5587 = vmatpush1.bf16.msra.mxu0 %v3631
  %5588 = vmatprep.subr.bf16.mxu0 %v3628
  %5589 = vmatpush1.bf16.msra.mxu0 %v3627
  %5590 = vmatprep.subr.bf16.mxu0 %v3624
  %5591 = vmatpush1.bf16.msra.mxu0 %v3623
  %5592 = vmatprep.subr.bf16.mxu0 %v3620
  %5593 = vmatpush1.bf16.msra.mxu0 %v3619
  %5594 = vmatprep.subr.bf16.mxu0 %v3616
  %5595 = vmatpush1.bf16.msra.mxu0 %v3615
  %5596 = vmatprep.subr.bf16.mxu0 %v3676
  %5597 = vmatpush2.bf16.msra.mxu0 %v3675
  %5598 = vmatprep.subr.bf16.mxu0 %v3672
  %5599 = vmatpush2.bf16.msra.mxu0 %v3671
  %5600 = vmatprep.subr.bf16.mxu0 %v3668
  %5601 = vmatpush2.bf16.msra.mxu0 %v3667
  %5602 = vmatprep.subr.bf16.mxu0 %v3664
  %5603 = vmatpush2.bf16.msra.mxu0 %v3663
  %5604 = vmatprep.subr.bf16.mxu0 %v3660
  %5605 = vmatpush2.bf16.msra.mxu0 %v3659
  %5606 = vmatprep.subr.bf16.mxu0 %v3656
  %5607 = vmatpush2.bf16.msra.mxu0 %v3655
  %5608 = vmatprep.subr.bf16.mxu0 %v3652
  %5609 = vmatpush2.bf16.msra.mxu0 %v3651
  %5610 = vmatprep.subr.bf16.mxu0 %v3648
  %5611 = vmatpush2.bf16.msra.mxu0 %v3647
  %5612 = vmatprep.mubr.bf16.mxu0 %v59
  %5613 = vmatmul.mubr.bf16.gmra.mxu0 %v58
  %v5614 = vpop.f32.mrf.mxu0
  %v5615 = vadd.f32 %v5574, %v5614
  %v5616 = vpop.f32.mrf.mxu0
  %v5617 = vadd.f32 %v5576, %v5616
  %v5618 = vpop.f32.mrf.mxu0
  %v5619 = vpop.f32.mrf.mxu0
  %5620 = vdwg.mxu0
  %5621 = vmatprep.subr.bf16.mxu0 %v3708
  %5622 = vmatpush1.bf16.msra.mxu0 %v3707
  %5623 = vmatprep.subr.bf16.mxu0 %v3704
  %5624 = vmatpush1.bf16.msra.mxu0 %v3703
  %5625 = vmatprep.subr.bf16.mxu0 %v3700
  %5626 = vmatpush1.bf16.msra.mxu0 %v3699
  %5627 = vmatprep.subr.bf16.mxu0 %v3696
  %5628 = vmatpush1.bf16.msra.mxu0 %v3695
  %5629 = vmatprep.subr.bf16.mxu0 %v3692
  %5630 = vmatpush1.bf16.msra.mxu0 %v3691
  %5631 = vmatprep.subr.bf16.mxu0 %v3688
  %5632 = vmatpush1.bf16.msra.mxu0 %v3687
  %5633 = vmatprep.subr.bf16.mxu0 %v3684
  %5634 = vmatpush1.bf16.msra.mxu0 %v3683
  %5635 = vmatprep.subr.bf16.mxu0 %v3680
  %5636 = vmatpush1.bf16.msra.mxu0 %v3679
  %5637 = vmatprep.subr.bf16.mxu0 %v3740
  %5638 = vmatpush2.bf16.msra.mxu0 %v3739
  %5639 = vmatprep.subr.bf16.mxu0 %v3736
  %5640 = vmatpush2.bf16.msra.mxu0 %v3735
  %5641 = vmatprep.subr.bf16.mxu0 %v3732
  %5642 = vmatpush2.bf16.msra.mxu0 %v3731
  %5643 = vmatprep.subr.bf16.mxu0 %v3728
  %5644 = vmatpush2.bf16.msra.mxu0 %v3727
  %5645 = vmatprep.subr.bf16.mxu0 %v3724
  %5646 = vmatpush2.bf16.msra.mxu0 %v3723
  %5647 = vmatprep.subr.bf16.mxu0 %v3720
  %5648 = vmatpush2.bf16.msra.mxu0 %v3719
  %5649 = vmatprep.subr.bf16.mxu0 %v3716
  %5650 = vmatpush2.bf16.msra.mxu0 %v3715
  %5651 = vmatprep.subr.bf16.mxu0 %v3712
  %5652 = vmatpush2.bf16.msra.mxu0 %v3711
  %5653 = vmatprep.mubr.bf16.mxu0 %v61
  %5654 = vmatmul.mubr.bf16.gmra.mxu0 %v60
  %v5655 = vpop.f32.mrf.mxu0
  %v5656 = vadd.f32 %v5615, %v5655
  %v5657 = vpop.f32.mrf.mxu0
  %v5658 = vadd.f32 %v5617, %v5657
  %v5659 = vpop.f32.mrf.mxu0
  %v5660 = vpop.f32.mrf.mxu0
  %5661 = vdwg.mxu0
  %5662 = vmatprep.subr.bf16.mxu0 %v3772
  %5663 = vmatpush1.bf16.msra.mxu0 %v3771
  %5664 = vmatprep.subr.bf16.mxu0 %v3768
  %5665 = vmatpush1.bf16.msra.mxu0 %v3767
  %5666 = vmatprep.subr.bf16.mxu0 %v3764
  %5667 = vmatpush1.bf16.msra.mxu0 %v3763
  %5668 = vmatprep.subr.bf16.mxu0 %v3760
  %5669 = vmatpush1.bf16.msra.mxu0 %v3759
  %5670 = vmatprep.subr.bf16.mxu0 %v3756
  %5671 = vmatpush1.bf16.msra.mxu0 %v3755
  %5672 = vmatprep.subr.bf16.mxu0 %v3752
  %5673 = vmatpush1.bf16.msra.mxu0 %v3751
  %5674 = vmatprep.subr.bf16.mxu0 %v3748
  %5675 = vmatpush1.bf16.msra.mxu0 %v3747
  %5676 = vmatprep.subr.bf16.mxu0 %v3744
  %5677 = vmatpush1.bf16.msra.mxu0 %v3743
  %5678 = vmatprep.subr.bf16.mxu0 %v3804
  %5679 = vmatpush2.bf16.msra.mxu0 %v3803
  %5680 = vmatprep.subr.bf16.mxu0 %v3800
  %5681 = vmatpush2.bf16.msra.mxu0 %v3799
  %5682 = vmatprep.subr.bf16.mxu0 %v3796
  %5683 = vmatpush2.bf16.msra.mxu0 %v3795
  %5684 = vmatprep.subr.bf16.mxu0 %v3792
  %5685 = vmatpush2.bf16.msra.mxu0 %v3791
  %5686 = vmatprep.subr.bf16.mxu0 %v3788
  %5687 = vmatpush2.bf16.msra.mxu0 %v3787
  %5688 = vmatprep.subr.bf16.mxu0 %v3784
  %5689 = vmatpush2.bf16.msra.mxu0 %v3783
  %5690 = vmatprep.subr.bf16.mxu0 %v3780
  %5691 = vmatpush2.bf16.msra.mxu0 %v3779
  %5692 = vmatprep.subr.bf16.mxu0 %v3776
  %5693 = vmatpush2.bf16.msra.mxu0 %v3775
  %5694 = vmatprep.mubr.bf16.mxu0 %v63
  %5695 = vmatmul.mubr.bf16.gmra.mxu0 %v62
  %v5696 = vpop.f32.mrf.mxu0
  %v5697 = vadd.f32 %v5656, %v5696
  %v5698 = vpop.f32.mrf.mxu0
  %v5699 = vadd.f32 %v5658, %v5698
  %v5700 = vpop.f32.mrf.mxu0
  %v5701 = vpop.f32.mrf.mxu0
  %5702 = vdwg.mxu0
  %5703 = vmatprep.subr.bf16.mxu0 %v3836
  %5704 = vmatpush1.bf16.msra.mxu0 %v3835
  %5705 = vmatprep.subr.bf16.mxu0 %v3832
  %5706 = vmatpush1.bf16.msra.mxu0 %v3831
  %5707 = vmatprep.subr.bf16.mxu0 %v3828
  %5708 = vmatpush1.bf16.msra.mxu0 %v3827
  %5709 = vmatprep.subr.bf16.mxu0 %v3824
  %5710 = vmatpush1.bf16.msra.mxu0 %v3823
  %5711 = vmatprep.subr.bf16.mxu0 %v3820
  %5712 = vmatpush1.bf16.msra.mxu0 %v3819
  %5713 = vmatprep.subr.bf16.mxu0 %v3816
  %5714 = vmatpush1.bf16.msra.mxu0 %v3815
  %5715 = vmatprep.subr.bf16.mxu0 %v3812
  %5716 = vmatpush1.bf16.msra.mxu0 %v3811
  %5717 = vmatprep.subr.bf16.mxu0 %v3808
  %5718 = vmatpush1.bf16.msra.mxu0 %v3807
  %5719 = vmatprep.subr.bf16.mxu0 %v3868
  %5720 = vmatpush2.bf16.msra.mxu0 %v3867
  %5721 = vmatprep.subr.bf16.mxu0 %v3864
  %5722 = vmatpush2.bf16.msra.mxu0 %v3863
  %5723 = vmatprep.subr.bf16.mxu0 %v3860
  %5724 = vmatpush2.bf16.msra.mxu0 %v3859
  %5725 = vmatprep.subr.bf16.mxu0 %v3856
  %5726 = vmatpush2.bf16.msra.mxu0 %v3855
  %5727 = vmatprep.subr.bf16.mxu0 %v3852
  %5728 = vmatpush2.bf16.msra.mxu0 %v3851
  %5729 = vmatprep.subr.bf16.mxu0 %v3848
  %5730 = vmatpush2.bf16.msra.mxu0 %v3847
  %5731 = vmatprep.subr.bf16.mxu0 %v3844
  %5732 = vmatpush2.bf16.msra.mxu0 %v3843
  %5733 = vmatprep.subr.bf16.mxu0 %v3840
  %5734 = vmatpush2.bf16.msra.mxu0 %v3839
  %5735 = vmatprep.mubr.bf16.mxu0 %v65
  %5736 = vmatmul.mubr.bf16.gmra.mxu0 %v64
  %v5737 = vpop.f32.mrf.mxu0
  %v5738 = vadd.f32 %v5697, %v5737
  %v5739 = vpop.f32.mrf.mxu0
  %v5740 = vadd.f32 %v5699, %v5739
  %v5741 = vpop.f32.mrf.mxu0
  %v5742 = vpop.f32.mrf.mxu0
  %5743 = vdwg.mxu0
  %5744 = vmatprep.subr.bf16.mxu0 %v3900
  %5745 = vmatpush1.bf16.msra.mxu0 %v3899
  %5746 = vmatprep.subr.bf16.mxu0 %v3896
  %5747 = vmatpush1.bf16.msra.mxu0 %v3895
  %5748 = vmatprep.subr.bf16.mxu0 %v3892
  %5749 = vmatpush1.bf16.msra.mxu0 %v3891
  %5750 = vmatprep.subr.bf16.mxu0 %v3888
  %5751 = vmatpush1.bf16.msra.mxu0 %v3887
  %5752 = vmatprep.subr.bf16.mxu0 %v3884
  %5753 = vmatpush1.bf16.msra.mxu0 %v3883
  %5754 = vmatprep.subr.bf16.mxu0 %v3880
  %5755 = vmatpush1.bf16.msra.mxu0 %v3879
  %5756 = vmatprep.subr.bf16.mxu0 %v3876
  %5757 = vmatpush1.bf16.msra.mxu0 %v3875
  %5758 = vmatprep.subr.bf16.mxu0 %v3872
  %5759 = vmatpush1.bf16.msra.mxu0 %v3871
  %5760 = vmatprep.subr.bf16.mxu0 %v3932
  %5761 = vmatpush2.bf16.msra.mxu0 %v3931
  %5762 = vmatprep.subr.bf16.mxu0 %v3928
  %5763 = vmatpush2.bf16.msra.mxu0 %v3927
  %5764 = vmatprep.subr.bf16.mxu0 %v3924
  %5765 = vmatpush2.bf16.msra.mxu0 %v3923
  %5766 = vmatprep.subr.bf16.mxu0 %v3920
  %5767 = vmatpush2.bf16.msra.mxu0 %v3919
  %5768 = vmatprep.subr.bf16.mxu0 %v3916
  %5769 = vmatpush2.bf16.msra.mxu0 %v3915
  %5770 = vmatprep.subr.bf16.mxu0 %v3912
  %5771 = vmatpush2.bf16.msra.mxu0 %v3911
  %5772 = vmatprep.subr.bf16.mxu0 %v3908
  %5773 = vmatpush2.bf16.msra.mxu0 %v3907
  %5774 = vmatprep.subr.bf16.mxu0 %v3904
  %5775 = vmatpush2.bf16.msra.mxu0 %v3903
  %5776 = vmatprep.mubr.bf16.mxu0 %v67
  %5777 = vmatmul.mubr.bf16.gmra.mxu0 %v66
  %v5778 = vpop.f32.mrf.mxu0
  %v5779 = vadd.f32 %v5738, %v5778
  %v5780 = vpop.f32.mrf.mxu0
  %v5781 = vadd.f32 %v5740, %v5780
  %v5782 = vpop.f32.mrf.mxu0
  %v5783 = vpop.f32.mrf.mxu0
  %5784 = vdwg.mxu0
  %5785 = vmatprep.subr.bf16.mxu0 %v3964
  %5786 = vmatpush1.bf16.msra.mxu0 %v3963
  %5787 = vmatprep.subr.bf16.mxu0 %v3960
  %5788 = vmatpush1.bf16.msra.mxu0 %v3959
  %5789 = vmatprep.subr.bf16.mxu0 %v3956
  %5790 = vmatpush1.bf16.msra.mxu0 %v3955
  %5791 = vmatprep.subr.bf16.mxu0 %v3952
  %5792 = vmatpush1.bf16.msra.mxu0 %v3951
  %5793 = vmatprep.subr.bf16.mxu0 %v3948
  %5794 = vmatpush1.bf16.msra.mxu0 %v3947
  %5795 = vmatprep.subr.bf16.mxu0 %v3944
  %5796 = vmatpush1.bf16.msra.mxu0 %v3943
  %5797 = vmatprep.subr.bf16.mxu0 %v3940
  %5798 = vmatpush1.bf16.msra.mxu0 %v3939
  %5799 = vmatprep.subr.bf16.mxu0 %v3936
  %5800 = vmatpush1.bf16.msra.mxu0 %v3935
  %5801 = vmatprep.subr.bf16.mxu0 %v3996
  %5802 = vmatpush2.bf16.msra.mxu0 %v3995
  %5803 = vmatprep.subr.bf16.mxu0 %v3992
  %5804 = vmatpush2.bf16.msra.mxu0 %v3991
  %5805 = vmatprep.subr.bf16.mxu0 %v3988
  %5806 = vmatpush2.bf16.msra.mxu0 %v3987
  %5807 = vmatprep.subr.bf16.mxu0 %v3984
  %5808 = vmatpush2.bf16.msra.mxu0 %v3983
  %5809 = vmatprep.subr.bf16.mxu0 %v3980
  %5810 = vmatpush2.bf16.msra.mxu0 %v3979
  %5811 = vmatprep.subr.bf16.mxu0 %v3976
  %5812 = vmatpush2.bf16.msra.mxu0 %v3975
  %5813 = vmatprep.subr.bf16.mxu0 %v3972
  %5814 = vmatpush2.bf16.msra.mxu0 %v3971
  %5815 = vmatprep.subr.bf16.mxu0 %v3968
  %5816 = vmatpush2.bf16.msra.mxu0 %v3967
  %5817 = vmatprep.mubr.bf16.mxu0 %v69
  %5818 = vmatmul.mubr.bf16.gmra.mxu0 %v68
  %v5819 = vpop.f32.mrf.mxu0
  %v5820 = vadd.f32 %v5779, %v5819
  %v5821 = vpop.f32.mrf.mxu0
  %v5822 = vadd.f32 %v5781, %v5821
  %v5823 = vpop.f32.mrf.mxu0
  %v5824 = vpop.f32.mrf.mxu0
  %5825 = vdwg.mxu0
  %5826 = vmatprep.subr.bf16.mxu0 0
  %5827 = vmatpush1.bf16.msra.mxu0 0
  %5828 = vmatprep.subr.bf16.mxu0 0
  %5829 = vmatpush1.bf16.msra.mxu0 0
  %5830 = vmatprep.subr.bf16.mxu0 0
  %5831 = vmatpush1.bf16.msra.mxu0 0
  %5832 = vmatprep.subr.bf16.mxu0 0
  %5833 = vmatpush1.bf16.msra.mxu0 0
  %5834 = vmatprep.subr.bf16.mxu0 %v4012
  %5835 = vmatpush1.bf16.msra.mxu0 %v4011
  %5836 = vmatprep.subr.bf16.mxu0 %v4008
  %5837 = vmatpush1.bf16.msra.mxu0 %v4007
  %5838 = vmatprep.subr.bf16.mxu0 %v4004
  %5839 = vmatpush1.bf16.msra.mxu0 %v4003
  %5840 = vmatprep.subr.bf16.mxu0 %v4000
  %5841 = vmatpush1.bf16.msra.mxu0 %v3999
  %5842 = vmatprep.subr.bf16.mxu0 0
  %5843 = vmatpush2.bf16.msra.mxu0 0
  %5844 = vmatprep.subr.bf16.mxu0 0
  %5845 = vmatpush2.bf16.msra.mxu0 0
  %5846 = vmatprep.subr.bf16.mxu0 0
  %5847 = vmatpush2.bf16.msra.mxu0 0
  %5848 = vmatprep.subr.bf16.mxu0 0
  %5849 = vmatpush2.bf16.msra.mxu0 0
  %5850 = vmatprep.subr.bf16.mxu0 0
  %5851 = vmatpush2.bf16.msra.mxu0 0
  %5852 = vmatprep.subr.bf16.mxu0 0
  %5853 = vmatpush2.bf16.msra.mxu0 0
  %5854 = vmatprep.subr.bf16.mxu0 0
  %5855 = vmatpush2.bf16.msra.mxu0 0
  %5856 = vmatprep.subr.bf16.mxu0 0
  %5857 = vmatpush2.bf16.msra.mxu0 0
  %5858 = vmatprep.mubr.bf16.mxu0 0
  %5859 = vmatmul.mubr.bf16.gmra.mxu0 %v4799
  %v5860 = vpop.f32.mrf.mxu0
  %v5861 = vadd.f32 %v5820, %v5860
  %v5862 = vpop.f32.mrf.mxu0
  %v5863 = vadd.f32 %v5822, %v5862
  %v5864 = vpop.f32.mrf.mxu0
  %v5865 = vpop.f32.mrf.mxu0
  %5866 = vdwg.mxu0
  %v5867 = vmax.f32 %v5328, 0.0
  %v5868 = vmax.f32 %v5330, 0.0
  %v5869 = vmax.f32 %v5861, 0.0
  %v5870 = vmax.f32 %v5863, 0.0
  %v5871 = vpack.c.bf16 %v5867, %v5867
  %v5872 = vpack.c.bf16 %v5868, %v5868
  %v5873 = vpack.c.bf16 %v5869, %v5869
  %v5874 = vpack.c.bf16 %v5870, %v5870
  %v5875 = vld [vmem:[%s3] sm:$0xf]
  %v5876 = vld [vmem:[%s3 + $0x4] sm:$0xf]
  %v5877 = vld [vmem:[%s3 + $0x8] sm:$0xf]
  %v5878 = vld [vmem:[%s3 + $0xc] sm:$0xf]
  %v5879 = vld [vmem:[%s3 + $0x10] sm:$0xf]
  %v5880 = vld [vmem:[%s3 + $0x14] sm:$0xf]
  %v5881 = vld [vmem:[%s3 + $0x18] sm:$0xf]
  %v5882 = vld [vmem:[%s3 + $0x1c] sm:$0xf]
  %v5883 = vld [vmem:[%s3 + $0x20] sm:$0xf]
  %v5884 = vld [vmem:[%s3 + $0x24] sm:$0xf]
  %v5885 = vld [vmem:[%s3 + $0x28] sm:$0xf]
  %v5886 = vld [vmem:[%s3 + $0x2c] sm:$0xf]
  %v5887 = vld [vmem:[%s3 + $0x30] sm:$0xf]
  %v5888 = vld [vmem:[%s3 + $0x34] sm:$0xf]
  %v5889 = vld [vmem:[%s3 + $0x38] sm:$0xf]
  %v5890 = vld [vmem:[%s3 + $0x3c] sm:$0xf]
  %v5891 = vld [vmem:[%s3 + $0x40] sm:$0xf]
  %v5892 = vld [vmem:[%s3 + $0x44] sm:$0xf]
  %v5893 = vld [vmem:[%s3 + $0x48] sm:$0xf]
  %v5894 = vld [vmem:[%s3 + $0x4c] sm:$0xf]
  %v5895 = vld [vmem:[%s3 + $0x50] sm:$0xf]
  %v5896 = vld [vmem:[%s3 + $0x54] sm:$0xf]
  %v5897 = vld [vmem:[%s3 + $0x58] sm:$0xf]
  %v5898 = vld [vmem:[%s3 + $0x5c] sm:$0xf]
  %v5899 = vld [vmem:[%s3 + $0x60] sm:$0xf]
  %v5900 = vld [vmem:[%s3 + $0x64] sm:$0xf]
  %v5901 = vld [vmem:[%s3 + $0x68] sm:$0xf]
  %v5902 = vld [vmem:[%s3 + $0x6c] sm:$0xf]
  %v5903 = vld [vmem:[%s3 + $0x70] sm:$0xf]
  %v5904 = vld [vmem:[%s3 + $0x74] sm:$0xf]
  %v5905 = vld [vmem:[%s3 + $0x78] sm:$0xf]
  %v5906 = vld [vmem:[%s3 + $0x7c] sm:$0xf]
  %v5907 = vld [vmem:[%s3 + $0x80] sm:$0xf]
  %v5908 = vld [vmem:[%s3 + $0x84] sm:$0xf]
  %v5909 = vld [vmem:[%s3 + $0x88] sm:$0xf]
  %v5910 = vld [vmem:[%s3 + $0x8c] sm:$0xf]
  %v5911 = vld [vmem:[%s3 + $0x90] sm:$0xf]
  %v5912 = vld [vmem:[%s3 + $0x94] sm:$0xf]
  %v5913 = vld [vmem:[%s3 + $0x98] sm:$0xf]
  %v5914 = vld [vmem:[%s3 + $0x9c] sm:$0xf]
  %v5915 = vld [vmem:[%s3 + $0xa0] sm:$0xf]
  %v5916 = vld [vmem:[%s3 + $0xa4] sm:$0xf]
  %v5917 = vld [vmem:[%s3 + $0xa8] sm:$0xf]
  %v5918 = vld [vmem:[%s3 + $0xac] sm:$0xf]
  %v5919 = vld [vmem:[%s3 + $0xb0] sm:$0xf]
  %v5920 = vld [vmem:[%s3 + $0xb4] sm:$0xf]
  %v5921 = vld [vmem:[%s3 + $0xb8] sm:$0xf]
  %v5922 = vld [vmem:[%s3 + $0xbc] sm:$0xf]
  %v5923 = vld [vmem:[%s3 + $0xc0] sm:$0xf]
  %v5924 = vld [vmem:[%s3 + $0xc4] sm:$0xf]
  %v5925 = vld [vmem:[%s3 + $0xc8] sm:$0xf]
  %v5926 = vld [vmem:[%s3 + $0xcc] sm:$0xf]
  %v5927 = vld [vmem:[%s3 + $0xd0] sm:$0xf]
  %v5928 = vld [vmem:[%s3 + $0xd4] sm:$0xf]
  %v5929 = vld [vmem:[%s3 + $0xd8] sm:$0xf]
  %v5930 = vld [vmem:[%s3 + $0xdc] sm:$0xf]
  %v5931 = vld [vmem:[%s3 + $0xe0] sm:$0xf]
  %v5932 = vld [vmem:[%s3 + $0xe4] sm:$0xf]
  %v5933 = vld [vmem:[%s3 + $0xe8] sm:$0xf]
  %v5934 = vld [vmem:[%s3 + $0xec] sm:$0xf]
  %v5935 = vld [vmem:[%s3 + $0xf0] sm:$0xf]
  %v5936 = vld [vmem:[%s3 + $0xf4] sm:$0xf]
  %v5937 = vld [vmem:[%s3 + $0xf8] sm:$0xf]
  %v5938 = vld [vmem:[%s3 + $0xfc] sm:$0xf]
  %v5939 = vld [vmem:[%s4] sm:$0x1]
  %v5941 = vlaneseq
  %v5942 = vshrl.u32 %v5941, 7
  %v5943 = vsub.s32 0, %v5942
  %v5944 = vrot.slane %v5939, %v5943
  %v6010 = vunpack.c.l.b16 %v5875
  %v6011 = vunpack.c.l.b16 %v5876
  %v6012 = vunpack.c.l.b16 %v5877
  %v6013 = vunpack.c.l.b16 %v5878
  %v6014 = vunpack.c.l.b16 %v5879
  %v6015 = vunpack.c.l.b16 %v5880
  %v6016 = vunpack.c.l.b16 %v5881
  %v6017 = vunpack.c.l.b16 %v5882
  %v6018 = vunpack.c.l.b16 %v5883
  %v6019 = vunpack.c.l.b16 %v5884
  %v6020 = vunpack.c.l.b16 %v5885
  %v6021 = vunpack.c.l.b16 %v5886
  %v6022 = vunpack.c.l.b16 %v5887
  %v6023 = vunpack.c.l.b16 %v5888
  %v6024 = vunpack.c.l.b16 %v5889
  %v6025 = vunpack.c.l.b16 %v5890
  %v6026 = vunpack.c.l.b16 %v5891
  %v6027 = vunpack.c.l.b16 %v5892
  %v6028 = vunpack.c.l.b16 %v5893
  %v6029 = vunpack.c.l.b16 %v5894
  %v6030 = vunpack.c.l.b16 %v5895
  %v6031 = vunpack.c.l.b16 %v5896
  %v6032 = vunpack.c.l.b16 %v5897
  %v6033 = vunpack.c.l.b16 %v5898
  %v6034 = vunpack.c.l.b16 %v5899
  %v6035 = vunpack.c.l.b16 %v5900
  %v6036 = vunpack.c.l.b16 %v5901
  %v6037 = vunpack.c.l.b16 %v5902
  %v6038 = vunpack.c.l.b16 %v5903
  %v6039 = vunpack.c.l.b16 %v5904
  %v6040 = vunpack.c.l.b16 %v5905
  %v6041 = vunpack.c.l.b16 %v5906
  %v6042 = vunpack.c.l.b16 %v5907
  %v6043 = vunpack.c.l.b16 %v5908
  %v6044 = vunpack.c.l.b16 %v5909
  %v6045 = vunpack.c.l.b16 %v5910
  %v6046 = vunpack.c.l.b16 %v5911
  %v6047 = vunpack.c.l.b16 %v5912
  %v6048 = vunpack.c.l.b16 %v5913
  %v6049 = vunpack.c.l.b16 %v5914
  %v6050 = vunpack.c.l.b16 %v5915
  %v6051 = vunpack.c.l.b16 %v5916
  %v6052 = vunpack.c.l.b16 %v5917
  %v6053 = vunpack.c.l.b16 %v5918
  %v6054 = vunpack.c.l.b16 %v5919
  %v6055 = vunpack.c.l.b16 %v5920
  %v6056 = vunpack.c.l.b16 %v5921
  %v6057 = vunpack.c.l.b16 %v5922
  %v6058 = vunpack.c.l.b16 %v5923
  %v6059 = vunpack.c.l.b16 %v5924
  %v6060 = vunpack.c.l.b16 %v5925
  %v6061 = vunpack.c.l.b16 %v5926
  %v6062 = vunpack.c.l.b16 %v5927
  %v6063 = vunpack.c.l.b16 %v5928
  %v6064 = vunpack.c.l.b16 %v5929
  %v6065 = vunpack.c.l.b16 %v5930
  %v6066 = vunpack.c.l.b16 %v5931
  %v6067 = vunpack.c.l.b16 %v5932
  %v6068 = vunpack.c.l.b16 %v5933
  %v6069 = vunpack.c.l.b16 %v5934
  %v6070 = vunpack.c.l.b16 %v5935
  %v6071 = vunpack.c.l.b16 %v5936
  %v6072 = vunpack.c.l.b16 %v5937
  %v6073 = vunpack.c.l.b16 %v5938
  %v6074 = vpack.c.b16 %v6011, %v6010
  %v6075 = vpack.c.b16 %v6013, %v6012
  %v6076 = vpack.c.b16 %v6015, %v6014
  %v6077 = vpack.c.b16 %v6017, %v6016
  %v6078 = vpack.c.b16 %v6019, %v6018
  %v6079 = vpack.c.b16 %v6021, %v6020
  %v6080 = vpack.c.b16 %v6023, %v6022
  %v6081 = vpack.c.b16 %v6025, %v6024
  %v6082 = vpack.c.b16 %v6027, %v6026
  %v6083 = vpack.c.b16 %v6029, %v6028
  %v6084 = vpack.c.b16 %v6031, %v6030
  %v6085 = vpack.c.b16 %v6033, %v6032
  %v6086 = vpack.c.b16 %v6035, %v6034
  %v6087 = vpack.c.b16 %v6037, %v6036
  %v6088 = vpack.c.b16 %v6039, %v6038
  %v6089 = vpack.c.b16 %v6041, %v6040
  %v6090 = vpack.c.b16 %v6043, %v6042
  %v6091 = vpack.c.b16 %v6045, %v6044
  %v6092 = vpack.c.b16 %v6047, %v6046
  %v6093 = vpack.c.b16 %v6049, %v6048
  %v6094 = vpack.c.b16 %v6051, %v6050
  %v6095 = vpack.c.b16 %v6053, %v6052
  %v6096 = vpack.c.b16 %v6055, %v6054
  %v6097 = vpack.c.b16 %v6057, %v6056
  %v6098 = vpack.c.b16 %v6059, %v6058
  %v6099 = vpack.c.b16 %v6061, %v6060
  %v6100 = vpack.c.b16 %v6063, %v6062
  %v6101 = vpack.c.b16 %v6065, %v6064
  %v6102 = vpack.c.b16 %v6067, %v6066
  %v6103 = vpack.c.b16 %v6069, %v6068
  %v6104 = vpack.c.b16 %v6071, %v6070
  %v6105 = vpack.c.b16 %v6073, %v6072
  %6138 = vmatprep.subr.bf16.mxu0 0
  %6139 = vmatpush1.bf16.msra.mxu0 %v6081
  %6140 = vmatprep.subr.bf16.mxu0 0
  %6141 = vmatpush1.bf16.msra.mxu0 %v6080
  %6142 = vmatprep.subr.bf16.mxu0 0
  %6143 = vmatpush1.bf16.msra.mxu0 %v6079
  %6144 = vmatprep.subr.bf16.mxu0 0
  %6145 = vmatpush1.bf16.msra.mxu0 %v6078
  %6146 = vmatprep.subr.bf16.mxu0 0
  %6147 = vmatpush1.bf16.msra.mxu0 %v6077
  %6148 = vmatprep.subr.bf16.mxu0 0
  %6149 = vmatpush1.bf16.msra.mxu0 %v6076
  %6150 = vmatprep.subr.bf16.mxu0 0
  %6151 = vmatpush1.bf16.msra.mxu0 %v6075
  %6152 = vmatprep.subr.bf16.mxu0 0
  %6153 = vmatpush1.bf16.msra.mxu0 %v6074
  %6154 = vmatprep.subr.bf16.mxu0 0
  %6155 = vmatpush2.bf16.msra.mxu0 %v6089
  %6156 = vmatprep.subr.bf16.mxu0 0
  %6157 = vmatpush2.bf16.msra.mxu0 %v6088
  %6158 = vmatprep.subr.bf16.mxu0 0
  %6159 = vmatpush2.bf16.msra.mxu0 %v6087
  %6160 = vmatprep.subr.bf16.mxu0 0
  %6161 = vmatpush2.bf16.msra.mxu0 %v6086
  %6162 = vmatprep.subr.bf16.mxu0 0
  %6163 = vmatpush2.bf16.msra.mxu0 %v6085
  %6164 = vmatprep.subr.bf16.mxu0 0
  %6165 = vmatpush2.bf16.msra.mxu0 %v6084
  %6166 = vmatprep.subr.bf16.mxu0 0
  %6167 = vmatpush2.bf16.msra.mxu0 %v6083
  %6168 = vmatprep.subr.bf16.mxu0 0
  %6169 = vmatpush2.bf16.msra.mxu0 %v6082
  %6170 = vmatprep.mubr.bf16.mxu0 %v5872
  %6171 = vmatmul.mubr.bf16.gmra.mxu0 %v5871
  %v6172 = vpop.f32.mrf.mxu0
  %v6173 = vadd.f32 %v5944, %v6172
  %v6174 = vpop.f32.mrf.mxu0
  %v6175 = vpop.f32.mrf.mxu0
  %v6176 = vpop.f32.mrf.mxu0
  %6177 = vdwg.mxu0
  %6178 = vmatprep.subr.bf16.mxu0 0
  %6179 = vmatpush1.bf16.msra.mxu0 %v6097
  %6180 = vmatprep.subr.bf16.mxu0 0
  %6181 = vmatpush1.bf16.msra.mxu0 %v6096
  %6182 = vmatprep.subr.bf16.mxu0 0
  %6183 = vmatpush1.bf16.msra.mxu0 %v6095
  %6184 = vmatprep.subr.bf16.mxu0 0
  %6185 = vmatpush1.bf16.msra.mxu0 %v6094
  %6186 = vmatprep.subr.bf16.mxu0 0
  %6187 = vmatpush1.bf16.msra.mxu0 %v6093
  %6188 = vmatprep.subr.bf16.mxu0 0
  %6189 = vmatpush1.bf16.msra.mxu0 %v6092
  %6190 = vmatprep.subr.bf16.mxu0 0
  %6191 = vmatpush1.bf16.msra.mxu0 %v6091
  %6192 = vmatprep.subr.bf16.mxu0 0
  %6193 = vmatpush1.bf16.msra.mxu0 %v6090
  %6194 = vmatprep.subr.bf16.mxu0 0
  %6195 = vmatpush2.bf16.msra.mxu0 %v6105
  %6196 = vmatprep.subr.bf16.mxu0 0
  %6197 = vmatpush2.bf16.msra.mxu0 %v6104
  %6198 = vmatprep.subr.bf16.mxu0 0
  %6199 = vmatpush2.bf16.msra.mxu0 %v6103
  %6200 = vmatprep.subr.bf16.mxu0 0
  %6201 = vmatpush2.bf16.msra.mxu0 %v6102
  %6202 = vmatprep.subr.bf16.mxu0 0
  %6203 = vmatpush2.bf16.msra.mxu0 %v6101
  %6204 = vmatprep.subr.bf16.mxu0 0
  %6205 = vmatpush2.bf16.msra.mxu0 %v6100
  %6206 = vmatprep.subr.bf16.mxu0 0
  %6207 = vmatpush2.bf16.msra.mxu0 %v6099
  %6208 = vmatprep.subr.bf16.mxu0 0
  %6209 = vmatpush2.bf16.msra.mxu0 %v6098
  %6210 = vmatprep.mubr.bf16.mxu0 %v5874
  %6211 = vmatmul.mubr.bf16.gmra.mxu0 %v5873
  %v6212 = vpop.f32.mrf.mxu0
  %v6213 = vadd.f32 %v6173, %v6212
  %v6214 = vpop.f32.mrf.mxu0
  %v6215 = vpop.f32.mrf.mxu0
  %v6216 = vpop.f32.mrf.mxu0
  %6217 = vdwg.mxu0
  %v6218 = vlaneseq
  %v6219 = vand.u32 %v6218, 127
  %vm6220 = vcmp.lt.s32.totalorder %v6219, 6
  %v6221 = vsel %vm6220, %v6213, -inf
  %6222 = vmax.xlane.f32.xlu0 %v6221
  %v6223 = vpop.xlane.xlu0 %6222
  %v6224 = vsub.f32 %v6221, %v6223
  %v6225 = vmul.f32 %v6224, 1.442695
  %v6226 = vpow.pop %v6225
  %6227 = vadd.xlane.f32.xlu0 %v6226
  %v6228 = vpop.xlane.xlu0 %6227
  %v6229 = vrcp.pop %v6228
  %v6230 = vmul.f32 %v6226, %v6229
  %vm6231 = vcmp.eq.s32.totalorder %v6219, 6
  %v6232 = vsel %vm6231, %v6213, %v6230
  %6233 = vst [vmem:[%s5] sm:$0xff] %v6232
  // Predicated region
  $region22: #{actor_critic_forward.7} parent=0 // pred_check
    _
  $region23: #{actor_critic_forward.7} parent=0 // pred_check_branch
    %6235 = sbr.rel (0) target = $region25
  $region24: #{actor_critic_forward.7} parent=0 // pred_region
    _
  $region25: #{actor_critic_forward.7} parent=0 // pred_fallthru
    _
  // Predicated region
  $region26: #{actor_critic_forward.7} parent=0 // pred_check
    _
  $region27: #{actor_critic_forward.7} parent=0 // pred_check_branch
    %6237 = sbr.rel (0) target = $region29
  $region28: #{actor_critic_forward.7} parent=0 // pred_region
    _
  $region29: #{actor_critic_forward.7} parent=0 // pred_fallthru
    _

</llo_original>
